<compile_context>
chip_gen: v5e
topology: v5e:2x2
jax: 0.10.0
libtpu: 0.0.40
codegen_flags: <defaults>
</compile_context>

<pallas_src>
import jax
import jax.numpy as jnp
from jax.experimental import pallas as pl
from jax.experimental.pallas import tpu as pltpu


def _round_up(x, m):
    return ((x + m - 1) // m) * m


# ---------------------------------------------------------------------------
# Fused Pallas kernel (all SineLayers + folded last linear)
# Feature-major layout: activations are [d, tile_n] (features in sublanes,
# points in lanes) so the concat split is sublane-aligned and the final
# 1-wide output is a lane-dense [1, tile_n] row (no masked stores).
# ---------------------------------------------------------------------------
def _make_fused_kernel(hidden_dims, offsets, b_off, lastlayer):
    n_layers = len(hidden_dims)

    def kernel(*refs):
        # refs = (x_ref, w_cat_0 .. w_cat_{L-1}, c_all_ref, o_ref)
        x_ref = refs[0]
        c_ref = refs[1 + n_layers]
        o_ref = refs[2 + n_layers]
        c_all = c_ref[...]                                # [C, 1] tiny, load once
        act = x_ref[...]                                  # [d_in_pad, tile_n]
        for l in range(n_layers):
            d_out = hidden_dims[l]
            off = offsets[l]
            w_cat = refs[1 + l][...]                      # [2*d_out, d_in]
            c_cat = c_all[off:off + 2 * d_out, :]         # [2*d_out, 1]
            # Single MXU push per layer; the small constant w_cat is the
            # natural stationary operand held across the whole lane tile.
            y = jnp.dot(w_cat, act, preferred_element_type=jnp.float32) + c_cat
            # omega0 & phase already folded into the top (sin-argument) half;
            # scale const (and w_last, for the final layer) folded into the
            # bottom (amplitude) half at prepare time.
            act = y[d_out:, :] * jnp.sin(y[:d_out, :])
        if lastlayer:
            b_last = c_all[b_off:b_off + 1, :]            # [1, 1]
            # w_last is pre-folded, so the epilogue is just a sublane reduce
            # producing a lane-dense [1, tile_n] output row.
            o_ref[...] = jnp.sum(act, axis=0, keepdims=True) + b_last
        else:
            o_ref[...] = act

    return kernel


# ---------------------------------------------------------------------------
# Parameter preparation (done ONCE, not per forward call)
# ---------------------------------------------------------------------------
def prepare_siren_params(layer_params, last_params, *, omega0=30.0, lastlayer=True):
    """Folds omega0, phase, scale-const and (if lastlayer) w_last into the
    concatenated per-layer weights/biases.  Returns (w_cats, c_all, meta)."""
    omega0 = float(omega0)
    n_layers = len(layer_params)
    assert n_layers >= 1
    w_cats, const_segs, offsets, hidden_dims = [], [], [], []
    off = 0
    d_in0 = None
    for li, p in enumerate(layer_params):
        w_lin = jnp.asarray(p["w_lin"], jnp.float32)            # [d_out, d_in]
        w_dyn = jnp.asarray(p["w_dyn"], jnp.float32)            # [d_out, d_in]
        b_lin = jnp.asarray(p["b_lin"], jnp.float32).reshape(-1)
        scale_w = jnp.asarray(p["scale_w"], jnp.float32)[:, 0]
        phase_w = jnp.asarray(p["phase_w"], jnp.float32)[:, 0]
        d_out, d_in = w_lin.shape
        hidden_dims.append(d_out)
        if li == 0:
            d_in0 = d_in
        # sin-argument path: omega0*(x@W^T + b) + phase == x@(omega0*W)^T + (omega0*b + phase)
        w_sin = omega0 * w_lin
        c_sin = omega0 * b_lin + phase_w
        # amplitude path: x@dynW^T + scale_const
        w_amp = w_dyn
        c_amp = scale_w
        if lastlayer and li == n_layers - 1:
            w_last = jnp.asarray(last_params["w_last"], jnp.float32).reshape(-1)
            w_amp = w_amp * w_last[:, None]
            c_amp = c_amp * w_last
        w_cat = jnp.concatenate([w_sin, w_amp], axis=0)          # [2*d_out, d_in]
        if li == 0:
            d_in_pad = _round_up(d_in, 8)
            if d_in_pad != d_in:   # zero-pad network input dim (sublane alignment)
                w_cat = jnp.pad(w_cat, ((0, 0), (0, d_in_pad - d_in)))
        w_cats.append(w_cat)
        c_seg = jnp.concatenate([c_sin, c_amp]).reshape(-1, 1)   # [2*d_out, 1]
        seg_rows = _round_up(2 * d_out, 8)                       # sublane-aligned segment
        if seg_rows != 2 * d_out:
            c_seg = jnp.pad(c_seg, ((0, seg_rows - 2 * d_out), (0, 0)))
        offsets.append(off)
        const_segs.append(c_seg)
        off += seg_rows
    b_off = None
    if lastlayer:
        b_last = jnp.asarray(last_params["b_last"], jnp.float32).reshape(1, 1)
        const_segs.append(jnp.pad(b_last, ((0, 7), (0, 0))))
        b_off = off
        off += 8
    c_all = jnp.concatenate(const_segs, axis=0)                  # [off, 1]
    meta = dict(hidden_dims=tuple(hidden_dims), offsets=tuple(offsets),
                b_off=b_off, lastlayer=lastlayer,
                d_in=d_in0, d_in_pad=w_cats[0].shape[1])
    return w_cats, c_all, meta


# ---------------------------------------------------------------------------
# Fused forward
# ---------------------------------------------------------------------------
def siren_forward_fused(x, w_cats, c_all, meta, *, tile_n=4096):
    """x: [N, d_in] float32. Returns [N, 1] (or [N, d_last] if lastlayer=False)."""
    N, d_in = x.shape
    hidden_dims = meta["hidden_dims"]
    d_in_pad = meta["d_in_pad"]
    lastlayer = meta["lastlayer"]
    assert d_in == meta["d_in"]

    # --- tile sizing -------------------------------------------------------
    # Large lane tiles amortize the ~0.35us per-grid-step pipeline overhead;
    # at tile_n=4096 the whole working set is a few MiB (fits default scoped
    # VMEM on v5e/v6e/v7x).  Also keep >=2 grid steps when possible so the
    # "parallel" axis can be split across both v7x TensorCores.
    n128 = _round_up(max(N, 1), 128)
    tile_n = max(128, (min(int(tile_n), n128) // 128) * 128)
    if _round_up(N, tile_n) // tile_n < 2 and tile_n >= 256:
        tile_n = max(128, (tile_n // 2 // 128) * 128)
    n_pad = _round_up(N, tile_n)
    num_tiles = n_pad // tile_n

    # Feature-major padded input [d_in_pad, n_pad]: a single fused pad of x.T
    # (no zeros().at[].set() scatter, no extra HBM round-trip).
    x_t = jnp.pad(jnp.asarray(x, jnp.float32).T,
                  ((0, d_in_pad - d_in), (0, n_pad - N)))

    in_specs = [pl.BlockSpec((d_in_pad, tile_n), lambda i: (0, i))]
    for w in w_cats:
        in_specs.append(pl.BlockSpec(w.shape, lambda i: (0, 0)))
    in_specs.append(pl.BlockSpec(c_all.shape, lambda i: (0, 0)))

    d_out_final = 1 if lastlayer else hidden_dims[-1]

    # Advisory cost hint for the XLA scheduler.
    flops, transc = 0, 0
    k = d_in_pad
    for d_out in hidden_dims:
        flops += 2 * (2 * d_out) * k * n_pad + 3 * d_out * n_pad
        transc += d_out * n_pad
        k = d_out
    bytes_accessed = 4 * (int(x_t.size) + n_pad * d_out_final
                          + sum(int(w.size) for w in w_cats) + int(c_all.size))
    cost = pl.CostEstimate(flops=int(flops), transcendentals=int(transc),
                           bytes_accessed=int(bytes_accessed))

    kernel = _make_fused_kernel(hidden_dims, meta["offsets"], meta["b_off"], lastlayer)
    out_fm = pl.pallas_call(
        kernel,
        out_shape=jax.ShapeDtypeStruct((d_out_final, n_pad), jnp.float32),
        grid_spec=pltpu.PrefetchScalarGridSpec(
            num_scalar_prefetch=0,
            grid=(num_tiles,),
            in_specs=in_specs,
            out_specs=pl.BlockSpec((d_out_final, tile_n), lambda i: (0, i)),
        ),
        compiler_params=pltpu.CompilerParams(dimension_semantics=("parallel",)),
        cost_estimate=cost,
    )(x_t, *w_cats, c_all)

    # Back to point-major, drop padded tail points.
    return out_fm[:, :N].T


# ---------------------------------------------------------------------------
# Parameter init (mirrors the PyTorch module's shapes / init ranges) + reference
# ---------------------------------------------------------------------------
def init_siren_params(key, dims, omega0=30.0):
    params = []
    for i in range(len(dims) - 1):
        d_in, d_out = dims[i], dims[i + 1]
        key, k1, k2, k3, k4, k5 = jax.random.split(key, 6)
        wbound = jnp.sqrt(6.0 / d_in) / omega0              # is_first=False in this SIREN
        params.append(dict(
            w_lin=jax.random.uniform(k1, (d_out, d_in), jnp.float32, -wbound, wbound),
            b_lin=jax.random.uniform(k2, (d_out,), jnp.float32,
                                     -1.0 / jnp.sqrt(d_in), 1.0 / jnp.sqrt(d_in)),
            w_dyn=jax.random.uniform(k3, (d_out, d_in), jnp.float32,
                                     -1.0 / d_in, 1.0 / d_in),
            scale_w=jax.random.uniform(k4, (d_out, 1), jnp.float32, 0.99, 1.0),
            phase_w=jax.random.uniform(k5, (d_out, 1), jnp.float32, -1.0, 1.0),
        ))
    key, k1, k2 = jax.random.split(key, 3)
    last = dict(
        w_last=jax.random.uniform(k1, (1, dims[-1]), jnp.float32, -1.0, 1.0),
        b_last=jax.random.uniform(k2, (1,), jnp.float32,
                                  -1.0 / jnp.sqrt(dims[-1]), 1.0 / jnp.sqrt(dims[-1])),
    )
    return params, last


def siren_reference(x, layer_params, last_params, *, omega0=30.0, lastlayer=True):
    """Pure-JAX reference matching the PyTorch forward exactly (no folding)."""
    hp = jax.lax.Precision.HIGHEST
    for p in layer_params:
        lin = jnp.dot(x, p["w_lin"].T, precision=hp) + p["b_lin"]
        scl = jnp.dot(x, p["w_dyn"].T, precision=hp) + p["scale_w"][:, 0]
        x = scl * jnp.sin(omega0 * lin + p["phase_w"][:, 0])
    if lastlayer:
        x = jnp.dot(x, last_params["w_last"].T, precision=hp) + last_params["b_last"]
    return x


# ---------------------------------------------------------------------------
if __name__ == "__main__":
    dims = [4, 32, 32]      # SIREN(dims): SineLayer(4->32), SineLayer(32->32), last 32->1
    N = 2000                # deliberately NOT a multiple of the tile (exercises padding)
    omega0 = 30.0

    key = jax.random.PRNGKey(0)
    key, kx = jax.random.split(key)
    x = jax.random.uniform(kx, (N, dims[0]), jnp.float32, -1.0, 1.0)

    layer_params, last_params = init_siren_params(key, dims, omega0=omega0)
    w_cats, c_all, meta = prepare_siren_params(layer_params, last_params,
                                               omega0=omega0, lastlayer=True)

    out = siren_forward_fused(x, w_cats, c_all, meta, tile_n=4096)
    out = jax.block_until_ready(out)

    ref = siren_reference(x, layer_params, last_params, omega0=omega0, lastlayer=True)
    assert out.shape == (N, 1)
    max_err = float(jnp.max(jnp.abs(out - ref)))
    assert max_err < 1e-3, f"mismatch vs pure-JAX reference, max abs err = {max_err}"

    print("KERNEL_OK")
</pallas_src>

<mosaic_0001>
module attributes {stable_mosaic.version = 11 : i64} {
  func.func @kernel(%arg0: i32, %arg1: memref<8x1024xf32, #tpu.memory_space<vmem>>, %arg2: memref<64x8xf32, #tpu.memory_space<vmem>>, %arg3: memref<64x32xf32, #tpu.memory_space<vmem>>, %arg4: memref<136x1xf32, #tpu.memory_space<vmem>>, %arg5: memref<1x1024xf32, #tpu.memory_space<vmem>>) attributes {dimension_semantics = [#tpu.dimension_semantics<parallel>], iteration_bounds = array<i64: 2>, scalar_prefetch = 0 : i64, scratch_operands = 0 : i64, tpu.core_type = #tpu.core_type<tc>, window_params = [{transform_indices = @transform_0, window_bounds = array<i64: 8, 1024>}, {pipeline_mode = #tpu.pipeline_mode<synchronous>, transform_indices = @transform_1, window_bounds = array<i64: 64, 8>}, {pipeline_mode = #tpu.pipeline_mode<synchronous>, transform_indices = @transform_2, window_bounds = array<i64: 64, 32>}, {pipeline_mode = #tpu.pipeline_mode<synchronous>, transform_indices = @transform_3, window_bounds = array<i64: 136, 1>}, {transform_indices = @transform_4, window_bounds = array<i64: 1, 1024>}]} {
    %c0 = arith.constant 0 : index
    %c0_0 = arith.constant 0 : index
    %0 = vector.load %arg4[%c0, %c0_0] : memref<136x1xf32, #tpu.memory_space<vmem>>, vector<136x1xf32>
    %c0_1 = arith.constant 0 : index
    %c0_2 = arith.constant 0 : index
    %1 = vector.load %arg1[%c0_1, %c0_2] : memref<8x1024xf32, #tpu.memory_space<vmem>>, vector<8x1024xf32>
    %c0_3 = arith.constant 0 : index
    %c0_4 = arith.constant 0 : index
    %2 = vector.load %arg2[%c0_3, %c0_4] : memref<64x8xf32, #tpu.memory_space<vmem>>, vector<64x8xf32>
    %3 = vector.extract_strided_slice %0 {offsets = [0, 0], sizes = [64, 1], strides = [1, 1]} : vector<136x1xf32> to vector<64x1xf32>
    %cst = arith.constant dense<0.000000e+00> : vector<64x1024xf32>
    %4 = tpu.matmul %2, %1, %cst {dimension_numbers = #tpu.dot_dimension_numbers<[1], [0], [0], [1], [0, 0, 1, 1], [], []>} : vector<64x8xf32>, vector<8x1024xf32>, vector<64x1024xf32> -> vector<64x1024xf32>
    %5 = vector.broadcast %3 : vector<64x1xf32> to vector<64x1024xf32>
    %6 = arith.addf %4, %5 : vector<64x1024xf32>
    %7 = vector.extract_strided_slice %6 {offsets = [32, 0], sizes = [32, 1024], strides = [1, 1]} : vector<64x1024xf32> to vector<32x1024xf32>
    %8 = vector.extract_strided_slice %6 {offsets = [0, 0], sizes = [32, 1024], strides = [1, 1]} : vector<64x1024xf32> to vector<32x1024xf32>
    %9 = math.sin %8 : vector<32x1024xf32>
    %10 = arith.mulf %7, %9 : vector<32x1024xf32>
    %c0_5 = arith.constant 0 : index
    %c0_6 = arith.constant 0 : index
    %11 = vector.load %arg3[%c0_5, %c0_6] : memref<64x32xf32, #tpu.memory_space<vmem>>, vector<64x32xf32>
    %12 = vector.extract_strided_slice %0 {offsets = [64, 0], sizes = [64, 1], strides = [1, 1]} : vector<136x1xf32> to vector<64x1xf32>
    %cst_7 = arith.constant dense<0.000000e+00> : vector<64x1024xf32>
    %13 = tpu.matmul %11, %10, %cst_7 {dimension_numbers = #tpu.dot_dimension_numbers<[1], [0], [0], [1], [0, 0, 1, 1], [], []>} : vector<64x32xf32>, vector<32x1024xf32>, vector<64x1024xf32> -> vector<64x1024xf32>
    %14 = vector.broadcast %12 : vector<64x1xf32> to vector<64x1024xf32>
    %15 = arith.addf %13, %14 : vector<64x1024xf32>
    %16 = vector.extract_strided_slice %15 {offsets = [32, 0], sizes = [32, 1024], strides = [1, 1]} : vector<64x1024xf32> to vector<32x1024xf32>
    %17 = vector.extract_strided_slice %15 {offsets = [0, 0], sizes = [32, 1024], strides = [1, 1]} : vector<64x1024xf32> to vector<32x1024xf32>
    %18 = math.sin %17 : vector<32x1024xf32>
    %19 = arith.mulf %16, %18 : vector<32x1024xf32>
    %20 = vector.extract_strided_slice %0 {offsets = [128, 0], sizes = [1, 1], strides = [1, 1]} : vector<136x1xf32> to vector<1x1xf32>
    %cst_8 = arith.constant dense<0.000000e+00> : vector<1024xf32>
    %21 = vector.multi_reduction <add>, %19, %cst_8 [0] : vector<32x1024xf32> to vector<1024xf32>
    %22 = vector.shape_cast %21 : vector<1024xf32> to vector<1x1024xf32>
    %23 = vector.broadcast %20 : vector<1x1xf32> to vector<1x1024xf32>
    %24 = arith.addf %22, %23 : vector<1x1024xf32>
    %c0_9 = arith.constant 0 : index
    %c0_10 = arith.constant 0 : index
    %25 = vector.load %arg5[%c0_9, %c0_10] : memref<1x1024xf32, #tpu.memory_space<vmem>>, vector<1x1024xf32>
    tpu.vector_store %arg5[%c0_9, %c0_10], %24 {strides = array<i32>} : memref<1x1024xf32, #tpu.memory_space<vmem>>, vector<1x1024xf32>,
    return
  }
  func.func @transform_0(%arg0: i32) -> (i32, i32) {
    %c0_i32 = arith.constant 0 : i32
    %c0_i32_0 = arith.constant 0 : i32
    return %c0_i32, %arg0 : i32, i32
  }
  func.func @transform_1(%arg0: i32) -> (i32, i32) {
    %c0_i32 = arith.constant 0 : i32
    %c0_i32_0 = arith.constant 0 : i32
    %c0_i32_1 = arith.constant 0 : i32
    return %c0_i32, %c0_i32_0 : i32, i32
  }
  func.func @transform_2(%arg0: i32) -> (i32, i32) {
    %c0_i32 = arith.constant 0 : i32
    %c0_i32_0 = arith.constant 0 : i32
    %c0_i32_1 = arith.constant 0 : i32
    return %c0_i32, %c0_i32_0 : i32, i32
  }
  func.func @transform_3(%arg0: i32) -> (i32, i32) {
    %c0_i32 = arith.constant 0 : i32
    %c0_i32_0 = arith.constant 0 : i32
    %c0_i32_1 = arith.constant 0 : i32
    return %c0_i32, %c0_i32_0 : i32, i32
  }
  func.func @transform_4(%arg0: i32) -> (i32, i32) {
    %c0_i32 = arith.constant 0 : i32
    %c0_i32_0 = arith.constant 0 : i32
    return %c0_i32, %arg0 : i32, i32
  }
}

</mosaic_0001>

<llo_original>
// kernel: tpu_custom_call.1
$region0: #{tpu_custom_call.1}
  #allocation0 [shape = 'u32[]', space=smem, size = 0x4, offset = 0x4, fixed_abs, tag = 'smem constant byte address 0x4 - core index']
  #allocation1 [shape = 'u32[72,128]{1,0:T(1,128)}', space=vmem, size = 0x9000, scoped, tag = 'internal scratch']
  %s0 = inlined_call_operand.vmem [shape: f32[8,2048], index: 0, kind: input, shape index: {}]
  %s1 = inlined_call_operand.vmem [shape: f32[64,8], index: 1, kind: input, shape index: {}]
  %s2 = inlined_call_operand.vmem [shape: f32[64,32], index: 2, kind: input, shape index: {}]
  %s3 = inlined_call_operand.vmem [shape: f32[136,1], index: 3, kind: input, shape index: {}]
  %s4 = inlined_call_operand.hbm [shape: f32[1,2048], index: 4, kind: output, shape index: {}]
  %s5 = sld [smem:[#allocation0]]
  $region49: #{tpu_custom_call.1} parent=0
    _
  %s7 = ssub.s32 1, %s5
  %s8 = scalar_select 0, %s7, %s5
  $region1: #{tpu_custom_call.1} parent=0
    #allocation2 [shape = 'u8[8192]{0}', space=vmem, size = 0x2000, scoped, tag = 'output window, operand 0']
    #allocation3 [shape = 's32[2]{0}', space=sflag, size = 0x8, scoped, tag = 'scoped memory for tpu_custom_call.1']
    %9 = vsyncpa [#allocation3], 0
    %s10 = scalar_lea.sflag [#allocation3], 1
    %11 = vsyncpa %s10, 0
    loop: start=0, step=1, limit=4
    $region2: #{tpu_custom_call.1} parent=1 // loop_pre_header
      _
    $region3: #{tpu_custom_call.1} parent=1 // loop_header
      %s13 = sphi 0, %s17
      %p14 = scmp.ge.s32.totalorder %s13, 4
      %s23 = sphi 0, %s25
      %s26 = sphi 0, %s23
      %s27 = sphi 0, %s26
      %s43 = sphi 0, %s27
      %s47 = sphi 0, %s47
      %s49 = sphi 0, %s47
      %s50 = sphi 0, %s49
      %s64 = sphi 0, %s50
      %s68 = sphi 0, %s68
      %s70 = sphi 0, %s68
      %s71 = sphi 0, %s70
      %s85 = sphi 0, %s71
      %s89 = sphi 0, %s89
      %s91 = sphi 0, %s89
      %s92 = sphi 0, %s91
      %s106 = sphi 0, %s92
      %s112 = sphi 0, %s114
      %s115 = sphi 0, %s112
      %s116 = sphi 0, %s115
      %s132 = sphi 0, %s116
    $region4: #{tpu_custom_call.1} parent=1 // loop_header_branch
      %16 = sbr.rel (%p14) target = $region8
    $region5: #{tpu_custom_call.1} parent=1 // loop_body
      %s18 = ssub.s32 %s13, 1
      %s19 = ssub.s32 %s13, 2
      %s20 = sadd.s32 %s13, 1
      %s21 = ssub.s32 %s13, %s20
      %p22 = scmp.eq.s32.totalorder %s21, 0
      %s24 = sadd.s32 %s23, 1
      %s25 = scalar_select %p22, %s23, %s24
      %p28 = pneg %p22
      %p29 = scmp.eq.s32.totalorder %s13, 1
      %p30 = por %p28, %p29
      %p31 = scmp.ne.s32.totalorder %s23, %s26
      %p32 = scmp.eq.s32.totalorder %s13, 0
      %p33 = por %p31, %p32
      %p34 = scmp.ne.s32.totalorder %s23, %s26
      %p35 = scmp.eq.s32.totalorder %s18, 1
      %p36 = por %p34, %p35
      %p37 = scmp.ne.s32.totalorder %s26, %s27
      %p38 = scmp.eq.s32.totalorder %s18, 0
      %p39 = por %p37, %p38
      %p40 = scmp.ne.s32.totalorder %s26, %s27
      %p41 = scmp.eq.s32.totalorder %s19, 1
      %p42 = por %p40, %p41
      %p44 = scmp.ne.s32.totalorder %s27, %s43
      %p45 = scmp.eq.s32.totalorder %s19, 0
      %p46 = por %p44, %p45
      %s48 = sadd.s32 %s47, 1
      %p51 = scmp.eq.s32.totalorder %s13, 1
      %p52 = scmp.ne.s32.totalorder %s47, %s49
      %p53 = scmp.eq.s32.totalorder %s13, 0
      %p54 = por %p52, %p53
      %p55 = scmp.ne.s32.totalorder %s47, %s49
      %p56 = scmp.eq.s32.totalorder %s18, 1
      %p57 = por %p55, %p56
      %p58 = scmp.ne.s32.totalorder %s49, %s50
      %p59 = scmp.eq.s32.totalorder %s18, 0
      %p60 = por %p58, %p59
      %p61 = scmp.ne.s32.totalorder %s49, %s50
      %p62 = scmp.eq.s32.totalorder %s19, 1
      %p63 = por %p61, %p62
      %p65 = scmp.ne.s32.totalorder %s50, %s64
      %p66 = scmp.eq.s32.totalorder %s19, 0
      %p67 = por %p65, %p66
      %s69 = sadd.s32 %s68, 1
      %p72 = scmp.eq.s32.totalorder %s13, 1
      %p73 = scmp.ne.s32.totalorder %s68, %s70
      %p74 = scmp.eq.s32.totalorder %s13, 0
      %p75 = por %p73, %p74
      %p76 = scmp.ne.s32.totalorder %s68, %s70
      %p77 = scmp.eq.s32.totalorder %s18, 1
      %p78 = por %p76, %p77
      %p79 = scmp.ne.s32.totalorder %s70, %s71
      %p80 = scmp.eq.s32.totalorder %s18, 0
      %p81 = por %p79, %p80
      %p82 = scmp.ne.s32.totalorder %s70, %s71
      %p83 = scmp.eq.s32.totalorder %s19, 1
      %p84 = por %p82, %p83
      %p86 = scmp.ne.s32.totalorder %s71, %s85
      %p87 = scmp.eq.s32.totalorder %s19, 0
      %p88 = por %p86, %p87
      %s90 = sadd.s32 %s89, 1
      %p93 = scmp.eq.s32.totalorder %s13, 1
      %p94 = scmp.ne.s32.totalorder %s89, %s91
      %p95 = scmp.eq.s32.totalorder %s13, 0
      %p96 = por %p94, %p95
      %p97 = scmp.ne.s32.totalorder %s89, %s91
      %p98 = scmp.eq.s32.totalorder %s18, 1
      %p99 = por %p97, %p98
      %p100 = scmp.ne.s32.totalorder %s91, %s92
      %p101 = scmp.eq.s32.totalorder %s18, 0
      %p102 = por %p100, %p101
      %p103 = scmp.ne.s32.totalorder %s91, %s92
      %p104 = scmp.eq.s32.totalorder %s19, 1
      %p105 = por %p103, %p104
      %p107 = scmp.ne.s32.totalorder %s92, %s106
      %p108 = scmp.eq.s32.totalorder %s19, 0
      %p109 = por %p107, %p108
      %s110 = ssub.s32 %s13, %s20
      %p111 = scmp.eq.s32.totalorder %s110, 0
      %s113 = sadd.s32 %s112, 1
      %s114 = scalar_select %p111, %s112, %s113
      %p117 = pneg %p111
      %p118 = scmp.eq.s32.totalorder %s13, 1
      %p119 = por %p117, %p118
      %p120 = scmp.ne.s32.totalorder %s112, %s115
      %p121 = scmp.eq.s32.totalorder %s13, 0
      %p122 = por %p120, %p121
      %p123 = scmp.ne.s32.totalorder %s112, %s115
      %p124 = scmp.eq.s32.totalorder %s18, 1
      %p125 = por %p123, %p124
      %p126 = scmp.ne.s32.totalorder %s115, %s116
      %p127 = scmp.eq.s32.totalorder %s18, 0
      %p128 = por %p126, %p127
      %p129 = scmp.ne.s32.totalorder %s115, %s116
      %p130 = scmp.eq.s32.totalorder %s19, 1
      %p131 = por %p129, %p130
      %p133 = scmp.ne.s32.totalorder %s116, %s132
      %p134 = scmp.eq.s32.totalorder %s19, 0
      %p135 = por %p133, %p134
      %p136 = scmp.le.s32.totalorder 1, %s13
      %p137 = scmp.lt.s32.totalorder %s13, 3
      %p138 = pnand %p136, %p137
      %p139 = pneg %p138
      // Predicated region
      $region9: #{tpu_custom_call.1} parent=5 // pred_check
        _
      $region10: #{tpu_custom_call.1} parent=5 // pred_check_branch
        %141 = sbr.rel (%p138) target = $region12
      $region11: #{tpu_custom_call.1} parent=5 // pred_region
        %s142 = ssub.s32 %s13, 1
        // Predicated region
        $region13: #{tpu_custom_call.1} parent=11 // pred_check
          %p143 = pneg %p60
        $region14: #{tpu_custom_call.1} parent=11 // pred_check_branch
          %145 = sbr.rel (%p143) target = $region16
        $region15: #{tpu_custom_call.1} parent=11 // pred_region
          _
        $region16: #{tpu_custom_call.1} parent=11 // pred_fallthru
          _
        // Predicated region
        $region17: #{tpu_custom_call.1} parent=11 // pred_check
          %p146 = pneg %p81
        $region18: #{tpu_custom_call.1} parent=11 // pred_check_branch
          %148 = sbr.rel (%p146) target = $region20
        $region19: #{tpu_custom_call.1} parent=11 // pred_region
          _
        $region20: #{tpu_custom_call.1} parent=11 // pred_fallthru
          _
        // Predicated region
        $region21: #{tpu_custom_call.1} parent=11 // pred_check
          %p149 = pneg %p102
        $region22: #{tpu_custom_call.1} parent=11 // pred_check_branch
          %151 = sbr.rel (%p149) target = $region24
        $region23: #{tpu_custom_call.1} parent=11 // pred_region
          _
        $region24: #{tpu_custom_call.1} parent=11 // pred_fallthru
          _
      $region12: #{tpu_custom_call.1} parent=5 // pred_fallthru
        _
      %p152 = scmp.lt.s32.totalorder %s13, 2
      // Predicated region
      $region25: #{tpu_custom_call.1} parent=5 // pred_check
        %p153 = pneg %p152
      $region26: #{tpu_custom_call.1} parent=5 // pred_check_branch
        %155 = sbr.rel (%p153) target = $region28
      $region27: #{tpu_custom_call.1} parent=5 // pred_region
        // Predicated region
        $region29: #{tpu_custom_call.1} parent=27 // pred_check
          %p156 = pneg %p33
        $region30: #{tpu_custom_call.1} parent=27 // pred_check_branch
          %158 = sbr.rel (%p156) target = $region32
        $region31: #{tpu_custom_call.1} parent=27 // pred_region
          %s159 = smul.u32 8, %s13
          %p160 = scmp.lt.s32.totalorder %s159, 15
          %s161 = scalar_select %p160, %s159, 15
          %s162 = smul.addr %s161, 8
          %s163 = scalar_lea.vmem %s0, %s162
          %s164 = smul.u32 8, %s13
        $region32: #{tpu_custom_call.1} parent=27 // pred_fallthru
          _
      $region28: #{tpu_custom_call.1} parent=5 // pred_fallthru
        _
      %p165 = scmp.le.s32.totalorder 1, %s13
      %p166 = scmp.lt.s32.totalorder %s13, 3
      %p167 = pnand %p165, %p166
      %p168 = pneg %p167
      // Predicated region
      $region33: #{tpu_custom_call.1} parent=5 // pred_check
        _
      $region34: #{tpu_custom_call.1} parent=5 // pred_check_branch
        %170 = sbr.rel (%p167) target = $region36
      $region35: #{tpu_custom_call.1} parent=5 // pred_region
        %s171 = ssub.s32 %s13, 1
        %s172 = smul.u32 8, %s18
        %p173 = scmp.lt.s32.totalorder %s172, 15
        %s174 = scalar_select %p173, %s172, 15
        %s175 = smul.addr %s174, 8
        %s176 = scalar_lea.vmem %s0, %s175
        %p177 = pneg %p39
        %p178 = pneg %p36
        %p179 = pneg %p60
        %p180 = pneg %p57
        %p181 = pneg %p81
        %p182 = pneg %p78
        %p183 = pneg %p102
        %p184 = pneg %p99
        %p185 = pneg %p128
        %p186 = pneg %p125
        %s187 = sand.u32 %s115, 1
        %s188 = scalar_lea.sflag [#allocation3], %s187
        %s189 = sand.u32 %s115, 1
        %s190 = smul.addr %s189, 8
        %s191 = scalar_lea.vmem [#allocation2], %s190
        %s192 = smul.u32 8, %s18
        %p193 = scmp.lt.s32.totalorder %s192, 15
        %s194 = scalar_select %p193, %s192, 15
        %s195 = smul.addr %s194, 8
        %s196 = scalar_lea.vmem %s0, %s195
        %s197 = smul.u32 8, %s18
        %s198 = smul.u32 8, %s18
        %v199 = vld [vmem:[%s3] sm:$0xff]
        %v200 = vld [vmem:[%s3 + $0x8] sm:$0xff]
        %v201 = vld [vmem:[%s3 + $0x10] sm:$0xff]
        %v202 = vld [vmem:[%s3 + $0x18] sm:$0xff]
        %v203 = vld [vmem:[%s3 + $0x20] sm:$0xff]
        %v204 = vld [vmem:[%s3 + $0x28] sm:$0xff]
        %v205 = vld [vmem:[%s3 + $0x30] sm:$0xff]
        %v206 = vld [vmem:[%s3 + $0x38] sm:$0xff]
        %v207 = vld [vmem:[%s3 + $0x40] sm:$0xff]
        %v208 = vld [vmem:[%s3 + $0x48] sm:$0xff]
        %v209 = vld [vmem:[%s3 + $0x50] sm:$0xff]
        %v210 = vld [vmem:[%s3 + $0x58] sm:$0xff]
        %v211 = vld [vmem:[%s3 + $0x60] sm:$0xff]
        %v212 = vld [vmem:[%s3 + $0x68] sm:$0xff]
        %v213 = vld [vmem:[%s3 + $0x70] sm:$0xff]
        %v214 = vld [vmem:[%s3 + $0x78] sm:$0xff]
        %v215 = vld [vmem:[%s3 + $0x80] sm:$0xff]
        %v216 = vld [vmem:[%s196] sm:$0xff]
        %v217 = vld [vmem:[%s196 + $0x8] sm:$0xff]
        %v218 = vld [vmem:[%s196 + $0x10] sm:$0xff]
        %v219 = vld [vmem:[%s196 + $0x18] sm:$0xff]
        %v220 = vld [vmem:[%s196 + $0x20] sm:$0xff]
        %v221 = vld [vmem:[%s196 + $0x28] sm:$0xff]
        %v222 = vld [vmem:[%s196 + $0x30] sm:$0xff]
        %v223 = vld [vmem:[%s196 + $0x38] sm:$0xff]
        %v224 = vld [vmem:[%s1] sm:$0xff]
        %v225 = vld [vmem:[%s1 + $0x8] sm:$0xff]
        %v226 = vld [vmem:[%s1 + $0x10] sm:$0xff]
        %v227 = vld [vmem:[%s1 + $0x18] sm:$0xff]
        %v228 = vld [vmem:[%s1 + $0x20] sm:$0xff]
        %v229 = vld [vmem:[%s1 + $0x28] sm:$0xff]
        %v230 = vld [vmem:[%s1 + $0x30] sm:$0xff]
        %v231 = vld [vmem:[%s1 + $0x38] sm:$0xff]
        %233 = vset.pattern.permute.xlu0 0
        %234 = vperm.xlu0 %233, %v199
        %v235 = vpop.permute.xlu0 %234
        %238 = vset.pattern.permute.xlu0 0
        %239 = vperm.xlu0 %238, %v200
        %v240 = vpop.permute.xlu0 %239
        %243 = vset.pattern.permute.xlu0 0
        %244 = vperm.xlu0 %243, %v201
        %v245 = vpop.permute.xlu0 %244
        %248 = vset.pattern.permute.xlu0 0
        %249 = vperm.xlu0 %248, %v202
        %v250 = vpop.permute.xlu0 %249
        %253 = vset.pattern.permute.xlu0 0
        %254 = vperm.xlu0 %253, %v203
        %v255 = vpop.permute.xlu0 %254
        %258 = vset.pattern.permute.xlu0 0
        %259 = vperm.xlu0 %258, %v204
        %v260 = vpop.permute.xlu0 %259
        %263 = vset.pattern.permute.xlu0 0
        %264 = vperm.xlu0 %263, %v205
        %v265 = vpop.permute.xlu0 %264
        %268 = vset.pattern.permute.xlu0 0
        %269 = vperm.xlu0 %268, %v206
        %v270 = vpop.permute.xlu0 %269
        %vm272 = vcmask 64512
        %v274 = vsel %vm272, %v224, 0
        %v277 = vsel %vm272, %v225, 0
        %v280 = vsel %vm272, %v226, 0
        %v283 = vsel %vm272, %v227, 0
        %v286 = vsel %vm272, %v228, 0
        %v289 = vsel %vm272, %v229, 0
        %v292 = vsel %vm272, %v230, 0
        %v295 = vsel %vm272, %v231, 0
        %297 = vmatpush.msra.mxu0 0.0
        %298 = vmatpush.msra.mxu0 0.0
        %299 = vmatpush.msra.mxu0 0.0
        %300 = vmatpush.msra.mxu0 0.0
        %301 = vmatpush.msra.mxu0 0.0
        %302 = vmatpush.msra.mxu0 0.0
        %303 = vmatpush.msra.mxu0 0.0
        %304 = vmatpush.msra.mxu0 0.0
        %305 = vmatpush.msra.mxu0 0.0
        %306 = vmatpush.msra.mxu0 0.0
        %307 = vmatpush.msra.mxu0 0.0
        %308 = vmatpush.msra.mxu0 0.0
        %309 = vmatpush.msra.mxu0 0.0
        %310 = vmatpush.msra.mxu0 0.0
        %311 = vmatpush.msra.mxu0 0.0
        %312 = vmatpush.msra.mxu0 %v216
        %313 = vmatmul.f32.gmra.mxu0 %v274
        %v314 = vpop.f32.mrf.mxu0
        %v315 = vadd.f32 %v235, %v314
        %316 = vmatmul.f32.gmra.mxu0 %v277
        %v317 = vpop.f32.mrf.mxu0
        %v318 = vadd.f32 %v240, %v317
        %319 = vmatmul.f32.gmra.mxu0 %v280
        %v320 = vpop.f32.mrf.mxu0
        %v321 = vadd.f32 %v245, %v320
        %322 = vmatmul.f32.gmra.mxu0 %v283
        %v323 = vpop.f32.mrf.mxu0
        %v324 = vadd.f32 %v250, %v323
        %325 = vmatmul.f32.gmra.mxu0 %v286
        %v326 = vpop.f32.mrf.mxu0
        %v327 = vadd.f32 %v255, %v326
        %328 = vmatmul.f32.gmra.mxu0 %v289
        %v329 = vpop.f32.mrf.mxu0
        %v330 = vadd.f32 %v260, %v329
        %331 = vmatmul.f32.gmra.mxu0 %v292
        %v332 = vpop.f32.mrf.mxu0
        %v333 = vadd.f32 %v265, %v332
        %334 = vmatmul.f32.gmra.mxu0 %v295
        %v335 = vpop.f32.mrf.mxu0
        %v336 = vadd.f32 %v270, %v335
        %337 = vdwg.mxu0
        %338 = vmatpush.msra.mxu0 0.0
        %339 = vmatpush.msra.mxu0 0.0
        %340 = vmatpush.msra.mxu0 0.0
        %341 = vmatpush.msra.mxu0 0.0
        %342 = vmatpush.msra.mxu0 0.0
        %343 = vmatpush.msra.mxu0 0.0
        %344 = vmatpush.msra.mxu0 0.0
        %345 = vmatpush.msra.mxu0 0.0
        %346 = vmatpush.msra.mxu0 0.0
        %347 = vmatpush.msra.mxu0 0.0
        %348 = vmatpush.msra.mxu0 0.0
        %349 = vmatpush.msra.mxu0 0.0
        %350 = vmatpush.msra.mxu0 0.0
        %351 = vmatpush.msra.mxu0 0.0
        %352 = vmatpush.msra.mxu0 0.0
        %353 = vmatpush.msra.mxu0 %v217
        %354 = vmatmul.f32.gmra.mxu0 %v274
        %v355 = vpop.f32.mrf.mxu0
        %v356 = vadd.f32 %v235, %v355
        %357 = vmatmul.f32.gmra.mxu0 %v277
        %v358 = vpop.f32.mrf.mxu0
        %v359 = vadd.f32 %v240, %v358
        %360 = vmatmul.f32.gmra.mxu0 %v280
        %v361 = vpop.f32.mrf.mxu0
        %v362 = vadd.f32 %v245, %v361
        %363 = vmatmul.f32.gmra.mxu0 %v283
        %v364 = vpop.f32.mrf.mxu0
        %v365 = vadd.f32 %v250, %v364
        %366 = vmatmul.f32.gmra.mxu0 %v286
        %v367 = vpop.f32.mrf.mxu0
        %v368 = vadd.f32 %v255, %v367
        %369 = vmatmul.f32.gmra.mxu0 %v289
        %v370 = vpop.f32.mrf.mxu0
        %v371 = vadd.f32 %v260, %v370
        %372 = vmatmul.f32.gmra.mxu0 %v292
        %v373 = vpop.f32.mrf.mxu0
        %v374 = vadd.f32 %v265, %v373
        %375 = vmatmul.f32.gmra.mxu0 %v295
        %v376 = vpop.f32.mrf.mxu0
        %v377 = vadd.f32 %v270, %v376
        %378 = vdwg.mxu0
        %379 = vmatpush.msra.mxu0 0.0
        %380 = vmatpush.msra.mxu0 0.0
        %381 = vmatpush.msra.mxu0 0.0
        %382 = vmatpush.msra.mxu0 0.0
        %383 = vmatpush.msra.mxu0 0.0
        %384 = vmatpush.msra.mxu0 0.0
        %385 = vmatpush.msra.mxu0 0.0
        %386 = vmatpush.msra.mxu0 0.0
        %387 = vmatpush.msra.mxu0 0.0
        %388 = vmatpush.msra.mxu0 0.0
        %389 = vmatpush.msra.mxu0 0.0
        %390 = vmatpush.msra.mxu0 0.0
        %391 = vmatpush.msra.mxu0 0.0
        %392 = vmatpush.msra.mxu0 0.0
        %393 = vmatpush.msra.mxu0 0.0
        %394 = vmatpush.msra.mxu0 %v218
        %395 = vmatmul.f32.gmra.mxu0 %v274
        %v396 = vpop.f32.mrf.mxu0
        %v397 = vadd.f32 %v235, %v396
        %398 = vmatmul.f32.gmra.mxu0 %v277
        %v399 = vpop.f32.mrf.mxu0
        %v400 = vadd.f32 %v240, %v399
        %401 = vmatmul.f32.gmra.mxu0 %v280
        %v402 = vpop.f32.mrf.mxu0
        %v403 = vadd.f32 %v245, %v402
        %404 = vmatmul.f32.gmra.mxu0 %v283
        %v405 = vpop.f32.mrf.mxu0
        %v406 = vadd.f32 %v250, %v405
        %407 = vmatmul.f32.gmra.mxu0 %v286
        %v408 = vpop.f32.mrf.mxu0
        %v409 = vadd.f32 %v255, %v408
        %410 = vmatmul.f32.gmra.mxu0 %v289
        %v411 = vpop.f32.mrf.mxu0
        %v412 = vadd.f32 %v260, %v411
        %413 = vmatmul.f32.gmra.mxu0 %v292
        %v414 = vpop.f32.mrf.mxu0
        %v415 = vadd.f32 %v265, %v414
        %416 = vmatmul.f32.gmra.mxu0 %v295
        %v417 = vpop.f32.mrf.mxu0
        %v418 = vadd.f32 %v270, %v417
        %419 = vdwg.mxu0
        %420 = vmatpush.msra.mxu0 0.0
        %421 = vmatpush.msra.mxu0 0.0
        %422 = vmatpush.msra.mxu0 0.0
        %423 = vmatpush.msra.mxu0 0.0
        %424 = vmatpush.msra.mxu0 0.0
        %425 = vmatpush.msra.mxu0 0.0
        %426 = vmatpush.msra.mxu0 0.0
        %427 = vmatpush.msra.mxu0 0.0
        %428 = vmatpush.msra.mxu0 0.0
        %429 = vmatpush.msra.mxu0 0.0
        %430 = vmatpush.msra.mxu0 0.0
        %431 = vmatpush.msra.mxu0 0.0
        %432 = vmatpush.msra.mxu0 0.0
        %433 = vmatpush.msra.mxu0 0.0
        %434 = vmatpush.msra.mxu0 0.0
        %435 = vmatpush.msra.mxu0 %v219
        %436 = vmatmul.f32.gmra.mxu0 %v274
        %v437 = vpop.f32.mrf.mxu0
        %v438 = vadd.f32 %v235, %v437
        %439 = vmatmul.f32.gmra.mxu0 %v277
        %v440 = vpop.f32.mrf.mxu0
        %v441 = vadd.f32 %v240, %v440
        %442 = vmatmul.f32.gmra.mxu0 %v280
        %v443 = vpop.f32.mrf.mxu0
        %v444 = vadd.f32 %v245, %v443
        %445 = vmatmul.f32.gmra.mxu0 %v283
        %v446 = vpop.f32.mrf.mxu0
        %v447 = vadd.f32 %v250, %v446
        %448 = vmatmul.f32.gmra.mxu0 %v286
        %v449 = vpop.f32.mrf.mxu0
        %v450 = vadd.f32 %v255, %v449
        %451 = vmatmul.f32.gmra.mxu0 %v289
        %v452 = vpop.f32.mrf.mxu0
        %v453 = vadd.f32 %v260, %v452
        %454 = vmatmul.f32.gmra.mxu0 %v292
        %v455 = vpop.f32.mrf.mxu0
        %v456 = vadd.f32 %v265, %v455
        %457 = vmatmul.f32.gmra.mxu0 %v295
        %v458 = vpop.f32.mrf.mxu0
        %v459 = vadd.f32 %v270, %v458
        %460 = vdwg.mxu0
        %461 = vmatpush.msra.mxu0 0.0
        %462 = vmatpush.msra.mxu0 0.0
        %463 = vmatpush.msra.mxu0 0.0
        %464 = vmatpush.msra.mxu0 0.0
        %465 = vmatpush.msra.mxu0 0.0
        %466 = vmatpush.msra.mxu0 0.0
        %467 = vmatpush.msra.mxu0 0.0
        %468 = vmatpush.msra.mxu0 0.0
        %469 = vmatpush.msra.mxu0 0.0
        %470 = vmatpush.msra.mxu0 0.0
        %471 = vmatpush.msra.mxu0 0.0
        %472 = vmatpush.msra.mxu0 0.0
        %473 = vmatpush.msra.mxu0 0.0
        %474 = vmatpush.msra.mxu0 0.0
        %475 = vmatpush.msra.mxu0 0.0
        %476 = vmatpush.msra.mxu0 %v220
        %477 = vmatmul.f32.gmra.mxu0 %v274
        %v478 = vpop.f32.mrf.mxu0
        %v479 = vadd.f32 %v235, %v478
        %480 = vmatmul.f32.gmra.mxu0 %v277
        %v481 = vpop.f32.mrf.mxu0
        %v482 = vadd.f32 %v240, %v481
        %483 = vmatmul.f32.gmra.mxu0 %v280
        %v484 = vpop.f32.mrf.mxu0
        %v485 = vadd.f32 %v245, %v484
        %486 = vmatmul.f32.gmra.mxu0 %v283
        %v487 = vpop.f32.mrf.mxu0
        %v488 = vadd.f32 %v250, %v487
        %489 = vmatmul.f32.gmra.mxu0 %v286
        %v490 = vpop.f32.mrf.mxu0
        %v491 = vadd.f32 %v255, %v490
        %492 = vmatmul.f32.gmra.mxu0 %v289
        %v493 = vpop.f32.mrf.mxu0
        %v494 = vadd.f32 %v260, %v493
        %495 = vmatmul.f32.gmra.mxu0 %v292
        %v496 = vpop.f32.mrf.mxu0
        %v497 = vadd.f32 %v265, %v496
        %498 = vmatmul.f32.gmra.mxu0 %v295
        %v499 = vpop.f32.mrf.mxu0
        %v500 = vadd.f32 %v270, %v499
        %501 = vdwg.mxu0
        %502 = vmatpush.msra.mxu0 0.0
        %503 = vmatpush.msra.mxu0 0.0
        %504 = vmatpush.msra.mxu0 0.0
        %505 = vmatpush.msra.mxu0 0.0
        %506 = vmatpush.msra.mxu0 0.0
        %507 = vmatpush.msra.mxu0 0.0
        %508 = vmatpush.msra.mxu0 0.0
        %509 = vmatpush.msra.mxu0 0.0
        %510 = vmatpush.msra.mxu0 0.0
        %511 = vmatpush.msra.mxu0 0.0
        %512 = vmatpush.msra.mxu0 0.0
        %513 = vmatpush.msra.mxu0 0.0
        %514 = vmatpush.msra.mxu0 0.0
        %515 = vmatpush.msra.mxu0 0.0
        %516 = vmatpush.msra.mxu0 0.0
        %517 = vmatpush.msra.mxu0 %v221
        %518 = vmatmul.f32.gmra.mxu0 %v274
        %v519 = vpop.f32.mrf.mxu0
        %v520 = vadd.f32 %v235, %v519
        %521 = vmatmul.f32.gmra.mxu0 %v277
        %v522 = vpop.f32.mrf.mxu0
        %v523 = vadd.f32 %v240, %v522
        %524 = vmatmul.f32.gmra.mxu0 %v280
        %v525 = vpop.f32.mrf.mxu0
        %v526 = vadd.f32 %v245, %v525
        %527 = vmatmul.f32.gmra.mxu0 %v283
        %v528 = vpop.f32.mrf.mxu0
        %v529 = vadd.f32 %v250, %v528
        %530 = vmatmul.f32.gmra.mxu0 %v286
        %v531 = vpop.f32.mrf.mxu0
        %v532 = vadd.f32 %v255, %v531
        %533 = vmatmul.f32.gmra.mxu0 %v289
        %v534 = vpop.f32.mrf.mxu0
        %v535 = vadd.f32 %v260, %v534
        %536 = vmatmul.f32.gmra.mxu0 %v292
        %v537 = vpop.f32.mrf.mxu0
        %v538 = vadd.f32 %v265, %v537
        %539 = vmatmul.f32.gmra.mxu0 %v295
        %v540 = vpop.f32.mrf.mxu0
        %v541 = vadd.f32 %v270, %v540
        %542 = vdwg.mxu0
        %543 = vmatpush.msra.mxu0 0.0
        %544 = vmatpush.msra.mxu0 0.0
        %545 = vmatpush.msra.mxu0 0.0
        %546 = vmatpush.msra.mxu0 0.0
        %547 = vmatpush.msra.mxu0 0.0
        %548 = vmatpush.msra.mxu0 0.0
        %549 = vmatpush.msra.mxu0 0.0
        %550 = vmatpush.msra.mxu0 0.0
        %551 = vmatpush.msra.mxu0 0.0
        %552 = vmatpush.msra.mxu0 0.0
        %553 = vmatpush.msra.mxu0 0.0
        %554 = vmatpush.msra.mxu0 0.0
        %555 = vmatpush.msra.mxu0 0.0
        %556 = vmatpush.msra.mxu0 0.0
        %557 = vmatpush.msra.mxu0 0.0
        %558 = vmatpush.msra.mxu0 %v222
        %559 = vmatmul.f32.gmra.mxu0 %v274
        %v560 = vpop.f32.mrf.mxu0
        %v561 = vadd.f32 %v235, %v560
        %562 = vmatmul.f32.gmra.mxu0 %v277
        %v563 = vpop.f32.mrf.mxu0
        %v564 = vadd.f32 %v240, %v563
        %565 = vmatmul.f32.gmra.mxu0 %v280
        %v566 = vpop.f32.mrf.mxu0
        %v567 = vadd.f32 %v245, %v566
        %568 = vmatmul.f32.gmra.mxu0 %v283
        %v569 = vpop.f32.mrf.mxu0
        %v570 = vadd.f32 %v250, %v569
        %571 = vmatmul.f32.gmra.mxu0 %v286
        %v572 = vpop.f32.mrf.mxu0
        %v573 = vadd.f32 %v255, %v572
        %574 = vmatmul.f32.gmra.mxu0 %v289
        %v575 = vpop.f32.mrf.mxu0
        %v576 = vadd.f32 %v260, %v575
        %577 = vmatmul.f32.gmra.mxu0 %v292
        %v578 = vpop.f32.mrf.mxu0
        %v579 = vadd.f32 %v265, %v578
        %580 = vmatmul.f32.gmra.mxu0 %v295
        %v581 = vpop.f32.mrf.mxu0
        %v582 = vadd.f32 %v270, %v581
        %583 = vdwg.mxu0
        %584 = vmatpush.msra.mxu0 0.0
        %585 = vmatpush.msra.mxu0 0.0
        %586 = vmatpush.msra.mxu0 0.0
        %587 = vmatpush.msra.mxu0 0.0
        %588 = vmatpush.msra.mxu0 0.0
        %589 = vmatpush.msra.mxu0 0.0
        %590 = vmatpush.msra.mxu0 0.0
        %591 = vmatpush.msra.mxu0 0.0
        %592 = vmatpush.msra.mxu0 0.0
        %593 = vmatpush.msra.mxu0 0.0
        %594 = vmatpush.msra.mxu0 0.0
        %595 = vmatpush.msra.mxu0 0.0
        %596 = vmatpush.msra.mxu0 0.0
        %597 = vmatpush.msra.mxu0 0.0
        %598 = vmatpush.msra.mxu0 0.0
        %599 = vmatpush.msra.mxu0 %v223
        %600 = vmatmul.f32.gmra.mxu0 %v274
        %v601 = vpop.f32.mrf.mxu0
        %v602 = vadd.f32 %v235, %v601
        %603 = vmatmul.f32.gmra.mxu0 %v277
        %v604 = vpop.f32.mrf.mxu0
        %v605 = vadd.f32 %v240, %v604
        %606 = vmatmul.f32.gmra.mxu0 %v280
        %v607 = vpop.f32.mrf.mxu0
        %v608 = vadd.f32 %v245, %v607
        %609 = vmatmul.f32.gmra.mxu0 %v283
        %v610 = vpop.f32.mrf.mxu0
        %v611 = vadd.f32 %v250, %v610
        %612 = vmatmul.f32.gmra.mxu0 %v286
        %v613 = vpop.f32.mrf.mxu0
        %v614 = vadd.f32 %v255, %v613
        %615 = vmatmul.f32.gmra.mxu0 %v289
        %v616 = vpop.f32.mrf.mxu0
        %v617 = vadd.f32 %v260, %v616
        %618 = vmatmul.f32.gmra.mxu0 %v292
        %v619 = vpop.f32.mrf.mxu0
        %v620 = vadd.f32 %v265, %v619
        %621 = vmatmul.f32.gmra.mxu0 %v295
        %v622 = vpop.f32.mrf.mxu0
        %v623 = vadd.f32 %v270, %v622
        %624 = vdwg.mxu0
        %v625 = vand.u32 2147483647, %v315
        %vm626 = vcmp.le.f32.partialorder %v625, 0.7853982
        %vm627 = vcmp.lt.s32.totalorder %v315, 0
        %v628 = vand.u32 %v315, 2139095040
        %v629 = vshrl.u32 %v628, 23
        %v630 = vsub.s32 %v629, 127
        %v631 = vand.u32 2147483647, %v315
        %v632 = vand.u32 %v631, 8388607
        %v633 = vor.u32 %v632, 8388608
        %v634 = vsub.s32 0, %v633
        %v635 = vadd.s32 %v630, 1
        %vm636 = vcmp.gt.s32.totalorder %v635, 0
        %v637 = vsel %vm636, %v635, 0
        %v638 = vshrl.u32 %v637, 5
        %v639 = vand.u32 %v637, 31
        %v640 = vsub.s32 32, %v639
        %v641 = vshrl.u32 683565275, %v640
        %v642 = vshll.u32 683565275, %v639
        %v643 = vshrl.u32 2475754826, %v640
        %v644 = vor.u32 %v642, %v643
        %v645 = vshll.u32 2475754826, %v639
        %v646 = vshrl.u32 2131351028, %v640
        %v647 = vor.u32 %v645, %v646
        %v648 = vshll.u32 2131351028, %v639
        %v649 = vshrl.u32 2102212464, %v640
        %v650 = vor.u32 %v648, %v649
        %v651 = vshll.u32 2102212464, %v639
        %v652 = vshrl.u32 920167782, %v640
        %v653 = vor.u32 %v651, %v652
        %v654 = vshll.u32 920167782, %v639
        %v655 = vshrl.u32 1326507024, %v640
        %v656 = vor.u32 %v654, %v655
        %vm657 = vcmp.lt.s32.totalorder %v638, 1
        %vm658 = vcmp.lt.s32.totalorder %v638, 2
        %vm659 = vcmp.lt.s32.totalorder %v638, 3
        %vm660 = vcmp.lt.s32.totalorder %v638, 4
        %v661 = vsel %vm657, %v641, %v644
        %v662 = vsel %vm660, %v650, 2102212464
        %v663 = vsel %vm659, %v647, %v662
        %v664 = vsel %vm658, %v661, %v663
        %v665 = vsel %vm657, %v644, %v647
        %v666 = vsel %vm660, %v653, 920167782
        %v667 = vsel %vm659, %v650, %v666
        %v668 = vsel %vm658, %v665, %v667
        %v669 = vsel %vm657, %v647, %v650
        %v670 = vsel %vm660, %v656, 1326507024
        %v671 = vsel %vm659, %v653, %v670
        %v672 = vsel %vm658, %v669, %v671
        %v673 = vshll.u32 %v633, 8
        %v674 = vand.u32 %v673, 65535
        %v675 = vshrl.u32 %v673, 16
        %v676 = vand.u32 %v672, 65535
        %v677 = vshrl.u32 %v672, 16
        %v678 = vmul.u32 %v674, %v676
        %v679 = vmul.u32 %v674, %v677
        %v680 = vmul.u32 %v675, %v676
        %v681 = vmul.u32 %v675, %v677
        %v682 = vshll.u32 %v679, 16
        %v683 = vshrl.u32 %v679, 16
        %v684 = vshll.u32 %v680, 16
        %v685 = vshrl.u32 %v680, 16
        %vm686 = vc.u32 %v678, %v682
        %v687 = vsel %vm686, 1, 0
        %v688 = vadd.s32 %v678, %v682
        %v689 = vadd.s32 %v681, %v687
        %vm690 = vc.u32 %v688, %v684
        %v691 = vsel %vm690, 1, 0
        %v692 = vadd.s32 %v688, %v684
        %v693 = vadd.s32 %v689, %v691
        %v694 = vadd.s32 %v693, %v683
        %v695 = vadd.s32 %v694, %v685
        %v696 = vand.u32 %v673, 65535
        %v697 = vshrl.u32 %v673, 16
        %v698 = vand.u32 %v668, 65535
        %v699 = vshrl.u32 %v668, 16
        %v700 = vmul.u32 %v696, %v698
        %v701 = vmul.u32 %v696, %v699
        %v702 = vmul.u32 %v697, %v698
        %v703 = vmul.u32 %v697, %v699
        %v704 = vshll.u32 %v701, 16
        %v705 = vshrl.u32 %v701, 16
        %v706 = vshll.u32 %v702, 16
        %v707 = vshrl.u32 %v702, 16
        %vm708 = vc.u32 %v700, %v704
        %v709 = vsel %vm708, 1, 0
        %v710 = vadd.s32 %v700, %v704
        %v711 = vadd.s32 %v703, %v709
        %vm712 = vc.u32 %v710, %v706
        %v713 = vsel %vm712, 1, 0
        %v714 = vadd.s32 %v710, %v706
        %v715 = vadd.s32 %v711, %v713
        %v716 = vadd.s32 %v715, %v705
        %v717 = vadd.s32 %v716, %v707
        %v718 = vmul.u32 %v673, %v664
        %v719 = vadd.s32 %v695, %v714
        %vm720 = vc.u32 %v695, %v714
        %v721 = vadd.s32 %v717, 1
        %v722 = vsel %vm720, %v721, %v717
        %v723 = vadd.s32 %v718, %v722
        %v724 = vadd.s32 %v723, 536870912
        %v725 = vshrl.u32 %v724, 30
        %v726 = vshll.u32 %v725, 30
        %v727 = vsub.s32 %v723, %v726
        %vm728 = vcmp.lt.s32.totalorder %v727, 0
        %v729 = vsub.s32 0, %v727
        %v730 = vsel %vm728, %v729, %v727
        %v731 = vclz %v730
        %v732 = vsub.s32 %v731, 2
        %vm733 = vcmp.gt.s32.totalorder 0, %v732
        %v734 = vsel %vm733, 0, %v732
        %v735 = vsub.s32 32, %v734
        %v736 = vshll.u32 %v727, %v734
        %v737 = vshrl.u32 %v719, %v735
        %v738 = vor.u32 %v736, %v737
        %v739 = vsub.s32 4294967266, %v734
        %v740 = vadd.s32 %v739, 127
        %v741 = vshll.u32 %v740, 23
        %v742 = vor.u32 4788187, %v741
        %v743 = vand.u32 2147483647, %v742
        %v745 = vcvt.s32.f32 %v738
        %v746 = vmul.f32 %v745, %v743
        %v747 = vxor.u32 %v746, 2147483648
        %v748 = vsel %vm627, %v747, %v746
        %v749 = vsub.s32 4, %v725
        %v750 = vsel %vm627, %v749, %v725
        %v751 = vsel %vm626, %v315, %v748
        %v752 = vsel %vm626, 0, %v750
        %v753 = vmul.f32 %v751, %v751
        %v754 = vmul.f32 %v753, -0.001358992
        %v755 = vadd.f32 %v754, 0.041655596
        %v756 = vmul.f32 %v753, %v755
        %v757 = vadd.f32 %v756, -0.4999988
        %v758 = vmul.f32 %v753, %v757
        %v759 = vadd.f32 1.0, %v758
        %v760 = vmul.f32 %v751, %v751
        %v761 = vmul.f32 %v760, -0.00019511016
        %v762 = vadd.f32 %v761, 0.008332121
        %v763 = vmul.f32 %v760, %v762
        %v764 = vadd.f32 %v763, -0.16666654
        %v765 = vmul.f32 %v760, %v764
        %v766 = vadd.f32 %v765, 1.0
        %v767 = vmul.f32 %v766, %v751
        %vm768 = vweird.f32 %v315
        %v769 = vadd.s32 %v752, 3
        %v770 = vand.u32 %v769, 3
        %vm771 = vcmp.lt.s32.totalorder %v770, 2
        %vm772 = vcmp.eq.s32.totalorder %v770, 0
        %v773 = vxor.u32 %v767, 2147483648
        %v774 = vsel %vm772, %v759, %v773
        %vm775 = vcmp.eq.s32.totalorder %v770, 2
        %v776 = vxor.u32 %v759, 2147483648
        %v777 = vsel %vm775, %v776, %v767
        %v778 = vsel %vm771, %v774, %v777
        %v779 = vsel %vm768, nan, %v778
        %v780 = vand.u32 2147483647, %v356
        %vm781 = vcmp.le.f32.partialorder %v780, 0.7853982
        %vm782 = vcmp.lt.s32.totalorder %v356, 0
        %v783 = vand.u32 %v356, 2139095040
        %v784 = vshrl.u32 %v783, 23
        %v785 = vsub.s32 %v784, 127
        %v786 = vand.u32 2147483647, %v356
        %v787 = vand.u32 %v786, 8388607
        %v788 = vor.u32 %v787, 8388608
        %v789 = vsub.s32 0, %v788
        %v790 = vadd.s32 %v785, 1
        %vm791 = vcmp.gt.s32.totalorder %v790, 0
        %v792 = vsel %vm791, %v790, 0
        %v793 = vshrl.u32 %v792, 5
        %v794 = vand.u32 %v792, 31
        %v795 = vsub.s32 32, %v794
        %v796 = vshrl.u32 683565275, %v795
        %v797 = vshll.u32 683565275, %v794
        %v798 = vshrl.u32 2475754826, %v795
        %v799 = vor.u32 %v797, %v798
        %v800 = vshll.u32 2475754826, %v794
        %v801 = vshrl.u32 2131351028, %v795
        %v802 = vor.u32 %v800, %v801
        %v803 = vshll.u32 2131351028, %v794
        %v804 = vshrl.u32 2102212464, %v795
        %v805 = vor.u32 %v803, %v804
        %v806 = vshll.u32 2102212464, %v794
        %v807 = vshrl.u32 920167782, %v795
        %v808 = vor.u32 %v806, %v807
        %v809 = vshll.u32 920167782, %v794
        %v810 = vshrl.u32 1326507024, %v795
        %v811 = vor.u32 %v809, %v810
        %vm812 = vcmp.lt.s32.totalorder %v793, 1
        %vm813 = vcmp.lt.s32.totalorder %v793, 2
        %vm814 = vcmp.lt.s32.totalorder %v793, 3
        %vm815 = vcmp.lt.s32.totalorder %v793, 4
        %v816 = vsel %vm812, %v796, %v799
        %v817 = vsel %vm815, %v805, 2102212464
        %v818 = vsel %vm814, %v802, %v817
        %v819 = vsel %vm813, %v816, %v818
        %v820 = vsel %vm812, %v799, %v802
        %v821 = vsel %vm815, %v808, 920167782
        %v822 = vsel %vm814, %v805, %v821
        %v823 = vsel %vm813, %v820, %v822
        %v824 = vsel %vm812, %v802, %v805
        %v825 = vsel %vm815, %v811, 1326507024
        %v826 = vsel %vm814, %v808, %v825
        %v827 = vsel %vm813, %v824, %v826
        %v828 = vshll.u32 %v788, 8
        %v829 = vand.u32 %v828, 65535
        %v830 = vshrl.u32 %v828, 16
        %v831 = vand.u32 %v827, 65535
        %v832 = vshrl.u32 %v827, 16
        %v833 = vmul.u32 %v829, %v831
        %v834 = vmul.u32 %v829, %v832
        %v835 = vmul.u32 %v830, %v831
        %v836 = vmul.u32 %v830, %v832
        %v837 = vshll.u32 %v834, 16
        %v838 = vshrl.u32 %v834, 16
        %v839 = vshll.u32 %v835, 16
        %v840 = vshrl.u32 %v835, 16
        %vm841 = vc.u32 %v833, %v837
        %v842 = vsel %vm841, 1, 0
        %v843 = vadd.s32 %v833, %v837
        %v844 = vadd.s32 %v836, %v842
        %vm845 = vc.u32 %v843, %v839
        %v846 = vsel %vm845, 1, 0
        %v847 = vadd.s32 %v843, %v839
        %v848 = vadd.s32 %v844, %v846
        %v849 = vadd.s32 %v848, %v838
        %v850 = vadd.s32 %v849, %v840
        %v851 = vand.u32 %v828, 65535
        %v852 = vshrl.u32 %v828, 16
        %v853 = vand.u32 %v823, 65535
        %v854 = vshrl.u32 %v823, 16
        %v855 = vmul.u32 %v851, %v853
        %v856 = vmul.u32 %v851, %v854
        %v857 = vmul.u32 %v852, %v853
        %v858 = vmul.u32 %v852, %v854
        %v859 = vshll.u32 %v856, 16
        %v860 = vshrl.u32 %v856, 16
        %v861 = vshll.u32 %v857, 16
        %v862 = vshrl.u32 %v857, 16
        %vm863 = vc.u32 %v855, %v859
        %v864 = vsel %vm863, 1, 0
        %v865 = vadd.s32 %v855, %v859
        %v866 = vadd.s32 %v858, %v864
        %vm867 = vc.u32 %v865, %v861
        %v868 = vsel %vm867, 1, 0
        %v869 = vadd.s32 %v865, %v861
        %v870 = vadd.s32 %v866, %v868
        %v871 = vadd.s32 %v870, %v860
        %v872 = vadd.s32 %v871, %v862
        %v873 = vmul.u32 %v828, %v819
        %v874 = vadd.s32 %v850, %v869
        %vm875 = vc.u32 %v850, %v869
        %v876 = vadd.s32 %v872, 1
        %v877 = vsel %vm875, %v876, %v872
        %v878 = vadd.s32 %v873, %v877
        %v879 = vadd.s32 %v878, 536870912
        %v880 = vshrl.u32 %v879, 30
        %v881 = vshll.u32 %v880, 30
        %v882 = vsub.s32 %v878, %v881
        %vm883 = vcmp.lt.s32.totalorder %v882, 0
        %v884 = vsub.s32 0, %v882
        %v885 = vsel %vm883, %v884, %v882
        %v886 = vclz %v885
        %v887 = vsub.s32 %v886, 2
        %vm888 = vcmp.gt.s32.totalorder 0, %v887
        %v889 = vsel %vm888, 0, %v887
        %v890 = vsub.s32 32, %v889
        %v891 = vshll.u32 %v882, %v889
        %v892 = vshrl.u32 %v874, %v890
        %v893 = vor.u32 %v891, %v892
        %v894 = vsub.s32 4294967266, %v889
        %v895 = vadd.s32 %v894, 127
        %v896 = vshll.u32 %v895, 23
        %v897 = vor.u32 4788187, %v896
        %v898 = vand.u32 2147483647, %v897
        %v900 = vcvt.s32.f32 %v893
        %v901 = vmul.f32 %v900, %v898
        %v902 = vxor.u32 %v901, 2147483648
        %v903 = vsel %vm782, %v902, %v901
        %v904 = vsub.s32 4, %v880
        %v905 = vsel %vm782, %v904, %v880
        %v906 = vsel %vm781, %v356, %v903
        %v907 = vsel %vm781, 0, %v905
        %v908 = vmul.f32 %v906, %v906
        %v909 = vmul.f32 %v908, -0.001358992
        %v910 = vadd.f32 %v909, 0.041655596
        %v911 = vmul.f32 %v908, %v910
        %v912 = vadd.f32 %v911, -0.4999988
        %v913 = vmul.f32 %v908, %v912
        %v914 = vadd.f32 1.0, %v913
        %v915 = vmul.f32 %v906, %v906
        %v916 = vmul.f32 %v915, -0.00019511016
        %v917 = vadd.f32 %v916, 0.008332121
        %v918 = vmul.f32 %v915, %v917
        %v919 = vadd.f32 %v918, -0.16666654
        %v920 = vmul.f32 %v915, %v919
        %v921 = vadd.f32 %v920, 1.0
        %v922 = vmul.f32 %v921, %v906
        %vm923 = vweird.f32 %v356
        %v924 = vadd.s32 %v907, 3
        %v925 = vand.u32 %v924, 3
        %vm926 = vcmp.lt.s32.totalorder %v925, 2
        %vm927 = vcmp.eq.s32.totalorder %v925, 0
        %v928 = vxor.u32 %v922, 2147483648
        %v929 = vsel %vm927, %v914, %v928
        %vm930 = vcmp.eq.s32.totalorder %v925, 2
        %v931 = vxor.u32 %v914, 2147483648
        %v932 = vsel %vm930, %v931, %v922
        %v933 = vsel %vm926, %v929, %v932
        %v934 = vsel %vm923, nan, %v933
        %v935 = vand.u32 2147483647, %v397
        %vm936 = vcmp.le.f32.partialorder %v935, 0.7853982
        %vm937 = vcmp.lt.s32.totalorder %v397, 0
        %v938 = vand.u32 %v397, 2139095040
        %v939 = vshrl.u32 %v938, 23
        %v940 = vsub.s32 %v939, 127
        %v941 = vand.u32 2147483647, %v397
        %v942 = vand.u32 %v941, 8388607
        %v943 = vor.u32 %v942, 8388608
        %v944 = vsub.s32 0, %v943
        %v945 = vadd.s32 %v940, 1
        %vm946 = vcmp.gt.s32.totalorder %v945, 0
        %v947 = vsel %vm946, %v945, 0
        %v948 = vshrl.u32 %v947, 5
        %v949 = vand.u32 %v947, 31
        %v950 = vsub.s32 32, %v949
        %v951 = vshrl.u32 683565275, %v950
        %v952 = vshll.u32 683565275, %v949
        %v953 = vshrl.u32 2475754826, %v950
        %v954 = vor.u32 %v952, %v953
        %v955 = vshll.u32 2475754826, %v949
        %v956 = vshrl.u32 2131351028, %v950
        %v957 = vor.u32 %v955, %v956
        %v958 = vshll.u32 2131351028, %v949
        %v959 = vshrl.u32 2102212464, %v950
        %v960 = vor.u32 %v958, %v959
        %v961 = vshll.u32 2102212464, %v949
        %v962 = vshrl.u32 920167782, %v950
        %v963 = vor.u32 %v961, %v962
        %v964 = vshll.u32 920167782, %v949
        %v965 = vshrl.u32 1326507024, %v950
        %v966 = vor.u32 %v964, %v965
        %vm967 = vcmp.lt.s32.totalorder %v948, 1
        %vm968 = vcmp.lt.s32.totalorder %v948, 2
        %vm969 = vcmp.lt.s32.totalorder %v948, 3
        %vm970 = vcmp.lt.s32.totalorder %v948, 4
        %v971 = vsel %vm967, %v951, %v954
        %v972 = vsel %vm970, %v960, 2102212464
        %v973 = vsel %vm969, %v957, %v972
        %v974 = vsel %vm968, %v971, %v973
        %v975 = vsel %vm967, %v954, %v957
        %v976 = vsel %vm970, %v963, 920167782
        %v977 = vsel %vm969, %v960, %v976
        %v978 = vsel %vm968, %v975, %v977
        %v979 = vsel %vm967, %v957, %v960
        %v980 = vsel %vm970, %v966, 1326507024
        %v981 = vsel %vm969, %v963, %v980
        %v982 = vsel %vm968, %v979, %v981
        %v983 = vshll.u32 %v943, 8
        %v984 = vand.u32 %v983, 65535
        %v985 = vshrl.u32 %v983, 16
        %v986 = vand.u32 %v982, 65535
        %v987 = vshrl.u32 %v982, 16
        %v988 = vmul.u32 %v984, %v986
        %v989 = vmul.u32 %v984, %v987
        %v990 = vmul.u32 %v985, %v986
        %v991 = vmul.u32 %v985, %v987
        %v992 = vshll.u32 %v989, 16
        %v993 = vshrl.u32 %v989, 16
        %v994 = vshll.u32 %v990, 16
        %v995 = vshrl.u32 %v990, 16
        %vm996 = vc.u32 %v988, %v992
        %v997 = vsel %vm996, 1, 0
        %v998 = vadd.s32 %v988, %v992
        %v999 = vadd.s32 %v991, %v997
        %vm1000 = vc.u32 %v998, %v994
        %v1001 = vsel %vm1000, 1, 0
        %v1002 = vadd.s32 %v998, %v994
        %v1003 = vadd.s32 %v999, %v1001
        %v1004 = vadd.s32 %v1003, %v993
        %v1005 = vadd.s32 %v1004, %v995
        %v1006 = vand.u32 %v983, 65535
        %v1007 = vshrl.u32 %v983, 16
        %v1008 = vand.u32 %v978, 65535
        %v1009 = vshrl.u32 %v978, 16
        %v1010 = vmul.u32 %v1006, %v1008
        %v1011 = vmul.u32 %v1006, %v1009
        %v1012 = vmul.u32 %v1007, %v1008
        %v1013 = vmul.u32 %v1007, %v1009
        %v1014 = vshll.u32 %v1011, 16
        %v1015 = vshrl.u32 %v1011, 16
        %v1016 = vshll.u32 %v1012, 16
        %v1017 = vshrl.u32 %v1012, 16
        %vm1018 = vc.u32 %v1010, %v1014
        %v1019 = vsel %vm1018, 1, 0
        %v1020 = vadd.s32 %v1010, %v1014
        %v1021 = vadd.s32 %v1013, %v1019
        %vm1022 = vc.u32 %v1020, %v1016
        %v1023 = vsel %vm1022, 1, 0
        %v1024 = vadd.s32 %v1020, %v1016
        %v1025 = vadd.s32 %v1021, %v1023
        %v1026 = vadd.s32 %v1025, %v1015
        %v1027 = vadd.s32 %v1026, %v1017
        %v1028 = vmul.u32 %v983, %v974
        %v1029 = vadd.s32 %v1005, %v1024
        %vm1030 = vc.u32 %v1005, %v1024
        %v1031 = vadd.s32 %v1027, 1
        %v1032 = vsel %vm1030, %v1031, %v1027
        %v1033 = vadd.s32 %v1028, %v1032
        %v1034 = vadd.s32 %v1033, 536870912
        %v1035 = vshrl.u32 %v1034, 30
        %v1036 = vshll.u32 %v1035, 30
        %v1037 = vsub.s32 %v1033, %v1036
        %vm1038 = vcmp.lt.s32.totalorder %v1037, 0
        %v1039 = vsub.s32 0, %v1037
        %v1040 = vsel %vm1038, %v1039, %v1037
        %v1041 = vclz %v1040
        %v1042 = vsub.s32 %v1041, 2
        %vm1043 = vcmp.gt.s32.totalorder 0, %v1042
        %v1044 = vsel %vm1043, 0, %v1042
        %v1045 = vsub.s32 32, %v1044
        %v1046 = vshll.u32 %v1037, %v1044
        %v1047 = vshrl.u32 %v1029, %v1045
        %v1048 = vor.u32 %v1046, %v1047
        %v1049 = vsub.s32 4294967266, %v1044
        %v1050 = vadd.s32 %v1049, 127
        %v1051 = vshll.u32 %v1050, 23
        %v1052 = vor.u32 4788187, %v1051
        %v1053 = vand.u32 2147483647, %v1052
        %v1055 = vcvt.s32.f32 %v1048
        %v1056 = vmul.f32 %v1055, %v1053
        %v1057 = vxor.u32 %v1056, 2147483648
        %v1058 = vsel %vm937, %v1057, %v1056
        %v1059 = vsub.s32 4, %v1035
        %v1060 = vsel %vm937, %v1059, %v1035
        %v1061 = vsel %vm936, %v397, %v1058
        %v1062 = vsel %vm936, 0, %v1060
        %v1063 = vmul.f32 %v1061, %v1061
        %v1064 = vmul.f32 %v1063, -0.001358992
        %v1065 = vadd.f32 %v1064, 0.041655596
        %v1066 = vmul.f32 %v1063, %v1065
        %v1067 = vadd.f32 %v1066, -0.4999988
        %v1068 = vmul.f32 %v1063, %v1067
        %v1069 = vadd.f32 1.0, %v1068
        %v1070 = vmul.f32 %v1061, %v1061
        %v1071 = vmul.f32 %v1070, -0.00019511016
        %v1072 = vadd.f32 %v1071, 0.008332121
        %v1073 = vmul.f32 %v1070, %v1072
        %v1074 = vadd.f32 %v1073, -0.16666654
        %v1075 = vmul.f32 %v1070, %v1074
        %v1076 = vadd.f32 %v1075, 1.0
        %v1077 = vmul.f32 %v1076, %v1061
        %vm1078 = vweird.f32 %v397
        %v1079 = vadd.s32 %v1062, 3
        %v1080 = vand.u32 %v1079, 3
        %vm1081 = vcmp.lt.s32.totalorder %v1080, 2
        %vm1082 = vcmp.eq.s32.totalorder %v1080, 0
        %v1083 = vxor.u32 %v1077, 2147483648
        %v1084 = vsel %vm1082, %v1069, %v1083
        %vm1085 = vcmp.eq.s32.totalorder %v1080, 2
        %v1086 = vxor.u32 %v1069, 2147483648
        %v1087 = vsel %vm1085, %v1086, %v1077
        %v1088 = vsel %vm1081, %v1084, %v1087
        %v1089 = vsel %vm1078, nan, %v1088
        %v1090 = vand.u32 2147483647, %v438
        %vm1091 = vcmp.le.f32.partialorder %v1090, 0.7853982
        %vm1092 = vcmp.lt.s32.totalorder %v438, 0
        %v1093 = vand.u32 %v438, 2139095040
        %v1094 = vshrl.u32 %v1093, 23
        %v1095 = vsub.s32 %v1094, 127
        %v1096 = vand.u32 2147483647, %v438
        %v1097 = vand.u32 %v1096, 8388607
        %v1098 = vor.u32 %v1097, 8388608
        %v1099 = vsub.s32 0, %v1098
        %v1100 = vadd.s32 %v1095, 1
        %vm1101 = vcmp.gt.s32.totalorder %v1100, 0
        %v1102 = vsel %vm1101, %v1100, 0
        %v1103 = vshrl.u32 %v1102, 5
        %v1104 = vand.u32 %v1102, 31
        %v1105 = vsub.s32 32, %v1104
        %v1106 = vshrl.u32 683565275, %v1105
        %v1107 = vshll.u32 683565275, %v1104
        %v1108 = vshrl.u32 2475754826, %v1105
        %v1109 = vor.u32 %v1107, %v1108
        %v1110 = vshll.u32 2475754826, %v1104
        %v1111 = vshrl.u32 2131351028, %v1105
        %v1112 = vor.u32 %v1110, %v1111
        %v1113 = vshll.u32 2131351028, %v1104
        %v1114 = vshrl.u32 2102212464, %v1105
        %v1115 = vor.u32 %v1113, %v1114
        %v1116 = vshll.u32 2102212464, %v1104
        %v1117 = vshrl.u32 920167782, %v1105
        %v1118 = vor.u32 %v1116, %v1117
        %v1119 = vshll.u32 920167782, %v1104
        %v1120 = vshrl.u32 1326507024, %v1105
        %v1121 = vor.u32 %v1119, %v1120
        %vm1122 = vcmp.lt.s32.totalorder %v1103, 1
        %vm1123 = vcmp.lt.s32.totalorder %v1103, 2
        %vm1124 = vcmp.lt.s32.totalorder %v1103, 3
        %vm1125 = vcmp.lt.s32.totalorder %v1103, 4
        %v1126 = vsel %vm1122, %v1106, %v1109
        %v1127 = vsel %vm1125, %v1115, 2102212464
        %v1128 = vsel %vm1124, %v1112, %v1127
        %v1129 = vsel %vm1123, %v1126, %v1128
        %v1130 = vsel %vm1122, %v1109, %v1112
        %v1131 = vsel %vm1125, %v1118, 920167782
        %v1132 = vsel %vm1124, %v1115, %v1131
        %v1133 = vsel %vm1123, %v1130, %v1132
        %v1134 = vsel %vm1122, %v1112, %v1115
        %v1135 = vsel %vm1125, %v1121, 1326507024
        %v1136 = vsel %vm1124, %v1118, %v1135
        %v1137 = vsel %vm1123, %v1134, %v1136
        %v1138 = vshll.u32 %v1098, 8
        %v1139 = vand.u32 %v1138, 65535
        %v1140 = vshrl.u32 %v1138, 16
        %v1141 = vand.u32 %v1137, 65535
        %v1142 = vshrl.u32 %v1137, 16
        %v1143 = vmul.u32 %v1139, %v1141
        %v1144 = vmul.u32 %v1139, %v1142
        %v1145 = vmul.u32 %v1140, %v1141
        %v1146 = vmul.u32 %v1140, %v1142
        %v1147 = vshll.u32 %v1144, 16
        %v1148 = vshrl.u32 %v1144, 16
        %v1149 = vshll.u32 %v1145, 16
        %v1150 = vshrl.u32 %v1145, 16
        %vm1151 = vc.u32 %v1143, %v1147
        %v1152 = vsel %vm1151, 1, 0
        %v1153 = vadd.s32 %v1143, %v1147
        %v1154 = vadd.s32 %v1146, %v1152
        %vm1155 = vc.u32 %v1153, %v1149
        %v1156 = vsel %vm1155, 1, 0
        %v1157 = vadd.s32 %v1153, %v1149
        %v1158 = vadd.s32 %v1154, %v1156
        %v1159 = vadd.s32 %v1158, %v1148
        %v1160 = vadd.s32 %v1159, %v1150
        %v1161 = vand.u32 %v1138, 65535
        %v1162 = vshrl.u32 %v1138, 16
        %v1163 = vand.u32 %v1133, 65535
        %v1164 = vshrl.u32 %v1133, 16
        %v1165 = vmul.u32 %v1161, %v1163
        %v1166 = vmul.u32 %v1161, %v1164
        %v1167 = vmul.u32 %v1162, %v1163
        %v1168 = vmul.u32 %v1162, %v1164
        %v1169 = vshll.u32 %v1166, 16
        %v1170 = vshrl.u32 %v1166, 16
        %v1171 = vshll.u32 %v1167, 16
        %v1172 = vshrl.u32 %v1167, 16
        %vm1173 = vc.u32 %v1165, %v1169
        %v1174 = vsel %vm1173, 1, 0
        %v1175 = vadd.s32 %v1165, %v1169
        %v1176 = vadd.s32 %v1168, %v1174
        %vm1177 = vc.u32 %v1175, %v1171
        %v1178 = vsel %vm1177, 1, 0
        %v1179 = vadd.s32 %v1175, %v1171
        %v1180 = vadd.s32 %v1176, %v1178
        %v1181 = vadd.s32 %v1180, %v1170
        %v1182 = vadd.s32 %v1181, %v1172
        %v1183 = vmul.u32 %v1138, %v1129
        %v1184 = vadd.s32 %v1160, %v1179
        %vm1185 = vc.u32 %v1160, %v1179
        %v1186 = vadd.s32 %v1182, 1
        %v1187 = vsel %vm1185, %v1186, %v1182
        %v1188 = vadd.s32 %v1183, %v1187
        %v1189 = vadd.s32 %v1188, 536870912
        %v1190 = vshrl.u32 %v1189, 30
        %v1191 = vshll.u32 %v1190, 30
        %v1192 = vsub.s32 %v1188, %v1191
        %vm1193 = vcmp.lt.s32.totalorder %v1192, 0
        %v1194 = vsub.s32 0, %v1192
        %v1195 = vsel %vm1193, %v1194, %v1192
        %v1196 = vclz %v1195
        %v1197 = vsub.s32 %v1196, 2
        %vm1198 = vcmp.gt.s32.totalorder 0, %v1197
        %v1199 = vsel %vm1198, 0, %v1197
        %v1200 = vsub.s32 32, %v1199
        %v1201 = vshll.u32 %v1192, %v1199
        %v1202 = vshrl.u32 %v1184, %v1200
        %v1203 = vor.u32 %v1201, %v1202
        %v1204 = vsub.s32 4294967266, %v1199
        %v1205 = vadd.s32 %v1204, 127
        %v1206 = vshll.u32 %v1205, 23
        %v1207 = vor.u32 4788187, %v1206
        %v1208 = vand.u32 2147483647, %v1207
        %v1210 = vcvt.s32.f32 %v1203
        %v1211 = vmul.f32 %v1210, %v1208
        %v1212 = vxor.u32 %v1211, 2147483648
        %v1213 = vsel %vm1092, %v1212, %v1211
        %v1214 = vsub.s32 4, %v1190
        %v1215 = vsel %vm1092, %v1214, %v1190
        %v1216 = vsel %vm1091, %v438, %v1213
        %v1217 = vsel %vm1091, 0, %v1215
        %v1218 = vmul.f32 %v1216, %v1216
        %v1219 = vmul.f32 %v1218, -0.001358992
        %v1220 = vadd.f32 %v1219, 0.041655596
        %v1221 = vmul.f32 %v1218, %v1220
        %v1222 = vadd.f32 %v1221, -0.4999988
        %v1223 = vmul.f32 %v1218, %v1222
        %v1224 = vadd.f32 1.0, %v1223
        %v1225 = vmul.f32 %v1216, %v1216
        %v1226 = vmul.f32 %v1225, -0.00019511016
        %v1227 = vadd.f32 %v1226, 0.008332121
        %v1228 = vmul.f32 %v1225, %v1227
        %v1229 = vadd.f32 %v1228, -0.16666654
        %v1230 = vmul.f32 %v1225, %v1229
        %v1231 = vadd.f32 %v1230, 1.0
        %v1232 = vmul.f32 %v1231, %v1216
        %vm1233 = vweird.f32 %v438
        %v1234 = vadd.s32 %v1217, 3
        %v1235 = vand.u32 %v1234, 3
        %vm1236 = vcmp.lt.s32.totalorder %v1235, 2
        %vm1237 = vcmp.eq.s32.totalorder %v1235, 0
        %v1238 = vxor.u32 %v1232, 2147483648
        %v1239 = vsel %vm1237, %v1224, %v1238
        %vm1240 = vcmp.eq.s32.totalorder %v1235, 2
        %v1241 = vxor.u32 %v1224, 2147483648
        %v1242 = vsel %vm1240, %v1241, %v1232
        %v1243 = vsel %vm1236, %v1239, %v1242
        %v1244 = vsel %vm1233, nan, %v1243
        %v1245 = vand.u32 2147483647, %v479
        %vm1246 = vcmp.le.f32.partialorder %v1245, 0.7853982
        %vm1247 = vcmp.lt.s32.totalorder %v479, 0
        %v1248 = vand.u32 %v479, 2139095040
        %v1249 = vshrl.u32 %v1248, 23
        %v1250 = vsub.s32 %v1249, 127
        %v1251 = vand.u32 2147483647, %v479
        %v1252 = vand.u32 %v1251, 8388607
        %v1253 = vor.u32 %v1252, 8388608
        %v1254 = vsub.s32 0, %v1253
        %v1255 = vadd.s32 %v1250, 1
        %vm1256 = vcmp.gt.s32.totalorder %v1255, 0
        %v1257 = vsel %vm1256, %v1255, 0
        %v1258 = vshrl.u32 %v1257, 5
        %v1259 = vand.u32 %v1257, 31
        %v1260 = vsub.s32 32, %v1259
        %v1261 = vshrl.u32 683565275, %v1260
        %v1262 = vshll.u32 683565275, %v1259
        %v1263 = vshrl.u32 2475754826, %v1260
        %v1264 = vor.u32 %v1262, %v1263
        %v1265 = vshll.u32 2475754826, %v1259
        %v1266 = vshrl.u32 2131351028, %v1260
        %v1267 = vor.u32 %v1265, %v1266
        %v1268 = vshll.u32 2131351028, %v1259
        %v1269 = vshrl.u32 2102212464, %v1260
        %v1270 = vor.u32 %v1268, %v1269
        %v1271 = vshll.u32 2102212464, %v1259
        %v1272 = vshrl.u32 920167782, %v1260
        %v1273 = vor.u32 %v1271, %v1272
        %v1274 = vshll.u32 920167782, %v1259
        %v1275 = vshrl.u32 1326507024, %v1260
        %v1276 = vor.u32 %v1274, %v1275
        %vm1277 = vcmp.lt.s32.totalorder %v1258, 1
        %vm1278 = vcmp.lt.s32.totalorder %v1258, 2
        %vm1279 = vcmp.lt.s32.totalorder %v1258, 3
        %vm1280 = vcmp.lt.s32.totalorder %v1258, 4
        %v1281 = vsel %vm1277, %v1261, %v1264
        %v1282 = vsel %vm1280, %v1270, 2102212464
        %v1283 = vsel %vm1279, %v1267, %v1282
        %v1284 = vsel %vm1278, %v1281, %v1283
        %v1285 = vsel %vm1277, %v1264, %v1267
        %v1286 = vsel %vm1280, %v1273, 920167782
        %v1287 = vsel %vm1279, %v1270, %v1286
        %v1288 = vsel %vm1278, %v1285, %v1287
        %v1289 = vsel %vm1277, %v1267, %v1270
        %v1290 = vsel %vm1280, %v1276, 1326507024
        %v1291 = vsel %vm1279, %v1273, %v1290
        %v1292 = vsel %vm1278, %v1289, %v1291
        %v1293 = vshll.u32 %v1253, 8
        %v1294 = vand.u32 %v1293, 65535
        %v1295 = vshrl.u32 %v1293, 16
        %v1296 = vand.u32 %v1292, 65535
        %v1297 = vshrl.u32 %v1292, 16
        %v1298 = vmul.u32 %v1294, %v1296
        %v1299 = vmul.u32 %v1294, %v1297
        %v1300 = vmul.u32 %v1295, %v1296
        %v1301 = vmul.u32 %v1295, %v1297
        %v1302 = vshll.u32 %v1299, 16
        %v1303 = vshrl.u32 %v1299, 16
        %v1304 = vshll.u32 %v1300, 16
        %v1305 = vshrl.u32 %v1300, 16
        %vm1306 = vc.u32 %v1298, %v1302
        %v1307 = vsel %vm1306, 1, 0
        %v1308 = vadd.s32 %v1298, %v1302
        %v1309 = vadd.s32 %v1301, %v1307
        %vm1310 = vc.u32 %v1308, %v1304
        %v1311 = vsel %vm1310, 1, 0
        %v1312 = vadd.s32 %v1308, %v1304
        %v1313 = vadd.s32 %v1309, %v1311
        %v1314 = vadd.s32 %v1313, %v1303
        %v1315 = vadd.s32 %v1314, %v1305
        %v1316 = vand.u32 %v1293, 65535
        %v1317 = vshrl.u32 %v1293, 16
        %v1318 = vand.u32 %v1288, 65535
        %v1319 = vshrl.u32 %v1288, 16
        %v1320 = vmul.u32 %v1316, %v1318
        %v1321 = vmul.u32 %v1316, %v1319
        %v1322 = vmul.u32 %v1317, %v1318
        %v1323 = vmul.u32 %v1317, %v1319
        %v1324 = vshll.u32 %v1321, 16
        %v1325 = vshrl.u32 %v1321, 16
        %v1326 = vshll.u32 %v1322, 16
        %v1327 = vshrl.u32 %v1322, 16
        %vm1328 = vc.u32 %v1320, %v1324
        %v1329 = vsel %vm1328, 1, 0
        %v1330 = vadd.s32 %v1320, %v1324
        %v1331 = vadd.s32 %v1323, %v1329
        %vm1332 = vc.u32 %v1330, %v1326
        %v1333 = vsel %vm1332, 1, 0
        %v1334 = vadd.s32 %v1330, %v1326
        %v1335 = vadd.s32 %v1331, %v1333
        %v1336 = vadd.s32 %v1335, %v1325
        %v1337 = vadd.s32 %v1336, %v1327
        %v1338 = vmul.u32 %v1293, %v1284
        %v1339 = vadd.s32 %v1315, %v1334
        %vm1340 = vc.u32 %v1315, %v1334
        %v1341 = vadd.s32 %v1337, 1
        %v1342 = vsel %vm1340, %v1341, %v1337
        %v1343 = vadd.s32 %v1338, %v1342
        %v1344 = vadd.s32 %v1343, 536870912
        %v1345 = vshrl.u32 %v1344, 30
        %v1346 = vshll.u32 %v1345, 30
        %v1347 = vsub.s32 %v1343, %v1346
        %vm1348 = vcmp.lt.s32.totalorder %v1347, 0
        %v1349 = vsub.s32 0, %v1347
        %v1350 = vsel %vm1348, %v1349, %v1347
        %v1351 = vclz %v1350
        %v1352 = vsub.s32 %v1351, 2
        %vm1353 = vcmp.gt.s32.totalorder 0, %v1352
        %v1354 = vsel %vm1353, 0, %v1352
        %v1355 = vsub.s32 32, %v1354
        %v1356 = vshll.u32 %v1347, %v1354
        %v1357 = vshrl.u32 %v1339, %v1355
        %v1358 = vor.u32 %v1356, %v1357
        %v1359 = vsub.s32 4294967266, %v1354
        %v1360 = vadd.s32 %v1359, 127
        %v1361 = vshll.u32 %v1360, 23
        %v1362 = vor.u32 4788187, %v1361
        %v1363 = vand.u32 2147483647, %v1362
        %v1365 = vcvt.s32.f32 %v1358
        %v1366 = vmul.f32 %v1365, %v1363
        %v1367 = vxor.u32 %v1366, 2147483648
        %v1368 = vsel %vm1247, %v1367, %v1366
        %v1369 = vsub.s32 4, %v1345
        %v1370 = vsel %vm1247, %v1369, %v1345
        %v1371 = vsel %vm1246, %v479, %v1368
        %v1372 = vsel %vm1246, 0, %v1370
        %v1373 = vmul.f32 %v1371, %v1371
        %v1374 = vmul.f32 %v1373, -0.001358992
        %v1375 = vadd.f32 %v1374, 0.041655596
        %v1376 = vmul.f32 %v1373, %v1375
        %v1377 = vadd.f32 %v1376, -0.4999988
        %v1378 = vmul.f32 %v1373, %v1377
        %v1379 = vadd.f32 1.0, %v1378
        %v1380 = vmul.f32 %v1371, %v1371
        %v1381 = vmul.f32 %v1380, -0.00019511016
        %v1382 = vadd.f32 %v1381, 0.008332121
        %v1383 = vmul.f32 %v1380, %v1382
        %v1384 = vadd.f32 %v1383, -0.16666654
        %v1385 = vmul.f32 %v1380, %v1384
        %v1386 = vadd.f32 %v1385, 1.0
        %v1387 = vmul.f32 %v1386, %v1371
        %vm1388 = vweird.f32 %v479
        %v1389 = vadd.s32 %v1372, 3
        %v1390 = vand.u32 %v1389, 3
        %vm1391 = vcmp.lt.s32.totalorder %v1390, 2
        %vm1392 = vcmp.eq.s32.totalorder %v1390, 0
        %v1393 = vxor.u32 %v1387, 2147483648
        %v1394 = vsel %vm1392, %v1379, %v1393
        %vm1395 = vcmp.eq.s32.totalorder %v1390, 2
        %v1396 = vxor.u32 %v1379, 2147483648
        %v1397 = vsel %vm1395, %v1396, %v1387
        %v1398 = vsel %vm1391, %v1394, %v1397
        %v1399 = vsel %vm1388, nan, %v1398
        %v1400 = vand.u32 2147483647, %v520
        %vm1401 = vcmp.le.f32.partialorder %v1400, 0.7853982
        %vm1402 = vcmp.lt.s32.totalorder %v520, 0
        %v1403 = vand.u32 %v520, 2139095040
        %v1404 = vshrl.u32 %v1403, 23
        %v1405 = vsub.s32 %v1404, 127
        %v1406 = vand.u32 2147483647, %v520
        %v1407 = vand.u32 %v1406, 8388607
        %v1408 = vor.u32 %v1407, 8388608
        %v1409 = vsub.s32 0, %v1408
        %v1410 = vadd.s32 %v1405, 1
        %vm1411 = vcmp.gt.s32.totalorder %v1410, 0
        %v1412 = vsel %vm1411, %v1410, 0
        %v1413 = vshrl.u32 %v1412, 5
        %v1414 = vand.u32 %v1412, 31
        %v1415 = vsub.s32 32, %v1414
        %v1416 = vshrl.u32 683565275, %v1415
        %v1417 = vshll.u32 683565275, %v1414
        %v1418 = vshrl.u32 2475754826, %v1415
        %v1419 = vor.u32 %v1417, %v1418
        %v1420 = vshll.u32 2475754826, %v1414
        %v1421 = vshrl.u32 2131351028, %v1415
        %v1422 = vor.u32 %v1420, %v1421
        %v1423 = vshll.u32 2131351028, %v1414
        %v1424 = vshrl.u32 2102212464, %v1415
        %v1425 = vor.u32 %v1423, %v1424
        %v1426 = vshll.u32 2102212464, %v1414
        %v1427 = vshrl.u32 920167782, %v1415
        %v1428 = vor.u32 %v1426, %v1427
        %v1429 = vshll.u32 920167782, %v1414
        %v1430 = vshrl.u32 1326507024, %v1415
        %v1431 = vor.u32 %v1429, %v1430
        %vm1432 = vcmp.lt.s32.totalorder %v1413, 1
        %vm1433 = vcmp.lt.s32.totalorder %v1413, 2
        %vm1434 = vcmp.lt.s32.totalorder %v1413, 3
        %vm1435 = vcmp.lt.s32.totalorder %v1413, 4
        %v1436 = vsel %vm1432, %v1416, %v1419
        %v1437 = vsel %vm1435, %v1425, 2102212464
        %v1438 = vsel %vm1434, %v1422, %v1437
        %v1439 = vsel %vm1433, %v1436, %v1438
        %v1440 = vsel %vm1432, %v1419, %v1422
        %v1441 = vsel %vm1435, %v1428, 920167782
        %v1442 = vsel %vm1434, %v1425, %v1441
        %v1443 = vsel %vm1433, %v1440, %v1442
        %v1444 = vsel %vm1432, %v1422, %v1425
        %v1445 = vsel %vm1435, %v1431, 1326507024
        %v1446 = vsel %vm1434, %v1428, %v1445
        %v1447 = vsel %vm1433, %v1444, %v1446
        %v1448 = vshll.u32 %v1408, 8
        %v1449 = vand.u32 %v1448, 65535
        %v1450 = vshrl.u32 %v1448, 16
        %v1451 = vand.u32 %v1447, 65535
        %v1452 = vshrl.u32 %v1447, 16
        %v1453 = vmul.u32 %v1449, %v1451
        %v1454 = vmul.u32 %v1449, %v1452
        %v1455 = vmul.u32 %v1450, %v1451
        %v1456 = vmul.u32 %v1450, %v1452
        %v1457 = vshll.u32 %v1454, 16
        %v1458 = vshrl.u32 %v1454, 16
        %v1459 = vshll.u32 %v1455, 16
        %v1460 = vshrl.u32 %v1455, 16
        %vm1461 = vc.u32 %v1453, %v1457
        %v1462 = vsel %vm1461, 1, 0
        %v1463 = vadd.s32 %v1453, %v1457
        %v1464 = vadd.s32 %v1456, %v1462
        %vm1465 = vc.u32 %v1463, %v1459
        %v1466 = vsel %vm1465, 1, 0
        %v1467 = vadd.s32 %v1463, %v1459
        %v1468 = vadd.s32 %v1464, %v1466
        %v1469 = vadd.s32 %v1468, %v1458
        %v1470 = vadd.s32 %v1469, %v1460
        %v1471 = vand.u32 %v1448, 65535
        %v1472 = vshrl.u32 %v1448, 16
        %v1473 = vand.u32 %v1443, 65535
        %v1474 = vshrl.u32 %v1443, 16
        %v1475 = vmul.u32 %v1471, %v1473
        %v1476 = vmul.u32 %v1471, %v1474
        %v1477 = vmul.u32 %v1472, %v1473
        %v1478 = vmul.u32 %v1472, %v1474
        %v1479 = vshll.u32 %v1476, 16
        %v1480 = vshrl.u32 %v1476, 16
        %v1481 = vshll.u32 %v1477, 16
        %v1482 = vshrl.u32 %v1477, 16
        %vm1483 = vc.u32 %v1475, %v1479
        %v1484 = vsel %vm1483, 1, 0
        %v1485 = vadd.s32 %v1475, %v1479
        %v1486 = vadd.s32 %v1478, %v1484
        %vm1487 = vc.u32 %v1485, %v1481
        %v1488 = vsel %vm1487, 1, 0
        %v1489 = vadd.s32 %v1485, %v1481
        %v1490 = vadd.s32 %v1486, %v1488
        %v1491 = vadd.s32 %v1490, %v1480
        %v1492 = vadd.s32 %v1491, %v1482
        %v1493 = vmul.u32 %v1448, %v1439
        %v1494 = vadd.s32 %v1470, %v1489
        %vm1495 = vc.u32 %v1470, %v1489
        %v1496 = vadd.s32 %v1492, 1
        %v1497 = vsel %vm1495, %v1496, %v1492
        %v1498 = vadd.s32 %v1493, %v1497
        %v1499 = vadd.s32 %v1498, 536870912
        %v1500 = vshrl.u32 %v1499, 30
        %v1501 = vshll.u32 %v1500, 30
        %v1502 = vsub.s32 %v1498, %v1501
        %vm1503 = vcmp.lt.s32.totalorder %v1502, 0
        %v1504 = vsub.s32 0, %v1502
        %v1505 = vsel %vm1503, %v1504, %v1502
        %v1506 = vclz %v1505
        %v1507 = vsub.s32 %v1506, 2
        %vm1508 = vcmp.gt.s32.totalorder 0, %v1507
        %v1509 = vsel %vm1508, 0, %v1507
        %v1510 = vsub.s32 32, %v1509
        %v1511 = vshll.u32 %v1502, %v1509
        %v1512 = vshrl.u32 %v1494, %v1510
        %v1513 = vor.u32 %v1511, %v1512
        %v1514 = vsub.s32 4294967266, %v1509
        %v1515 = vadd.s32 %v1514, 127
        %v1516 = vshll.u32 %v1515, 23
        %v1517 = vor.u32 4788187, %v1516
        %v1518 = vand.u32 2147483647, %v1517
        %v1520 = vcvt.s32.f32 %v1513
        %v1521 = vmul.f32 %v1520, %v1518
        %v1522 = vxor.u32 %v1521, 2147483648
        %v1523 = vsel %vm1402, %v1522, %v1521
        %v1524 = vsub.s32 4, %v1500
        %v1525 = vsel %vm1402, %v1524, %v1500
        %v1526 = vsel %vm1401, %v520, %v1523
        %v1527 = vsel %vm1401, 0, %v1525
        %v1528 = vmul.f32 %v1526, %v1526
        %v1529 = vmul.f32 %v1528, -0.001358992
        %v1530 = vadd.f32 %v1529, 0.041655596
        %v1531 = vmul.f32 %v1528, %v1530
        %v1532 = vadd.f32 %v1531, -0.4999988
        %v1533 = vmul.f32 %v1528, %v1532
        %v1534 = vadd.f32 1.0, %v1533
        %v1535 = vmul.f32 %v1526, %v1526
        %v1536 = vmul.f32 %v1535, -0.00019511016
        %v1537 = vadd.f32 %v1536, 0.008332121
        %v1538 = vmul.f32 %v1535, %v1537
        %v1539 = vadd.f32 %v1538, -0.16666654
        %v1540 = vmul.f32 %v1535, %v1539
        %v1541 = vadd.f32 %v1540, 1.0
        %v1542 = vmul.f32 %v1541, %v1526
        %vm1543 = vweird.f32 %v520
        %v1544 = vadd.s32 %v1527, 3
        %v1545 = vand.u32 %v1544, 3
        %vm1546 = vcmp.lt.s32.totalorder %v1545, 2
        %vm1547 = vcmp.eq.s32.totalorder %v1545, 0
        %v1548 = vxor.u32 %v1542, 2147483648
        %v1549 = vsel %vm1547, %v1534, %v1548
        %vm1550 = vcmp.eq.s32.totalorder %v1545, 2
        %v1551 = vxor.u32 %v1534, 2147483648
        %v1552 = vsel %vm1550, %v1551, %v1542
        %v1553 = vsel %vm1546, %v1549, %v1552
        %v1554 = vsel %vm1543, nan, %v1553
        %v1555 = vand.u32 2147483647, %v561
        %vm1556 = vcmp.le.f32.partialorder %v1555, 0.7853982
        %vm1557 = vcmp.lt.s32.totalorder %v561, 0
        %v1558 = vand.u32 %v561, 2139095040
        %v1559 = vshrl.u32 %v1558, 23
        %v1560 = vsub.s32 %v1559, 127
        %v1561 = vand.u32 2147483647, %v561
        %v1562 = vand.u32 %v1561, 8388607
        %v1563 = vor.u32 %v1562, 8388608
        %v1564 = vsub.s32 0, %v1563
        %v1565 = vadd.s32 %v1560, 1
        %vm1566 = vcmp.gt.s32.totalorder %v1565, 0
        %v1567 = vsel %vm1566, %v1565, 0
        %v1568 = vshrl.u32 %v1567, 5
        %v1569 = vand.u32 %v1567, 31
        %v1570 = vsub.s32 32, %v1569
        %v1571 = vshrl.u32 683565275, %v1570
        %v1572 = vshll.u32 683565275, %v1569
        %v1573 = vshrl.u32 2475754826, %v1570
        %v1574 = vor.u32 %v1572, %v1573
        %v1575 = vshll.u32 2475754826, %v1569
        %v1576 = vshrl.u32 2131351028, %v1570
        %v1577 = vor.u32 %v1575, %v1576
        %v1578 = vshll.u32 2131351028, %v1569
        %v1579 = vshrl.u32 2102212464, %v1570
        %v1580 = vor.u32 %v1578, %v1579
        %v1581 = vshll.u32 2102212464, %v1569
        %v1582 = vshrl.u32 920167782, %v1570
        %v1583 = vor.u32 %v1581, %v1582
        %v1584 = vshll.u32 920167782, %v1569
        %v1585 = vshrl.u32 1326507024, %v1570
        %v1586 = vor.u32 %v1584, %v1585
        %vm1587 = vcmp.lt.s32.totalorder %v1568, 1
        %vm1588 = vcmp.lt.s32.totalorder %v1568, 2
        %vm1589 = vcmp.lt.s32.totalorder %v1568, 3
        %vm1590 = vcmp.lt.s32.totalorder %v1568, 4
        %v1591 = vsel %vm1587, %v1571, %v1574
        %v1592 = vsel %vm1590, %v1580, 2102212464
        %v1593 = vsel %vm1589, %v1577, %v1592
        %v1594 = vsel %vm1588, %v1591, %v1593
        %v1595 = vsel %vm1587, %v1574, %v1577
        %v1596 = vsel %vm1590, %v1583, 920167782
        %v1597 = vsel %vm1589, %v1580, %v1596
        %v1598 = vsel %vm1588, %v1595, %v1597
        %v1599 = vsel %vm1587, %v1577, %v1580
        %v1600 = vsel %vm1590, %v1586, 1326507024
        %v1601 = vsel %vm1589, %v1583, %v1600
        %v1602 = vsel %vm1588, %v1599, %v1601
        %v1603 = vshll.u32 %v1563, 8
        %v1604 = vand.u32 %v1603, 65535
        %v1605 = vshrl.u32 %v1603, 16
        %v1606 = vand.u32 %v1602, 65535
        %v1607 = vshrl.u32 %v1602, 16
        %v1608 = vmul.u32 %v1604, %v1606
        %v1609 = vmul.u32 %v1604, %v1607
        %v1610 = vmul.u32 %v1605, %v1606
        %v1611 = vmul.u32 %v1605, %v1607
        %v1612 = vshll.u32 %v1609, 16
        %v1613 = vshrl.u32 %v1609, 16
        %v1614 = vshll.u32 %v1610, 16
        %v1615 = vshrl.u32 %v1610, 16
        %vm1616 = vc.u32 %v1608, %v1612
        %v1617 = vsel %vm1616, 1, 0
        %v1618 = vadd.s32 %v1608, %v1612
        %v1619 = vadd.s32 %v1611, %v1617
        %vm1620 = vc.u32 %v1618, %v1614
        %v1621 = vsel %vm1620, 1, 0
        %v1622 = vadd.s32 %v1618, %v1614
        %v1623 = vadd.s32 %v1619, %v1621
        %v1624 = vadd.s32 %v1623, %v1613
        %v1625 = vadd.s32 %v1624, %v1615
        %v1626 = vand.u32 %v1603, 65535
        %v1627 = vshrl.u32 %v1603, 16
        %v1628 = vand.u32 %v1598, 65535
        %v1629 = vshrl.u32 %v1598, 16
        %v1630 = vmul.u32 %v1626, %v1628
        %v1631 = vmul.u32 %v1626, %v1629
        %v1632 = vmul.u32 %v1627, %v1628
        %v1633 = vmul.u32 %v1627, %v1629
        %v1634 = vshll.u32 %v1631, 16
        %v1635 = vshrl.u32 %v1631, 16
        %v1636 = vshll.u32 %v1632, 16
        %v1637 = vshrl.u32 %v1632, 16
        %vm1638 = vc.u32 %v1630, %v1634
        %v1639 = vsel %vm1638, 1, 0
        %v1640 = vadd.s32 %v1630, %v1634
        %v1641 = vadd.s32 %v1633, %v1639
        %vm1642 = vc.u32 %v1640, %v1636
        %v1643 = vsel %vm1642, 1, 0
        %v1644 = vadd.s32 %v1640, %v1636
        %v1645 = vadd.s32 %v1641, %v1643
        %v1646 = vadd.s32 %v1645, %v1635
        %v1647 = vadd.s32 %v1646, %v1637
        %v1648 = vmul.u32 %v1603, %v1594
        %v1649 = vadd.s32 %v1625, %v1644
        %vm1650 = vc.u32 %v1625, %v1644
        %v1651 = vadd.s32 %v1647, 1
        %v1652 = vsel %vm1650, %v1651, %v1647
        %v1653 = vadd.s32 %v1648, %v1652
        %v1654 = vadd.s32 %v1653, 536870912
        %v1655 = vshrl.u32 %v1654, 30
        %v1656 = vshll.u32 %v1655, 30
        %v1657 = vsub.s32 %v1653, %v1656
        %vm1658 = vcmp.lt.s32.totalorder %v1657, 0
        %v1659 = vsub.s32 0, %v1657
        %v1660 = vsel %vm1658, %v1659, %v1657
        %v1661 = vclz %v1660
        %v1662 = vsub.s32 %v1661, 2
        %vm1663 = vcmp.gt.s32.totalorder 0, %v1662
        %v1664 = vsel %vm1663, 0, %v1662
        %v1665 = vsub.s32 32, %v1664
        %v1666 = vshll.u32 %v1657, %v1664
        %v1667 = vshrl.u32 %v1649, %v1665
        %v1668 = vor.u32 %v1666, %v1667
        %v1669 = vsub.s32 4294967266, %v1664
        %v1670 = vadd.s32 %v1669, 127
        %v1671 = vshll.u32 %v1670, 23
        %v1672 = vor.u32 4788187, %v1671
        %v1673 = vand.u32 2147483647, %v1672
        %v1675 = vcvt.s32.f32 %v1668
        %v1676 = vmul.f32 %v1675, %v1673
        %v1677 = vxor.u32 %v1676, 2147483648
        %v1678 = vsel %vm1557, %v1677, %v1676
        %v1679 = vsub.s32 4, %v1655
        %v1680 = vsel %vm1557, %v1679, %v1655
        %v1681 = vsel %vm1556, %v561, %v1678
        %v1682 = vsel %vm1556, 0, %v1680
        %v1683 = vmul.f32 %v1681, %v1681
        %v1684 = vmul.f32 %v1683, -0.001358992
        %v1685 = vadd.f32 %v1684, 0.041655596
        %v1686 = vmul.f32 %v1683, %v1685
        %v1687 = vadd.f32 %v1686, -0.4999988
        %v1688 = vmul.f32 %v1683, %v1687
        %v1689 = vadd.f32 1.0, %v1688
        %v1690 = vmul.f32 %v1681, %v1681
        %v1691 = vmul.f32 %v1690, -0.00019511016
        %v1692 = vadd.f32 %v1691, 0.008332121
        %v1693 = vmul.f32 %v1690, %v1692
        %v1694 = vadd.f32 %v1693, -0.16666654
        %v1695 = vmul.f32 %v1690, %v1694
        %v1696 = vadd.f32 %v1695, 1.0
        %v1697 = vmul.f32 %v1696, %v1681
        %vm1698 = vweird.f32 %v561
        %v1699 = vadd.s32 %v1682, 3
        %v1700 = vand.u32 %v1699, 3
        %vm1701 = vcmp.lt.s32.totalorder %v1700, 2
        %vm1702 = vcmp.eq.s32.totalorder %v1700, 0
        %v1703 = vxor.u32 %v1697, 2147483648
        %v1704 = vsel %vm1702, %v1689, %v1703
        %vm1705 = vcmp.eq.s32.totalorder %v1700, 2
        %v1706 = vxor.u32 %v1689, 2147483648
        %v1707 = vsel %vm1705, %v1706, %v1697
        %v1708 = vsel %vm1701, %v1704, %v1707
        %v1709 = vsel %vm1698, nan, %v1708
        %v1710 = vand.u32 2147483647, %v602
        %vm1711 = vcmp.le.f32.partialorder %v1710, 0.7853982
        %vm1712 = vcmp.lt.s32.totalorder %v602, 0
        %v1713 = vand.u32 %v602, 2139095040
        %v1714 = vshrl.u32 %v1713, 23
        %v1715 = vsub.s32 %v1714, 127
        %v1716 = vand.u32 2147483647, %v602
        %v1717 = vand.u32 %v1716, 8388607
        %v1718 = vor.u32 %v1717, 8388608
        %v1719 = vsub.s32 0, %v1718
        %v1720 = vadd.s32 %v1715, 1
        %vm1721 = vcmp.gt.s32.totalorder %v1720, 0
        %v1722 = vsel %vm1721, %v1720, 0
        %v1723 = vshrl.u32 %v1722, 5
        %v1724 = vand.u32 %v1722, 31
        %v1725 = vsub.s32 32, %v1724
        %v1726 = vshrl.u32 683565275, %v1725
        %v1727 = vshll.u32 683565275, %v1724
        %v1728 = vshrl.u32 2475754826, %v1725
        %v1729 = vor.u32 %v1727, %v1728
        %v1730 = vshll.u32 2475754826, %v1724
        %v1731 = vshrl.u32 2131351028, %v1725
        %v1732 = vor.u32 %v1730, %v1731
        %v1733 = vshll.u32 2131351028, %v1724
        %v1734 = vshrl.u32 2102212464, %v1725
        %v1735 = vor.u32 %v1733, %v1734
        %v1736 = vshll.u32 2102212464, %v1724
        %v1737 = vshrl.u32 920167782, %v1725
        %v1738 = vor.u32 %v1736, %v1737
        %v1739 = vshll.u32 920167782, %v1724
        %v1740 = vshrl.u32 1326507024, %v1725
        %v1741 = vor.u32 %v1739, %v1740
        %vm1742 = vcmp.lt.s32.totalorder %v1723, 1
        %vm1743 = vcmp.lt.s32.totalorder %v1723, 2
        %vm1744 = vcmp.lt.s32.totalorder %v1723, 3
        %vm1745 = vcmp.lt.s32.totalorder %v1723, 4
        %v1746 = vsel %vm1742, %v1726, %v1729
        %v1747 = vsel %vm1745, %v1735, 2102212464
        %v1748 = vsel %vm1744, %v1732, %v1747
        %v1749 = vsel %vm1743, %v1746, %v1748
        %v1750 = vsel %vm1742, %v1729, %v1732
        %v1751 = vsel %vm1745, %v1738, 920167782
        %v1752 = vsel %vm1744, %v1735, %v1751
        %v1753 = vsel %vm1743, %v1750, %v1752
        %v1754 = vsel %vm1742, %v1732, %v1735
        %v1755 = vsel %vm1745, %v1741, 1326507024
        %v1756 = vsel %vm1744, %v1738, %v1755
        %v1757 = vsel %vm1743, %v1754, %v1756
        %v1758 = vshll.u32 %v1718, 8
        %v1759 = vand.u32 %v1758, 65535
        %v1760 = vshrl.u32 %v1758, 16
        %v1761 = vand.u32 %v1757, 65535
        %v1762 = vshrl.u32 %v1757, 16
        %v1763 = vmul.u32 %v1759, %v1761
        %v1764 = vmul.u32 %v1759, %v1762
        %v1765 = vmul.u32 %v1760, %v1761
        %v1766 = vmul.u32 %v1760, %v1762
        %v1767 = vshll.u32 %v1764, 16
        %v1768 = vshrl.u32 %v1764, 16
        %v1769 = vshll.u32 %v1765, 16
        %v1770 = vshrl.u32 %v1765, 16
        %vm1771 = vc.u32 %v1763, %v1767
        %v1772 = vsel %vm1771, 1, 0
        %v1773 = vadd.s32 %v1763, %v1767
        %v1774 = vadd.s32 %v1766, %v1772
        %vm1775 = vc.u32 %v1773, %v1769
        %v1776 = vsel %vm1775, 1, 0
        %v1777 = vadd.s32 %v1773, %v1769
        %v1778 = vadd.s32 %v1774, %v1776
        %v1779 = vadd.s32 %v1778, %v1768
        %v1780 = vadd.s32 %v1779, %v1770
        %v1781 = vand.u32 %v1758, 65535
        %v1782 = vshrl.u32 %v1758, 16
        %v1783 = vand.u32 %v1753, 65535
        %v1784 = vshrl.u32 %v1753, 16
        %v1785 = vmul.u32 %v1781, %v1783
        %v1786 = vmul.u32 %v1781, %v1784
        %v1787 = vmul.u32 %v1782, %v1783
        %v1788 = vmul.u32 %v1782, %v1784
        %v1789 = vshll.u32 %v1786, 16
        %v1790 = vshrl.u32 %v1786, 16
        %v1791 = vshll.u32 %v1787, 16
        %v1792 = vshrl.u32 %v1787, 16
        %vm1793 = vc.u32 %v1785, %v1789
        %v1794 = vsel %vm1793, 1, 0
        %v1795 = vadd.s32 %v1785, %v1789
        %v1796 = vadd.s32 %v1788, %v1794
        %vm1797 = vc.u32 %v1795, %v1791
        %v1798 = vsel %vm1797, 1, 0
        %v1799 = vadd.s32 %v1795, %v1791
        %v1800 = vadd.s32 %v1796, %v1798
        %v1801 = vadd.s32 %v1800, %v1790
        %v1802 = vadd.s32 %v1801, %v1792
        %v1803 = vmul.u32 %v1758, %v1749
        %v1804 = vadd.s32 %v1780, %v1799
        %vm1805 = vc.u32 %v1780, %v1799
        %v1806 = vadd.s32 %v1802, 1
        %v1807 = vsel %vm1805, %v1806, %v1802
        %v1808 = vadd.s32 %v1803, %v1807
        %v1809 = vadd.s32 %v1808, 536870912
        %v1810 = vshrl.u32 %v1809, 30
        %v1811 = vshll.u32 %v1810, 30
        %v1812 = vsub.s32 %v1808, %v1811
        %vm1813 = vcmp.lt.s32.totalorder %v1812, 0
        %v1814 = vsub.s32 0, %v1812
        %v1815 = vsel %vm1813, %v1814, %v1812
        %v1816 = vclz %v1815
        %v1817 = vsub.s32 %v1816, 2
        %vm1818 = vcmp.gt.s32.totalorder 0, %v1817
        %v1819 = vsel %vm1818, 0, %v1817
        %v1820 = vsub.s32 32, %v1819
        %v1821 = vshll.u32 %v1812, %v1819
        %v1822 = vshrl.u32 %v1804, %v1820
        %v1823 = vor.u32 %v1821, %v1822
        %v1824 = vsub.s32 4294967266, %v1819
        %v1825 = vadd.s32 %v1824, 127
        %v1826 = vshll.u32 %v1825, 23
        %v1827 = vor.u32 4788187, %v1826
        %v1828 = vand.u32 2147483647, %v1827
        %v1830 = vcvt.s32.f32 %v1823
        %v1831 = vmul.f32 %v1830, %v1828
        %v1832 = vxor.u32 %v1831, 2147483648
        %v1833 = vsel %vm1712, %v1832, %v1831
        %v1834 = vsub.s32 4, %v1810
        %v1835 = vsel %vm1712, %v1834, %v1810
        %v1836 = vsel %vm1711, %v602, %v1833
        %v1837 = vsel %vm1711, 0, %v1835
        %v1838 = vmul.f32 %v1836, %v1836
        %v1839 = vmul.f32 %v1838, -0.001358992
        %v1840 = vadd.f32 %v1839, 0.041655596
        %v1841 = vmul.f32 %v1838, %v1840
        %v1842 = vadd.f32 %v1841, -0.4999988
        %v1843 = vmul.f32 %v1838, %v1842
        %v1844 = vadd.f32 1.0, %v1843
        %v1845 = vmul.f32 %v1836, %v1836
        %v1846 = vmul.f32 %v1845, -0.00019511016
        %v1847 = vadd.f32 %v1846, 0.008332121
        %v1848 = vmul.f32 %v1845, %v1847
        %v1849 = vadd.f32 %v1848, -0.16666654
        %v1850 = vmul.f32 %v1845, %v1849
        %v1851 = vadd.f32 %v1850, 1.0
        %v1852 = vmul.f32 %v1851, %v1836
        %vm1853 = vweird.f32 %v602
        %v1854 = vadd.s32 %v1837, 3
        %v1855 = vand.u32 %v1854, 3
        %vm1856 = vcmp.lt.s32.totalorder %v1855, 2
        %vm1857 = vcmp.eq.s32.totalorder %v1855, 0
        %v1858 = vxor.u32 %v1852, 2147483648
        %v1859 = vsel %vm1857, %v1844, %v1858
        %vm1860 = vcmp.eq.s32.totalorder %v1855, 2
        %v1861 = vxor.u32 %v1844, 2147483648
        %v1862 = vsel %vm1860, %v1861, %v1852
        %v1863 = vsel %vm1856, %v1859, %v1862
        %v1864 = vsel %vm1853, nan, %v1863
        %v1865 = vand.u32 2147483647, %v318
        %vm1866 = vcmp.le.f32.partialorder %v1865, 0.7853982
        %vm1867 = vcmp.lt.s32.totalorder %v318, 0
        %v1868 = vand.u32 %v318, 2139095040
        %v1869 = vshrl.u32 %v1868, 23
        %v1870 = vsub.s32 %v1869, 127
        %v1871 = vand.u32 2147483647, %v318
        %v1872 = vand.u32 %v1871, 8388607
        %v1873 = vor.u32 %v1872, 8388608
        %v1874 = vsub.s32 0, %v1873
        %v1875 = vadd.s32 %v1870, 1
        %vm1876 = vcmp.gt.s32.totalorder %v1875, 0
        %v1877 = vsel %vm1876, %v1875, 0
        %v1878 = vshrl.u32 %v1877, 5
        %v1879 = vand.u32 %v1877, 31
        %v1880 = vsub.s32 32, %v1879
        %v1881 = vshrl.u32 683565275, %v1880
        %v1882 = vshll.u32 683565275, %v1879
        %v1883 = vshrl.u32 2475754826, %v1880
        %v1884 = vor.u32 %v1882, %v1883
        %v1885 = vshll.u32 2475754826, %v1879
        %v1886 = vshrl.u32 2131351028, %v1880
        %v1887 = vor.u32 %v1885, %v1886
        %v1888 = vshll.u32 2131351028, %v1879
        %v1889 = vshrl.u32 2102212464, %v1880
        %v1890 = vor.u32 %v1888, %v1889
        %v1891 = vshll.u32 2102212464, %v1879
        %v1892 = vshrl.u32 920167782, %v1880
        %v1893 = vor.u32 %v1891, %v1892
        %v1894 = vshll.u32 920167782, %v1879
        %v1895 = vshrl.u32 1326507024, %v1880
        %v1896 = vor.u32 %v1894, %v1895
        %vm1897 = vcmp.lt.s32.totalorder %v1878, 1
        %vm1898 = vcmp.lt.s32.totalorder %v1878, 2
        %vm1899 = vcmp.lt.s32.totalorder %v1878, 3
        %vm1900 = vcmp.lt.s32.totalorder %v1878, 4
        %v1901 = vsel %vm1897, %v1881, %v1884
        %v1902 = vsel %vm1900, %v1890, 2102212464
        %v1903 = vsel %vm1899, %v1887, %v1902
        %v1904 = vsel %vm1898, %v1901, %v1903
        %v1905 = vsel %vm1897, %v1884, %v1887
        %v1906 = vsel %vm1900, %v1893, 920167782
        %v1907 = vsel %vm1899, %v1890, %v1906
        %v1908 = vsel %vm1898, %v1905, %v1907
        %v1909 = vsel %vm1897, %v1887, %v1890
        %v1910 = vsel %vm1900, %v1896, 1326507024
        %v1911 = vsel %vm1899, %v1893, %v1910
        %v1912 = vsel %vm1898, %v1909, %v1911
        %v1913 = vshll.u32 %v1873, 8
        %v1914 = vand.u32 %v1913, 65535
        %v1915 = vshrl.u32 %v1913, 16
        %v1916 = vand.u32 %v1912, 65535
        %v1917 = vshrl.u32 %v1912, 16
        %v1918 = vmul.u32 %v1914, %v1916
        %v1919 = vmul.u32 %v1914, %v1917
        %v1920 = vmul.u32 %v1915, %v1916
        %v1921 = vmul.u32 %v1915, %v1917
        %v1922 = vshll.u32 %v1919, 16
        %v1923 = vshrl.u32 %v1919, 16
        %v1924 = vshll.u32 %v1920, 16
        %v1925 = vshrl.u32 %v1920, 16
        %vm1926 = vc.u32 %v1918, %v1922
        %v1927 = vsel %vm1926, 1, 0
        %v1928 = vadd.s32 %v1918, %v1922
        %v1929 = vadd.s32 %v1921, %v1927
        %vm1930 = vc.u32 %v1928, %v1924
        %v1931 = vsel %vm1930, 1, 0
        %v1932 = vadd.s32 %v1928, %v1924
        %v1933 = vadd.s32 %v1929, %v1931
        %v1934 = vadd.s32 %v1933, %v1923
        %v1935 = vadd.s32 %v1934, %v1925
        %v1936 = vand.u32 %v1913, 65535
        %v1937 = vshrl.u32 %v1913, 16
        %v1938 = vand.u32 %v1908, 65535
        %v1939 = vshrl.u32 %v1908, 16
        %v1940 = vmul.u32 %v1936, %v1938
        %v1941 = vmul.u32 %v1936, %v1939
        %v1942 = vmul.u32 %v1937, %v1938
        %v1943 = vmul.u32 %v1937, %v1939
        %v1944 = vshll.u32 %v1941, 16
        %v1945 = vshrl.u32 %v1941, 16
        %v1946 = vshll.u32 %v1942, 16
        %v1947 = vshrl.u32 %v1942, 16
        %vm1948 = vc.u32 %v1940, %v1944
        %v1949 = vsel %vm1948, 1, 0
        %v1950 = vadd.s32 %v1940, %v1944
        %v1951 = vadd.s32 %v1943, %v1949
        %vm1952 = vc.u32 %v1950, %v1946
        %v1953 = vsel %vm1952, 1, 0
        %v1954 = vadd.s32 %v1950, %v1946
        %v1955 = vadd.s32 %v1951, %v1953
        %v1956 = vadd.s32 %v1955, %v1945
        %v1957 = vadd.s32 %v1956, %v1947
        %v1958 = vmul.u32 %v1913, %v1904
        %v1959 = vadd.s32 %v1935, %v1954
        %vm1960 = vc.u32 %v1935, %v1954
        %v1961 = vadd.s32 %v1957, 1
        %v1962 = vsel %vm1960, %v1961, %v1957
        %v1963 = vadd.s32 %v1958, %v1962
        %v1964 = vadd.s32 %v1963, 536870912
        %v1965 = vshrl.u32 %v1964, 30
        %v1966 = vshll.u32 %v1965, 30
        %v1967 = vsub.s32 %v1963, %v1966
        %vm1968 = vcmp.lt.s32.totalorder %v1967, 0
        %v1969 = vsub.s32 0, %v1967
        %v1970 = vsel %vm1968, %v1969, %v1967
        %v1971 = vclz %v1970
        %v1972 = vsub.s32 %v1971, 2
        %vm1973 = vcmp.gt.s32.totalorder 0, %v1972
        %v1974 = vsel %vm1973, 0, %v1972
        %v1975 = vsub.s32 32, %v1974
        %v1976 = vshll.u32 %v1967, %v1974
        %v1977 = vshrl.u32 %v1959, %v1975
        %v1978 = vor.u32 %v1976, %v1977
        %v1979 = vsub.s32 4294967266, %v1974
        %v1980 = vadd.s32 %v1979, 127
        %v1981 = vshll.u32 %v1980, 23
        %v1982 = vor.u32 4788187, %v1981
        %v1983 = vand.u32 2147483647, %v1982
        %v1985 = vcvt.s32.f32 %v1978
        %v1986 = vmul.f32 %v1985, %v1983
        %v1987 = vxor.u32 %v1986, 2147483648
        %v1988 = vsel %vm1867, %v1987, %v1986
        %v1989 = vsub.s32 4, %v1965
        %v1990 = vsel %vm1867, %v1989, %v1965
        %v1991 = vsel %vm1866, %v318, %v1988
        %v1992 = vsel %vm1866, 0, %v1990
        %v1993 = vmul.f32 %v1991, %v1991
        %v1994 = vmul.f32 %v1993, -0.001358992
        %v1995 = vadd.f32 %v1994, 0.041655596
        %v1996 = vmul.f32 %v1993, %v1995
        %v1997 = vadd.f32 %v1996, -0.4999988
        %v1998 = vmul.f32 %v1993, %v1997
        %v1999 = vadd.f32 1.0, %v1998
        %v2000 = vmul.f32 %v1991, %v1991
        %v2001 = vmul.f32 %v2000, -0.00019511016
        %v2002 = vadd.f32 %v2001, 0.008332121
        %v2003 = vmul.f32 %v2000, %v2002
        %v2004 = vadd.f32 %v2003, -0.16666654
        %v2005 = vmul.f32 %v2000, %v2004
        %v2006 = vadd.f32 %v2005, 1.0
        %v2007 = vmul.f32 %v2006, %v1991
        %vm2008 = vweird.f32 %v318
        %v2009 = vadd.s32 %v1992, 3
        %v2010 = vand.u32 %v2009, 3
        %vm2011 = vcmp.lt.s32.totalorder %v2010, 2
        %vm2012 = vcmp.eq.s32.totalorder %v2010, 0
        %v2013 = vxor.u32 %v2007, 2147483648
        %v2014 = vsel %vm2012, %v1999, %v2013
        %vm2015 = vcmp.eq.s32.totalorder %v2010, 2
        %v2016 = vxor.u32 %v1999, 2147483648
        %v2017 = vsel %vm2015, %v2016, %v2007
        %v2018 = vsel %vm2011, %v2014, %v2017
        %v2019 = vsel %vm2008, nan, %v2018
        %v2020 = vand.u32 2147483647, %v359
        %vm2021 = vcmp.le.f32.partialorder %v2020, 0.7853982
        %vm2022 = vcmp.lt.s32.totalorder %v359, 0
        %v2023 = vand.u32 %v359, 2139095040
        %v2024 = vshrl.u32 %v2023, 23
        %v2025 = vsub.s32 %v2024, 127
        %v2026 = vand.u32 2147483647, %v359
        %v2027 = vand.u32 %v2026, 8388607
        %v2028 = vor.u32 %v2027, 8388608
        %v2029 = vsub.s32 0, %v2028
        %v2030 = vadd.s32 %v2025, 1
        %vm2031 = vcmp.gt.s32.totalorder %v2030, 0
        %v2032 = vsel %vm2031, %v2030, 0
        %v2033 = vshrl.u32 %v2032, 5
        %v2034 = vand.u32 %v2032, 31
        %v2035 = vsub.s32 32, %v2034
        %v2036 = vshrl.u32 683565275, %v2035
        %v2037 = vshll.u32 683565275, %v2034
        %v2038 = vshrl.u32 2475754826, %v2035
        %v2039 = vor.u32 %v2037, %v2038
        %v2040 = vshll.u32 2475754826, %v2034
        %v2041 = vshrl.u32 2131351028, %v2035
        %v2042 = vor.u32 %v2040, %v2041
        %v2043 = vshll.u32 2131351028, %v2034
        %v2044 = vshrl.u32 2102212464, %v2035
        %v2045 = vor.u32 %v2043, %v2044
        %v2046 = vshll.u32 2102212464, %v2034
        %v2047 = vshrl.u32 920167782, %v2035
        %v2048 = vor.u32 %v2046, %v2047
        %v2049 = vshll.u32 920167782, %v2034
        %v2050 = vshrl.u32 1326507024, %v2035
        %v2051 = vor.u32 %v2049, %v2050
        %vm2052 = vcmp.lt.s32.totalorder %v2033, 1
        %vm2053 = vcmp.lt.s32.totalorder %v2033, 2
        %vm2054 = vcmp.lt.s32.totalorder %v2033, 3
        %vm2055 = vcmp.lt.s32.totalorder %v2033, 4
        %v2056 = vsel %vm2052, %v2036, %v2039
        %v2057 = vsel %vm2055, %v2045, 2102212464
        %v2058 = vsel %vm2054, %v2042, %v2057
        %v2059 = vsel %vm2053, %v2056, %v2058
        %v2060 = vsel %vm2052, %v2039, %v2042
        %v2061 = vsel %vm2055, %v2048, 920167782
        %v2062 = vsel %vm2054, %v2045, %v2061
        %v2063 = vsel %vm2053, %v2060, %v2062
        %v2064 = vsel %vm2052, %v2042, %v2045
        %v2065 = vsel %vm2055, %v2051, 1326507024
        %v2066 = vsel %vm2054, %v2048, %v2065
        %v2067 = vsel %vm2053, %v2064, %v2066
        %v2068 = vshll.u32 %v2028, 8
        %v2069 = vand.u32 %v2068, 65535
        %v2070 = vshrl.u32 %v2068, 16
        %v2071 = vand.u32 %v2067, 65535
        %v2072 = vshrl.u32 %v2067, 16
        %v2073 = vmul.u32 %v2069, %v2071
        %v2074 = vmul.u32 %v2069, %v2072
        %v2075 = vmul.u32 %v2070, %v2071
        %v2076 = vmul.u32 %v2070, %v2072
        %v2077 = vshll.u32 %v2074, 16
        %v2078 = vshrl.u32 %v2074, 16
        %v2079 = vshll.u32 %v2075, 16
        %v2080 = vshrl.u32 %v2075, 16
        %vm2081 = vc.u32 %v2073, %v2077
        %v2082 = vsel %vm2081, 1, 0
        %v2083 = vadd.s32 %v2073, %v2077
        %v2084 = vadd.s32 %v2076, %v2082
        %vm2085 = vc.u32 %v2083, %v2079
        %v2086 = vsel %vm2085, 1, 0
        %v2087 = vadd.s32 %v2083, %v2079
        %v2088 = vadd.s32 %v2084, %v2086
        %v2089 = vadd.s32 %v2088, %v2078
        %v2090 = vadd.s32 %v2089, %v2080
        %v2091 = vand.u32 %v2068, 65535
        %v2092 = vshrl.u32 %v2068, 16
        %v2093 = vand.u32 %v2063, 65535
        %v2094 = vshrl.u32 %v2063, 16
        %v2095 = vmul.u32 %v2091, %v2093
        %v2096 = vmul.u32 %v2091, %v2094
        %v2097 = vmul.u32 %v2092, %v2093
        %v2098 = vmul.u32 %v2092, %v2094
        %v2099 = vshll.u32 %v2096, 16
        %v2100 = vshrl.u32 %v2096, 16
        %v2101 = vshll.u32 %v2097, 16
        %v2102 = vshrl.u32 %v2097, 16
        %vm2103 = vc.u32 %v2095, %v2099
        %v2104 = vsel %vm2103, 1, 0
        %v2105 = vadd.s32 %v2095, %v2099
        %v2106 = vadd.s32 %v2098, %v2104
        %vm2107 = vc.u32 %v2105, %v2101
        %v2108 = vsel %vm2107, 1, 0
        %v2109 = vadd.s32 %v2105, %v2101
        %v2110 = vadd.s32 %v2106, %v2108
        %v2111 = vadd.s32 %v2110, %v2100
        %v2112 = vadd.s32 %v2111, %v2102
        %v2113 = vmul.u32 %v2068, %v2059
        %v2114 = vadd.s32 %v2090, %v2109
        %vm2115 = vc.u32 %v2090, %v2109
        %v2116 = vadd.s32 %v2112, 1
        %v2117 = vsel %vm2115, %v2116, %v2112
        %v2118 = vadd.s32 %v2113, %v2117
        %v2119 = vadd.s32 %v2118, 536870912
        %v2120 = vshrl.u32 %v2119, 30
        %v2121 = vshll.u32 %v2120, 30
        %v2122 = vsub.s32 %v2118, %v2121
        %vm2123 = vcmp.lt.s32.totalorder %v2122, 0
        %v2124 = vsub.s32 0, %v2122
        %v2125 = vsel %vm2123, %v2124, %v2122
        %v2126 = vclz %v2125
        %v2127 = vsub.s32 %v2126, 2
        %vm2128 = vcmp.gt.s32.totalorder 0, %v2127
        %v2129 = vsel %vm2128, 0, %v2127
        %v2130 = vsub.s32 32, %v2129
        %v2131 = vshll.u32 %v2122, %v2129
        %v2132 = vshrl.u32 %v2114, %v2130
        %v2133 = vor.u32 %v2131, %v2132
        %v2134 = vsub.s32 4294967266, %v2129
        %v2135 = vadd.s32 %v2134, 127
        %v2136 = vshll.u32 %v2135, 23
        %v2137 = vor.u32 4788187, %v2136
        %v2138 = vand.u32 2147483647, %v2137
        %v2140 = vcvt.s32.f32 %v2133
        %v2141 = vmul.f32 %v2140, %v2138
        %v2142 = vxor.u32 %v2141, 2147483648
        %v2143 = vsel %vm2022, %v2142, %v2141
        %v2144 = vsub.s32 4, %v2120
        %v2145 = vsel %vm2022, %v2144, %v2120
        %v2146 = vsel %vm2021, %v359, %v2143
        %v2147 = vsel %vm2021, 0, %v2145
        %v2148 = vmul.f32 %v2146, %v2146
        %v2149 = vmul.f32 %v2148, -0.001358992
        %v2150 = vadd.f32 %v2149, 0.041655596
        %v2151 = vmul.f32 %v2148, %v2150
        %v2152 = vadd.f32 %v2151, -0.4999988
        %v2153 = vmul.f32 %v2148, %v2152
        %v2154 = vadd.f32 1.0, %v2153
        %v2155 = vmul.f32 %v2146, %v2146
        %v2156 = vmul.f32 %v2155, -0.00019511016
        %v2157 = vadd.f32 %v2156, 0.008332121
        %v2158 = vmul.f32 %v2155, %v2157
        %v2159 = vadd.f32 %v2158, -0.16666654
        %v2160 = vmul.f32 %v2155, %v2159
        %v2161 = vadd.f32 %v2160, 1.0
        %v2162 = vmul.f32 %v2161, %v2146
        %vm2163 = vweird.f32 %v359
        %v2164 = vadd.s32 %v2147, 3
        %v2165 = vand.u32 %v2164, 3
        %vm2166 = vcmp.lt.s32.totalorder %v2165, 2
        %vm2167 = vcmp.eq.s32.totalorder %v2165, 0
        %v2168 = vxor.u32 %v2162, 2147483648
        %v2169 = vsel %vm2167, %v2154, %v2168
        %vm2170 = vcmp.eq.s32.totalorder %v2165, 2
        %v2171 = vxor.u32 %v2154, 2147483648
        %v2172 = vsel %vm2170, %v2171, %v2162
        %v2173 = vsel %vm2166, %v2169, %v2172
        %v2174 = vsel %vm2163, nan, %v2173
        %v2175 = vand.u32 2147483647, %v400
        %vm2176 = vcmp.le.f32.partialorder %v2175, 0.7853982
        %vm2177 = vcmp.lt.s32.totalorder %v400, 0
        %v2178 = vand.u32 %v400, 2139095040
        %v2179 = vshrl.u32 %v2178, 23
        %v2180 = vsub.s32 %v2179, 127
        %v2181 = vand.u32 2147483647, %v400
        %v2182 = vand.u32 %v2181, 8388607
        %v2183 = vor.u32 %v2182, 8388608
        %v2184 = vsub.s32 0, %v2183
        %v2185 = vadd.s32 %v2180, 1
        %vm2186 = vcmp.gt.s32.totalorder %v2185, 0
        %v2187 = vsel %vm2186, %v2185, 0
        %v2188 = vshrl.u32 %v2187, 5
        %v2189 = vand.u32 %v2187, 31
        %v2190 = vsub.s32 32, %v2189
        %v2191 = vshrl.u32 683565275, %v2190
        %v2192 = vshll.u32 683565275, %v2189
        %v2193 = vshrl.u32 2475754826, %v2190
        %v2194 = vor.u32 %v2192, %v2193
        %v2195 = vshll.u32 2475754826, %v2189
        %v2196 = vshrl.u32 2131351028, %v2190
        %v2197 = vor.u32 %v2195, %v2196
        %v2198 = vshll.u32 2131351028, %v2189
        %v2199 = vshrl.u32 2102212464, %v2190
        %v2200 = vor.u32 %v2198, %v2199
        %v2201 = vshll.u32 2102212464, %v2189
        %v2202 = vshrl.u32 920167782, %v2190
        %v2203 = vor.u32 %v2201, %v2202
        %v2204 = vshll.u32 920167782, %v2189
        %v2205 = vshrl.u32 1326507024, %v2190
        %v2206 = vor.u32 %v2204, %v2205
        %vm2207 = vcmp.lt.s32.totalorder %v2188, 1
        %vm2208 = vcmp.lt.s32.totalorder %v2188, 2
        %vm2209 = vcmp.lt.s32.totalorder %v2188, 3
        %vm2210 = vcmp.lt.s32.totalorder %v2188, 4
        %v2211 = vsel %vm2207, %v2191, %v2194
        %v2212 = vsel %vm2210, %v2200, 2102212464
        %v2213 = vsel %vm2209, %v2197, %v2212
        %v2214 = vsel %vm2208, %v2211, %v2213
        %v2215 = vsel %vm2207, %v2194, %v2197
        %v2216 = vsel %vm2210, %v2203, 920167782
        %v2217 = vsel %vm2209, %v2200, %v2216
        %v2218 = vsel %vm2208, %v2215, %v2217
        %v2219 = vsel %vm2207, %v2197, %v2200
        %v2220 = vsel %vm2210, %v2206, 1326507024
        %v2221 = vsel %vm2209, %v2203, %v2220
        %v2222 = vsel %vm2208, %v2219, %v2221
        %v2223 = vshll.u32 %v2183, 8
        %v2224 = vand.u32 %v2223, 65535
        %v2225 = vshrl.u32 %v2223, 16
        %v2226 = vand.u32 %v2222, 65535
        %v2227 = vshrl.u32 %v2222, 16
        %v2228 = vmul.u32 %v2224, %v2226
        %v2229 = vmul.u32 %v2224, %v2227
        %v2230 = vmul.u32 %v2225, %v2226
        %v2231 = vmul.u32 %v2225, %v2227
        %v2232 = vshll.u32 %v2229, 16
        %v2233 = vshrl.u32 %v2229, 16
        %v2234 = vshll.u32 %v2230, 16
        %v2235 = vshrl.u32 %v2230, 16
        %vm2236 = vc.u32 %v2228, %v2232
        %v2237 = vsel %vm2236, 1, 0
        %v2238 = vadd.s32 %v2228, %v2232
        %v2239 = vadd.s32 %v2231, %v2237
        %vm2240 = vc.u32 %v2238, %v2234
        %v2241 = vsel %vm2240, 1, 0
        %v2242 = vadd.s32 %v2238, %v2234
        %v2243 = vadd.s32 %v2239, %v2241
        %v2244 = vadd.s32 %v2243, %v2233
        %v2245 = vadd.s32 %v2244, %v2235
        %v2246 = vand.u32 %v2223, 65535
        %v2247 = vshrl.u32 %v2223, 16
        %v2248 = vand.u32 %v2218, 65535
        %v2249 = vshrl.u32 %v2218, 16
        %v2250 = vmul.u32 %v2246, %v2248
        %v2251 = vmul.u32 %v2246, %v2249
        %v2252 = vmul.u32 %v2247, %v2248
        %v2253 = vmul.u32 %v2247, %v2249
        %v2254 = vshll.u32 %v2251, 16
        %v2255 = vshrl.u32 %v2251, 16
        %v2256 = vshll.u32 %v2252, 16
        %v2257 = vshrl.u32 %v2252, 16
        %vm2258 = vc.u32 %v2250, %v2254
        %v2259 = vsel %vm2258, 1, 0
        %v2260 = vadd.s32 %v2250, %v2254
        %v2261 = vadd.s32 %v2253, %v2259
        %vm2262 = vc.u32 %v2260, %v2256
        %v2263 = vsel %vm2262, 1, 0
        %v2264 = vadd.s32 %v2260, %v2256
        %v2265 = vadd.s32 %v2261, %v2263
        %v2266 = vadd.s32 %v2265, %v2255
        %v2267 = vadd.s32 %v2266, %v2257
        %v2268 = vmul.u32 %v2223, %v2214
        %v2269 = vadd.s32 %v2245, %v2264
        %vm2270 = vc.u32 %v2245, %v2264
        %v2271 = vadd.s32 %v2267, 1
        %v2272 = vsel %vm2270, %v2271, %v2267
        %v2273 = vadd.s32 %v2268, %v2272
        %v2274 = vadd.s32 %v2273, 536870912
        %v2275 = vshrl.u32 %v2274, 30
        %v2276 = vshll.u32 %v2275, 30
        %v2277 = vsub.s32 %v2273, %v2276
        %vm2278 = vcmp.lt.s32.totalorder %v2277, 0
        %v2279 = vsub.s32 0, %v2277
        %v2280 = vsel %vm2278, %v2279, %v2277
        %v2281 = vclz %v2280
        %v2282 = vsub.s32 %v2281, 2
        %vm2283 = vcmp.gt.s32.totalorder 0, %v2282
        %v2284 = vsel %vm2283, 0, %v2282
        %v2285 = vsub.s32 32, %v2284
        %v2286 = vshll.u32 %v2277, %v2284
        %v2287 = vshrl.u32 %v2269, %v2285
        %v2288 = vor.u32 %v2286, %v2287
        %v2289 = vsub.s32 4294967266, %v2284
        %v2290 = vadd.s32 %v2289, 127
        %v2291 = vshll.u32 %v2290, 23
        %v2292 = vor.u32 4788187, %v2291
        %v2293 = vand.u32 2147483647, %v2292
        %v2295 = vcvt.s32.f32 %v2288
        %v2296 = vmul.f32 %v2295, %v2293
        %v2297 = vxor.u32 %v2296, 2147483648
        %v2298 = vsel %vm2177, %v2297, %v2296
        %v2299 = vsub.s32 4, %v2275
        %v2300 = vsel %vm2177, %v2299, %v2275
        %v2301 = vsel %vm2176, %v400, %v2298
        %v2302 = vsel %vm2176, 0, %v2300
        %v2303 = vmul.f32 %v2301, %v2301
        %v2304 = vmul.f32 %v2303, -0.001358992
        %v2305 = vadd.f32 %v2304, 0.041655596
        %v2306 = vmul.f32 %v2303, %v2305
        %v2307 = vadd.f32 %v2306, -0.4999988
        %v2308 = vmul.f32 %v2303, %v2307
        %v2309 = vadd.f32 1.0, %v2308
        %v2310 = vmul.f32 %v2301, %v2301
        %v2311 = vmul.f32 %v2310, -0.00019511016
        %v2312 = vadd.f32 %v2311, 0.008332121
        %v2313 = vmul.f32 %v2310, %v2312
        %v2314 = vadd.f32 %v2313, -0.16666654
        %v2315 = vmul.f32 %v2310, %v2314
        %v2316 = vadd.f32 %v2315, 1.0
        %v2317 = vmul.f32 %v2316, %v2301
        %vm2318 = vweird.f32 %v400
        %v2319 = vadd.s32 %v2302, 3
        %v2320 = vand.u32 %v2319, 3
        %vm2321 = vcmp.lt.s32.totalorder %v2320, 2
        %vm2322 = vcmp.eq.s32.totalorder %v2320, 0
        %v2323 = vxor.u32 %v2317, 2147483648
        %v2324 = vsel %vm2322, %v2309, %v2323
        %vm2325 = vcmp.eq.s32.totalorder %v2320, 2
        %v2326 = vxor.u32 %v2309, 2147483648
        %v2327 = vsel %vm2325, %v2326, %v2317
        %v2328 = vsel %vm2321, %v2324, %v2327
        %v2329 = vsel %vm2318, nan, %v2328
        %v2330 = vand.u32 2147483647, %v441
        %vm2331 = vcmp.le.f32.partialorder %v2330, 0.7853982
        %vm2332 = vcmp.lt.s32.totalorder %v441, 0
        %v2333 = vand.u32 %v441, 2139095040
        %v2334 = vshrl.u32 %v2333, 23
        %v2335 = vsub.s32 %v2334, 127
        %v2336 = vand.u32 2147483647, %v441
        %v2337 = vand.u32 %v2336, 8388607
        %v2338 = vor.u32 %v2337, 8388608
        %v2339 = vsub.s32 0, %v2338
        %v2340 = vadd.s32 %v2335, 1
        %vm2341 = vcmp.gt.s32.totalorder %v2340, 0
        %v2342 = vsel %vm2341, %v2340, 0
        %v2343 = vshrl.u32 %v2342, 5
        %v2344 = vand.u32 %v2342, 31
        %v2345 = vsub.s32 32, %v2344
        %v2346 = vshrl.u32 683565275, %v2345
        %v2347 = vshll.u32 683565275, %v2344
        %v2348 = vshrl.u32 2475754826, %v2345
        %v2349 = vor.u32 %v2347, %v2348
        %v2350 = vshll.u32 2475754826, %v2344
        %v2351 = vshrl.u32 2131351028, %v2345
        %v2352 = vor.u32 %v2350, %v2351
        %v2353 = vshll.u32 2131351028, %v2344
        %v2354 = vshrl.u32 2102212464, %v2345
        %v2355 = vor.u32 %v2353, %v2354
        %v2356 = vshll.u32 2102212464, %v2344
        %v2357 = vshrl.u32 920167782, %v2345
        %v2358 = vor.u32 %v2356, %v2357
        %v2359 = vshll.u32 920167782, %v2344
        %v2360 = vshrl.u32 1326507024, %v2345
        %v2361 = vor.u32 %v2359, %v2360
        %vm2362 = vcmp.lt.s32.totalorder %v2343, 1
        %vm2363 = vcmp.lt.s32.totalorder %v2343, 2
        %vm2364 = vcmp.lt.s32.totalorder %v2343, 3
        %vm2365 = vcmp.lt.s32.totalorder %v2343, 4
        %v2366 = vsel %vm2362, %v2346, %v2349
        %v2367 = vsel %vm2365, %v2355, 2102212464
        %v2368 = vsel %vm2364, %v2352, %v2367
        %v2369 = vsel %vm2363, %v2366, %v2368
        %v2370 = vsel %vm2362, %v2349, %v2352
        %v2371 = vsel %vm2365, %v2358, 920167782
        %v2372 = vsel %vm2364, %v2355, %v2371
        %v2373 = vsel %vm2363, %v2370, %v2372
        %v2374 = vsel %vm2362, %v2352, %v2355
        %v2375 = vsel %vm2365, %v2361, 1326507024
        %v2376 = vsel %vm2364, %v2358, %v2375
        %v2377 = vsel %vm2363, %v2374, %v2376
        %v2378 = vshll.u32 %v2338, 8
        %v2379 = vand.u32 %v2378, 65535
        %v2380 = vshrl.u32 %v2378, 16
        %v2381 = vand.u32 %v2377, 65535
        %v2382 = vshrl.u32 %v2377, 16
        %v2383 = vmul.u32 %v2379, %v2381
        %v2384 = vmul.u32 %v2379, %v2382
        %v2385 = vmul.u32 %v2380, %v2381
        %v2386 = vmul.u32 %v2380, %v2382
        %v2387 = vshll.u32 %v2384, 16
        %v2388 = vshrl.u32 %v2384, 16
        %v2389 = vshll.u32 %v2385, 16
        %v2390 = vshrl.u32 %v2385, 16
        %vm2391 = vc.u32 %v2383, %v2387
        %v2392 = vsel %vm2391, 1, 0
        %v2393 = vadd.s32 %v2383, %v2387
        %v2394 = vadd.s32 %v2386, %v2392
        %vm2395 = vc.u32 %v2393, %v2389
        %v2396 = vsel %vm2395, 1, 0
        %v2397 = vadd.s32 %v2393, %v2389
        %v2398 = vadd.s32 %v2394, %v2396
        %v2399 = vadd.s32 %v2398, %v2388
        %v2400 = vadd.s32 %v2399, %v2390
        %v2401 = vand.u32 %v2378, 65535
        %v2402 = vshrl.u32 %v2378, 16
        %v2403 = vand.u32 %v2373, 65535
        %v2404 = vshrl.u32 %v2373, 16
        %v2405 = vmul.u32 %v2401, %v2403
        %v2406 = vmul.u32 %v2401, %v2404
        %v2407 = vmul.u32 %v2402, %v2403
        %v2408 = vmul.u32 %v2402, %v2404
        %v2409 = vshll.u32 %v2406, 16
        %v2410 = vshrl.u32 %v2406, 16
        %v2411 = vshll.u32 %v2407, 16
        %v2412 = vshrl.u32 %v2407, 16
        %vm2413 = vc.u32 %v2405, %v2409
        %v2414 = vsel %vm2413, 1, 0
        %v2415 = vadd.s32 %v2405, %v2409
        %v2416 = vadd.s32 %v2408, %v2414
        %vm2417 = vc.u32 %v2415, %v2411
        %v2418 = vsel %vm2417, 1, 0
        %v2419 = vadd.s32 %v2415, %v2411
        %v2420 = vadd.s32 %v2416, %v2418
        %v2421 = vadd.s32 %v2420, %v2410
        %v2422 = vadd.s32 %v2421, %v2412
        %v2423 = vmul.u32 %v2378, %v2369
        %v2424 = vadd.s32 %v2400, %v2419
        %vm2425 = vc.u32 %v2400, %v2419
        %v2426 = vadd.s32 %v2422, 1
        %v2427 = vsel %vm2425, %v2426, %v2422
        %v2428 = vadd.s32 %v2423, %v2427
        %v2429 = vadd.s32 %v2428, 536870912
        %v2430 = vshrl.u32 %v2429, 30
        %v2431 = vshll.u32 %v2430, 30
        %v2432 = vsub.s32 %v2428, %v2431
        %vm2433 = vcmp.lt.s32.totalorder %v2432, 0
        %v2434 = vsub.s32 0, %v2432
        %v2435 = vsel %vm2433, %v2434, %v2432
        %v2436 = vclz %v2435
        %v2437 = vsub.s32 %v2436, 2
        %vm2438 = vcmp.gt.s32.totalorder 0, %v2437
        %v2439 = vsel %vm2438, 0, %v2437
        %v2440 = vsub.s32 32, %v2439
        %v2441 = vshll.u32 %v2432, %v2439
        %v2442 = vshrl.u32 %v2424, %v2440
        %v2443 = vor.u32 %v2441, %v2442
        %v2444 = vsub.s32 4294967266, %v2439
        %v2445 = vadd.s32 %v2444, 127
        %v2446 = vshll.u32 %v2445, 23
        %v2447 = vor.u32 4788187, %v2446
        %v2448 = vand.u32 2147483647, %v2447
        %v2450 = vcvt.s32.f32 %v2443
        %v2451 = vmul.f32 %v2450, %v2448
        %v2452 = vxor.u32 %v2451, 2147483648
        %v2453 = vsel %vm2332, %v2452, %v2451
        %v2454 = vsub.s32 4, %v2430
        %v2455 = vsel %vm2332, %v2454, %v2430
        %v2456 = vsel %vm2331, %v441, %v2453
        %v2457 = vsel %vm2331, 0, %v2455
        %v2458 = vmul.f32 %v2456, %v2456
        %v2459 = vmul.f32 %v2458, -0.001358992
        %v2460 = vadd.f32 %v2459, 0.041655596
        %v2461 = vmul.f32 %v2458, %v2460
        %v2462 = vadd.f32 %v2461, -0.4999988
        %v2463 = vmul.f32 %v2458, %v2462
        %v2464 = vadd.f32 1.0, %v2463
        %v2465 = vmul.f32 %v2456, %v2456
        %v2466 = vmul.f32 %v2465, -0.00019511016
        %v2467 = vadd.f32 %v2466, 0.008332121
        %v2468 = vmul.f32 %v2465, %v2467
        %v2469 = vadd.f32 %v2468, -0.16666654
        %v2470 = vmul.f32 %v2465, %v2469
        %v2471 = vadd.f32 %v2470, 1.0
        %v2472 = vmul.f32 %v2471, %v2456
        %vm2473 = vweird.f32 %v441
        %v2474 = vadd.s32 %v2457, 3
        %v2475 = vand.u32 %v2474, 3
        %vm2476 = vcmp.lt.s32.totalorder %v2475, 2
        %vm2477 = vcmp.eq.s32.totalorder %v2475, 0
        %v2478 = vxor.u32 %v2472, 2147483648
        %v2479 = vsel %vm2477, %v2464, %v2478
        %vm2480 = vcmp.eq.s32.totalorder %v2475, 2
        %v2481 = vxor.u32 %v2464, 2147483648
        %v2482 = vsel %vm2480, %v2481, %v2472
        %v2483 = vsel %vm2476, %v2479, %v2482
        %v2484 = vsel %vm2473, nan, %v2483
        %v2485 = vand.u32 2147483647, %v482
        %vm2486 = vcmp.le.f32.partialorder %v2485, 0.7853982
        %vm2487 = vcmp.lt.s32.totalorder %v482, 0
        %v2488 = vand.u32 %v482, 2139095040
        %v2489 = vshrl.u32 %v2488, 23
        %v2490 = vsub.s32 %v2489, 127
        %v2491 = vand.u32 2147483647, %v482
        %v2492 = vand.u32 %v2491, 8388607
        %v2493 = vor.u32 %v2492, 8388608
        %v2494 = vsub.s32 0, %v2493
        %v2495 = vadd.s32 %v2490, 1
        %vm2496 = vcmp.gt.s32.totalorder %v2495, 0
        %v2497 = vsel %vm2496, %v2495, 0
        %v2498 = vshrl.u32 %v2497, 5
        %v2499 = vand.u32 %v2497, 31
        %v2500 = vsub.s32 32, %v2499
        %v2501 = vshrl.u32 683565275, %v2500
        %v2502 = vshll.u32 683565275, %v2499
        %v2503 = vshrl.u32 2475754826, %v2500
        %v2504 = vor.u32 %v2502, %v2503
        %v2505 = vshll.u32 2475754826, %v2499
        %v2506 = vshrl.u32 2131351028, %v2500
        %v2507 = vor.u32 %v2505, %v2506
        %v2508 = vshll.u32 2131351028, %v2499
        %v2509 = vshrl.u32 2102212464, %v2500
        %v2510 = vor.u32 %v2508, %v2509
        %v2511 = vshll.u32 2102212464, %v2499
        %v2512 = vshrl.u32 920167782, %v2500
        %v2513 = vor.u32 %v2511, %v2512
        %v2514 = vshll.u32 920167782, %v2499
        %v2515 = vshrl.u32 1326507024, %v2500
        %v2516 = vor.u32 %v2514, %v2515
        %vm2517 = vcmp.lt.s32.totalorder %v2498, 1
        %vm2518 = vcmp.lt.s32.totalorder %v2498, 2
        %vm2519 = vcmp.lt.s32.totalorder %v2498, 3
        %vm2520 = vcmp.lt.s32.totalorder %v2498, 4
        %v2521 = vsel %vm2517, %v2501, %v2504
        %v2522 = vsel %vm2520, %v2510, 2102212464
        %v2523 = vsel %vm2519, %v2507, %v2522
        %v2524 = vsel %vm2518, %v2521, %v2523
        %v2525 = vsel %vm2517, %v2504, %v2507
        %v2526 = vsel %vm2520, %v2513, 920167782
        %v2527 = vsel %vm2519, %v2510, %v2526
        %v2528 = vsel %vm2518, %v2525, %v2527
        %v2529 = vsel %vm2517, %v2507, %v2510
        %v2530 = vsel %vm2520, %v2516, 1326507024
        %v2531 = vsel %vm2519, %v2513, %v2530
        %v2532 = vsel %vm2518, %v2529, %v2531
        %v2533 = vshll.u32 %v2493, 8
        %v2534 = vand.u32 %v2533, 65535
        %v2535 = vshrl.u32 %v2533, 16
        %v2536 = vand.u32 %v2532, 65535
        %v2537 = vshrl.u32 %v2532, 16
        %v2538 = vmul.u32 %v2534, %v2536
        %v2539 = vmul.u32 %v2534, %v2537
        %v2540 = vmul.u32 %v2535, %v2536
        %v2541 = vmul.u32 %v2535, %v2537
        %v2542 = vshll.u32 %v2539, 16
        %v2543 = vshrl.u32 %v2539, 16
        %v2544 = vshll.u32 %v2540, 16
        %v2545 = vshrl.u32 %v2540, 16
        %vm2546 = vc.u32 %v2538, %v2542
        %v2547 = vsel %vm2546, 1, 0
        %v2548 = vadd.s32 %v2538, %v2542
        %v2549 = vadd.s32 %v2541, %v2547
        %vm2550 = vc.u32 %v2548, %v2544
        %v2551 = vsel %vm2550, 1, 0
        %v2552 = vadd.s32 %v2548, %v2544
        %v2553 = vadd.s32 %v2549, %v2551
        %v2554 = vadd.s32 %v2553, %v2543
        %v2555 = vadd.s32 %v2554, %v2545
        %v2556 = vand.u32 %v2533, 65535
        %v2557 = vshrl.u32 %v2533, 16
        %v2558 = vand.u32 %v2528, 65535
        %v2559 = vshrl.u32 %v2528, 16
        %v2560 = vmul.u32 %v2556, %v2558
        %v2561 = vmul.u32 %v2556, %v2559
        %v2562 = vmul.u32 %v2557, %v2558
        %v2563 = vmul.u32 %v2557, %v2559
        %v2564 = vshll.u32 %v2561, 16
        %v2565 = vshrl.u32 %v2561, 16
        %v2566 = vshll.u32 %v2562, 16
        %v2567 = vshrl.u32 %v2562, 16
        %vm2568 = vc.u32 %v2560, %v2564
        %v2569 = vsel %vm2568, 1, 0
        %v2570 = vadd.s32 %v2560, %v2564
        %v2571 = vadd.s32 %v2563, %v2569
        %vm2572 = vc.u32 %v2570, %v2566
        %v2573 = vsel %vm2572, 1, 0
        %v2574 = vadd.s32 %v2570, %v2566
        %v2575 = vadd.s32 %v2571, %v2573
        %v2576 = vadd.s32 %v2575, %v2565
        %v2577 = vadd.s32 %v2576, %v2567
        %v2578 = vmul.u32 %v2533, %v2524
        %v2579 = vadd.s32 %v2555, %v2574
        %vm2580 = vc.u32 %v2555, %v2574
        %v2581 = vadd.s32 %v2577, 1
        %v2582 = vsel %vm2580, %v2581, %v2577
        %v2583 = vadd.s32 %v2578, %v2582
        %v2584 = vadd.s32 %v2583, 536870912
        %v2585 = vshrl.u32 %v2584, 30
        %v2586 = vshll.u32 %v2585, 30
        %v2587 = vsub.s32 %v2583, %v2586
        %vm2588 = vcmp.lt.s32.totalorder %v2587, 0
        %v2589 = vsub.s32 0, %v2587
        %v2590 = vsel %vm2588, %v2589, %v2587
        %v2591 = vclz %v2590
        %v2592 = vsub.s32 %v2591, 2
        %vm2593 = vcmp.gt.s32.totalorder 0, %v2592
        %v2594 = vsel %vm2593, 0, %v2592
        %v2595 = vsub.s32 32, %v2594
        %v2596 = vshll.u32 %v2587, %v2594
        %v2597 = vshrl.u32 %v2579, %v2595
        %v2598 = vor.u32 %v2596, %v2597
        %v2599 = vsub.s32 4294967266, %v2594
        %v2600 = vadd.s32 %v2599, 127
        %v2601 = vshll.u32 %v2600, 23
        %v2602 = vor.u32 4788187, %v2601
        %v2603 = vand.u32 2147483647, %v2602
        %v2605 = vcvt.s32.f32 %v2598
        %v2606 = vmul.f32 %v2605, %v2603
        %v2607 = vxor.u32 %v2606, 2147483648
        %v2608 = vsel %vm2487, %v2607, %v2606
        %v2609 = vsub.s32 4, %v2585
        %v2610 = vsel %vm2487, %v2609, %v2585
        %v2611 = vsel %vm2486, %v482, %v2608
        %v2612 = vsel %vm2486, 0, %v2610
        %v2613 = vmul.f32 %v2611, %v2611
        %v2614 = vmul.f32 %v2613, -0.001358992
        %v2615 = vadd.f32 %v2614, 0.041655596
        %v2616 = vmul.f32 %v2613, %v2615
        %v2617 = vadd.f32 %v2616, -0.4999988
        %v2618 = vmul.f32 %v2613, %v2617
        %v2619 = vadd.f32 1.0, %v2618
        %v2620 = vmul.f32 %v2611, %v2611
        %v2621 = vmul.f32 %v2620, -0.00019511016
        %v2622 = vadd.f32 %v2621, 0.008332121
        %v2623 = vmul.f32 %v2620, %v2622
        %v2624 = vadd.f32 %v2623, -0.16666654
        %v2625 = vmul.f32 %v2620, %v2624
        %v2626 = vadd.f32 %v2625, 1.0
        %v2627 = vmul.f32 %v2626, %v2611
        %vm2628 = vweird.f32 %v482
        %v2629 = vadd.s32 %v2612, 3
        %v2630 = vand.u32 %v2629, 3
        %vm2631 = vcmp.lt.s32.totalorder %v2630, 2
        %vm2632 = vcmp.eq.s32.totalorder %v2630, 0
        %v2633 = vxor.u32 %v2627, 2147483648
        %v2634 = vsel %vm2632, %v2619, %v2633
        %vm2635 = vcmp.eq.s32.totalorder %v2630, 2
        %v2636 = vxor.u32 %v2619, 2147483648
        %v2637 = vsel %vm2635, %v2636, %v2627
        %v2638 = vsel %vm2631, %v2634, %v2637
        %v2639 = vsel %vm2628, nan, %v2638
        %v2640 = vand.u32 2147483647, %v523
        %vm2641 = vcmp.le.f32.partialorder %v2640, 0.7853982
        %vm2642 = vcmp.lt.s32.totalorder %v523, 0
        %v2643 = vand.u32 %v523, 2139095040
        %v2644 = vshrl.u32 %v2643, 23
        %v2645 = vsub.s32 %v2644, 127
        %v2646 = vand.u32 2147483647, %v523
        %v2647 = vand.u32 %v2646, 8388607
        %v2648 = vor.u32 %v2647, 8388608
        %v2649 = vsub.s32 0, %v2648
        %v2650 = vadd.s32 %v2645, 1
        %vm2651 = vcmp.gt.s32.totalorder %v2650, 0
        %v2652 = vsel %vm2651, %v2650, 0
        %v2653 = vshrl.u32 %v2652, 5
        %v2654 = vand.u32 %v2652, 31
        %v2655 = vsub.s32 32, %v2654
        %v2656 = vshrl.u32 683565275, %v2655
        %v2657 = vshll.u32 683565275, %v2654
        %v2658 = vshrl.u32 2475754826, %v2655
        %v2659 = vor.u32 %v2657, %v2658
        %v2660 = vshll.u32 2475754826, %v2654
        %v2661 = vshrl.u32 2131351028, %v2655
        %v2662 = vor.u32 %v2660, %v2661
        %v2663 = vshll.u32 2131351028, %v2654
        %v2664 = vshrl.u32 2102212464, %v2655
        %v2665 = vor.u32 %v2663, %v2664
        %v2666 = vshll.u32 2102212464, %v2654
        %v2667 = vshrl.u32 920167782, %v2655
        %v2668 = vor.u32 %v2666, %v2667
        %v2669 = vshll.u32 920167782, %v2654
        %v2670 = vshrl.u32 1326507024, %v2655
        %v2671 = vor.u32 %v2669, %v2670
        %vm2672 = vcmp.lt.s32.totalorder %v2653, 1
        %vm2673 = vcmp.lt.s32.totalorder %v2653, 2
        %vm2674 = vcmp.lt.s32.totalorder %v2653, 3
        %vm2675 = vcmp.lt.s32.totalorder %v2653, 4
        %v2676 = vsel %vm2672, %v2656, %v2659
        %v2677 = vsel %vm2675, %v2665, 2102212464
        %v2678 = vsel %vm2674, %v2662, %v2677
        %v2679 = vsel %vm2673, %v2676, %v2678
        %v2680 = vsel %vm2672, %v2659, %v2662
        %v2681 = vsel %vm2675, %v2668, 920167782
        %v2682 = vsel %vm2674, %v2665, %v2681
        %v2683 = vsel %vm2673, %v2680, %v2682
        %v2684 = vsel %vm2672, %v2662, %v2665
        %v2685 = vsel %vm2675, %v2671, 1326507024
        %v2686 = vsel %vm2674, %v2668, %v2685
        %v2687 = vsel %vm2673, %v2684, %v2686
        %v2688 = vshll.u32 %v2648, 8
        %v2689 = vand.u32 %v2688, 65535
        %v2690 = vshrl.u32 %v2688, 16
        %v2691 = vand.u32 %v2687, 65535
        %v2692 = vshrl.u32 %v2687, 16
        %v2693 = vmul.u32 %v2689, %v2691
        %v2694 = vmul.u32 %v2689, %v2692
        %v2695 = vmul.u32 %v2690, %v2691
        %v2696 = vmul.u32 %v2690, %v2692
        %v2697 = vshll.u32 %v2694, 16
        %v2698 = vshrl.u32 %v2694, 16
        %v2699 = vshll.u32 %v2695, 16
        %v2700 = vshrl.u32 %v2695, 16
        %vm2701 = vc.u32 %v2693, %v2697
        %v2702 = vsel %vm2701, 1, 0
        %v2703 = vadd.s32 %v2693, %v2697
        %v2704 = vadd.s32 %v2696, %v2702
        %vm2705 = vc.u32 %v2703, %v2699
        %v2706 = vsel %vm2705, 1, 0
        %v2707 = vadd.s32 %v2703, %v2699
        %v2708 = vadd.s32 %v2704, %v2706
        %v2709 = vadd.s32 %v2708, %v2698
        %v2710 = vadd.s32 %v2709, %v2700
        %v2711 = vand.u32 %v2688, 65535
        %v2712 = vshrl.u32 %v2688, 16
        %v2713 = vand.u32 %v2683, 65535
        %v2714 = vshrl.u32 %v2683, 16
        %v2715 = vmul.u32 %v2711, %v2713
        %v2716 = vmul.u32 %v2711, %v2714
        %v2717 = vmul.u32 %v2712, %v2713
        %v2718 = vmul.u32 %v2712, %v2714
        %v2719 = vshll.u32 %v2716, 16
        %v2720 = vshrl.u32 %v2716, 16
        %v2721 = vshll.u32 %v2717, 16
        %v2722 = vshrl.u32 %v2717, 16
        %vm2723 = vc.u32 %v2715, %v2719
        %v2724 = vsel %vm2723, 1, 0
        %v2725 = vadd.s32 %v2715, %v2719
        %v2726 = vadd.s32 %v2718, %v2724
        %vm2727 = vc.u32 %v2725, %v2721
        %v2728 = vsel %vm2727, 1, 0
        %v2729 = vadd.s32 %v2725, %v2721
        %v2730 = vadd.s32 %v2726, %v2728
        %v2731 = vadd.s32 %v2730, %v2720
        %v2732 = vadd.s32 %v2731, %v2722
        %v2733 = vmul.u32 %v2688, %v2679
        %v2734 = vadd.s32 %v2710, %v2729
        %vm2735 = vc.u32 %v2710, %v2729
        %v2736 = vadd.s32 %v2732, 1
        %v2737 = vsel %vm2735, %v2736, %v2732
        %v2738 = vadd.s32 %v2733, %v2737
        %v2739 = vadd.s32 %v2738, 536870912
        %v2740 = vshrl.u32 %v2739, 30
        %v2741 = vshll.u32 %v2740, 30
        %v2742 = vsub.s32 %v2738, %v2741
        %vm2743 = vcmp.lt.s32.totalorder %v2742, 0
        %v2744 = vsub.s32 0, %v2742
        %v2745 = vsel %vm2743, %v2744, %v2742
        %v2746 = vclz %v2745
        %v2747 = vsub.s32 %v2746, 2
        %vm2748 = vcmp.gt.s32.totalorder 0, %v2747
        %v2749 = vsel %vm2748, 0, %v2747
        %v2750 = vsub.s32 32, %v2749
        %v2751 = vshll.u32 %v2742, %v2749
        %v2752 = vshrl.u32 %v2734, %v2750
        %v2753 = vor.u32 %v2751, %v2752
        %v2754 = vsub.s32 4294967266, %v2749
        %v2755 = vadd.s32 %v2754, 127
        %v2756 = vshll.u32 %v2755, 23
        %v2757 = vor.u32 4788187, %v2756
        %v2758 = vand.u32 2147483647, %v2757
        %v2760 = vcvt.s32.f32 %v2753
        %v2761 = vmul.f32 %v2760, %v2758
        %v2762 = vxor.u32 %v2761, 2147483648
        %v2763 = vsel %vm2642, %v2762, %v2761
        %v2764 = vsub.s32 4, %v2740
        %v2765 = vsel %vm2642, %v2764, %v2740
        %v2766 = vsel %vm2641, %v523, %v2763
        %v2767 = vsel %vm2641, 0, %v2765
        %v2768 = vmul.f32 %v2766, %v2766
        %v2769 = vmul.f32 %v2768, -0.001358992
        %v2770 = vadd.f32 %v2769, 0.041655596
        %v2771 = vmul.f32 %v2768, %v2770
        %v2772 = vadd.f32 %v2771, -0.4999988
        %v2773 = vmul.f32 %v2768, %v2772
        %v2774 = vadd.f32 1.0, %v2773
        %v2775 = vmul.f32 %v2766, %v2766
        %v2776 = vmul.f32 %v2775, -0.00019511016
        %v2777 = vadd.f32 %v2776, 0.008332121
        %v2778 = vmul.f32 %v2775, %v2777
        %v2779 = vadd.f32 %v2778, -0.16666654
        %v2780 = vmul.f32 %v2775, %v2779
        %v2781 = vadd.f32 %v2780, 1.0
        %v2782 = vmul.f32 %v2781, %v2766
        %vm2783 = vweird.f32 %v523
        %v2784 = vadd.s32 %v2767, 3
        %v2785 = vand.u32 %v2784, 3
        %vm2786 = vcmp.lt.s32.totalorder %v2785, 2
        %vm2787 = vcmp.eq.s32.totalorder %v2785, 0
        %v2788 = vxor.u32 %v2782, 2147483648
        %v2789 = vsel %vm2787, %v2774, %v2788
        %vm2790 = vcmp.eq.s32.totalorder %v2785, 2
        %v2791 = vxor.u32 %v2774, 2147483648
        %v2792 = vsel %vm2790, %v2791, %v2782
        %v2793 = vsel %vm2786, %v2789, %v2792
        %v2794 = vsel %vm2783, nan, %v2793
        %v2795 = vand.u32 2147483647, %v564
        %vm2796 = vcmp.le.f32.partialorder %v2795, 0.7853982
        %vm2797 = vcmp.lt.s32.totalorder %v564, 0
        %v2798 = vand.u32 %v564, 2139095040
        %v2799 = vshrl.u32 %v2798, 23
        %v2800 = vsub.s32 %v2799, 127
        %v2801 = vand.u32 2147483647, %v564
        %v2802 = vand.u32 %v2801, 8388607
        %v2803 = vor.u32 %v2802, 8388608
        %v2804 = vsub.s32 0, %v2803
        %v2805 = vadd.s32 %v2800, 1
        %vm2806 = vcmp.gt.s32.totalorder %v2805, 0
        %v2807 = vsel %vm2806, %v2805, 0
        %v2808 = vshrl.u32 %v2807, 5
        %v2809 = vand.u32 %v2807, 31
        %v2810 = vsub.s32 32, %v2809
        %v2811 = vshrl.u32 683565275, %v2810
        %v2812 = vshll.u32 683565275, %v2809
        %v2813 = vshrl.u32 2475754826, %v2810
        %v2814 = vor.u32 %v2812, %v2813
        %v2815 = vshll.u32 2475754826, %v2809
        %v2816 = vshrl.u32 2131351028, %v2810
        %v2817 = vor.u32 %v2815, %v2816
        %v2818 = vshll.u32 2131351028, %v2809
        %v2819 = vshrl.u32 2102212464, %v2810
        %v2820 = vor.u32 %v2818, %v2819
        %v2821 = vshll.u32 2102212464, %v2809
        %v2822 = vshrl.u32 920167782, %v2810
        %v2823 = vor.u32 %v2821, %v2822
        %v2824 = vshll.u32 920167782, %v2809
        %v2825 = vshrl.u32 1326507024, %v2810
        %v2826 = vor.u32 %v2824, %v2825
        %vm2827 = vcmp.lt.s32.totalorder %v2808, 1
        %vm2828 = vcmp.lt.s32.totalorder %v2808, 2
        %vm2829 = vcmp.lt.s32.totalorder %v2808, 3
        %vm2830 = vcmp.lt.s32.totalorder %v2808, 4
        %v2831 = vsel %vm2827, %v2811, %v2814
        %v2832 = vsel %vm2830, %v2820, 2102212464
        %v2833 = vsel %vm2829, %v2817, %v2832
        %v2834 = vsel %vm2828, %v2831, %v2833
        %v2835 = vsel %vm2827, %v2814, %v2817
        %v2836 = vsel %vm2830, %v2823, 920167782
        %v2837 = vsel %vm2829, %v2820, %v2836
        %v2838 = vsel %vm2828, %v2835, %v2837
        %v2839 = vsel %vm2827, %v2817, %v2820
        %v2840 = vsel %vm2830, %v2826, 1326507024
        %v2841 = vsel %vm2829, %v2823, %v2840
        %v2842 = vsel %vm2828, %v2839, %v2841
        %v2843 = vshll.u32 %v2803, 8
        %v2844 = vand.u32 %v2843, 65535
        %v2845 = vshrl.u32 %v2843, 16
        %v2846 = vand.u32 %v2842, 65535
        %v2847 = vshrl.u32 %v2842, 16
        %v2848 = vmul.u32 %v2844, %v2846
        %v2849 = vmul.u32 %v2844, %v2847
        %v2850 = vmul.u32 %v2845, %v2846
        %v2851 = vmul.u32 %v2845, %v2847
        %v2852 = vshll.u32 %v2849, 16
        %v2853 = vshrl.u32 %v2849, 16
        %v2854 = vshll.u32 %v2850, 16
        %v2855 = vshrl.u32 %v2850, 16
        %vm2856 = vc.u32 %v2848, %v2852
        %v2857 = vsel %vm2856, 1, 0
        %v2858 = vadd.s32 %v2848, %v2852
        %v2859 = vadd.s32 %v2851, %v2857
        %vm2860 = vc.u32 %v2858, %v2854
        %v2861 = vsel %vm2860, 1, 0
        %v2862 = vadd.s32 %v2858, %v2854
        %v2863 = vadd.s32 %v2859, %v2861
        %v2864 = vadd.s32 %v2863, %v2853
        %v2865 = vadd.s32 %v2864, %v2855
        %v2866 = vand.u32 %v2843, 65535
        %v2867 = vshrl.u32 %v2843, 16
        %v2868 = vand.u32 %v2838, 65535
        %v2869 = vshrl.u32 %v2838, 16
        %v2870 = vmul.u32 %v2866, %v2868
        %v2871 = vmul.u32 %v2866, %v2869
        %v2872 = vmul.u32 %v2867, %v2868
        %v2873 = vmul.u32 %v2867, %v2869
        %v2874 = vshll.u32 %v2871, 16
        %v2875 = vshrl.u32 %v2871, 16
        %v2876 = vshll.u32 %v2872, 16
        %v2877 = vshrl.u32 %v2872, 16
        %vm2878 = vc.u32 %v2870, %v2874
        %v2879 = vsel %vm2878, 1, 0
        %v2880 = vadd.s32 %v2870, %v2874
        %v2881 = vadd.s32 %v2873, %v2879
        %vm2882 = vc.u32 %v2880, %v2876
        %v2883 = vsel %vm2882, 1, 0
        %v2884 = vadd.s32 %v2880, %v2876
        %v2885 = vadd.s32 %v2881, %v2883
        %v2886 = vadd.s32 %v2885, %v2875
        %v2887 = vadd.s32 %v2886, %v2877
        %v2888 = vmul.u32 %v2843, %v2834
        %v2889 = vadd.s32 %v2865, %v2884
        %vm2890 = vc.u32 %v2865, %v2884
        %v2891 = vadd.s32 %v2887, 1
        %v2892 = vsel %vm2890, %v2891, %v2887
        %v2893 = vadd.s32 %v2888, %v2892
        %v2894 = vadd.s32 %v2893, 536870912
        %v2895 = vshrl.u32 %v2894, 30
        %v2896 = vshll.u32 %v2895, 30
        %v2897 = vsub.s32 %v2893, %v2896
        %vm2898 = vcmp.lt.s32.totalorder %v2897, 0
        %v2899 = vsub.s32 0, %v2897
        %v2900 = vsel %vm2898, %v2899, %v2897
        %v2901 = vclz %v2900
        %v2902 = vsub.s32 %v2901, 2
        %vm2903 = vcmp.gt.s32.totalorder 0, %v2902
        %v2904 = vsel %vm2903, 0, %v2902
        %v2905 = vsub.s32 32, %v2904
        %v2906 = vshll.u32 %v2897, %v2904
        %v2907 = vshrl.u32 %v2889, %v2905
        %v2908 = vor.u32 %v2906, %v2907
        %v2909 = vsub.s32 4294967266, %v2904
        %v2910 = vadd.s32 %v2909, 127
        %v2911 = vshll.u32 %v2910, 23
        %v2912 = vor.u32 4788187, %v2911
        %v2913 = vand.u32 2147483647, %v2912
        %v2915 = vcvt.s32.f32 %v2908
        %v2916 = vmul.f32 %v2915, %v2913
        %v2917 = vxor.u32 %v2916, 2147483648
        %v2918 = vsel %vm2797, %v2917, %v2916
        %v2919 = vsub.s32 4, %v2895
        %v2920 = vsel %vm2797, %v2919, %v2895
        %v2921 = vsel %vm2796, %v564, %v2918
        %v2922 = vsel %vm2796, 0, %v2920
        %v2923 = vmul.f32 %v2921, %v2921
        %v2924 = vmul.f32 %v2923, -0.001358992
        %v2925 = vadd.f32 %v2924, 0.041655596
        %v2926 = vmul.f32 %v2923, %v2925
        %v2927 = vadd.f32 %v2926, -0.4999988
        %v2928 = vmul.f32 %v2923, %v2927
        %v2929 = vadd.f32 1.0, %v2928
        %v2930 = vmul.f32 %v2921, %v2921
        %v2931 = vmul.f32 %v2930, -0.00019511016
        %v2932 = vadd.f32 %v2931, 0.008332121
        %v2933 = vmul.f32 %v2930, %v2932
        %v2934 = vadd.f32 %v2933, -0.16666654
        %v2935 = vmul.f32 %v2930, %v2934
        %v2936 = vadd.f32 %v2935, 1.0
        %v2937 = vmul.f32 %v2936, %v2921
        %vm2938 = vweird.f32 %v564
        %v2939 = vadd.s32 %v2922, 3
        %v2940 = vand.u32 %v2939, 3
        %vm2941 = vcmp.lt.s32.totalorder %v2940, 2
        %vm2942 = vcmp.eq.s32.totalorder %v2940, 0
        %v2943 = vxor.u32 %v2937, 2147483648
        %v2944 = vsel %vm2942, %v2929, %v2943
        %vm2945 = vcmp.eq.s32.totalorder %v2940, 2
        %v2946 = vxor.u32 %v2929, 2147483648
        %v2947 = vsel %vm2945, %v2946, %v2937
        %v2948 = vsel %vm2941, %v2944, %v2947
        %v2949 = vsel %vm2938, nan, %v2948
        %v2950 = vand.u32 2147483647, %v605
        %vm2951 = vcmp.le.f32.partialorder %v2950, 0.7853982
        %vm2952 = vcmp.lt.s32.totalorder %v605, 0
        %v2953 = vand.u32 %v605, 2139095040
        %v2954 = vshrl.u32 %v2953, 23
        %v2955 = vsub.s32 %v2954, 127
        %v2956 = vand.u32 2147483647, %v605
        %v2957 = vand.u32 %v2956, 8388607
        %v2958 = vor.u32 %v2957, 8388608
        %v2959 = vsub.s32 0, %v2958
        %v2960 = vadd.s32 %v2955, 1
        %vm2961 = vcmp.gt.s32.totalorder %v2960, 0
        %v2962 = vsel %vm2961, %v2960, 0
        %v2963 = vshrl.u32 %v2962, 5
        %v2964 = vand.u32 %v2962, 31
        %v2965 = vsub.s32 32, %v2964
        %v2966 = vshrl.u32 683565275, %v2965
        %v2967 = vshll.u32 683565275, %v2964
        %v2968 = vshrl.u32 2475754826, %v2965
        %v2969 = vor.u32 %v2967, %v2968
        %v2970 = vshll.u32 2475754826, %v2964
        %v2971 = vshrl.u32 2131351028, %v2965
        %v2972 = vor.u32 %v2970, %v2971
        %v2973 = vshll.u32 2131351028, %v2964
        %v2974 = vshrl.u32 2102212464, %v2965
        %v2975 = vor.u32 %v2973, %v2974
        %v2976 = vshll.u32 2102212464, %v2964
        %v2977 = vshrl.u32 920167782, %v2965
        %v2978 = vor.u32 %v2976, %v2977
        %v2979 = vshll.u32 920167782, %v2964
        %v2980 = vshrl.u32 1326507024, %v2965
        %v2981 = vor.u32 %v2979, %v2980
        %vm2982 = vcmp.lt.s32.totalorder %v2963, 1
        %vm2983 = vcmp.lt.s32.totalorder %v2963, 2
        %vm2984 = vcmp.lt.s32.totalorder %v2963, 3
        %vm2985 = vcmp.lt.s32.totalorder %v2963, 4
        %v2986 = vsel %vm2982, %v2966, %v2969
        %v2987 = vsel %vm2985, %v2975, 2102212464
        %v2988 = vsel %vm2984, %v2972, %v2987
        %v2989 = vsel %vm2983, %v2986, %v2988
        %v2990 = vsel %vm2982, %v2969, %v2972
        %v2991 = vsel %vm2985, %v2978, 920167782
        %v2992 = vsel %vm2984, %v2975, %v2991
        %v2993 = vsel %vm2983, %v2990, %v2992
        %v2994 = vsel %vm2982, %v2972, %v2975
        %v2995 = vsel %vm2985, %v2981, 1326507024
        %v2996 = vsel %vm2984, %v2978, %v2995
        %v2997 = vsel %vm2983, %v2994, %v2996
        %v2998 = vshll.u32 %v2958, 8
        %v2999 = vand.u32 %v2998, 65535
        %v3000 = vshrl.u32 %v2998, 16
        %v3001 = vand.u32 %v2997, 65535
        %v3002 = vshrl.u32 %v2997, 16
        %v3003 = vmul.u32 %v2999, %v3001
        %v3004 = vmul.u32 %v2999, %v3002
        %v3005 = vmul.u32 %v3000, %v3001
        %v3006 = vmul.u32 %v3000, %v3002
        %v3007 = vshll.u32 %v3004, 16
        %v3008 = vshrl.u32 %v3004, 16
        %v3009 = vshll.u32 %v3005, 16
        %v3010 = vshrl.u32 %v3005, 16
        %vm3011 = vc.u32 %v3003, %v3007
        %v3012 = vsel %vm3011, 1, 0
        %v3013 = vadd.s32 %v3003, %v3007
        %v3014 = vadd.s32 %v3006, %v3012
        %vm3015 = vc.u32 %v3013, %v3009
        %v3016 = vsel %vm3015, 1, 0
        %v3017 = vadd.s32 %v3013, %v3009
        %v3018 = vadd.s32 %v3014, %v3016
        %v3019 = vadd.s32 %v3018, %v3008
        %v3020 = vadd.s32 %v3019, %v3010
        %v3021 = vand.u32 %v2998, 65535
        %v3022 = vshrl.u32 %v2998, 16
        %v3023 = vand.u32 %v2993, 65535
        %v3024 = vshrl.u32 %v2993, 16
        %v3025 = vmul.u32 %v3021, %v3023
        %v3026 = vmul.u32 %v3021, %v3024
        %v3027 = vmul.u32 %v3022, %v3023
        %v3028 = vmul.u32 %v3022, %v3024
        %v3029 = vshll.u32 %v3026, 16
        %v3030 = vshrl.u32 %v3026, 16
        %v3031 = vshll.u32 %v3027, 16
        %v3032 = vshrl.u32 %v3027, 16
        %vm3033 = vc.u32 %v3025, %v3029
        %v3034 = vsel %vm3033, 1, 0
        %v3035 = vadd.s32 %v3025, %v3029
        %v3036 = vadd.s32 %v3028, %v3034
        %vm3037 = vc.u32 %v3035, %v3031
        %v3038 = vsel %vm3037, 1, 0
        %v3039 = vadd.s32 %v3035, %v3031
        %v3040 = vadd.s32 %v3036, %v3038
        %v3041 = vadd.s32 %v3040, %v3030
        %v3042 = vadd.s32 %v3041, %v3032
        %v3043 = vmul.u32 %v2998, %v2989
        %v3044 = vadd.s32 %v3020, %v3039
        %vm3045 = vc.u32 %v3020, %v3039
        %v3046 = vadd.s32 %v3042, 1
        %v3047 = vsel %vm3045, %v3046, %v3042
        %v3048 = vadd.s32 %v3043, %v3047
        %v3049 = vadd.s32 %v3048, 536870912
        %v3050 = vshrl.u32 %v3049, 30
        %v3051 = vshll.u32 %v3050, 30
        %v3052 = vsub.s32 %v3048, %v3051
        %vm3053 = vcmp.lt.s32.totalorder %v3052, 0
        %v3054 = vsub.s32 0, %v3052
        %v3055 = vsel %vm3053, %v3054, %v3052
        %v3056 = vclz %v3055
        %v3057 = vsub.s32 %v3056, 2
        %vm3058 = vcmp.gt.s32.totalorder 0, %v3057
        %v3059 = vsel %vm3058, 0, %v3057
        %v3060 = vsub.s32 32, %v3059
        %v3061 = vshll.u32 %v3052, %v3059
        %v3062 = vshrl.u32 %v3044, %v3060
        %v3063 = vor.u32 %v3061, %v3062
        %v3064 = vsub.s32 4294967266, %v3059
        %v3065 = vadd.s32 %v3064, 127
        %v3066 = vshll.u32 %v3065, 23
        %v3067 = vor.u32 4788187, %v3066
        %v3068 = vand.u32 2147483647, %v3067
        %v3070 = vcvt.s32.f32 %v3063
        %v3071 = vmul.f32 %v3070, %v3068
        %v3072 = vxor.u32 %v3071, 2147483648
        %v3073 = vsel %vm2952, %v3072, %v3071
        %v3074 = vsub.s32 4, %v3050
        %v3075 = vsel %vm2952, %v3074, %v3050
        %v3076 = vsel %vm2951, %v605, %v3073
        %v3077 = vsel %vm2951, 0, %v3075
        %v3078 = vmul.f32 %v3076, %v3076
        %v3079 = vmul.f32 %v3078, -0.001358992
        %v3080 = vadd.f32 %v3079, 0.041655596
        %v3081 = vmul.f32 %v3078, %v3080
        %v3082 = vadd.f32 %v3081, -0.4999988
        %v3083 = vmul.f32 %v3078, %v3082
        %v3084 = vadd.f32 1.0, %v3083
        %v3085 = vmul.f32 %v3076, %v3076
        %v3086 = vmul.f32 %v3085, -0.00019511016
        %v3087 = vadd.f32 %v3086, 0.008332121
        %v3088 = vmul.f32 %v3085, %v3087
        %v3089 = vadd.f32 %v3088, -0.16666654
        %v3090 = vmul.f32 %v3085, %v3089
        %v3091 = vadd.f32 %v3090, 1.0
        %v3092 = vmul.f32 %v3091, %v3076
        %vm3093 = vweird.f32 %v605
        %v3094 = vadd.s32 %v3077, 3
        %v3095 = vand.u32 %v3094, 3
        %vm3096 = vcmp.lt.s32.totalorder %v3095, 2
        %vm3097 = vcmp.eq.s32.totalorder %v3095, 0
        %v3098 = vxor.u32 %v3092, 2147483648
        %v3099 = vsel %vm3097, %v3084, %v3098
        %vm3100 = vcmp.eq.s32.totalorder %v3095, 2
        %v3101 = vxor.u32 %v3084, 2147483648
        %v3102 = vsel %vm3100, %v3101, %v3092
        %v3103 = vsel %vm3096, %v3099, %v3102
        %v3104 = vsel %vm3093, nan, %v3103
        %v3105 = vand.u32 2147483647, %v321
        %vm3106 = vcmp.le.f32.partialorder %v3105, 0.7853982
        %vm3107 = vcmp.lt.s32.totalorder %v321, 0
        %v3108 = vand.u32 %v321, 2139095040
        %v3109 = vshrl.u32 %v3108, 23
        %v3110 = vsub.s32 %v3109, 127
        %v3111 = vand.u32 2147483647, %v321
        %v3112 = vand.u32 %v3111, 8388607
        %v3113 = vor.u32 %v3112, 8388608
        %v3114 = vsub.s32 0, %v3113
        %v3115 = vadd.s32 %v3110, 1
        %vm3116 = vcmp.gt.s32.totalorder %v3115, 0
        %v3117 = vsel %vm3116, %v3115, 0
        %v3118 = vshrl.u32 %v3117, 5
        %v3119 = vand.u32 %v3117, 31
        %v3120 = vsub.s32 32, %v3119
        %v3121 = vshrl.u32 683565275, %v3120
        %v3122 = vshll.u32 683565275, %v3119
        %v3123 = vshrl.u32 2475754826, %v3120
        %v3124 = vor.u32 %v3122, %v3123
        %v3125 = vshll.u32 2475754826, %v3119
        %v3126 = vshrl.u32 2131351028, %v3120
        %v3127 = vor.u32 %v3125, %v3126
        %v3128 = vshll.u32 2131351028, %v3119
        %v3129 = vshrl.u32 2102212464, %v3120
        %v3130 = vor.u32 %v3128, %v3129
        %v3131 = vshll.u32 2102212464, %v3119
        %v3132 = vshrl.u32 920167782, %v3120
        %v3133 = vor.u32 %v3131, %v3132
        %v3134 = vshll.u32 920167782, %v3119
        %v3135 = vshrl.u32 1326507024, %v3120
        %v3136 = vor.u32 %v3134, %v3135
        %vm3137 = vcmp.lt.s32.totalorder %v3118, 1
        %vm3138 = vcmp.lt.s32.totalorder %v3118, 2
        %vm3139 = vcmp.lt.s32.totalorder %v3118, 3
        %vm3140 = vcmp.lt.s32.totalorder %v3118, 4
        %v3141 = vsel %vm3137, %v3121, %v3124
        %v3142 = vsel %vm3140, %v3130, 2102212464
        %v3143 = vsel %vm3139, %v3127, %v3142
        %v3144 = vsel %vm3138, %v3141, %v3143
        %v3145 = vsel %vm3137, %v3124, %v3127
        %v3146 = vsel %vm3140, %v3133, 920167782
        %v3147 = vsel %vm3139, %v3130, %v3146
        %v3148 = vsel %vm3138, %v3145, %v3147
        %v3149 = vsel %vm3137, %v3127, %v3130
        %v3150 = vsel %vm3140, %v3136, 1326507024
        %v3151 = vsel %vm3139, %v3133, %v3150
        %v3152 = vsel %vm3138, %v3149, %v3151
        %v3153 = vshll.u32 %v3113, 8
        %v3154 = vand.u32 %v3153, 65535
        %v3155 = vshrl.u32 %v3153, 16
        %v3156 = vand.u32 %v3152, 65535
        %v3157 = vshrl.u32 %v3152, 16
        %v3158 = vmul.u32 %v3154, %v3156
        %v3159 = vmul.u32 %v3154, %v3157
        %v3160 = vmul.u32 %v3155, %v3156
        %v3161 = vmul.u32 %v3155, %v3157
        %v3162 = vshll.u32 %v3159, 16
        %v3163 = vshrl.u32 %v3159, 16
        %v3164 = vshll.u32 %v3160, 16
        %v3165 = vshrl.u32 %v3160, 16
        %vm3166 = vc.u32 %v3158, %v3162
        %v3167 = vsel %vm3166, 1, 0
        %v3168 = vadd.s32 %v3158, %v3162
        %v3169 = vadd.s32 %v3161, %v3167
        %vm3170 = vc.u32 %v3168, %v3164
        %v3171 = vsel %vm3170, 1, 0
        %v3172 = vadd.s32 %v3168, %v3164
        %v3173 = vadd.s32 %v3169, %v3171
        %v3174 = vadd.s32 %v3173, %v3163
        %v3175 = vadd.s32 %v3174, %v3165
        %v3176 = vand.u32 %v3153, 65535
        %v3177 = vshrl.u32 %v3153, 16
        %v3178 = vand.u32 %v3148, 65535
        %v3179 = vshrl.u32 %v3148, 16
        %v3180 = vmul.u32 %v3176, %v3178
        %v3181 = vmul.u32 %v3176, %v3179
        %v3182 = vmul.u32 %v3177, %v3178
        %v3183 = vmul.u32 %v3177, %v3179
        %v3184 = vshll.u32 %v3181, 16
        %v3185 = vshrl.u32 %v3181, 16
        %v3186 = vshll.u32 %v3182, 16
        %v3187 = vshrl.u32 %v3182, 16
        %vm3188 = vc.u32 %v3180, %v3184
        %v3189 = vsel %vm3188, 1, 0
        %v3190 = vadd.s32 %v3180, %v3184
        %v3191 = vadd.s32 %v3183, %v3189
        %vm3192 = vc.u32 %v3190, %v3186
        %v3193 = vsel %vm3192, 1, 0
        %v3194 = vadd.s32 %v3190, %v3186
        %v3195 = vadd.s32 %v3191, %v3193
        %v3196 = vadd.s32 %v3195, %v3185
        %v3197 = vadd.s32 %v3196, %v3187
        %v3198 = vmul.u32 %v3153, %v3144
        %v3199 = vadd.s32 %v3175, %v3194
        %vm3200 = vc.u32 %v3175, %v3194
        %v3201 = vadd.s32 %v3197, 1
        %v3202 = vsel %vm3200, %v3201, %v3197
        %v3203 = vadd.s32 %v3198, %v3202
        %v3204 = vadd.s32 %v3203, 536870912
        %v3205 = vshrl.u32 %v3204, 30
        %v3206 = vshll.u32 %v3205, 30
        %v3207 = vsub.s32 %v3203, %v3206
        %vm3208 = vcmp.lt.s32.totalorder %v3207, 0
        %v3209 = vsub.s32 0, %v3207
        %v3210 = vsel %vm3208, %v3209, %v3207
        %v3211 = vclz %v3210
        %v3212 = vsub.s32 %v3211, 2
        %vm3213 = vcmp.gt.s32.totalorder 0, %v3212
        %v3214 = vsel %vm3213, 0, %v3212
        %v3215 = vsub.s32 32, %v3214
        %v3216 = vshll.u32 %v3207, %v3214
        %v3217 = vshrl.u32 %v3199, %v3215
        %v3218 = vor.u32 %v3216, %v3217
        %v3219 = vsub.s32 4294967266, %v3214
        %v3220 = vadd.s32 %v3219, 127
        %v3221 = vshll.u32 %v3220, 23
        %v3222 = vor.u32 4788187, %v3221
        %v3223 = vand.u32 2147483647, %v3222
        %v3225 = vcvt.s32.f32 %v3218
        %v3226 = vmul.f32 %v3225, %v3223
        %v3227 = vxor.u32 %v3226, 2147483648
        %v3228 = vsel %vm3107, %v3227, %v3226
        %v3229 = vsub.s32 4, %v3205
        %v3230 = vsel %vm3107, %v3229, %v3205
        %v3231 = vsel %vm3106, %v321, %v3228
        %v3232 = vsel %vm3106, 0, %v3230
        %v3233 = vmul.f32 %v3231, %v3231
        %v3234 = vmul.f32 %v3233, -0.001358992
        %v3235 = vadd.f32 %v3234, 0.041655596
        %v3236 = vmul.f32 %v3233, %v3235
        %v3237 = vadd.f32 %v3236, -0.4999988
        %v3238 = vmul.f32 %v3233, %v3237
        %v3239 = vadd.f32 1.0, %v3238
        %v3240 = vmul.f32 %v3231, %v3231
        %v3241 = vmul.f32 %v3240, -0.00019511016
        %v3242 = vadd.f32 %v3241, 0.008332121
        %v3243 = vmul.f32 %v3240, %v3242
        %v3244 = vadd.f32 %v3243, -0.16666654
        %v3245 = vmul.f32 %v3240, %v3244
        %v3246 = vadd.f32 %v3245, 1.0
        %v3247 = vmul.f32 %v3246, %v3231
        %vm3248 = vweird.f32 %v321
        %v3249 = vadd.s32 %v3232, 3
        %v3250 = vand.u32 %v3249, 3
        %vm3251 = vcmp.lt.s32.totalorder %v3250, 2
        %vm3252 = vcmp.eq.s32.totalorder %v3250, 0
        %v3253 = vxor.u32 %v3247, 2147483648
        %v3254 = vsel %vm3252, %v3239, %v3253
        %vm3255 = vcmp.eq.s32.totalorder %v3250, 2
        %v3256 = vxor.u32 %v3239, 2147483648
        %v3257 = vsel %vm3255, %v3256, %v3247
        %v3258 = vsel %vm3251, %v3254, %v3257
        %v3259 = vsel %vm3248, nan, %v3258
        %v3260 = vand.u32 2147483647, %v362
        %vm3261 = vcmp.le.f32.partialorder %v3260, 0.7853982
        %vm3262 = vcmp.lt.s32.totalorder %v362, 0
        %v3263 = vand.u32 %v362, 2139095040
        %v3264 = vshrl.u32 %v3263, 23
        %v3265 = vsub.s32 %v3264, 127
        %v3266 = vand.u32 2147483647, %v362
        %v3267 = vand.u32 %v3266, 8388607
        %v3268 = vor.u32 %v3267, 8388608
        %v3269 = vsub.s32 0, %v3268
        %v3270 = vadd.s32 %v3265, 1
        %vm3271 = vcmp.gt.s32.totalorder %v3270, 0
        %v3272 = vsel %vm3271, %v3270, 0
        %v3273 = vshrl.u32 %v3272, 5
        %v3274 = vand.u32 %v3272, 31
        %v3275 = vsub.s32 32, %v3274
        %v3276 = vshrl.u32 683565275, %v3275
        %v3277 = vshll.u32 683565275, %v3274
        %v3278 = vshrl.u32 2475754826, %v3275
        %v3279 = vor.u32 %v3277, %v3278
        %v3280 = vshll.u32 2475754826, %v3274
        %v3281 = vshrl.u32 2131351028, %v3275
        %v3282 = vor.u32 %v3280, %v3281
        %v3283 = vshll.u32 2131351028, %v3274
        %v3284 = vshrl.u32 2102212464, %v3275
        %v3285 = vor.u32 %v3283, %v3284
        %v3286 = vshll.u32 2102212464, %v3274
        %v3287 = vshrl.u32 920167782, %v3275
        %v3288 = vor.u32 %v3286, %v3287
        %v3289 = vshll.u32 920167782, %v3274
        %v3290 = vshrl.u32 1326507024, %v3275
        %v3291 = vor.u32 %v3289, %v3290
        %vm3292 = vcmp.lt.s32.totalorder %v3273, 1
        %vm3293 = vcmp.lt.s32.totalorder %v3273, 2
        %vm3294 = vcmp.lt.s32.totalorder %v3273, 3
        %vm3295 = vcmp.lt.s32.totalorder %v3273, 4
        %v3296 = vsel %vm3292, %v3276, %v3279
        %v3297 = vsel %vm3295, %v3285, 2102212464
        %v3298 = vsel %vm3294, %v3282, %v3297
        %v3299 = vsel %vm3293, %v3296, %v3298
        %v3300 = vsel %vm3292, %v3279, %v3282
        %v3301 = vsel %vm3295, %v3288, 920167782
        %v3302 = vsel %vm3294, %v3285, %v3301
        %v3303 = vsel %vm3293, %v3300, %v3302
        %v3304 = vsel %vm3292, %v3282, %v3285
        %v3305 = vsel %vm3295, %v3291, 1326507024
        %v3306 = vsel %vm3294, %v3288, %v3305
        %v3307 = vsel %vm3293, %v3304, %v3306
        %v3308 = vshll.u32 %v3268, 8
        %v3309 = vand.u32 %v3308, 65535
        %v3310 = vshrl.u32 %v3308, 16
        %v3311 = vand.u32 %v3307, 65535
        %v3312 = vshrl.u32 %v3307, 16
        %v3313 = vmul.u32 %v3309, %v3311
        %v3314 = vmul.u32 %v3309, %v3312
        %v3315 = vmul.u32 %v3310, %v3311
        %v3316 = vmul.u32 %v3310, %v3312
        %v3317 = vshll.u32 %v3314, 16
        %v3318 = vshrl.u32 %v3314, 16
        %v3319 = vshll.u32 %v3315, 16
        %v3320 = vshrl.u32 %v3315, 16
        %vm3321 = vc.u32 %v3313, %v3317
        %v3322 = vsel %vm3321, 1, 0
        %v3323 = vadd.s32 %v3313, %v3317
        %v3324 = vadd.s32 %v3316, %v3322
        %vm3325 = vc.u32 %v3323, %v3319
        %v3326 = vsel %vm3325, 1, 0
        %v3327 = vadd.s32 %v3323, %v3319
        %v3328 = vadd.s32 %v3324, %v3326
        %v3329 = vadd.s32 %v3328, %v3318
        %v3330 = vadd.s32 %v3329, %v3320
        %v3331 = vand.u32 %v3308, 65535
        %v3332 = vshrl.u32 %v3308, 16
        %v3333 = vand.u32 %v3303, 65535
        %v3334 = vshrl.u32 %v3303, 16
        %v3335 = vmul.u32 %v3331, %v3333
        %v3336 = vmul.u32 %v3331, %v3334
        %v3337 = vmul.u32 %v3332, %v3333
        %v3338 = vmul.u32 %v3332, %v3334
        %v3339 = vshll.u32 %v3336, 16
        %v3340 = vshrl.u32 %v3336, 16
        %v3341 = vshll.u32 %v3337, 16
        %v3342 = vshrl.u32 %v3337, 16
        %vm3343 = vc.u32 %v3335, %v3339
        %v3344 = vsel %vm3343, 1, 0
        %v3345 = vadd.s32 %v3335, %v3339
        %v3346 = vadd.s32 %v3338, %v3344
        %vm3347 = vc.u32 %v3345, %v3341
        %v3348 = vsel %vm3347, 1, 0
        %v3349 = vadd.s32 %v3345, %v3341
        %v3350 = vadd.s32 %v3346, %v3348
        %v3351 = vadd.s32 %v3350, %v3340
        %v3352 = vadd.s32 %v3351, %v3342
        %v3353 = vmul.u32 %v3308, %v3299
        %v3354 = vadd.s32 %v3330, %v3349
        %vm3355 = vc.u32 %v3330, %v3349
        %v3356 = vadd.s32 %v3352, 1
        %v3357 = vsel %vm3355, %v3356, %v3352
        %v3358 = vadd.s32 %v3353, %v3357
        %v3359 = vadd.s32 %v3358, 536870912
        %v3360 = vshrl.u32 %v3359, 30
        %v3361 = vshll.u32 %v3360, 30
        %v3362 = vsub.s32 %v3358, %v3361
        %vm3363 = vcmp.lt.s32.totalorder %v3362, 0
        %v3364 = vsub.s32 0, %v3362
        %v3365 = vsel %vm3363, %v3364, %v3362
        %v3366 = vclz %v3365
        %v3367 = vsub.s32 %v3366, 2
        %vm3368 = vcmp.gt.s32.totalorder 0, %v3367
        %v3369 = vsel %vm3368, 0, %v3367
        %v3370 = vsub.s32 32, %v3369
        %v3371 = vshll.u32 %v3362, %v3369
        %v3372 = vshrl.u32 %v3354, %v3370
        %v3373 = vor.u32 %v3371, %v3372
        %v3374 = vsub.s32 4294967266, %v3369
        %v3375 = vadd.s32 %v3374, 127
        %v3376 = vshll.u32 %v3375, 23
        %v3377 = vor.u32 4788187, %v3376
        %v3378 = vand.u32 2147483647, %v3377
        %v3380 = vcvt.s32.f32 %v3373
        %v3381 = vmul.f32 %v3380, %v3378
        %v3382 = vxor.u32 %v3381, 2147483648
        %v3383 = vsel %vm3262, %v3382, %v3381
        %v3384 = vsub.s32 4, %v3360
        %v3385 = vsel %vm3262, %v3384, %v3360
        %v3386 = vsel %vm3261, %v362, %v3383
        %v3387 = vsel %vm3261, 0, %v3385
        %v3388 = vmul.f32 %v3386, %v3386
        %v3389 = vmul.f32 %v3388, -0.001358992
        %v3390 = vadd.f32 %v3389, 0.041655596
        %v3391 = vmul.f32 %v3388, %v3390
        %v3392 = vadd.f32 %v3391, -0.4999988
        %v3393 = vmul.f32 %v3388, %v3392
        %v3394 = vadd.f32 1.0, %v3393
        %v3395 = vmul.f32 %v3386, %v3386
        %v3396 = vmul.f32 %v3395, -0.00019511016
        %v3397 = vadd.f32 %v3396, 0.008332121
        %v3398 = vmul.f32 %v3395, %v3397
        %v3399 = vadd.f32 %v3398, -0.16666654
        %v3400 = vmul.f32 %v3395, %v3399
        %v3401 = vadd.f32 %v3400, 1.0
        %v3402 = vmul.f32 %v3401, %v3386
        %vm3403 = vweird.f32 %v362
        %v3404 = vadd.s32 %v3387, 3
        %v3405 = vand.u32 %v3404, 3
        %vm3406 = vcmp.lt.s32.totalorder %v3405, 2
        %vm3407 = vcmp.eq.s32.totalorder %v3405, 0
        %v3408 = vxor.u32 %v3402, 2147483648
        %v3409 = vsel %vm3407, %v3394, %v3408
        %vm3410 = vcmp.eq.s32.totalorder %v3405, 2
        %v3411 = vxor.u32 %v3394, 2147483648
        %v3412 = vsel %vm3410, %v3411, %v3402
        %v3413 = vsel %vm3406, %v3409, %v3412
        %v3414 = vsel %vm3403, nan, %v3413
        %v3415 = vand.u32 2147483647, %v403
        %vm3416 = vcmp.le.f32.partialorder %v3415, 0.7853982
        %vm3417 = vcmp.lt.s32.totalorder %v403, 0
        %v3418 = vand.u32 %v403, 2139095040
        %v3419 = vshrl.u32 %v3418, 23
        %v3420 = vsub.s32 %v3419, 127
        %v3421 = vand.u32 2147483647, %v403
        %v3422 = vand.u32 %v3421, 8388607
        %v3423 = vor.u32 %v3422, 8388608
        %v3424 = vsub.s32 0, %v3423
        %v3425 = vadd.s32 %v3420, 1
        %vm3426 = vcmp.gt.s32.totalorder %v3425, 0
        %v3427 = vsel %vm3426, %v3425, 0
        %v3428 = vshrl.u32 %v3427, 5
        %v3429 = vand.u32 %v3427, 31
        %v3430 = vsub.s32 32, %v3429
        %v3431 = vshrl.u32 683565275, %v3430
        %v3432 = vshll.u32 683565275, %v3429
        %v3433 = vshrl.u32 2475754826, %v3430
        %v3434 = vor.u32 %v3432, %v3433
        %v3435 = vshll.u32 2475754826, %v3429
        %v3436 = vshrl.u32 2131351028, %v3430
        %v3437 = vor.u32 %v3435, %v3436
        %v3438 = vshll.u32 2131351028, %v3429
        %v3439 = vshrl.u32 2102212464, %v3430
        %v3440 = vor.u32 %v3438, %v3439
        %v3441 = vshll.u32 2102212464, %v3429
        %v3442 = vshrl.u32 920167782, %v3430
        %v3443 = vor.u32 %v3441, %v3442
        %v3444 = vshll.u32 920167782, %v3429
        %v3445 = vshrl.u32 1326507024, %v3430
        %v3446 = vor.u32 %v3444, %v3445
        %vm3447 = vcmp.lt.s32.totalorder %v3428, 1
        %vm3448 = vcmp.lt.s32.totalorder %v3428, 2
        %vm3449 = vcmp.lt.s32.totalorder %v3428, 3
        %vm3450 = vcmp.lt.s32.totalorder %v3428, 4
        %v3451 = vsel %vm3447, %v3431, %v3434
        %v3452 = vsel %vm3450, %v3440, 2102212464
        %v3453 = vsel %vm3449, %v3437, %v3452
        %v3454 = vsel %vm3448, %v3451, %v3453
        %v3455 = vsel %vm3447, %v3434, %v3437
        %v3456 = vsel %vm3450, %v3443, 920167782
        %v3457 = vsel %vm3449, %v3440, %v3456
        %v3458 = vsel %vm3448, %v3455, %v3457
        %v3459 = vsel %vm3447, %v3437, %v3440
        %v3460 = vsel %vm3450, %v3446, 1326507024
        %v3461 = vsel %vm3449, %v3443, %v3460
        %v3462 = vsel %vm3448, %v3459, %v3461
        %v3463 = vshll.u32 %v3423, 8
        %v3464 = vand.u32 %v3463, 65535
        %v3465 = vshrl.u32 %v3463, 16
        %v3466 = vand.u32 %v3462, 65535
        %v3467 = vshrl.u32 %v3462, 16
        %v3468 = vmul.u32 %v3464, %v3466
        %v3469 = vmul.u32 %v3464, %v3467
        %v3470 = vmul.u32 %v3465, %v3466
        %v3471 = vmul.u32 %v3465, %v3467
        %v3472 = vshll.u32 %v3469, 16
        %v3473 = vshrl.u32 %v3469, 16
        %v3474 = vshll.u32 %v3470, 16
        %v3475 = vshrl.u32 %v3470, 16
        %vm3476 = vc.u32 %v3468, %v3472
        %v3477 = vsel %vm3476, 1, 0
        %v3478 = vadd.s32 %v3468, %v3472
        %v3479 = vadd.s32 %v3471, %v3477
        %vm3480 = vc.u32 %v3478, %v3474
        %v3481 = vsel %vm3480, 1, 0
        %v3482 = vadd.s32 %v3478, %v3474
        %v3483 = vadd.s32 %v3479, %v3481
        %v3484 = vadd.s32 %v3483, %v3473
        %v3485 = vadd.s32 %v3484, %v3475
        %v3486 = vand.u32 %v3463, 65535
        %v3487 = vshrl.u32 %v3463, 16
        %v3488 = vand.u32 %v3458, 65535
        %v3489 = vshrl.u32 %v3458, 16
        %v3490 = vmul.u32 %v3486, %v3488
        %v3491 = vmul.u32 %v3486, %v3489
        %v3492 = vmul.u32 %v3487, %v3488
        %v3493 = vmul.u32 %v3487, %v3489
        %v3494 = vshll.u32 %v3491, 16
        %v3495 = vshrl.u32 %v3491, 16
        %v3496 = vshll.u32 %v3492, 16
        %v3497 = vshrl.u32 %v3492, 16
        %vm3498 = vc.u32 %v3490, %v3494
        %v3499 = vsel %vm3498, 1, 0
        %v3500 = vadd.s32 %v3490, %v3494
        %v3501 = vadd.s32 %v3493, %v3499
        %vm3502 = vc.u32 %v3500, %v3496
        %v3503 = vsel %vm3502, 1, 0
        %v3504 = vadd.s32 %v3500, %v3496
        %v3505 = vadd.s32 %v3501, %v3503
        %v3506 = vadd.s32 %v3505, %v3495
        %v3507 = vadd.s32 %v3506, %v3497
        %v3508 = vmul.u32 %v3463, %v3454
        %v3509 = vadd.s32 %v3485, %v3504
        %vm3510 = vc.u32 %v3485, %v3504
        %v3511 = vadd.s32 %v3507, 1
        %v3512 = vsel %vm3510, %v3511, %v3507
        %v3513 = vadd.s32 %v3508, %v3512
        %v3514 = vadd.s32 %v3513, 536870912
        %v3515 = vshrl.u32 %v3514, 30
        %v3516 = vshll.u32 %v3515, 30
        %v3517 = vsub.s32 %v3513, %v3516
        %vm3518 = vcmp.lt.s32.totalorder %v3517, 0
        %v3519 = vsub.s32 0, %v3517
        %v3520 = vsel %vm3518, %v3519, %v3517
        %v3521 = vclz %v3520
        %v3522 = vsub.s32 %v3521, 2
        %vm3523 = vcmp.gt.s32.totalorder 0, %v3522
        %v3524 = vsel %vm3523, 0, %v3522
        %v3525 = vsub.s32 32, %v3524
        %v3526 = vshll.u32 %v3517, %v3524
        %v3527 = vshrl.u32 %v3509, %v3525
        %v3528 = vor.u32 %v3526, %v3527
        %v3529 = vsub.s32 4294967266, %v3524
        %v3530 = vadd.s32 %v3529, 127
        %v3531 = vshll.u32 %v3530, 23
        %v3532 = vor.u32 4788187, %v3531
        %v3533 = vand.u32 2147483647, %v3532
        %v3535 = vcvt.s32.f32 %v3528
        %v3536 = vmul.f32 %v3535, %v3533
        %v3537 = vxor.u32 %v3536, 2147483648
        %v3538 = vsel %vm3417, %v3537, %v3536
        %v3539 = vsub.s32 4, %v3515
        %v3540 = vsel %vm3417, %v3539, %v3515
        %v3541 = vsel %vm3416, %v403, %v3538
        %v3542 = vsel %vm3416, 0, %v3540
        %v3543 = vmul.f32 %v3541, %v3541
        %v3544 = vmul.f32 %v3543, -0.001358992
        %v3545 = vadd.f32 %v3544, 0.041655596
        %v3546 = vmul.f32 %v3543, %v3545
        %v3547 = vadd.f32 %v3546, -0.4999988
        %v3548 = vmul.f32 %v3543, %v3547
        %v3549 = vadd.f32 1.0, %v3548
        %v3550 = vmul.f32 %v3541, %v3541
        %v3551 = vmul.f32 %v3550, -0.00019511016
        %v3552 = vadd.f32 %v3551, 0.008332121
        %v3553 = vmul.f32 %v3550, %v3552
        %v3554 = vadd.f32 %v3553, -0.16666654
        %v3555 = vmul.f32 %v3550, %v3554
        %v3556 = vadd.f32 %v3555, 1.0
        %v3557 = vmul.f32 %v3556, %v3541
        %vm3558 = vweird.f32 %v403
        %v3559 = vadd.s32 %v3542, 3
        %v3560 = vand.u32 %v3559, 3
        %vm3561 = vcmp.lt.s32.totalorder %v3560, 2
        %vm3562 = vcmp.eq.s32.totalorder %v3560, 0
        %v3563 = vxor.u32 %v3557, 2147483648
        %v3564 = vsel %vm3562, %v3549, %v3563
        %vm3565 = vcmp.eq.s32.totalorder %v3560, 2
        %v3566 = vxor.u32 %v3549, 2147483648
        %v3567 = vsel %vm3565, %v3566, %v3557
        %v3568 = vsel %vm3561, %v3564, %v3567
        %v3569 = vsel %vm3558, nan, %v3568
        %v3570 = vand.u32 2147483647, %v444
        %vm3571 = vcmp.le.f32.partialorder %v3570, 0.7853982
        %vm3572 = vcmp.lt.s32.totalorder %v444, 0
        %v3573 = vand.u32 %v444, 2139095040
        %v3574 = vshrl.u32 %v3573, 23
        %v3575 = vsub.s32 %v3574, 127
        %v3576 = vand.u32 2147483647, %v444
        %v3577 = vand.u32 %v3576, 8388607
        %v3578 = vor.u32 %v3577, 8388608
        %v3579 = vsub.s32 0, %v3578
        %v3580 = vadd.s32 %v3575, 1
        %vm3581 = vcmp.gt.s32.totalorder %v3580, 0
        %v3582 = vsel %vm3581, %v3580, 0
        %v3583 = vshrl.u32 %v3582, 5
        %v3584 = vand.u32 %v3582, 31
        %v3585 = vsub.s32 32, %v3584
        %v3586 = vshrl.u32 683565275, %v3585
        %v3587 = vshll.u32 683565275, %v3584
        %v3588 = vshrl.u32 2475754826, %v3585
        %v3589 = vor.u32 %v3587, %v3588
        %v3590 = vshll.u32 2475754826, %v3584
        %v3591 = vshrl.u32 2131351028, %v3585
        %v3592 = vor.u32 %v3590, %v3591
        %v3593 = vshll.u32 2131351028, %v3584
        %v3594 = vshrl.u32 2102212464, %v3585
        %v3595 = vor.u32 %v3593, %v3594
        %v3596 = vshll.u32 2102212464, %v3584
        %v3597 = vshrl.u32 920167782, %v3585
        %v3598 = vor.u32 %v3596, %v3597
        %v3599 = vshll.u32 920167782, %v3584
        %v3600 = vshrl.u32 1326507024, %v3585
        %v3601 = vor.u32 %v3599, %v3600
        %vm3602 = vcmp.lt.s32.totalorder %v3583, 1
        %vm3603 = vcmp.lt.s32.totalorder %v3583, 2
        %vm3604 = vcmp.lt.s32.totalorder %v3583, 3
        %vm3605 = vcmp.lt.s32.totalorder %v3583, 4
        %v3606 = vsel %vm3602, %v3586, %v3589
        %v3607 = vsel %vm3605, %v3595, 2102212464
        %v3608 = vsel %vm3604, %v3592, %v3607
        %v3609 = vsel %vm3603, %v3606, %v3608
        %v3610 = vsel %vm3602, %v3589, %v3592
        %v3611 = vsel %vm3605, %v3598, 920167782
        %v3612 = vsel %vm3604, %v3595, %v3611
        %v3613 = vsel %vm3603, %v3610, %v3612
        %v3614 = vsel %vm3602, %v3592, %v3595
        %v3615 = vsel %vm3605, %v3601, 1326507024
        %v3616 = vsel %vm3604, %v3598, %v3615
        %v3617 = vsel %vm3603, %v3614, %v3616
        %v3618 = vshll.u32 %v3578, 8
        %v3619 = vand.u32 %v3618, 65535
        %v3620 = vshrl.u32 %v3618, 16
        %v3621 = vand.u32 %v3617, 65535
        %v3622 = vshrl.u32 %v3617, 16
        %v3623 = vmul.u32 %v3619, %v3621
        %v3624 = vmul.u32 %v3619, %v3622
        %v3625 = vmul.u32 %v3620, %v3621
        %v3626 = vmul.u32 %v3620, %v3622
        %v3627 = vshll.u32 %v3624, 16
        %v3628 = vshrl.u32 %v3624, 16
        %v3629 = vshll.u32 %v3625, 16
        %v3630 = vshrl.u32 %v3625, 16
        %vm3631 = vc.u32 %v3623, %v3627
        %v3632 = vsel %vm3631, 1, 0
        %v3633 = vadd.s32 %v3623, %v3627
        %v3634 = vadd.s32 %v3626, %v3632
        %vm3635 = vc.u32 %v3633, %v3629
        %v3636 = vsel %vm3635, 1, 0
        %v3637 = vadd.s32 %v3633, %v3629
        %v3638 = vadd.s32 %v3634, %v3636
        %v3639 = vadd.s32 %v3638, %v3628
        %v3640 = vadd.s32 %v3639, %v3630
        %v3641 = vand.u32 %v3618, 65535
        %v3642 = vshrl.u32 %v3618, 16
        %v3643 = vand.u32 %v3613, 65535
        %v3644 = vshrl.u32 %v3613, 16
        %v3645 = vmul.u32 %v3641, %v3643
        %v3646 = vmul.u32 %v3641, %v3644
        %v3647 = vmul.u32 %v3642, %v3643
        %v3648 = vmul.u32 %v3642, %v3644
        %v3649 = vshll.u32 %v3646, 16
        %v3650 = vshrl.u32 %v3646, 16
        %v3651 = vshll.u32 %v3647, 16
        %v3652 = vshrl.u32 %v3647, 16
        %vm3653 = vc.u32 %v3645, %v3649
        %v3654 = vsel %vm3653, 1, 0
        %v3655 = vadd.s32 %v3645, %v3649
        %v3656 = vadd.s32 %v3648, %v3654
        %vm3657 = vc.u32 %v3655, %v3651
        %v3658 = vsel %vm3657, 1, 0
        %v3659 = vadd.s32 %v3655, %v3651
        %v3660 = vadd.s32 %v3656, %v3658
        %v3661 = vadd.s32 %v3660, %v3650
        %v3662 = vadd.s32 %v3661, %v3652
        %v3663 = vmul.u32 %v3618, %v3609
        %v3664 = vadd.s32 %v3640, %v3659
        %vm3665 = vc.u32 %v3640, %v3659
        %v3666 = vadd.s32 %v3662, 1
        %v3667 = vsel %vm3665, %v3666, %v3662
        %v3668 = vadd.s32 %v3663, %v3667
        %v3669 = vadd.s32 %v3668, 536870912
        %v3670 = vshrl.u32 %v3669, 30
        %v3671 = vshll.u32 %v3670, 30
        %v3672 = vsub.s32 %v3668, %v3671
        %vm3673 = vcmp.lt.s32.totalorder %v3672, 0
        %v3674 = vsub.s32 0, %v3672
        %v3675 = vsel %vm3673, %v3674, %v3672
        %v3676 = vclz %v3675
        %v3677 = vsub.s32 %v3676, 2
        %vm3678 = vcmp.gt.s32.totalorder 0, %v3677
        %v3679 = vsel %vm3678, 0, %v3677
        %v3680 = vsub.s32 32, %v3679
        %v3681 = vshll.u32 %v3672, %v3679
        %v3682 = vshrl.u32 %v3664, %v3680
        %v3683 = vor.u32 %v3681, %v3682
        %v3684 = vsub.s32 4294967266, %v3679
        %v3685 = vadd.s32 %v3684, 127
        %v3686 = vshll.u32 %v3685, 23
        %v3687 = vor.u32 4788187, %v3686
        %v3688 = vand.u32 2147483647, %v3687
        %v3690 = vcvt.s32.f32 %v3683
        %v3691 = vmul.f32 %v3690, %v3688
        %v3692 = vxor.u32 %v3691, 2147483648
        %v3693 = vsel %vm3572, %v3692, %v3691
        %v3694 = vsub.s32 4, %v3670
        %v3695 = vsel %vm3572, %v3694, %v3670
        %v3696 = vsel %vm3571, %v444, %v3693
        %v3697 = vsel %vm3571, 0, %v3695
        %v3698 = vmul.f32 %v3696, %v3696
        %v3699 = vmul.f32 %v3698, -0.001358992
        %v3700 = vadd.f32 %v3699, 0.041655596
        %v3701 = vmul.f32 %v3698, %v3700
        %v3702 = vadd.f32 %v3701, -0.4999988
        %v3703 = vmul.f32 %v3698, %v3702
        %v3704 = vadd.f32 1.0, %v3703
        %v3705 = vmul.f32 %v3696, %v3696
        %v3706 = vmul.f32 %v3705, -0.00019511016
        %v3707 = vadd.f32 %v3706, 0.008332121
        %v3708 = vmul.f32 %v3705, %v3707
        %v3709 = vadd.f32 %v3708, -0.16666654
        %v3710 = vmul.f32 %v3705, %v3709
        %v3711 = vadd.f32 %v3710, 1.0
        %v3712 = vmul.f32 %v3711, %v3696
        %vm3713 = vweird.f32 %v444
        %v3714 = vadd.s32 %v3697, 3
        %v3715 = vand.u32 %v3714, 3
        %vm3716 = vcmp.lt.s32.totalorder %v3715, 2
        %vm3717 = vcmp.eq.s32.totalorder %v3715, 0
        %v3718 = vxor.u32 %v3712, 2147483648
        %v3719 = vsel %vm3717, %v3704, %v3718
        %vm3720 = vcmp.eq.s32.totalorder %v3715, 2
        %v3721 = vxor.u32 %v3704, 2147483648
        %v3722 = vsel %vm3720, %v3721, %v3712
        %v3723 = vsel %vm3716, %v3719, %v3722
        %v3724 = vsel %vm3713, nan, %v3723
        %v3725 = vand.u32 2147483647, %v485
        %vm3726 = vcmp.le.f32.partialorder %v3725, 0.7853982
        %vm3727 = vcmp.lt.s32.totalorder %v485, 0
        %v3728 = vand.u32 %v485, 2139095040
        %v3729 = vshrl.u32 %v3728, 23
        %v3730 = vsub.s32 %v3729, 127
        %v3731 = vand.u32 2147483647, %v485
        %v3732 = vand.u32 %v3731, 8388607
        %v3733 = vor.u32 %v3732, 8388608
        %v3734 = vsub.s32 0, %v3733
        %v3735 = vadd.s32 %v3730, 1
        %vm3736 = vcmp.gt.s32.totalorder %v3735, 0
        %v3737 = vsel %vm3736, %v3735, 0
        %v3738 = vshrl.u32 %v3737, 5
        %v3739 = vand.u32 %v3737, 31
        %v3740 = vsub.s32 32, %v3739
        %v3741 = vshrl.u32 683565275, %v3740
        %v3742 = vshll.u32 683565275, %v3739
        %v3743 = vshrl.u32 2475754826, %v3740
        %v3744 = vor.u32 %v3742, %v3743
        %v3745 = vshll.u32 2475754826, %v3739
        %v3746 = vshrl.u32 2131351028, %v3740
        %v3747 = vor.u32 %v3745, %v3746
        %v3748 = vshll.u32 2131351028, %v3739
        %v3749 = vshrl.u32 2102212464, %v3740
        %v3750 = vor.u32 %v3748, %v3749
        %v3751 = vshll.u32 2102212464, %v3739
        %v3752 = vshrl.u32 920167782, %v3740
        %v3753 = vor.u32 %v3751, %v3752
        %v3754 = vshll.u32 920167782, %v3739
        %v3755 = vshrl.u32 1326507024, %v3740
        %v3756 = vor.u32 %v3754, %v3755
        %vm3757 = vcmp.lt.s32.totalorder %v3738, 1
        %vm3758 = vcmp.lt.s32.totalorder %v3738, 2
        %vm3759 = vcmp.lt.s32.totalorder %v3738, 3
        %vm3760 = vcmp.lt.s32.totalorder %v3738, 4
        %v3761 = vsel %vm3757, %v3741, %v3744
        %v3762 = vsel %vm3760, %v3750, 2102212464
        %v3763 = vsel %vm3759, %v3747, %v3762
        %v3764 = vsel %vm3758, %v3761, %v3763
        %v3765 = vsel %vm3757, %v3744, %v3747
        %v3766 = vsel %vm3760, %v3753, 920167782
        %v3767 = vsel %vm3759, %v3750, %v3766
        %v3768 = vsel %vm3758, %v3765, %v3767
        %v3769 = vsel %vm3757, %v3747, %v3750
        %v3770 = vsel %vm3760, %v3756, 1326507024
        %v3771 = vsel %vm3759, %v3753, %v3770
        %v3772 = vsel %vm3758, %v3769, %v3771
        %v3773 = vshll.u32 %v3733, 8
        %v3774 = vand.u32 %v3773, 65535
        %v3775 = vshrl.u32 %v3773, 16
        %v3776 = vand.u32 %v3772, 65535
        %v3777 = vshrl.u32 %v3772, 16
        %v3778 = vmul.u32 %v3774, %v3776
        %v3779 = vmul.u32 %v3774, %v3777
        %v3780 = vmul.u32 %v3775, %v3776
        %v3781 = vmul.u32 %v3775, %v3777
        %v3782 = vshll.u32 %v3779, 16
        %v3783 = vshrl.u32 %v3779, 16
        %v3784 = vshll.u32 %v3780, 16
        %v3785 = vshrl.u32 %v3780, 16
        %vm3786 = vc.u32 %v3778, %v3782
        %v3787 = vsel %vm3786, 1, 0
        %v3788 = vadd.s32 %v3778, %v3782
        %v3789 = vadd.s32 %v3781, %v3787
        %vm3790 = vc.u32 %v3788, %v3784
        %v3791 = vsel %vm3790, 1, 0
        %v3792 = vadd.s32 %v3788, %v3784
        %v3793 = vadd.s32 %v3789, %v3791
        %v3794 = vadd.s32 %v3793, %v3783
        %v3795 = vadd.s32 %v3794, %v3785
        %v3796 = vand.u32 %v3773, 65535
        %v3797 = vshrl.u32 %v3773, 16
        %v3798 = vand.u32 %v3768, 65535
        %v3799 = vshrl.u32 %v3768, 16
        %v3800 = vmul.u32 %v3796, %v3798
        %v3801 = vmul.u32 %v3796, %v3799
        %v3802 = vmul.u32 %v3797, %v3798
        %v3803 = vmul.u32 %v3797, %v3799
        %v3804 = vshll.u32 %v3801, 16
        %v3805 = vshrl.u32 %v3801, 16
        %v3806 = vshll.u32 %v3802, 16
        %v3807 = vshrl.u32 %v3802, 16
        %vm3808 = vc.u32 %v3800, %v3804
        %v3809 = vsel %vm3808, 1, 0
        %v3810 = vadd.s32 %v3800, %v3804
        %v3811 = vadd.s32 %v3803, %v3809
        %vm3812 = vc.u32 %v3810, %v3806
        %v3813 = vsel %vm3812, 1, 0
        %v3814 = vadd.s32 %v3810, %v3806
        %v3815 = vadd.s32 %v3811, %v3813
        %v3816 = vadd.s32 %v3815, %v3805
        %v3817 = vadd.s32 %v3816, %v3807
        %v3818 = vmul.u32 %v3773, %v3764
        %v3819 = vadd.s32 %v3795, %v3814
        %vm3820 = vc.u32 %v3795, %v3814
        %v3821 = vadd.s32 %v3817, 1
        %v3822 = vsel %vm3820, %v3821, %v3817
        %v3823 = vadd.s32 %v3818, %v3822
        %v3824 = vadd.s32 %v3823, 536870912
        %v3825 = vshrl.u32 %v3824, 30
        %v3826 = vshll.u32 %v3825, 30
        %v3827 = vsub.s32 %v3823, %v3826
        %vm3828 = vcmp.lt.s32.totalorder %v3827, 0
        %v3829 = vsub.s32 0, %v3827
        %v3830 = vsel %vm3828, %v3829, %v3827
        %v3831 = vclz %v3830
        %v3832 = vsub.s32 %v3831, 2
        %vm3833 = vcmp.gt.s32.totalorder 0, %v3832
        %v3834 = vsel %vm3833, 0, %v3832
        %v3835 = vsub.s32 32, %v3834
        %v3836 = vshll.u32 %v3827, %v3834
        %v3837 = vshrl.u32 %v3819, %v3835
        %v3838 = vor.u32 %v3836, %v3837
        %v3839 = vsub.s32 4294967266, %v3834
        %v3840 = vadd.s32 %v3839, 127
        %v3841 = vshll.u32 %v3840, 23
        %v3842 = vor.u32 4788187, %v3841
        %v3843 = vand.u32 2147483647, %v3842
        %v3845 = vcvt.s32.f32 %v3838
        %v3846 = vmul.f32 %v3845, %v3843
        %v3847 = vxor.u32 %v3846, 2147483648
        %v3848 = vsel %vm3727, %v3847, %v3846
        %v3849 = vsub.s32 4, %v3825
        %v3850 = vsel %vm3727, %v3849, %v3825
        %v3851 = vsel %vm3726, %v485, %v3848
        %v3852 = vsel %vm3726, 0, %v3850
        %v3853 = vmul.f32 %v3851, %v3851
        %v3854 = vmul.f32 %v3853, -0.001358992
        %v3855 = vadd.f32 %v3854, 0.041655596
        %v3856 = vmul.f32 %v3853, %v3855
        %v3857 = vadd.f32 %v3856, -0.4999988
        %v3858 = vmul.f32 %v3853, %v3857
        %v3859 = vadd.f32 1.0, %v3858
        %v3860 = vmul.f32 %v3851, %v3851
        %v3861 = vmul.f32 %v3860, -0.00019511016
        %v3862 = vadd.f32 %v3861, 0.008332121
        %v3863 = vmul.f32 %v3860, %v3862
        %v3864 = vadd.f32 %v3863, -0.16666654
        %v3865 = vmul.f32 %v3860, %v3864
        %v3866 = vadd.f32 %v3865, 1.0
        %v3867 = vmul.f32 %v3866, %v3851
        %vm3868 = vweird.f32 %v485
        %v3869 = vadd.s32 %v3852, 3
        %v3870 = vand.u32 %v3869, 3
        %vm3871 = vcmp.lt.s32.totalorder %v3870, 2
        %vm3872 = vcmp.eq.s32.totalorder %v3870, 0
        %v3873 = vxor.u32 %v3867, 2147483648
        %v3874 = vsel %vm3872, %v3859, %v3873
        %vm3875 = vcmp.eq.s32.totalorder %v3870, 2
        %v3876 = vxor.u32 %v3859, 2147483648
        %v3877 = vsel %vm3875, %v3876, %v3867
        %v3878 = vsel %vm3871, %v3874, %v3877
        %v3879 = vsel %vm3868, nan, %v3878
        %v3880 = vand.u32 2147483647, %v526
        %vm3881 = vcmp.le.f32.partialorder %v3880, 0.7853982
        %vm3882 = vcmp.lt.s32.totalorder %v526, 0
        %v3883 = vand.u32 %v526, 2139095040
        %v3884 = vshrl.u32 %v3883, 23
        %v3885 = vsub.s32 %v3884, 127
        %v3886 = vand.u32 2147483647, %v526
        %v3887 = vand.u32 %v3886, 8388607
        %v3888 = vor.u32 %v3887, 8388608
        %v3889 = vsub.s32 0, %v3888
        %v3890 = vadd.s32 %v3885, 1
        %vm3891 = vcmp.gt.s32.totalorder %v3890, 0
        %v3892 = vsel %vm3891, %v3890, 0
        %v3893 = vshrl.u32 %v3892, 5
        %v3894 = vand.u32 %v3892, 31
        %v3895 = vsub.s32 32, %v3894
        %v3896 = vshrl.u32 683565275, %v3895
        %v3897 = vshll.u32 683565275, %v3894
        %v3898 = vshrl.u32 2475754826, %v3895
        %v3899 = vor.u32 %v3897, %v3898
        %v3900 = vshll.u32 2475754826, %v3894
        %v3901 = vshrl.u32 2131351028, %v3895
        %v3902 = vor.u32 %v3900, %v3901
        %v3903 = vshll.u32 2131351028, %v3894
        %v3904 = vshrl.u32 2102212464, %v3895
        %v3905 = vor.u32 %v3903, %v3904
        %v3906 = vshll.u32 2102212464, %v3894
        %v3907 = vshrl.u32 920167782, %v3895
        %v3908 = vor.u32 %v3906, %v3907
        %v3909 = vshll.u32 920167782, %v3894
        %v3910 = vshrl.u32 1326507024, %v3895
        %v3911 = vor.u32 %v3909, %v3910
        %vm3912 = vcmp.lt.s32.totalorder %v3893, 1
        %vm3913 = vcmp.lt.s32.totalorder %v3893, 2
        %vm3914 = vcmp.lt.s32.totalorder %v3893, 3
        %vm3915 = vcmp.lt.s32.totalorder %v3893, 4
        %v3916 = vsel %vm3912, %v3896, %v3899
        %v3917 = vsel %vm3915, %v3905, 2102212464
        %v3918 = vsel %vm3914, %v3902, %v3917
        %v3919 = vsel %vm3913, %v3916, %v3918
        %v3920 = vsel %vm3912, %v3899, %v3902
        %v3921 = vsel %vm3915, %v3908, 920167782
        %v3922 = vsel %vm3914, %v3905, %v3921
        %v3923 = vsel %vm3913, %v3920, %v3922
        %v3924 = vsel %vm3912, %v3902, %v3905
        %v3925 = vsel %vm3915, %v3911, 1326507024
        %v3926 = vsel %vm3914, %v3908, %v3925
        %v3927 = vsel %vm3913, %v3924, %v3926
        %v3928 = vshll.u32 %v3888, 8
        %v3929 = vand.u32 %v3928, 65535
        %v3930 = vshrl.u32 %v3928, 16
        %v3931 = vand.u32 %v3927, 65535
        %v3932 = vshrl.u32 %v3927, 16
        %v3933 = vmul.u32 %v3929, %v3931
        %v3934 = vmul.u32 %v3929, %v3932
        %v3935 = vmul.u32 %v3930, %v3931
        %v3936 = vmul.u32 %v3930, %v3932
        %v3937 = vshll.u32 %v3934, 16
        %v3938 = vshrl.u32 %v3934, 16
        %v3939 = vshll.u32 %v3935, 16
        %v3940 = vshrl.u32 %v3935, 16
        %vm3941 = vc.u32 %v3933, %v3937
        %v3942 = vsel %vm3941, 1, 0
        %v3943 = vadd.s32 %v3933, %v3937
        %v3944 = vadd.s32 %v3936, %v3942
        %vm3945 = vc.u32 %v3943, %v3939
        %v3946 = vsel %vm3945, 1, 0
        %v3947 = vadd.s32 %v3943, %v3939
        %v3948 = vadd.s32 %v3944, %v3946
        %v3949 = vadd.s32 %v3948, %v3938
        %v3950 = vadd.s32 %v3949, %v3940
        %v3951 = vand.u32 %v3928, 65535
        %v3952 = vshrl.u32 %v3928, 16
        %v3953 = vand.u32 %v3923, 65535
        %v3954 = vshrl.u32 %v3923, 16
        %v3955 = vmul.u32 %v3951, %v3953
        %v3956 = vmul.u32 %v3951, %v3954
        %v3957 = vmul.u32 %v3952, %v3953
        %v3958 = vmul.u32 %v3952, %v3954
        %v3959 = vshll.u32 %v3956, 16
        %v3960 = vshrl.u32 %v3956, 16
        %v3961 = vshll.u32 %v3957, 16
        %v3962 = vshrl.u32 %v3957, 16
        %vm3963 = vc.u32 %v3955, %v3959
        %v3964 = vsel %vm3963, 1, 0
        %v3965 = vadd.s32 %v3955, %v3959
        %v3966 = vadd.s32 %v3958, %v3964
        %vm3967 = vc.u32 %v3965, %v3961
        %v3968 = vsel %vm3967, 1, 0
        %v3969 = vadd.s32 %v3965, %v3961
        %v3970 = vadd.s32 %v3966, %v3968
        %v3971 = vadd.s32 %v3970, %v3960
        %v3972 = vadd.s32 %v3971, %v3962
        %v3973 = vmul.u32 %v3928, %v3919
        %v3974 = vadd.s32 %v3950, %v3969
        %vm3975 = vc.u32 %v3950, %v3969
        %v3976 = vadd.s32 %v3972, 1
        %v3977 = vsel %vm3975, %v3976, %v3972
        %v3978 = vadd.s32 %v3973, %v3977
        %v3979 = vadd.s32 %v3978, 536870912
        %v3980 = vshrl.u32 %v3979, 30
        %v3981 = vshll.u32 %v3980, 30
        %v3982 = vsub.s32 %v3978, %v3981
        %vm3983 = vcmp.lt.s32.totalorder %v3982, 0
        %v3984 = vsub.s32 0, %v3982
        %v3985 = vsel %vm3983, %v3984, %v3982
        %v3986 = vclz %v3985
        %v3987 = vsub.s32 %v3986, 2
        %vm3988 = vcmp.gt.s32.totalorder 0, %v3987
        %v3989 = vsel %vm3988, 0, %v3987
        %v3990 = vsub.s32 32, %v3989
        %v3991 = vshll.u32 %v3982, %v3989
        %v3992 = vshrl.u32 %v3974, %v3990
        %v3993 = vor.u32 %v3991, %v3992
        %v3994 = vsub.s32 4294967266, %v3989
        %v3995 = vadd.s32 %v3994, 127
        %v3996 = vshll.u32 %v3995, 23
        %v3997 = vor.u32 4788187, %v3996
        %v3998 = vand.u32 2147483647, %v3997
        %v4000 = vcvt.s32.f32 %v3993
        %v4001 = vmul.f32 %v4000, %v3998
        %v4002 = vxor.u32 %v4001, 2147483648
        %v4003 = vsel %vm3882, %v4002, %v4001
        %v4004 = vsub.s32 4, %v3980
        %v4005 = vsel %vm3882, %v4004, %v3980
        %v4006 = vsel %vm3881, %v526, %v4003
        %v4007 = vsel %vm3881, 0, %v4005
        %v4008 = vmul.f32 %v4006, %v4006
        %v4009 = vmul.f32 %v4008, -0.001358992
        %v4010 = vadd.f32 %v4009, 0.041655596
        %v4011 = vmul.f32 %v4008, %v4010
        %v4012 = vadd.f32 %v4011, -0.4999988
        %v4013 = vmul.f32 %v4008, %v4012
        %v4014 = vadd.f32 1.0, %v4013
        %v4015 = vmul.f32 %v4006, %v4006
        %v4016 = vmul.f32 %v4015, -0.00019511016
        %v4017 = vadd.f32 %v4016, 0.008332121
        %v4018 = vmul.f32 %v4015, %v4017
        %v4019 = vadd.f32 %v4018, -0.16666654
        %v4020 = vmul.f32 %v4015, %v4019
        %v4021 = vadd.f32 %v4020, 1.0
        %v4022 = vmul.f32 %v4021, %v4006
        %vm4023 = vweird.f32 %v526
        %v4024 = vadd.s32 %v4007, 3
        %v4025 = vand.u32 %v4024, 3
        %vm4026 = vcmp.lt.s32.totalorder %v4025, 2
        %vm4027 = vcmp.eq.s32.totalorder %v4025, 0
        %v4028 = vxor.u32 %v4022, 2147483648
        %v4029 = vsel %vm4027, %v4014, %v4028
        %vm4030 = vcmp.eq.s32.totalorder %v4025, 2
        %v4031 = vxor.u32 %v4014, 2147483648
        %v4032 = vsel %vm4030, %v4031, %v4022
        %v4033 = vsel %vm4026, %v4029, %v4032
        %v4034 = vsel %vm4023, nan, %v4033
        %v4035 = vand.u32 2147483647, %v567
        %vm4036 = vcmp.le.f32.partialorder %v4035, 0.7853982
        %vm4037 = vcmp.lt.s32.totalorder %v567, 0
        %v4038 = vand.u32 %v567, 2139095040
        %v4039 = vshrl.u32 %v4038, 23
        %v4040 = vsub.s32 %v4039, 127
        %v4041 = vand.u32 2147483647, %v567
        %v4042 = vand.u32 %v4041, 8388607
        %v4043 = vor.u32 %v4042, 8388608
        %v4044 = vsub.s32 0, %v4043
        %v4045 = vadd.s32 %v4040, 1
        %vm4046 = vcmp.gt.s32.totalorder %v4045, 0
        %v4047 = vsel %vm4046, %v4045, 0
        %v4048 = vshrl.u32 %v4047, 5
        %v4049 = vand.u32 %v4047, 31
        %v4050 = vsub.s32 32, %v4049
        %v4051 = vshrl.u32 683565275, %v4050
        %v4052 = vshll.u32 683565275, %v4049
        %v4053 = vshrl.u32 2475754826, %v4050
        %v4054 = vor.u32 %v4052, %v4053
        %v4055 = vshll.u32 2475754826, %v4049
        %v4056 = vshrl.u32 2131351028, %v4050
        %v4057 = vor.u32 %v4055, %v4056
        %v4058 = vshll.u32 2131351028, %v4049
        %v4059 = vshrl.u32 2102212464, %v4050
        %v4060 = vor.u32 %v4058, %v4059
        %v4061 = vshll.u32 2102212464, %v4049
        %v4062 = vshrl.u32 920167782, %v4050
        %v4063 = vor.u32 %v4061, %v4062
        %v4064 = vshll.u32 920167782, %v4049
        %v4065 = vshrl.u32 1326507024, %v4050
        %v4066 = vor.u32 %v4064, %v4065
        %vm4067 = vcmp.lt.s32.totalorder %v4048, 1
        %vm4068 = vcmp.lt.s32.totalorder %v4048, 2
        %vm4069 = vcmp.lt.s32.totalorder %v4048, 3
        %vm4070 = vcmp.lt.s32.totalorder %v4048, 4
        %v4071 = vsel %vm4067, %v4051, %v4054
        %v4072 = vsel %vm4070, %v4060, 2102212464
        %v4073 = vsel %vm4069, %v4057, %v4072
        %v4074 = vsel %vm4068, %v4071, %v4073
        %v4075 = vsel %vm4067, %v4054, %v4057
        %v4076 = vsel %vm4070, %v4063, 920167782
        %v4077 = vsel %vm4069, %v4060, %v4076
        %v4078 = vsel %vm4068, %v4075, %v4077
        %v4079 = vsel %vm4067, %v4057, %v4060
        %v4080 = vsel %vm4070, %v4066, 1326507024
        %v4081 = vsel %vm4069, %v4063, %v4080
        %v4082 = vsel %vm4068, %v4079, %v4081
        %v4083 = vshll.u32 %v4043, 8
        %v4084 = vand.u32 %v4083, 65535
        %v4085 = vshrl.u32 %v4083, 16
        %v4086 = vand.u32 %v4082, 65535
        %v4087 = vshrl.u32 %v4082, 16
        %v4088 = vmul.u32 %v4084, %v4086
        %v4089 = vmul.u32 %v4084, %v4087
        %v4090 = vmul.u32 %v4085, %v4086
        %v4091 = vmul.u32 %v4085, %v4087
        %v4092 = vshll.u32 %v4089, 16
        %v4093 = vshrl.u32 %v4089, 16
        %v4094 = vshll.u32 %v4090, 16
        %v4095 = vshrl.u32 %v4090, 16
        %vm4096 = vc.u32 %v4088, %v4092
        %v4097 = vsel %vm4096, 1, 0
        %v4098 = vadd.s32 %v4088, %v4092
        %v4099 = vadd.s32 %v4091, %v4097
        %vm4100 = vc.u32 %v4098, %v4094
        %v4101 = vsel %vm4100, 1, 0
        %v4102 = vadd.s32 %v4098, %v4094
        %v4103 = vadd.s32 %v4099, %v4101
        %v4104 = vadd.s32 %v4103, %v4093
        %v4105 = vadd.s32 %v4104, %v4095
        %v4106 = vand.u32 %v4083, 65535
        %v4107 = vshrl.u32 %v4083, 16
        %v4108 = vand.u32 %v4078, 65535
        %v4109 = vshrl.u32 %v4078, 16
        %v4110 = vmul.u32 %v4106, %v4108
        %v4111 = vmul.u32 %v4106, %v4109
        %v4112 = vmul.u32 %v4107, %v4108
        %v4113 = vmul.u32 %v4107, %v4109
        %v4114 = vshll.u32 %v4111, 16
        %v4115 = vshrl.u32 %v4111, 16
        %v4116 = vshll.u32 %v4112, 16
        %v4117 = vshrl.u32 %v4112, 16
        %vm4118 = vc.u32 %v4110, %v4114
        %v4119 = vsel %vm4118, 1, 0
        %v4120 = vadd.s32 %v4110, %v4114
        %v4121 = vadd.s32 %v4113, %v4119
        %vm4122 = vc.u32 %v4120, %v4116
        %v4123 = vsel %vm4122, 1, 0
        %v4124 = vadd.s32 %v4120, %v4116
        %v4125 = vadd.s32 %v4121, %v4123
        %v4126 = vadd.s32 %v4125, %v4115
        %v4127 = vadd.s32 %v4126, %v4117
        %v4128 = vmul.u32 %v4083, %v4074
        %v4129 = vadd.s32 %v4105, %v4124
        %vm4130 = vc.u32 %v4105, %v4124
        %v4131 = vadd.s32 %v4127, 1
        %v4132 = vsel %vm4130, %v4131, %v4127
        %v4133 = vadd.s32 %v4128, %v4132
        %v4134 = vadd.s32 %v4133, 536870912
        %v4135 = vshrl.u32 %v4134, 30
        %v4136 = vshll.u32 %v4135, 30
        %v4137 = vsub.s32 %v4133, %v4136
        %vm4138 = vcmp.lt.s32.totalorder %v4137, 0
        %v4139 = vsub.s32 0, %v4137
        %v4140 = vsel %vm4138, %v4139, %v4137
        %v4141 = vclz %v4140
        %v4142 = vsub.s32 %v4141, 2
        %vm4143 = vcmp.gt.s32.totalorder 0, %v4142
        %v4144 = vsel %vm4143, 0, %v4142
        %v4145 = vsub.s32 32, %v4144
        %v4146 = vshll.u32 %v4137, %v4144
        %v4147 = vshrl.u32 %v4129, %v4145
        %v4148 = vor.u32 %v4146, %v4147
        %v4149 = vsub.s32 4294967266, %v4144
        %v4150 = vadd.s32 %v4149, 127
        %v4151 = vshll.u32 %v4150, 23
        %v4152 = vor.u32 4788187, %v4151
        %v4153 = vand.u32 2147483647, %v4152
        %v4155 = vcvt.s32.f32 %v4148
        %v4156 = vmul.f32 %v4155, %v4153
        %v4157 = vxor.u32 %v4156, 2147483648
        %v4158 = vsel %vm4037, %v4157, %v4156
        %v4159 = vsub.s32 4, %v4135
        %v4160 = vsel %vm4037, %v4159, %v4135
        %v4161 = vsel %vm4036, %v567, %v4158
        %v4162 = vsel %vm4036, 0, %v4160
        %v4163 = vmul.f32 %v4161, %v4161
        %v4164 = vmul.f32 %v4163, -0.001358992
        %v4165 = vadd.f32 %v4164, 0.041655596
        %v4166 = vmul.f32 %v4163, %v4165
        %v4167 = vadd.f32 %v4166, -0.4999988
        %v4168 = vmul.f32 %v4163, %v4167
        %v4169 = vadd.f32 1.0, %v4168
        %v4170 = vmul.f32 %v4161, %v4161
        %v4171 = vmul.f32 %v4170, -0.00019511016
        %v4172 = vadd.f32 %v4171, 0.008332121
        %v4173 = vmul.f32 %v4170, %v4172
        %v4174 = vadd.f32 %v4173, -0.16666654
        %v4175 = vmul.f32 %v4170, %v4174
        %v4176 = vadd.f32 %v4175, 1.0
        %v4177 = vmul.f32 %v4176, %v4161
        %vm4178 = vweird.f32 %v567
        %v4179 = vadd.s32 %v4162, 3
        %v4180 = vand.u32 %v4179, 3
        %vm4181 = vcmp.lt.s32.totalorder %v4180, 2
        %vm4182 = vcmp.eq.s32.totalorder %v4180, 0
        %v4183 = vxor.u32 %v4177, 2147483648
        %v4184 = vsel %vm4182, %v4169, %v4183
        %vm4185 = vcmp.eq.s32.totalorder %v4180, 2
        %v4186 = vxor.u32 %v4169, 2147483648
        %v4187 = vsel %vm4185, %v4186, %v4177
        %v4188 = vsel %vm4181, %v4184, %v4187
        %v4189 = vsel %vm4178, nan, %v4188
        %v4190 = vand.u32 2147483647, %v608
        %vm4191 = vcmp.le.f32.partialorder %v4190, 0.7853982
        %vm4192 = vcmp.lt.s32.totalorder %v608, 0
        %v4193 = vand.u32 %v608, 2139095040
        %v4194 = vshrl.u32 %v4193, 23
        %v4195 = vsub.s32 %v4194, 127
        %v4196 = vand.u32 2147483647, %v608
        %v4197 = vand.u32 %v4196, 8388607
        %v4198 = vor.u32 %v4197, 8388608
        %v4199 = vsub.s32 0, %v4198
        %v4200 = vadd.s32 %v4195, 1
        %vm4201 = vcmp.gt.s32.totalorder %v4200, 0
        %v4202 = vsel %vm4201, %v4200, 0
        %v4203 = vshrl.u32 %v4202, 5
        %v4204 = vand.u32 %v4202, 31
        %v4205 = vsub.s32 32, %v4204
        %v4206 = vshrl.u32 683565275, %v4205
        %v4207 = vshll.u32 683565275, %v4204
        %v4208 = vshrl.u32 2475754826, %v4205
        %v4209 = vor.u32 %v4207, %v4208
        %v4210 = vshll.u32 2475754826, %v4204
        %v4211 = vshrl.u32 2131351028, %v4205
        %v4212 = vor.u32 %v4210, %v4211
        %v4213 = vshll.u32 2131351028, %v4204
        %v4214 = vshrl.u32 2102212464, %v4205
        %v4215 = vor.u32 %v4213, %v4214
        %v4216 = vshll.u32 2102212464, %v4204
        %v4217 = vshrl.u32 920167782, %v4205
        %v4218 = vor.u32 %v4216, %v4217
        %v4219 = vshll.u32 920167782, %v4204
        %v4220 = vshrl.u32 1326507024, %v4205
        %v4221 = vor.u32 %v4219, %v4220
        %vm4222 = vcmp.lt.s32.totalorder %v4203, 1
        %vm4223 = vcmp.lt.s32.totalorder %v4203, 2
        %vm4224 = vcmp.lt.s32.totalorder %v4203, 3
        %vm4225 = vcmp.lt.s32.totalorder %v4203, 4
        %v4226 = vsel %vm4222, %v4206, %v4209
        %v4227 = vsel %vm4225, %v4215, 2102212464
        %v4228 = vsel %vm4224, %v4212, %v4227
        %v4229 = vsel %vm4223, %v4226, %v4228
        %v4230 = vsel %vm4222, %v4209, %v4212
        %v4231 = vsel %vm4225, %v4218, 920167782
        %v4232 = vsel %vm4224, %v4215, %v4231
        %v4233 = vsel %vm4223, %v4230, %v4232
        %v4234 = vsel %vm4222, %v4212, %v4215
        %v4235 = vsel %vm4225, %v4221, 1326507024
        %v4236 = vsel %vm4224, %v4218, %v4235
        %v4237 = vsel %vm4223, %v4234, %v4236
        %v4238 = vshll.u32 %v4198, 8
        %v4239 = vand.u32 %v4238, 65535
        %v4240 = vshrl.u32 %v4238, 16
        %v4241 = vand.u32 %v4237, 65535
        %v4242 = vshrl.u32 %v4237, 16
        %v4243 = vmul.u32 %v4239, %v4241
        %v4244 = vmul.u32 %v4239, %v4242
        %v4245 = vmul.u32 %v4240, %v4241
        %v4246 = vmul.u32 %v4240, %v4242
        %v4247 = vshll.u32 %v4244, 16
        %v4248 = vshrl.u32 %v4244, 16
        %v4249 = vshll.u32 %v4245, 16
        %v4250 = vshrl.u32 %v4245, 16
        %vm4251 = vc.u32 %v4243, %v4247
        %v4252 = vsel %vm4251, 1, 0
        %v4253 = vadd.s32 %v4243, %v4247
        %v4254 = vadd.s32 %v4246, %v4252
        %vm4255 = vc.u32 %v4253, %v4249
        %v4256 = vsel %vm4255, 1, 0
        %v4257 = vadd.s32 %v4253, %v4249
        %v4258 = vadd.s32 %v4254, %v4256
        %v4259 = vadd.s32 %v4258, %v4248
        %v4260 = vadd.s32 %v4259, %v4250
        %v4261 = vand.u32 %v4238, 65535
        %v4262 = vshrl.u32 %v4238, 16
        %v4263 = vand.u32 %v4233, 65535
        %v4264 = vshrl.u32 %v4233, 16
        %v4265 = vmul.u32 %v4261, %v4263
        %v4266 = vmul.u32 %v4261, %v4264
        %v4267 = vmul.u32 %v4262, %v4263
        %v4268 = vmul.u32 %v4262, %v4264
        %v4269 = vshll.u32 %v4266, 16
        %v4270 = vshrl.u32 %v4266, 16
        %v4271 = vshll.u32 %v4267, 16
        %v4272 = vshrl.u32 %v4267, 16
        %vm4273 = vc.u32 %v4265, %v4269
        %v4274 = vsel %vm4273, 1, 0
        %v4275 = vadd.s32 %v4265, %v4269
        %v4276 = vadd.s32 %v4268, %v4274
        %vm4277 = vc.u32 %v4275, %v4271
        %v4278 = vsel %vm4277, 1, 0
        %v4279 = vadd.s32 %v4275, %v4271
        %v4280 = vadd.s32 %v4276, %v4278
        %v4281 = vadd.s32 %v4280, %v4270
        %v4282 = vadd.s32 %v4281, %v4272
        %v4283 = vmul.u32 %v4238, %v4229
        %v4284 = vadd.s32 %v4260, %v4279
        %vm4285 = vc.u32 %v4260, %v4279
        %v4286 = vadd.s32 %v4282, 1
        %v4287 = vsel %vm4285, %v4286, %v4282
        %v4288 = vadd.s32 %v4283, %v4287
        %v4289 = vadd.s32 %v4288, 536870912
        %v4290 = vshrl.u32 %v4289, 30
        %v4291 = vshll.u32 %v4290, 30
        %v4292 = vsub.s32 %v4288, %v4291
        %vm4293 = vcmp.lt.s32.totalorder %v4292, 0
        %v4294 = vsub.s32 0, %v4292
        %v4295 = vsel %vm4293, %v4294, %v4292
        %v4296 = vclz %v4295
        %v4297 = vsub.s32 %v4296, 2
        %vm4298 = vcmp.gt.s32.totalorder 0, %v4297
        %v4299 = vsel %vm4298, 0, %v4297
        %v4300 = vsub.s32 32, %v4299
        %v4301 = vshll.u32 %v4292, %v4299
        %v4302 = vshrl.u32 %v4284, %v4300
        %v4303 = vor.u32 %v4301, %v4302
        %v4304 = vsub.s32 4294967266, %v4299
        %v4305 = vadd.s32 %v4304, 127
        %v4306 = vshll.u32 %v4305, 23
        %v4307 = vor.u32 4788187, %v4306
        %v4308 = vand.u32 2147483647, %v4307
        %v4310 = vcvt.s32.f32 %v4303
        %v4311 = vmul.f32 %v4310, %v4308
        %v4312 = vxor.u32 %v4311, 2147483648
        %v4313 = vsel %vm4192, %v4312, %v4311
        %v4314 = vsub.s32 4, %v4290
        %v4315 = vsel %vm4192, %v4314, %v4290
        %v4316 = vsel %vm4191, %v608, %v4313
        %v4317 = vsel %vm4191, 0, %v4315
        %v4318 = vmul.f32 %v4316, %v4316
        %v4319 = vmul.f32 %v4318, -0.001358992
        %v4320 = vadd.f32 %v4319, 0.041655596
        %v4321 = vmul.f32 %v4318, %v4320
        %v4322 = vadd.f32 %v4321, -0.4999988
        %v4323 = vmul.f32 %v4318, %v4322
        %v4324 = vadd.f32 1.0, %v4323
        %v4325 = vmul.f32 %v4316, %v4316
        %v4326 = vmul.f32 %v4325, -0.00019511016
        %v4327 = vadd.f32 %v4326, 0.008332121
        %v4328 = vmul.f32 %v4325, %v4327
        %v4329 = vadd.f32 %v4328, -0.16666654
        %v4330 = vmul.f32 %v4325, %v4329
        %v4331 = vadd.f32 %v4330, 1.0
        %v4332 = vmul.f32 %v4331, %v4316
        %vm4333 = vweird.f32 %v608
        %v4334 = vadd.s32 %v4317, 3
        %v4335 = vand.u32 %v4334, 3
        %vm4336 = vcmp.lt.s32.totalorder %v4335, 2
        %vm4337 = vcmp.eq.s32.totalorder %v4335, 0
        %v4338 = vxor.u32 %v4332, 2147483648
        %v4339 = vsel %vm4337, %v4324, %v4338
        %vm4340 = vcmp.eq.s32.totalorder %v4335, 2
        %v4341 = vxor.u32 %v4324, 2147483648
        %v4342 = vsel %vm4340, %v4341, %v4332
        %v4343 = vsel %vm4336, %v4339, %v4342
        %v4344 = vsel %vm4333, nan, %v4343
        %v4345 = vand.u32 2147483647, %v324
        %vm4346 = vcmp.le.f32.partialorder %v4345, 0.7853982
        %vm4347 = vcmp.lt.s32.totalorder %v324, 0
        %v4348 = vand.u32 %v324, 2139095040
        %v4349 = vshrl.u32 %v4348, 23
        %v4350 = vsub.s32 %v4349, 127
        %v4351 = vand.u32 2147483647, %v324
        %v4352 = vand.u32 %v4351, 8388607
        %v4353 = vor.u32 %v4352, 8388608
        %v4354 = vsub.s32 0, %v4353
        %v4355 = vadd.s32 %v4350, 1
        %vm4356 = vcmp.gt.s32.totalorder %v4355, 0
        %v4357 = vsel %vm4356, %v4355, 0
        %v4358 = vshrl.u32 %v4357, 5
        %v4359 = vand.u32 %v4357, 31
        %v4360 = vsub.s32 32, %v4359
        %v4361 = vshrl.u32 683565275, %v4360
        %v4362 = vshll.u32 683565275, %v4359
        %v4363 = vshrl.u32 2475754826, %v4360
        %v4364 = vor.u32 %v4362, %v4363
        %v4365 = vshll.u32 2475754826, %v4359
        %v4366 = vshrl.u32 2131351028, %v4360
        %v4367 = vor.u32 %v4365, %v4366
        %v4368 = vshll.u32 2131351028, %v4359
        %v4369 = vshrl.u32 2102212464, %v4360
        %v4370 = vor.u32 %v4368, %v4369
        %v4371 = vshll.u32 2102212464, %v4359
        %v4372 = vshrl.u32 920167782, %v4360
        %v4373 = vor.u32 %v4371, %v4372
        %v4374 = vshll.u32 920167782, %v4359
        %v4375 = vshrl.u32 1326507024, %v4360
        %v4376 = vor.u32 %v4374, %v4375
        %vm4377 = vcmp.lt.s32.totalorder %v4358, 1
        %vm4378 = vcmp.lt.s32.totalorder %v4358, 2
        %vm4379 = vcmp.lt.s32.totalorder %v4358, 3
        %vm4380 = vcmp.lt.s32.totalorder %v4358, 4
        %v4381 = vsel %vm4377, %v4361, %v4364
        %v4382 = vsel %vm4380, %v4370, 2102212464
        %v4383 = vsel %vm4379, %v4367, %v4382
        %v4384 = vsel %vm4378, %v4381, %v4383
        %v4385 = vsel %vm4377, %v4364, %v4367
        %v4386 = vsel %vm4380, %v4373, 920167782
        %v4387 = vsel %vm4379, %v4370, %v4386
        %v4388 = vsel %vm4378, %v4385, %v4387
        %v4389 = vsel %vm4377, %v4367, %v4370
        %v4390 = vsel %vm4380, %v4376, 1326507024
        %v4391 = vsel %vm4379, %v4373, %v4390
        %v4392 = vsel %vm4378, %v4389, %v4391
        %v4393 = vshll.u32 %v4353, 8
        %v4394 = vand.u32 %v4393, 65535
        %v4395 = vshrl.u32 %v4393, 16
        %v4396 = vand.u32 %v4392, 65535
        %v4397 = vshrl.u32 %v4392, 16
        %v4398 = vmul.u32 %v4394, %v4396
        %v4399 = vmul.u32 %v4394, %v4397
        %v4400 = vmul.u32 %v4395, %v4396
        %v4401 = vmul.u32 %v4395, %v4397
        %v4402 = vshll.u32 %v4399, 16
        %v4403 = vshrl.u32 %v4399, 16
        %v4404 = vshll.u32 %v4400, 16
        %v4405 = vshrl.u32 %v4400, 16
        %vm4406 = vc.u32 %v4398, %v4402
        %v4407 = vsel %vm4406, 1, 0
        %v4408 = vadd.s32 %v4398, %v4402
        %v4409 = vadd.s32 %v4401, %v4407
        %vm4410 = vc.u32 %v4408, %v4404
        %v4411 = vsel %vm4410, 1, 0
        %v4412 = vadd.s32 %v4408, %v4404
        %v4413 = vadd.s32 %v4409, %v4411
        %v4414 = vadd.s32 %v4413, %v4403
        %v4415 = vadd.s32 %v4414, %v4405
        %v4416 = vand.u32 %v4393, 65535
        %v4417 = vshrl.u32 %v4393, 16
        %v4418 = vand.u32 %v4388, 65535
        %v4419 = vshrl.u32 %v4388, 16
        %v4420 = vmul.u32 %v4416, %v4418
        %v4421 = vmul.u32 %v4416, %v4419
        %v4422 = vmul.u32 %v4417, %v4418
        %v4423 = vmul.u32 %v4417, %v4419
        %v4424 = vshll.u32 %v4421, 16
        %v4425 = vshrl.u32 %v4421, 16
        %v4426 = vshll.u32 %v4422, 16
        %v4427 = vshrl.u32 %v4422, 16
        %vm4428 = vc.u32 %v4420, %v4424
        %v4429 = vsel %vm4428, 1, 0
        %v4430 = vadd.s32 %v4420, %v4424
        %v4431 = vadd.s32 %v4423, %v4429
        %vm4432 = vc.u32 %v4430, %v4426
        %v4433 = vsel %vm4432, 1, 0
        %v4434 = vadd.s32 %v4430, %v4426
        %v4435 = vadd.s32 %v4431, %v4433
        %v4436 = vadd.s32 %v4435, %v4425
        %v4437 = vadd.s32 %v4436, %v4427
        %v4438 = vmul.u32 %v4393, %v4384
        %v4439 = vadd.s32 %v4415, %v4434
        %vm4440 = vc.u32 %v4415, %v4434
        %v4441 = vadd.s32 %v4437, 1
        %v4442 = vsel %vm4440, %v4441, %v4437
        %v4443 = vadd.s32 %v4438, %v4442
        %v4444 = vadd.s32 %v4443, 536870912
        %v4445 = vshrl.u32 %v4444, 30
        %v4446 = vshll.u32 %v4445, 30
        %v4447 = vsub.s32 %v4443, %v4446
        %vm4448 = vcmp.lt.s32.totalorder %v4447, 0
        %v4449 = vsub.s32 0, %v4447
        %v4450 = vsel %vm4448, %v4449, %v4447
        %v4451 = vclz %v4450
        %v4452 = vsub.s32 %v4451, 2
        %vm4453 = vcmp.gt.s32.totalorder 0, %v4452
        %v4454 = vsel %vm4453, 0, %v4452
        %v4455 = vsub.s32 32, %v4454
        %v4456 = vshll.u32 %v4447, %v4454
        %v4457 = vshrl.u32 %v4439, %v4455
        %v4458 = vor.u32 %v4456, %v4457
        %v4459 = vsub.s32 4294967266, %v4454
        %v4460 = vadd.s32 %v4459, 127
        %v4461 = vshll.u32 %v4460, 23
        %v4462 = vor.u32 4788187, %v4461
        %v4463 = vand.u32 2147483647, %v4462
        %v4465 = vcvt.s32.f32 %v4458
        %v4466 = vmul.f32 %v4465, %v4463
        %v4467 = vxor.u32 %v4466, 2147483648
        %v4468 = vsel %vm4347, %v4467, %v4466
        %v4469 = vsub.s32 4, %v4445
        %v4470 = vsel %vm4347, %v4469, %v4445
        %v4471 = vsel %vm4346, %v324, %v4468
        %v4472 = vsel %vm4346, 0, %v4470
        %v4473 = vmul.f32 %v4471, %v4471
        %v4474 = vmul.f32 %v4473, -0.001358992
        %v4475 = vadd.f32 %v4474, 0.041655596
        %v4476 = vmul.f32 %v4473, %v4475
        %v4477 = vadd.f32 %v4476, -0.4999988
        %v4478 = vmul.f32 %v4473, %v4477
        %v4479 = vadd.f32 1.0, %v4478
        %v4480 = vmul.f32 %v4471, %v4471
        %v4481 = vmul.f32 %v4480, -0.00019511016
        %v4482 = vadd.f32 %v4481, 0.008332121
        %v4483 = vmul.f32 %v4480, %v4482
        %v4484 = vadd.f32 %v4483, -0.16666654
        %v4485 = vmul.f32 %v4480, %v4484
        %v4486 = vadd.f32 %v4485, 1.0
        %v4487 = vmul.f32 %v4486, %v4471
        %vm4488 = vweird.f32 %v324
        %v4489 = vadd.s32 %v4472, 3
        %v4490 = vand.u32 %v4489, 3
        %vm4491 = vcmp.lt.s32.totalorder %v4490, 2
        %vm4492 = vcmp.eq.s32.totalorder %v4490, 0
        %v4493 = vxor.u32 %v4487, 2147483648
        %v4494 = vsel %vm4492, %v4479, %v4493
        %vm4495 = vcmp.eq.s32.totalorder %v4490, 2
        %v4496 = vxor.u32 %v4479, 2147483648
        %v4497 = vsel %vm4495, %v4496, %v4487
        %v4498 = vsel %vm4491, %v4494, %v4497
        %v4499 = vsel %vm4488, nan, %v4498
        %v4500 = vand.u32 2147483647, %v365
        %vm4501 = vcmp.le.f32.partialorder %v4500, 0.7853982
        %vm4502 = vcmp.lt.s32.totalorder %v365, 0
        %v4503 = vand.u32 %v365, 2139095040
        %v4504 = vshrl.u32 %v4503, 23
        %v4505 = vsub.s32 %v4504, 127
        %v4506 = vand.u32 2147483647, %v365
        %v4507 = vand.u32 %v4506, 8388607
        %v4508 = vor.u32 %v4507, 8388608
        %v4509 = vsub.s32 0, %v4508
        %v4510 = vadd.s32 %v4505, 1
        %vm4511 = vcmp.gt.s32.totalorder %v4510, 0
        %v4512 = vsel %vm4511, %v4510, 0
        %v4513 = vshrl.u32 %v4512, 5
        %v4514 = vand.u32 %v4512, 31
        %v4515 = vsub.s32 32, %v4514
        %v4516 = vshrl.u32 683565275, %v4515
        %v4517 = vshll.u32 683565275, %v4514
        %v4518 = vshrl.u32 2475754826, %v4515
        %v4519 = vor.u32 %v4517, %v4518
        %v4520 = vshll.u32 2475754826, %v4514
        %v4521 = vshrl.u32 2131351028, %v4515
        %v4522 = vor.u32 %v4520, %v4521
        %v4523 = vshll.u32 2131351028, %v4514
        %v4524 = vshrl.u32 2102212464, %v4515
        %v4525 = vor.u32 %v4523, %v4524
        %v4526 = vshll.u32 2102212464, %v4514
        %v4527 = vshrl.u32 920167782, %v4515
        %v4528 = vor.u32 %v4526, %v4527
        %v4529 = vshll.u32 920167782, %v4514
        %v4530 = vshrl.u32 1326507024, %v4515
        %v4531 = vor.u32 %v4529, %v4530
        %vm4532 = vcmp.lt.s32.totalorder %v4513, 1
        %vm4533 = vcmp.lt.s32.totalorder %v4513, 2
        %vm4534 = vcmp.lt.s32.totalorder %v4513, 3
        %vm4535 = vcmp.lt.s32.totalorder %v4513, 4
        %v4536 = vsel %vm4532, %v4516, %v4519
        %v4537 = vsel %vm4535, %v4525, 2102212464
        %v4538 = vsel %vm4534, %v4522, %v4537
        %v4539 = vsel %vm4533, %v4536, %v4538
        %v4540 = vsel %vm4532, %v4519, %v4522
        %v4541 = vsel %vm4535, %v4528, 920167782
        %v4542 = vsel %vm4534, %v4525, %v4541
        %v4543 = vsel %vm4533, %v4540, %v4542
        %v4544 = vsel %vm4532, %v4522, %v4525
        %v4545 = vsel %vm4535, %v4531, 1326507024
        %v4546 = vsel %vm4534, %v4528, %v4545
        %v4547 = vsel %vm4533, %v4544, %v4546
        %v4548 = vshll.u32 %v4508, 8
        %v4549 = vand.u32 %v4548, 65535
        %v4550 = vshrl.u32 %v4548, 16
        %v4551 = vand.u32 %v4547, 65535
        %v4552 = vshrl.u32 %v4547, 16
        %v4553 = vmul.u32 %v4549, %v4551
        %v4554 = vmul.u32 %v4549, %v4552
        %v4555 = vmul.u32 %v4550, %v4551
        %v4556 = vmul.u32 %v4550, %v4552
        %v4557 = vshll.u32 %v4554, 16
        %v4558 = vshrl.u32 %v4554, 16
        %v4559 = vshll.u32 %v4555, 16
        %v4560 = vshrl.u32 %v4555, 16
        %vm4561 = vc.u32 %v4553, %v4557
        %v4562 = vsel %vm4561, 1, 0
        %v4563 = vadd.s32 %v4553, %v4557
        %v4564 = vadd.s32 %v4556, %v4562
        %vm4565 = vc.u32 %v4563, %v4559
        %v4566 = vsel %vm4565, 1, 0
        %v4567 = vadd.s32 %v4563, %v4559
        %v4568 = vadd.s32 %v4564, %v4566
        %v4569 = vadd.s32 %v4568, %v4558
        %v4570 = vadd.s32 %v4569, %v4560
        %v4571 = vand.u32 %v4548, 65535
        %v4572 = vshrl.u32 %v4548, 16
        %v4573 = vand.u32 %v4543, 65535
        %v4574 = vshrl.u32 %v4543, 16
        %v4575 = vmul.u32 %v4571, %v4573
        %v4576 = vmul.u32 %v4571, %v4574
        %v4577 = vmul.u32 %v4572, %v4573
        %v4578 = vmul.u32 %v4572, %v4574
        %v4579 = vshll.u32 %v4576, 16
        %v4580 = vshrl.u32 %v4576, 16
        %v4581 = vshll.u32 %v4577, 16
        %v4582 = vshrl.u32 %v4577, 16
        %vm4583 = vc.u32 %v4575, %v4579
        %v4584 = vsel %vm4583, 1, 0
        %v4585 = vadd.s32 %v4575, %v4579
        %v4586 = vadd.s32 %v4578, %v4584
        %vm4587 = vc.u32 %v4585, %v4581
        %v4588 = vsel %vm4587, 1, 0
        %v4589 = vadd.s32 %v4585, %v4581
        %v4590 = vadd.s32 %v4586, %v4588
        %v4591 = vadd.s32 %v4590, %v4580
        %v4592 = vadd.s32 %v4591, %v4582
        %v4593 = vmul.u32 %v4548, %v4539
        %v4594 = vadd.s32 %v4570, %v4589
        %vm4595 = vc.u32 %v4570, %v4589
        %v4596 = vadd.s32 %v4592, 1
        %v4597 = vsel %vm4595, %v4596, %v4592
        %v4598 = vadd.s32 %v4593, %v4597
        %v4599 = vadd.s32 %v4598, 536870912
        %v4600 = vshrl.u32 %v4599, 30
        %v4601 = vshll.u32 %v4600, 30
        %v4602 = vsub.s32 %v4598, %v4601
        %vm4603 = vcmp.lt.s32.totalorder %v4602, 0
        %v4604 = vsub.s32 0, %v4602
        %v4605 = vsel %vm4603, %v4604, %v4602
        %v4606 = vclz %v4605
        %v4607 = vsub.s32 %v4606, 2
        %vm4608 = vcmp.gt.s32.totalorder 0, %v4607
        %v4609 = vsel %vm4608, 0, %v4607
        %v4610 = vsub.s32 32, %v4609
        %v4611 = vshll.u32 %v4602, %v4609
        %v4612 = vshrl.u32 %v4594, %v4610
        %v4613 = vor.u32 %v4611, %v4612
        %v4614 = vsub.s32 4294967266, %v4609
        %v4615 = vadd.s32 %v4614, 127
        %v4616 = vshll.u32 %v4615, 23
        %v4617 = vor.u32 4788187, %v4616
        %v4618 = vand.u32 2147483647, %v4617
        %v4620 = vcvt.s32.f32 %v4613
        %v4621 = vmul.f32 %v4620, %v4618
        %v4622 = vxor.u32 %v4621, 2147483648
        %v4623 = vsel %vm4502, %v4622, %v4621
        %v4624 = vsub.s32 4, %v4600
        %v4625 = vsel %vm4502, %v4624, %v4600
        %v4626 = vsel %vm4501, %v365, %v4623
        %v4627 = vsel %vm4501, 0, %v4625
        %v4628 = vmul.f32 %v4626, %v4626
        %v4629 = vmul.f32 %v4628, -0.001358992
        %v4630 = vadd.f32 %v4629, 0.041655596
        %v4631 = vmul.f32 %v4628, %v4630
        %v4632 = vadd.f32 %v4631, -0.4999988
        %v4633 = vmul.f32 %v4628, %v4632
        %v4634 = vadd.f32 1.0, %v4633
        %v4635 = vmul.f32 %v4626, %v4626
        %v4636 = vmul.f32 %v4635, -0.00019511016
        %v4637 = vadd.f32 %v4636, 0.008332121
        %v4638 = vmul.f32 %v4635, %v4637
        %v4639 = vadd.f32 %v4638, -0.16666654
        %v4640 = vmul.f32 %v4635, %v4639
        %v4641 = vadd.f32 %v4640, 1.0
        %v4642 = vmul.f32 %v4641, %v4626
        %vm4643 = vweird.f32 %v365
        %v4644 = vadd.s32 %v4627, 3
        %v4645 = vand.u32 %v4644, 3
        %vm4646 = vcmp.lt.s32.totalorder %v4645, 2
        %vm4647 = vcmp.eq.s32.totalorder %v4645, 0
        %v4648 = vxor.u32 %v4642, 2147483648
        %v4649 = vsel %vm4647, %v4634, %v4648
        %vm4650 = vcmp.eq.s32.totalorder %v4645, 2
        %v4651 = vxor.u32 %v4634, 2147483648
        %v4652 = vsel %vm4650, %v4651, %v4642
        %v4653 = vsel %vm4646, %v4649, %v4652
        %v4654 = vsel %vm4643, nan, %v4653
        %v4655 = vand.u32 2147483647, %v406
        %vm4656 = vcmp.le.f32.partialorder %v4655, 0.7853982
        %vm4657 = vcmp.lt.s32.totalorder %v406, 0
        %v4658 = vand.u32 %v406, 2139095040
        %v4659 = vshrl.u32 %v4658, 23
        %v4660 = vsub.s32 %v4659, 127
        %v4661 = vand.u32 2147483647, %v406
        %v4662 = vand.u32 %v4661, 8388607
        %v4663 = vor.u32 %v4662, 8388608
        %v4664 = vsub.s32 0, %v4663
        %v4665 = vadd.s32 %v4660, 1
        %vm4666 = vcmp.gt.s32.totalorder %v4665, 0
        %v4667 = vsel %vm4666, %v4665, 0
        %v4668 = vshrl.u32 %v4667, 5
        %v4669 = vand.u32 %v4667, 31
        %v4670 = vsub.s32 32, %v4669
        %v4671 = vshrl.u32 683565275, %v4670
        %v4672 = vshll.u32 683565275, %v4669
        %v4673 = vshrl.u32 2475754826, %v4670
        %v4674 = vor.u32 %v4672, %v4673
        %v4675 = vshll.u32 2475754826, %v4669
        %v4676 = vshrl.u32 2131351028, %v4670
        %v4677 = vor.u32 %v4675, %v4676
        %v4678 = vshll.u32 2131351028, %v4669
        %v4679 = vshrl.u32 2102212464, %v4670
        %v4680 = vor.u32 %v4678, %v4679
        %v4681 = vshll.u32 2102212464, %v4669
        %v4682 = vshrl.u32 920167782, %v4670
        %v4683 = vor.u32 %v4681, %v4682
        %v4684 = vshll.u32 920167782, %v4669
        %v4685 = vshrl.u32 1326507024, %v4670
        %v4686 = vor.u32 %v4684, %v4685
        %vm4687 = vcmp.lt.s32.totalorder %v4668, 1
        %vm4688 = vcmp.lt.s32.totalorder %v4668, 2
        %vm4689 = vcmp.lt.s32.totalorder %v4668, 3
        %vm4690 = vcmp.lt.s32.totalorder %v4668, 4
        %v4691 = vsel %vm4687, %v4671, %v4674
        %v4692 = vsel %vm4690, %v4680, 2102212464
        %v4693 = vsel %vm4689, %v4677, %v4692
        %v4694 = vsel %vm4688, %v4691, %v4693
        %v4695 = vsel %vm4687, %v4674, %v4677
        %v4696 = vsel %vm4690, %v4683, 920167782
        %v4697 = vsel %vm4689, %v4680, %v4696
        %v4698 = vsel %vm4688, %v4695, %v4697
        %v4699 = vsel %vm4687, %v4677, %v4680
        %v4700 = vsel %vm4690, %v4686, 1326507024
        %v4701 = vsel %vm4689, %v4683, %v4700
        %v4702 = vsel %vm4688, %v4699, %v4701
        %v4703 = vshll.u32 %v4663, 8
        %v4704 = vand.u32 %v4703, 65535
        %v4705 = vshrl.u32 %v4703, 16
        %v4706 = vand.u32 %v4702, 65535
        %v4707 = vshrl.u32 %v4702, 16
        %v4708 = vmul.u32 %v4704, %v4706
        %v4709 = vmul.u32 %v4704, %v4707
        %v4710 = vmul.u32 %v4705, %v4706
        %v4711 = vmul.u32 %v4705, %v4707
        %v4712 = vshll.u32 %v4709, 16
        %v4713 = vshrl.u32 %v4709, 16
        %v4714 = vshll.u32 %v4710, 16
        %v4715 = vshrl.u32 %v4710, 16
        %vm4716 = vc.u32 %v4708, %v4712
        %v4717 = vsel %vm4716, 1, 0
        %v4718 = vadd.s32 %v4708, %v4712
        %v4719 = vadd.s32 %v4711, %v4717
        %vm4720 = vc.u32 %v4718, %v4714
        %v4721 = vsel %vm4720, 1, 0
        %v4722 = vadd.s32 %v4718, %v4714
        %v4723 = vadd.s32 %v4719, %v4721
        %v4724 = vadd.s32 %v4723, %v4713
        %v4725 = vadd.s32 %v4724, %v4715
        %v4726 = vand.u32 %v4703, 65535
        %v4727 = vshrl.u32 %v4703, 16
        %v4728 = vand.u32 %v4698, 65535
        %v4729 = vshrl.u32 %v4698, 16
        %v4730 = vmul.u32 %v4726, %v4728
        %v4731 = vmul.u32 %v4726, %v4729
        %v4732 = vmul.u32 %v4727, %v4728
        %v4733 = vmul.u32 %v4727, %v4729
        %v4734 = vshll.u32 %v4731, 16
        %v4735 = vshrl.u32 %v4731, 16
        %v4736 = vshll.u32 %v4732, 16
        %v4737 = vshrl.u32 %v4732, 16
        %vm4738 = vc.u32 %v4730, %v4734
        %v4739 = vsel %vm4738, 1, 0
        %v4740 = vadd.s32 %v4730, %v4734
        %v4741 = vadd.s32 %v4733, %v4739
        %vm4742 = vc.u32 %v4740, %v4736
        %v4743 = vsel %vm4742, 1, 0
        %v4744 = vadd.s32 %v4740, %v4736
        %v4745 = vadd.s32 %v4741, %v4743
        %v4746 = vadd.s32 %v4745, %v4735
        %v4747 = vadd.s32 %v4746, %v4737
        %v4748 = vmul.u32 %v4703, %v4694
        %v4749 = vadd.s32 %v4725, %v4744
        %vm4750 = vc.u32 %v4725, %v4744
        %v4751 = vadd.s32 %v4747, 1
        %v4752 = vsel %vm4750, %v4751, %v4747
        %v4753 = vadd.s32 %v4748, %v4752
        %v4754 = vadd.s32 %v4753, 536870912
        %v4755 = vshrl.u32 %v4754, 30
        %v4756 = vshll.u32 %v4755, 30
        %v4757 = vsub.s32 %v4753, %v4756
        %vm4758 = vcmp.lt.s32.totalorder %v4757, 0
        %v4759 = vsub.s32 0, %v4757
        %v4760 = vsel %vm4758, %v4759, %v4757
        %v4761 = vclz %v4760
        %v4762 = vsub.s32 %v4761, 2
        %vm4763 = vcmp.gt.s32.totalorder 0, %v4762
        %v4764 = vsel %vm4763, 0, %v4762
        %v4765 = vsub.s32 32, %v4764
        %v4766 = vshll.u32 %v4757, %v4764
        %v4767 = vshrl.u32 %v4749, %v4765
        %v4768 = vor.u32 %v4766, %v4767
        %v4769 = vsub.s32 4294967266, %v4764
        %v4770 = vadd.s32 %v4769, 127
        %v4771 = vshll.u32 %v4770, 23
        %v4772 = vor.u32 4788187, %v4771
        %v4773 = vand.u32 2147483647, %v4772
        %v4775 = vcvt.s32.f32 %v4768
        %v4776 = vmul.f32 %v4775, %v4773
        %v4777 = vxor.u32 %v4776, 2147483648
        %v4778 = vsel %vm4657, %v4777, %v4776
        %v4779 = vsub.s32 4, %v4755
        %v4780 = vsel %vm4657, %v4779, %v4755
        %v4781 = vsel %vm4656, %v406, %v4778
        %v4782 = vsel %vm4656, 0, %v4780
        %v4783 = vmul.f32 %v4781, %v4781
        %v4784 = vmul.f32 %v4783, -0.001358992
        %v4785 = vadd.f32 %v4784, 0.041655596
        %v4786 = vmul.f32 %v4783, %v4785
        %v4787 = vadd.f32 %v4786, -0.4999988
        %v4788 = vmul.f32 %v4783, %v4787
        %v4789 = vadd.f32 1.0, %v4788
        %v4790 = vmul.f32 %v4781, %v4781
        %v4791 = vmul.f32 %v4790, -0.00019511016
        %v4792 = vadd.f32 %v4791, 0.008332121
        %v4793 = vmul.f32 %v4790, %v4792
        %v4794 = vadd.f32 %v4793, -0.16666654
        %v4795 = vmul.f32 %v4790, %v4794
        %v4796 = vadd.f32 %v4795, 1.0
        %v4797 = vmul.f32 %v4796, %v4781
        %vm4798 = vweird.f32 %v406
        %v4799 = vadd.s32 %v4782, 3
        %v4800 = vand.u32 %v4799, 3
        %vm4801 = vcmp.lt.s32.totalorder %v4800, 2
        %vm4802 = vcmp.eq.s32.totalorder %v4800, 0
        %v4803 = vxor.u32 %v4797, 2147483648
        %v4804 = vsel %vm4802, %v4789, %v4803
        %vm4805 = vcmp.eq.s32.totalorder %v4800, 2
        %v4806 = vxor.u32 %v4789, 2147483648
        %v4807 = vsel %vm4805, %v4806, %v4797
        %v4808 = vsel %vm4801, %v4804, %v4807
        %v4809 = vsel %vm4798, nan, %v4808
        %v4810 = vand.u32 2147483647, %v447
        %vm4811 = vcmp.le.f32.partialorder %v4810, 0.7853982
        %vm4812 = vcmp.lt.s32.totalorder %v447, 0
        %v4813 = vand.u32 %v447, 2139095040
        %v4814 = vshrl.u32 %v4813, 23
        %v4815 = vsub.s32 %v4814, 127
        %v4816 = vand.u32 2147483647, %v447
        %v4817 = vand.u32 %v4816, 8388607
        %v4818 = vor.u32 %v4817, 8388608
        %v4819 = vsub.s32 0, %v4818
        %v4820 = vadd.s32 %v4815, 1
        %vm4821 = vcmp.gt.s32.totalorder %v4820, 0
        %v4822 = vsel %vm4821, %v4820, 0
        %v4823 = vshrl.u32 %v4822, 5
        %v4824 = vand.u32 %v4822, 31
        %v4825 = vsub.s32 32, %v4824
        %v4826 = vshrl.u32 683565275, %v4825
        %v4827 = vshll.u32 683565275, %v4824
        %v4828 = vshrl.u32 2475754826, %v4825
        %v4829 = vor.u32 %v4827, %v4828
        %v4830 = vshll.u32 2475754826, %v4824
        %v4831 = vshrl.u32 2131351028, %v4825
        %v4832 = vor.u32 %v4830, %v4831
        %v4833 = vshll.u32 2131351028, %v4824
        %v4834 = vshrl.u32 2102212464, %v4825
        %v4835 = vor.u32 %v4833, %v4834
        %v4836 = vshll.u32 2102212464, %v4824
        %v4837 = vshrl.u32 920167782, %v4825
        %v4838 = vor.u32 %v4836, %v4837
        %v4839 = vshll.u32 920167782, %v4824
        %v4840 = vshrl.u32 1326507024, %v4825
        %v4841 = vor.u32 %v4839, %v4840
        %vm4842 = vcmp.lt.s32.totalorder %v4823, 1
        %vm4843 = vcmp.lt.s32.totalorder %v4823, 2
        %vm4844 = vcmp.lt.s32.totalorder %v4823, 3
        %vm4845 = vcmp.lt.s32.totalorder %v4823, 4
        %v4846 = vsel %vm4842, %v4826, %v4829
        %v4847 = vsel %vm4845, %v4835, 2102212464
        %v4848 = vsel %vm4844, %v4832, %v4847
        %v4849 = vsel %vm4843, %v4846, %v4848
        %v4850 = vsel %vm4842, %v4829, %v4832
        %v4851 = vsel %vm4845, %v4838, 920167782
        %v4852 = vsel %vm4844, %v4835, %v4851
        %v4853 = vsel %vm4843, %v4850, %v4852
        %v4854 = vsel %vm4842, %v4832, %v4835
        %v4855 = vsel %vm4845, %v4841, 1326507024
        %v4856 = vsel %vm4844, %v4838, %v4855
        %v4857 = vsel %vm4843, %v4854, %v4856
        %v4858 = vshll.u32 %v4818, 8
        %v4859 = vand.u32 %v4858, 65535
        %v4860 = vshrl.u32 %v4858, 16
        %v4861 = vand.u32 %v4857, 65535
        %v4862 = vshrl.u32 %v4857, 16
        %v4863 = vmul.u32 %v4859, %v4861
        %v4864 = vmul.u32 %v4859, %v4862
        %v4865 = vmul.u32 %v4860, %v4861
        %v4866 = vmul.u32 %v4860, %v4862
        %v4867 = vshll.u32 %v4864, 16
        %v4868 = vshrl.u32 %v4864, 16
        %v4869 = vshll.u32 %v4865, 16
        %v4870 = vshrl.u32 %v4865, 16
        %vm4871 = vc.u32 %v4863, %v4867
        %v4872 = vsel %vm4871, 1, 0
        %v4873 = vadd.s32 %v4863, %v4867
        %v4874 = vadd.s32 %v4866, %v4872
        %vm4875 = vc.u32 %v4873, %v4869
        %v4876 = vsel %vm4875, 1, 0
        %v4877 = vadd.s32 %v4873, %v4869
        %v4878 = vadd.s32 %v4874, %v4876
        %v4879 = vadd.s32 %v4878, %v4868
        %v4880 = vadd.s32 %v4879, %v4870
        %v4881 = vand.u32 %v4858, 65535
        %v4882 = vshrl.u32 %v4858, 16
        %v4883 = vand.u32 %v4853, 65535
        %v4884 = vshrl.u32 %v4853, 16
        %v4885 = vmul.u32 %v4881, %v4883
        %v4886 = vmul.u32 %v4881, %v4884
        %v4887 = vmul.u32 %v4882, %v4883
        %v4888 = vmul.u32 %v4882, %v4884
        %v4889 = vshll.u32 %v4886, 16
        %v4890 = vshrl.u32 %v4886, 16
        %v4891 = vshll.u32 %v4887, 16
        %v4892 = vshrl.u32 %v4887, 16
        %vm4893 = vc.u32 %v4885, %v4889
        %v4894 = vsel %vm4893, 1, 0
        %v4895 = vadd.s32 %v4885, %v4889
        %v4896 = vadd.s32 %v4888, %v4894
        %vm4897 = vc.u32 %v4895, %v4891
        %v4898 = vsel %vm4897, 1, 0
        %v4899 = vadd.s32 %v4895, %v4891
        %v4900 = vadd.s32 %v4896, %v4898
        %v4901 = vadd.s32 %v4900, %v4890
        %v4902 = vadd.s32 %v4901, %v4892
        %v4903 = vmul.u32 %v4858, %v4849
        %v4904 = vadd.s32 %v4880, %v4899
        %vm4905 = vc.u32 %v4880, %v4899
        %v4906 = vadd.s32 %v4902, 1
        %v4907 = vsel %vm4905, %v4906, %v4902
        %v4908 = vadd.s32 %v4903, %v4907
        %v4909 = vadd.s32 %v4908, 536870912
        %v4910 = vshrl.u32 %v4909, 30
        %v4911 = vshll.u32 %v4910, 30
        %v4912 = vsub.s32 %v4908, %v4911
        %vm4913 = vcmp.lt.s32.totalorder %v4912, 0
        %v4914 = vsub.s32 0, %v4912
        %v4915 = vsel %vm4913, %v4914, %v4912
        %v4916 = vclz %v4915
        %v4917 = vsub.s32 %v4916, 2
        %vm4918 = vcmp.gt.s32.totalorder 0, %v4917
        %v4919 = vsel %vm4918, 0, %v4917
        %v4920 = vsub.s32 32, %v4919
        %v4921 = vshll.u32 %v4912, %v4919
        %v4922 = vshrl.u32 %v4904, %v4920
        %v4923 = vor.u32 %v4921, %v4922
        %v4924 = vsub.s32 4294967266, %v4919
        %v4925 = vadd.s32 %v4924, 127
        %v4926 = vshll.u32 %v4925, 23
        %v4927 = vor.u32 4788187, %v4926
        %v4928 = vand.u32 2147483647, %v4927
        %v4930 = vcvt.s32.f32 %v4923
        %v4931 = vmul.f32 %v4930, %v4928
        %v4932 = vxor.u32 %v4931, 2147483648
        %v4933 = vsel %vm4812, %v4932, %v4931
        %v4934 = vsub.s32 4, %v4910
        %v4935 = vsel %vm4812, %v4934, %v4910
        %v4936 = vsel %vm4811, %v447, %v4933
        %v4937 = vsel %vm4811, 0, %v4935
        %v4938 = vmul.f32 %v4936, %v4936
        %v4939 = vmul.f32 %v4938, -0.001358992
        %v4940 = vadd.f32 %v4939, 0.041655596
        %v4941 = vmul.f32 %v4938, %v4940
        %v4942 = vadd.f32 %v4941, -0.4999988
        %v4943 = vmul.f32 %v4938, %v4942
        %v4944 = vadd.f32 1.0, %v4943
        %v4945 = vmul.f32 %v4936, %v4936
        %v4946 = vmul.f32 %v4945, -0.00019511016
        %v4947 = vadd.f32 %v4946, 0.008332121
        %v4948 = vmul.f32 %v4945, %v4947
        %v4949 = vadd.f32 %v4948, -0.16666654
        %v4950 = vmul.f32 %v4945, %v4949
        %v4951 = vadd.f32 %v4950, 1.0
        %v4952 = vmul.f32 %v4951, %v4936
        %vm4953 = vweird.f32 %v447
        %v4954 = vadd.s32 %v4937, 3
        %v4955 = vand.u32 %v4954, 3
        %vm4956 = vcmp.lt.s32.totalorder %v4955, 2
        %vm4957 = vcmp.eq.s32.totalorder %v4955, 0
        %v4958 = vxor.u32 %v4952, 2147483648
        %v4959 = vsel %vm4957, %v4944, %v4958
        %vm4960 = vcmp.eq.s32.totalorder %v4955, 2
        %v4961 = vxor.u32 %v4944, 2147483648
        %v4962 = vsel %vm4960, %v4961, %v4952
        %v4963 = vsel %vm4956, %v4959, %v4962
        %v4964 = vsel %vm4953, nan, %v4963
        %v4965 = vand.u32 2147483647, %v488
        %vm4966 = vcmp.le.f32.partialorder %v4965, 0.7853982
        %vm4967 = vcmp.lt.s32.totalorder %v488, 0
        %v4968 = vand.u32 %v488, 2139095040
        %v4969 = vshrl.u32 %v4968, 23
        %v4970 = vsub.s32 %v4969, 127
        %v4971 = vand.u32 2147483647, %v488
        %v4972 = vand.u32 %v4971, 8388607
        %v4973 = vor.u32 %v4972, 8388608
        %v4974 = vsub.s32 0, %v4973
        %v4975 = vadd.s32 %v4970, 1
        %vm4976 = vcmp.gt.s32.totalorder %v4975, 0
        %v4977 = vsel %vm4976, %v4975, 0
        %v4978 = vshrl.u32 %v4977, 5
        %v4979 = vand.u32 %v4977, 31
        %v4980 = vsub.s32 32, %v4979
        %v4981 = vshrl.u32 683565275, %v4980
        %v4982 = vshll.u32 683565275, %v4979
        %v4983 = vshrl.u32 2475754826, %v4980
        %v4984 = vor.u32 %v4982, %v4983
        %v4985 = vshll.u32 2475754826, %v4979
        %v4986 = vshrl.u32 2131351028, %v4980
        %v4987 = vor.u32 %v4985, %v4986
        %v4988 = vshll.u32 2131351028, %v4979
        %v4989 = vshrl.u32 2102212464, %v4980
        %v4990 = vor.u32 %v4988, %v4989
        %v4991 = vshll.u32 2102212464, %v4979
        %v4992 = vshrl.u32 920167782, %v4980
        %v4993 = vor.u32 %v4991, %v4992
        %v4994 = vshll.u32 920167782, %v4979
        %v4995 = vshrl.u32 1326507024, %v4980
        %v4996 = vor.u32 %v4994, %v4995
        %vm4997 = vcmp.lt.s32.totalorder %v4978, 1
        %vm4998 = vcmp.lt.s32.totalorder %v4978, 2
        %vm4999 = vcmp.lt.s32.totalorder %v4978, 3
        %vm5000 = vcmp.lt.s32.totalorder %v4978, 4
        %v5001 = vsel %vm4997, %v4981, %v4984
        %v5002 = vsel %vm5000, %v4990, 2102212464
        %v5003 = vsel %vm4999, %v4987, %v5002
        %v5004 = vsel %vm4998, %v5001, %v5003
        %v5005 = vsel %vm4997, %v4984, %v4987
        %v5006 = vsel %vm5000, %v4993, 920167782
        %v5007 = vsel %vm4999, %v4990, %v5006
        %v5008 = vsel %vm4998, %v5005, %v5007
        %v5009 = vsel %vm4997, %v4987, %v4990
        %v5010 = vsel %vm5000, %v4996, 1326507024
        %v5011 = vsel %vm4999, %v4993, %v5010
        %v5012 = vsel %vm4998, %v5009, %v5011
        %v5013 = vshll.u32 %v4973, 8
        %v5014 = vand.u32 %v5013, 65535
        %v5015 = vshrl.u32 %v5013, 16
        %v5016 = vand.u32 %v5012, 65535
        %v5017 = vshrl.u32 %v5012, 16
        %v5018 = vmul.u32 %v5014, %v5016
        %v5019 = vmul.u32 %v5014, %v5017
        %v5020 = vmul.u32 %v5015, %v5016
        %v5021 = vmul.u32 %v5015, %v5017
        %v5022 = vshll.u32 %v5019, 16
        %v5023 = vshrl.u32 %v5019, 16
        %v5024 = vshll.u32 %v5020, 16
        %v5025 = vshrl.u32 %v5020, 16
        %vm5026 = vc.u32 %v5018, %v5022
        %v5027 = vsel %vm5026, 1, 0
        %v5028 = vadd.s32 %v5018, %v5022
        %v5029 = vadd.s32 %v5021, %v5027
        %vm5030 = vc.u32 %v5028, %v5024
        %v5031 = vsel %vm5030, 1, 0
        %v5032 = vadd.s32 %v5028, %v5024
        %v5033 = vadd.s32 %v5029, %v5031
        %v5034 = vadd.s32 %v5033, %v5023
        %v5035 = vadd.s32 %v5034, %v5025
        %v5036 = vand.u32 %v5013, 65535
        %v5037 = vshrl.u32 %v5013, 16
        %v5038 = vand.u32 %v5008, 65535
        %v5039 = vshrl.u32 %v5008, 16
        %v5040 = vmul.u32 %v5036, %v5038
        %v5041 = vmul.u32 %v5036, %v5039
        %v5042 = vmul.u32 %v5037, %v5038
        %v5043 = vmul.u32 %v5037, %v5039
        %v5044 = vshll.u32 %v5041, 16
        %v5045 = vshrl.u32 %v5041, 16
        %v5046 = vshll.u32 %v5042, 16
        %v5047 = vshrl.u32 %v5042, 16
        %vm5048 = vc.u32 %v5040, %v5044
        %v5049 = vsel %vm5048, 1, 0
        %v5050 = vadd.s32 %v5040, %v5044
        %v5051 = vadd.s32 %v5043, %v5049
        %vm5052 = vc.u32 %v5050, %v5046
        %v5053 = vsel %vm5052, 1, 0
        %v5054 = vadd.s32 %v5050, %v5046
        %v5055 = vadd.s32 %v5051, %v5053
        %v5056 = vadd.s32 %v5055, %v5045
        %v5057 = vadd.s32 %v5056, %v5047
        %v5058 = vmul.u32 %v5013, %v5004
        %v5059 = vadd.s32 %v5035, %v5054
        %vm5060 = vc.u32 %v5035, %v5054
        %v5061 = vadd.s32 %v5057, 1
        %v5062 = vsel %vm5060, %v5061, %v5057
        %v5063 = vadd.s32 %v5058, %v5062
        %v5064 = vadd.s32 %v5063, 536870912
        %v5065 = vshrl.u32 %v5064, 30
        %v5066 = vshll.u32 %v5065, 30
        %v5067 = vsub.s32 %v5063, %v5066
        %vm5068 = vcmp.lt.s32.totalorder %v5067, 0
        %v5069 = vsub.s32 0, %v5067
        %v5070 = vsel %vm5068, %v5069, %v5067
        %v5071 = vclz %v5070
        %v5072 = vsub.s32 %v5071, 2
        %vm5073 = vcmp.gt.s32.totalorder 0, %v5072
        %v5074 = vsel %vm5073, 0, %v5072
        %v5075 = vsub.s32 32, %v5074
        %v5076 = vshll.u32 %v5067, %v5074
        %v5077 = vshrl.u32 %v5059, %v5075
        %v5078 = vor.u32 %v5076, %v5077
        %v5079 = vsub.s32 4294967266, %v5074
        %v5080 = vadd.s32 %v5079, 127
        %v5081 = vshll.u32 %v5080, 23
        %v5082 = vor.u32 4788187, %v5081
        %v5083 = vand.u32 2147483647, %v5082
        %v5085 = vcvt.s32.f32 %v5078
        %v5086 = vmul.f32 %v5085, %v5083
        %v5087 = vxor.u32 %v5086, 2147483648
        %v5088 = vsel %vm4967, %v5087, %v5086
        %v5089 = vsub.s32 4, %v5065
        %v5090 = vsel %vm4967, %v5089, %v5065
        %v5091 = vsel %vm4966, %v488, %v5088
        %v5092 = vsel %vm4966, 0, %v5090
        %v5093 = vmul.f32 %v5091, %v5091
        %v5094 = vmul.f32 %v5093, -0.001358992
        %v5095 = vadd.f32 %v5094, 0.041655596
        %v5096 = vmul.f32 %v5093, %v5095
        %v5097 = vadd.f32 %v5096, -0.4999988
        %v5098 = vmul.f32 %v5093, %v5097
        %v5099 = vadd.f32 1.0, %v5098
        %v5100 = vmul.f32 %v5091, %v5091
        %v5101 = vmul.f32 %v5100, -0.00019511016
        %v5102 = vadd.f32 %v5101, 0.008332121
        %v5103 = vmul.f32 %v5100, %v5102
        %v5104 = vadd.f32 %v5103, -0.16666654
        %v5105 = vmul.f32 %v5100, %v5104
        %v5106 = vadd.f32 %v5105, 1.0
        %v5107 = vmul.f32 %v5106, %v5091
        %vm5108 = vweird.f32 %v488
        %v5109 = vadd.s32 %v5092, 3
        %v5110 = vand.u32 %v5109, 3
        %vm5111 = vcmp.lt.s32.totalorder %v5110, 2
        %vm5112 = vcmp.eq.s32.totalorder %v5110, 0
        %v5113 = vxor.u32 %v5107, 2147483648
        %v5114 = vsel %vm5112, %v5099, %v5113
        %vm5115 = vcmp.eq.s32.totalorder %v5110, 2
        %v5116 = vxor.u32 %v5099, 2147483648
        %v5117 = vsel %vm5115, %v5116, %v5107
        %v5118 = vsel %vm5111, %v5114, %v5117
        %v5119 = vsel %vm5108, nan, %v5118
        %v5120 = vand.u32 2147483647, %v529
        %vm5121 = vcmp.le.f32.partialorder %v5120, 0.7853982
        %vm5122 = vcmp.lt.s32.totalorder %v529, 0
        %v5123 = vand.u32 %v529, 2139095040
        %v5124 = vshrl.u32 %v5123, 23
        %v5125 = vsub.s32 %v5124, 127
        %v5126 = vand.u32 2147483647, %v529
        %v5127 = vand.u32 %v5126, 8388607
        %v5128 = vor.u32 %v5127, 8388608
        %v5129 = vsub.s32 0, %v5128
        %v5130 = vadd.s32 %v5125, 1
        %vm5131 = vcmp.gt.s32.totalorder %v5130, 0
        %v5132 = vsel %vm5131, %v5130, 0
        %v5133 = vshrl.u32 %v5132, 5
        %v5134 = vand.u32 %v5132, 31
        %v5135 = vsub.s32 32, %v5134
        %v5136 = vshrl.u32 683565275, %v5135
        %v5137 = vshll.u32 683565275, %v5134
        %v5138 = vshrl.u32 2475754826, %v5135
        %v5139 = vor.u32 %v5137, %v5138
        %v5140 = vshll.u32 2475754826, %v5134
        %v5141 = vshrl.u32 2131351028, %v5135
        %v5142 = vor.u32 %v5140, %v5141
        %v5143 = vshll.u32 2131351028, %v5134
        %v5144 = vshrl.u32 2102212464, %v5135
        %v5145 = vor.u32 %v5143, %v5144
        %v5146 = vshll.u32 2102212464, %v5134
        %v5147 = vshrl.u32 920167782, %v5135
        %v5148 = vor.u32 %v5146, %v5147
        %v5149 = vshll.u32 920167782, %v5134
        %v5150 = vshrl.u32 1326507024, %v5135
        %v5151 = vor.u32 %v5149, %v5150
        %vm5152 = vcmp.lt.s32.totalorder %v5133, 1
        %vm5153 = vcmp.lt.s32.totalorder %v5133, 2
        %vm5154 = vcmp.lt.s32.totalorder %v5133, 3
        %vm5155 = vcmp.lt.s32.totalorder %v5133, 4
        %v5156 = vsel %vm5152, %v5136, %v5139
        %v5157 = vsel %vm5155, %v5145, 2102212464
        %v5158 = vsel %vm5154, %v5142, %v5157
        %v5159 = vsel %vm5153, %v5156, %v5158
        %v5160 = vsel %vm5152, %v5139, %v5142
        %v5161 = vsel %vm5155, %v5148, 920167782
        %v5162 = vsel %vm5154, %v5145, %v5161
        %v5163 = vsel %vm5153, %v5160, %v5162
        %v5164 = vsel %vm5152, %v5142, %v5145
        %v5165 = vsel %vm5155, %v5151, 1326507024
        %v5166 = vsel %vm5154, %v5148, %v5165
        %v5167 = vsel %vm5153, %v5164, %v5166
        %v5168 = vshll.u32 %v5128, 8
        %v5169 = vand.u32 %v5168, 65535
        %v5170 = vshrl.u32 %v5168, 16
        %v5171 = vand.u32 %v5167, 65535
        %v5172 = vshrl.u32 %v5167, 16
        %v5173 = vmul.u32 %v5169, %v5171
        %v5174 = vmul.u32 %v5169, %v5172
        %v5175 = vmul.u32 %v5170, %v5171
        %v5176 = vmul.u32 %v5170, %v5172
        %v5177 = vshll.u32 %v5174, 16
        %v5178 = vshrl.u32 %v5174, 16
        %v5179 = vshll.u32 %v5175, 16
        %v5180 = vshrl.u32 %v5175, 16
        %vm5181 = vc.u32 %v5173, %v5177
        %v5182 = vsel %vm5181, 1, 0
        %v5183 = vadd.s32 %v5173, %v5177
        %v5184 = vadd.s32 %v5176, %v5182
        %vm5185 = vc.u32 %v5183, %v5179
        %v5186 = vsel %vm5185, 1, 0
        %v5187 = vadd.s32 %v5183, %v5179
        %v5188 = vadd.s32 %v5184, %v5186
        %v5189 = vadd.s32 %v5188, %v5178
        %v5190 = vadd.s32 %v5189, %v5180
        %v5191 = vand.u32 %v5168, 65535
        %v5192 = vshrl.u32 %v5168, 16
        %v5193 = vand.u32 %v5163, 65535
        %v5194 = vshrl.u32 %v5163, 16
        %v5195 = vmul.u32 %v5191, %v5193
        %v5196 = vmul.u32 %v5191, %v5194
        %v5197 = vmul.u32 %v5192, %v5193
        %v5198 = vmul.u32 %v5192, %v5194
        %v5199 = vshll.u32 %v5196, 16
        %v5200 = vshrl.u32 %v5196, 16
        %v5201 = vshll.u32 %v5197, 16
        %v5202 = vshrl.u32 %v5197, 16
        %vm5203 = vc.u32 %v5195, %v5199
        %v5204 = vsel %vm5203, 1, 0
        %v5205 = vadd.s32 %v5195, %v5199
        %v5206 = vadd.s32 %v5198, %v5204
        %vm5207 = vc.u32 %v5205, %v5201
        %v5208 = vsel %vm5207, 1, 0
        %v5209 = vadd.s32 %v5205, %v5201
        %v5210 = vadd.s32 %v5206, %v5208
        %v5211 = vadd.s32 %v5210, %v5200
        %v5212 = vadd.s32 %v5211, %v5202
        %v5213 = vmul.u32 %v5168, %v5159
        %v5214 = vadd.s32 %v5190, %v5209
        %vm5215 = vc.u32 %v5190, %v5209
        %v5216 = vadd.s32 %v5212, 1
        %v5217 = vsel %vm5215, %v5216, %v5212
        %v5218 = vadd.s32 %v5213, %v5217
        %v5219 = vadd.s32 %v5218, 536870912
        %v5220 = vshrl.u32 %v5219, 30
        %v5221 = vshll.u32 %v5220, 30
        %v5222 = vsub.s32 %v5218, %v5221
        %vm5223 = vcmp.lt.s32.totalorder %v5222, 0
        %v5224 = vsub.s32 0, %v5222
        %v5225 = vsel %vm5223, %v5224, %v5222
        %v5226 = vclz %v5225
        %v5227 = vsub.s32 %v5226, 2
        %vm5228 = vcmp.gt.s32.totalorder 0, %v5227
        %v5229 = vsel %vm5228, 0, %v5227
        %v5230 = vsub.s32 32, %v5229
        %v5231 = vshll.u32 %v5222, %v5229
        %v5232 = vshrl.u32 %v5214, %v5230
        %v5233 = vor.u32 %v5231, %v5232
        %v5234 = vsub.s32 4294967266, %v5229
        %v5235 = vadd.s32 %v5234, 127
        %v5236 = vshll.u32 %v5235, 23
        %v5237 = vor.u32 4788187, %v5236
        %v5238 = vand.u32 2147483647, %v5237
        %v5240 = vcvt.s32.f32 %v5233
        %v5241 = vmul.f32 %v5240, %v5238
        %v5242 = vxor.u32 %v5241, 2147483648
        %v5243 = vsel %vm5122, %v5242, %v5241
        %v5244 = vsub.s32 4, %v5220
        %v5245 = vsel %vm5122, %v5244, %v5220
        %v5246 = vsel %vm5121, %v529, %v5243
        %v5247 = vsel %vm5121, 0, %v5245
        %v5248 = vmul.f32 %v5246, %v5246
        %v5249 = vmul.f32 %v5248, -0.001358992
        %v5250 = vadd.f32 %v5249, 0.041655596
        %v5251 = vmul.f32 %v5248, %v5250
        %v5252 = vadd.f32 %v5251, -0.4999988
        %v5253 = vmul.f32 %v5248, %v5252
        %v5254 = vadd.f32 1.0, %v5253
        %v5255 = vmul.f32 %v5246, %v5246
        %v5256 = vmul.f32 %v5255, -0.00019511016
        %v5257 = vadd.f32 %v5256, 0.008332121
        %v5258 = vmul.f32 %v5255, %v5257
        %v5259 = vadd.f32 %v5258, -0.16666654
        %v5260 = vmul.f32 %v5255, %v5259
        %v5261 = vadd.f32 %v5260, 1.0
        %v5262 = vmul.f32 %v5261, %v5246
        %vm5263 = vweird.f32 %v529
        %v5264 = vadd.s32 %v5247, 3
        %v5265 = vand.u32 %v5264, 3
        %vm5266 = vcmp.lt.s32.totalorder %v5265, 2
        %vm5267 = vcmp.eq.s32.totalorder %v5265, 0
        %v5268 = vxor.u32 %v5262, 2147483648
        %v5269 = vsel %vm5267, %v5254, %v5268
        %vm5270 = vcmp.eq.s32.totalorder %v5265, 2
        %v5271 = vxor.u32 %v5254, 2147483648
        %v5272 = vsel %vm5270, %v5271, %v5262
        %v5273 = vsel %vm5266, %v5269, %v5272
        %v5274 = vsel %vm5263, nan, %v5273
        %v5275 = vand.u32 2147483647, %v570
        %vm5276 = vcmp.le.f32.partialorder %v5275, 0.7853982
        %vm5277 = vcmp.lt.s32.totalorder %v570, 0
        %v5278 = vand.u32 %v570, 2139095040
        %v5279 = vshrl.u32 %v5278, 23
        %v5280 = vsub.s32 %v5279, 127
        %v5281 = vand.u32 2147483647, %v570
        %v5282 = vand.u32 %v5281, 8388607
        %v5283 = vor.u32 %v5282, 8388608
        %v5284 = vsub.s32 0, %v5283
        %v5285 = vadd.s32 %v5280, 1
        %vm5286 = vcmp.gt.s32.totalorder %v5285, 0
        %v5287 = vsel %vm5286, %v5285, 0
        %v5288 = vshrl.u32 %v5287, 5
        %v5289 = vand.u32 %v5287, 31
        %v5290 = vsub.s32 32, %v5289
        %v5291 = vshrl.u32 683565275, %v5290
        %v5292 = vshll.u32 683565275, %v5289
        %v5293 = vshrl.u32 2475754826, %v5290
        %v5294 = vor.u32 %v5292, %v5293
        %v5295 = vshll.u32 2475754826, %v5289
        %v5296 = vshrl.u32 2131351028, %v5290
        %v5297 = vor.u32 %v5295, %v5296
        %v5298 = vshll.u32 2131351028, %v5289
        %v5299 = vshrl.u32 2102212464, %v5290
        %v5300 = vor.u32 %v5298, %v5299
        %v5301 = vshll.u32 2102212464, %v5289
        %v5302 = vshrl.u32 920167782, %v5290
        %v5303 = vor.u32 %v5301, %v5302
        %v5304 = vshll.u32 920167782, %v5289
        %v5305 = vshrl.u32 1326507024, %v5290
        %v5306 = vor.u32 %v5304, %v5305
        %vm5307 = vcmp.lt.s32.totalorder %v5288, 1
        %vm5308 = vcmp.lt.s32.totalorder %v5288, 2
        %vm5309 = vcmp.lt.s32.totalorder %v5288, 3
        %vm5310 = vcmp.lt.s32.totalorder %v5288, 4
        %v5311 = vsel %vm5307, %v5291, %v5294
        %v5312 = vsel %vm5310, %v5300, 2102212464
        %v5313 = vsel %vm5309, %v5297, %v5312
        %v5314 = vsel %vm5308, %v5311, %v5313
        %v5315 = vsel %vm5307, %v5294, %v5297
        %v5316 = vsel %vm5310, %v5303, 920167782
        %v5317 = vsel %vm5309, %v5300, %v5316
        %v5318 = vsel %vm5308, %v5315, %v5317
        %v5319 = vsel %vm5307, %v5297, %v5300
        %v5320 = vsel %vm5310, %v5306, 1326507024
        %v5321 = vsel %vm5309, %v5303, %v5320
        %v5322 = vsel %vm5308, %v5319, %v5321
        %v5323 = vshll.u32 %v5283, 8
        %v5324 = vand.u32 %v5323, 65535
        %v5325 = vshrl.u32 %v5323, 16
        %v5326 = vand.u32 %v5322, 65535
        %v5327 = vshrl.u32 %v5322, 16
        %v5328 = vmul.u32 %v5324, %v5326
        %v5329 = vmul.u32 %v5324, %v5327
        %v5330 = vmul.u32 %v5325, %v5326
        %v5331 = vmul.u32 %v5325, %v5327
        %v5332 = vshll.u32 %v5329, 16
        %v5333 = vshrl.u32 %v5329, 16
        %v5334 = vshll.u32 %v5330, 16
        %v5335 = vshrl.u32 %v5330, 16
        %vm5336 = vc.u32 %v5328, %v5332
        %v5337 = vsel %vm5336, 1, 0
        %v5338 = vadd.s32 %v5328, %v5332
        %v5339 = vadd.s32 %v5331, %v5337
        %vm5340 = vc.u32 %v5338, %v5334
        %v5341 = vsel %vm5340, 1, 0
        %v5342 = vadd.s32 %v5338, %v5334
        %v5343 = vadd.s32 %v5339, %v5341
        %v5344 = vadd.s32 %v5343, %v5333
        %v5345 = vadd.s32 %v5344, %v5335
        %v5346 = vand.u32 %v5323, 65535
        %v5347 = vshrl.u32 %v5323, 16
        %v5348 = vand.u32 %v5318, 65535
        %v5349 = vshrl.u32 %v5318, 16
        %v5350 = vmul.u32 %v5346, %v5348
        %v5351 = vmul.u32 %v5346, %v5349
        %v5352 = vmul.u32 %v5347, %v5348
        %v5353 = vmul.u32 %v5347, %v5349
        %v5354 = vshll.u32 %v5351, 16
        %v5355 = vshrl.u32 %v5351, 16
        %v5356 = vshll.u32 %v5352, 16
        %v5357 = vshrl.u32 %v5352, 16
        %vm5358 = vc.u32 %v5350, %v5354
        %v5359 = vsel %vm5358, 1, 0
        %v5360 = vadd.s32 %v5350, %v5354
        %v5361 = vadd.s32 %v5353, %v5359
        %vm5362 = vc.u32 %v5360, %v5356
        %v5363 = vsel %vm5362, 1, 0
        %v5364 = vadd.s32 %v5360, %v5356
        %v5365 = vadd.s32 %v5361, %v5363
        %v5366 = vadd.s32 %v5365, %v5355
        %v5367 = vadd.s32 %v5366, %v5357
        %v5368 = vmul.u32 %v5323, %v5314
        %v5369 = vadd.s32 %v5345, %v5364
        %vm5370 = vc.u32 %v5345, %v5364
        %v5371 = vadd.s32 %v5367, 1
        %v5372 = vsel %vm5370, %v5371, %v5367
        %v5373 = vadd.s32 %v5368, %v5372
        %v5374 = vadd.s32 %v5373, 536870912
        %v5375 = vshrl.u32 %v5374, 30
        %v5376 = vshll.u32 %v5375, 30
        %v5377 = vsub.s32 %v5373, %v5376
        %vm5378 = vcmp.lt.s32.totalorder %v5377, 0
        %v5379 = vsub.s32 0, %v5377
        %v5380 = vsel %vm5378, %v5379, %v5377
        %v5381 = vclz %v5380
        %v5382 = vsub.s32 %v5381, 2
        %vm5383 = vcmp.gt.s32.totalorder 0, %v5382
        %v5384 = vsel %vm5383, 0, %v5382
        %v5385 = vsub.s32 32, %v5384
        %v5386 = vshll.u32 %v5377, %v5384
        %v5387 = vshrl.u32 %v5369, %v5385
        %v5388 = vor.u32 %v5386, %v5387
        %v5389 = vsub.s32 4294967266, %v5384
        %v5390 = vadd.s32 %v5389, 127
        %v5391 = vshll.u32 %v5390, 23
        %v5392 = vor.u32 4788187, %v5391
        %v5393 = vand.u32 2147483647, %v5392
        %v5395 = vcvt.s32.f32 %v5388
        %v5396 = vmul.f32 %v5395, %v5393
        %v5397 = vxor.u32 %v5396, 2147483648
        %v5398 = vsel %vm5277, %v5397, %v5396
        %v5399 = vsub.s32 4, %v5375
        %v5400 = vsel %vm5277, %v5399, %v5375
        %v5401 = vsel %vm5276, %v570, %v5398
        %v5402 = vsel %vm5276, 0, %v5400
        %v5403 = vmul.f32 %v5401, %v5401
        %v5404 = vmul.f32 %v5403, -0.001358992
        %v5405 = vadd.f32 %v5404, 0.041655596
        %v5406 = vmul.f32 %v5403, %v5405
        %v5407 = vadd.f32 %v5406, -0.4999988
        %v5408 = vmul.f32 %v5403, %v5407
        %v5409 = vadd.f32 1.0, %v5408
        %v5410 = vmul.f32 %v5401, %v5401
        %v5411 = vmul.f32 %v5410, -0.00019511016
        %v5412 = vadd.f32 %v5411, 0.008332121
        %v5413 = vmul.f32 %v5410, %v5412
        %v5414 = vadd.f32 %v5413, -0.16666654
        %v5415 = vmul.f32 %v5410, %v5414
        %v5416 = vadd.f32 %v5415, 1.0
        %v5417 = vmul.f32 %v5416, %v5401
        %vm5418 = vweird.f32 %v570
        %v5419 = vadd.s32 %v5402, 3
        %v5420 = vand.u32 %v5419, 3
        %vm5421 = vcmp.lt.s32.totalorder %v5420, 2
        %vm5422 = vcmp.eq.s32.totalorder %v5420, 0
        %v5423 = vxor.u32 %v5417, 2147483648
        %v5424 = vsel %vm5422, %v5409, %v5423
        %vm5425 = vcmp.eq.s32.totalorder %v5420, 2
        %v5426 = vxor.u32 %v5409, 2147483648
        %v5427 = vsel %vm5425, %v5426, %v5417
        %v5428 = vsel %vm5421, %v5424, %v5427
        %v5429 = vsel %vm5418, nan, %v5428
        %v5430 = vand.u32 2147483647, %v611
        %vm5431 = vcmp.le.f32.partialorder %v5430, 0.7853982
        %vm5432 = vcmp.lt.s32.totalorder %v611, 0
        %v5433 = vand.u32 %v611, 2139095040
        %v5434 = vshrl.u32 %v5433, 23
        %v5435 = vsub.s32 %v5434, 127
        %v5436 = vand.u32 2147483647, %v611
        %v5437 = vand.u32 %v5436, 8388607
        %v5438 = vor.u32 %v5437, 8388608
        %v5439 = vsub.s32 0, %v5438
        %v5440 = vadd.s32 %v5435, 1
        %vm5441 = vcmp.gt.s32.totalorder %v5440, 0
        %v5442 = vsel %vm5441, %v5440, 0
        %v5443 = vshrl.u32 %v5442, 5
        %v5444 = vand.u32 %v5442, 31
        %v5445 = vsub.s32 32, %v5444
        %v5446 = vshrl.u32 683565275, %v5445
        %v5447 = vshll.u32 683565275, %v5444
        %v5448 = vshrl.u32 2475754826, %v5445
        %v5449 = vor.u32 %v5447, %v5448
        %v5450 = vshll.u32 2475754826, %v5444
        %v5451 = vshrl.u32 2131351028, %v5445
        %v5452 = vor.u32 %v5450, %v5451
        %v5453 = vshll.u32 2131351028, %v5444
        %v5454 = vshrl.u32 2102212464, %v5445
        %v5455 = vor.u32 %v5453, %v5454
        %v5456 = vshll.u32 2102212464, %v5444
        %v5457 = vshrl.u32 920167782, %v5445
        %v5458 = vor.u32 %v5456, %v5457
        %v5459 = vshll.u32 920167782, %v5444
        %v5460 = vshrl.u32 1326507024, %v5445
        %v5461 = vor.u32 %v5459, %v5460
        %vm5462 = vcmp.lt.s32.totalorder %v5443, 1
        %vm5463 = vcmp.lt.s32.totalorder %v5443, 2
        %vm5464 = vcmp.lt.s32.totalorder %v5443, 3
        %vm5465 = vcmp.lt.s32.totalorder %v5443, 4
        %v5466 = vsel %vm5462, %v5446, %v5449
        %v5467 = vsel %vm5465, %v5455, 2102212464
        %v5468 = vsel %vm5464, %v5452, %v5467
        %v5469 = vsel %vm5463, %v5466, %v5468
        %v5470 = vsel %vm5462, %v5449, %v5452
        %v5471 = vsel %vm5465, %v5458, 920167782
        %v5472 = vsel %vm5464, %v5455, %v5471
        %v5473 = vsel %vm5463, %v5470, %v5472
        %v5474 = vsel %vm5462, %v5452, %v5455
        %v5475 = vsel %vm5465, %v5461, 1326507024
        %v5476 = vsel %vm5464, %v5458, %v5475
        %v5477 = vsel %vm5463, %v5474, %v5476
        %v5478 = vshll.u32 %v5438, 8
        %v5479 = vand.u32 %v5478, 65535
        %v5480 = vshrl.u32 %v5478, 16
        %v5481 = vand.u32 %v5477, 65535
        %v5482 = vshrl.u32 %v5477, 16
        %v5483 = vmul.u32 %v5479, %v5481
        %v5484 = vmul.u32 %v5479, %v5482
        %v5485 = vmul.u32 %v5480, %v5481
        %v5486 = vmul.u32 %v5480, %v5482
        %v5487 = vshll.u32 %v5484, 16
        %v5488 = vshrl.u32 %v5484, 16
        %v5489 = vshll.u32 %v5485, 16
        %v5490 = vshrl.u32 %v5485, 16
        %vm5491 = vc.u32 %v5483, %v5487
        %v5492 = vsel %vm5491, 1, 0
        %v5493 = vadd.s32 %v5483, %v5487
        %v5494 = vadd.s32 %v5486, %v5492
        %vm5495 = vc.u32 %v5493, %v5489
        %v5496 = vsel %vm5495, 1, 0
        %v5497 = vadd.s32 %v5493, %v5489
        %v5498 = vadd.s32 %v5494, %v5496
        %v5499 = vadd.s32 %v5498, %v5488
        %v5500 = vadd.s32 %v5499, %v5490
        %v5501 = vand.u32 %v5478, 65535
        %v5502 = vshrl.u32 %v5478, 16
        %v5503 = vand.u32 %v5473, 65535
        %v5504 = vshrl.u32 %v5473, 16
        %v5505 = vmul.u32 %v5501, %v5503
        %v5506 = vmul.u32 %v5501, %v5504
        %v5507 = vmul.u32 %v5502, %v5503
        %v5508 = vmul.u32 %v5502, %v5504
        %v5509 = vshll.u32 %v5506, 16
        %v5510 = vshrl.u32 %v5506, 16
        %v5511 = vshll.u32 %v5507, 16
        %v5512 = vshrl.u32 %v5507, 16
        %vm5513 = vc.u32 %v5505, %v5509
        %v5514 = vsel %vm5513, 1, 0
        %v5515 = vadd.s32 %v5505, %v5509
        %v5516 = vadd.s32 %v5508, %v5514
        %vm5517 = vc.u32 %v5515, %v5511
        %v5518 = vsel %vm5517, 1, 0
        %v5519 = vadd.s32 %v5515, %v5511
        %v5520 = vadd.s32 %v5516, %v5518
        %v5521 = vadd.s32 %v5520, %v5510
        %v5522 = vadd.s32 %v5521, %v5512
        %v5523 = vmul.u32 %v5478, %v5469
        %v5524 = vadd.s32 %v5500, %v5519
        %vm5525 = vc.u32 %v5500, %v5519
        %v5526 = vadd.s32 %v5522, 1
        %v5527 = vsel %vm5525, %v5526, %v5522
        %v5528 = vadd.s32 %v5523, %v5527
        %v5529 = vadd.s32 %v5528, 536870912
        %v5530 = vshrl.u32 %v5529, 30
        %v5531 = vshll.u32 %v5530, 30
        %v5532 = vsub.s32 %v5528, %v5531
        %vm5533 = vcmp.lt.s32.totalorder %v5532, 0
        %v5534 = vsub.s32 0, %v5532
        %v5535 = vsel %vm5533, %v5534, %v5532
        %v5536 = vclz %v5535
        %v5537 = vsub.s32 %v5536, 2
        %vm5538 = vcmp.gt.s32.totalorder 0, %v5537
        %v5539 = vsel %vm5538, 0, %v5537
        %v5540 = vsub.s32 32, %v5539
        %v5541 = vshll.u32 %v5532, %v5539
        %v5542 = vshrl.u32 %v5524, %v5540
        %v5543 = vor.u32 %v5541, %v5542
        %v5544 = vsub.s32 4294967266, %v5539
        %v5545 = vadd.s32 %v5544, 127
        %v5546 = vshll.u32 %v5545, 23
        %v5547 = vor.u32 4788187, %v5546
        %v5548 = vand.u32 2147483647, %v5547
        %v5550 = vcvt.s32.f32 %v5543
        %v5551 = vmul.f32 %v5550, %v5548
        %v5552 = vxor.u32 %v5551, 2147483648
        %v5553 = vsel %vm5432, %v5552, %v5551
        %v5554 = vsub.s32 4, %v5530
        %v5555 = vsel %vm5432, %v5554, %v5530
        %v5556 = vsel %vm5431, %v611, %v5553
        %v5557 = vsel %vm5431, 0, %v5555
        %v5558 = vmul.f32 %v5556, %v5556
        %v5559 = vmul.f32 %v5558, -0.001358992
        %v5560 = vadd.f32 %v5559, 0.041655596
        %v5561 = vmul.f32 %v5558, %v5560
        %v5562 = vadd.f32 %v5561, -0.4999988
        %v5563 = vmul.f32 %v5558, %v5562
        %v5564 = vadd.f32 1.0, %v5563
        %v5565 = vmul.f32 %v5556, %v5556
        %v5566 = vmul.f32 %v5565, -0.00019511016
        %v5567 = vadd.f32 %v5566, 0.008332121
        %v5568 = vmul.f32 %v5565, %v5567
        %v5569 = vadd.f32 %v5568, -0.16666654
        %v5570 = vmul.f32 %v5565, %v5569
        %v5571 = vadd.f32 %v5570, 1.0
        %v5572 = vmul.f32 %v5571, %v5556
        %vm5573 = vweird.f32 %v611
        %v5574 = vadd.s32 %v5557, 3
        %v5575 = vand.u32 %v5574, 3
        %vm5576 = vcmp.lt.s32.totalorder %v5575, 2
        %vm5577 = vcmp.eq.s32.totalorder %v5575, 0
        %v5578 = vxor.u32 %v5572, 2147483648
        %v5579 = vsel %vm5577, %v5564, %v5578
        %vm5580 = vcmp.eq.s32.totalorder %v5575, 2
        %v5581 = vxor.u32 %v5564, 2147483648
        %v5582 = vsel %vm5580, %v5581, %v5572
        %v5583 = vsel %vm5576, %v5579, %v5582
        %v5584 = vsel %vm5573, nan, %v5583
        %v5585 = vmul.f32 %v327, %v779
        %v5586 = vmul.f32 %v368, %v934
        %v5587 = vmul.f32 %v409, %v1089
        %v5588 = vmul.f32 %v450, %v1244
        %v5589 = vmul.f32 %v491, %v1399
        %v5590 = vmul.f32 %v532, %v1554
        %v5591 = vmul.f32 %v573, %v1709
        %v5592 = vmul.f32 %v614, %v1864
        %v5593 = vmul.f32 %v330, %v2019
        %v5594 = vmul.f32 %v371, %v2174
        %v5595 = vmul.f32 %v412, %v2329
        %v5596 = vmul.f32 %v453, %v2484
        %v5597 = vmul.f32 %v494, %v2639
        %v5598 = vmul.f32 %v535, %v2794
        %v5599 = vmul.f32 %v576, %v2949
        %v5600 = vmul.f32 %v617, %v3104
        %v5601 = vmul.f32 %v333, %v3259
        %v5602 = vmul.f32 %v374, %v3414
        %v5603 = vmul.f32 %v415, %v3569
        %v5604 = vmul.f32 %v456, %v3724
        %v5605 = vmul.f32 %v497, %v3879
        %v5606 = vmul.f32 %v538, %v4034
        %v5607 = vmul.f32 %v579, %v4189
        %v5608 = vmul.f32 %v620, %v4344
        %v5609 = vmul.f32 %v336, %v4499
        %v5610 = vmul.f32 %v377, %v4654
        %v5611 = vmul.f32 %v418, %v4809
        %v5612 = vmul.f32 %v459, %v4964
        %v5613 = vmul.f32 %v500, %v5119
        %v5614 = vmul.f32 %v541, %v5274
        %v5615 = vmul.f32 %v582, %v5429
        %v5616 = vmul.f32 %v623, %v5584
        %v5617 = vld [vmem:[%s2] sm:$0xff]
        %v5618 = vld [vmem:[%s2 + $0x8] sm:$0xff]
        %v5619 = vld [vmem:[%s2 + $0x10] sm:$0xff]
        %v5620 = vld [vmem:[%s2 + $0x18] sm:$0xff]
        %v5621 = vld [vmem:[%s2 + $0x20] sm:$0xff]
        %v5622 = vld [vmem:[%s2 + $0x28] sm:$0xff]
        %v5623 = vld [vmem:[%s2 + $0x30] sm:$0xff]
        %v5624 = vld [vmem:[%s2 + $0x38] sm:$0xff]
        %5626 = vset.pattern.permute.xlu0 0
        %5627 = vperm.xlu0 %5626, %v207
        %v5628 = vpop.permute.xlu0 %5627
        %5631 = vset.pattern.permute.xlu0 0
        %5632 = vperm.xlu0 %5631, %v208
        %v5633 = vpop.permute.xlu0 %5632
        %5636 = vset.pattern.permute.xlu0 0
        %5637 = vperm.xlu0 %5636, %v209
        %v5638 = vpop.permute.xlu0 %5637
        %5641 = vset.pattern.permute.xlu0 0
        %5642 = vperm.xlu0 %5641, %v210
        %v5643 = vpop.permute.xlu0 %5642
        %5646 = vset.pattern.permute.xlu0 0
        %5647 = vperm.xlu0 %5646, %v211
        %v5648 = vpop.permute.xlu0 %5647
        %5651 = vset.pattern.permute.xlu0 0
        %5652 = vperm.xlu0 %5651, %v212
        %v5653 = vpop.permute.xlu0 %5652
        %5656 = vset.pattern.permute.xlu0 0
        %5657 = vperm.xlu0 %5656, %v213
        %v5658 = vpop.permute.xlu0 %5657
        %5661 = vset.pattern.permute.xlu0 0
        %5662 = vperm.xlu0 %5661, %v214
        %v5663 = vpop.permute.xlu0 %5662
        %vm5665 = vcmask 261120
        %v5667 = vsel %vm5665, %v5617, 0
        %v5670 = vsel %vm5665, %v5618, 0
        %v5673 = vsel %vm5665, %v5619, 0
        %v5676 = vsel %vm5665, %v5620, 0
        %v5679 = vsel %vm5665, %v5621, 0
        %v5682 = vsel %vm5665, %v5622, 0
        %v5685 = vsel %vm5665, %v5623, 0
        %v5688 = vsel %vm5665, %v5624, 0
        %5690 = vmatpush.msra.mxu0 0.0
        %5691 = vmatpush.msra.mxu0 0.0
        %5692 = vmatpush.msra.mxu0 0.0
        %5693 = vmatpush.msra.mxu0 0.0
        %5694 = vmatpush.msra.mxu0 0.0
        %5695 = vmatpush.msra.mxu0 0.0
        %5696 = vmatpush.msra.mxu0 0.0
        %5697 = vmatpush.msra.mxu0 0.0
        %5698 = vmatpush.msra.mxu0 0.0
        %5699 = vmatpush.msra.mxu0 0.0
        %5700 = vmatpush.msra.mxu0 0.0
        %5701 = vmatpush.msra.mxu0 0.0
        %5702 = vmatpush.msra.mxu0 %v5609
        %5703 = vmatpush.msra.mxu0 %v5601
        %5704 = vmatpush.msra.mxu0 %v5593
        %5705 = vmatpush.msra.mxu0 %v5585
        %5706 = vmatmul.f32.gmra.mxu0 %v5667
        %v5707 = vpop.f32.mrf.mxu0
        %v5708 = vadd.f32 %v5628, %v5707
        %5709 = vmatmul.f32.gmra.mxu0 %v5670
        %v5710 = vpop.f32.mrf.mxu0
        %v5711 = vadd.f32 %v5633, %v5710
        %5712 = vmatmul.f32.gmra.mxu0 %v5673
        %v5713 = vpop.f32.mrf.mxu0
        %v5714 = vadd.f32 %v5638, %v5713
        %5715 = vmatmul.f32.gmra.mxu0 %v5676
        %v5716 = vpop.f32.mrf.mxu0
        %v5717 = vadd.f32 %v5643, %v5716
        %5718 = vmatmul.f32.gmra.mxu0 %v5679
        %v5719 = vpop.f32.mrf.mxu0
        %v5720 = vadd.f32 %v5648, %v5719
        %5721 = vmatmul.f32.gmra.mxu0 %v5682
        %v5722 = vpop.f32.mrf.mxu0
        %v5723 = vadd.f32 %v5653, %v5722
        %5724 = vmatmul.f32.gmra.mxu0 %v5685
        %v5725 = vpop.f32.mrf.mxu0
        %v5726 = vadd.f32 %v5658, %v5725
        %5727 = vmatmul.f32.gmra.mxu0 %v5688
        %v5728 = vpop.f32.mrf.mxu0
        %v5729 = vadd.f32 %v5663, %v5728
        %5730 = vdwg.mxu0
        %5731 = vmatpush.msra.mxu0 0.0
        %5732 = vmatpush.msra.mxu0 0.0
        %5733 = vmatpush.msra.mxu0 0.0
        %5734 = vmatpush.msra.mxu0 0.0
        %5735 = vmatpush.msra.mxu0 0.0
        %5736 = vmatpush.msra.mxu0 0.0
        %5737 = vmatpush.msra.mxu0 0.0
        %5738 = vmatpush.msra.mxu0 0.0
        %5739 = vmatpush.msra.mxu0 0.0
        %5740 = vmatpush.msra.mxu0 0.0
        %5741 = vmatpush.msra.mxu0 0.0
        %5742 = vmatpush.msra.mxu0 0.0
        %5743 = vmatpush.msra.mxu0 %v5610
        %5744 = vmatpush.msra.mxu0 %v5602
        %5745 = vmatpush.msra.mxu0 %v5594
        %5746 = vmatpush.msra.mxu0 %v5586
        %5747 = vmatmul.f32.gmra.mxu0 %v5667
        %v5748 = vpop.f32.mrf.mxu0
        %v5749 = vadd.f32 %v5628, %v5748
        %5750 = vmatmul.f32.gmra.mxu0 %v5670
        %v5751 = vpop.f32.mrf.mxu0
        %v5752 = vadd.f32 %v5633, %v5751
        %5753 = vmatmul.f32.gmra.mxu0 %v5673
        %v5754 = vpop.f32.mrf.mxu0
        %v5755 = vadd.f32 %v5638, %v5754
        %5756 = vmatmul.f32.gmra.mxu0 %v5676
        %v5757 = vpop.f32.mrf.mxu0
        %v5758 = vadd.f32 %v5643, %v5757
        %5759 = vmatmul.f32.gmra.mxu0 %v5679
        %v5760 = vpop.f32.mrf.mxu0
        %v5761 = vadd.f32 %v5648, %v5760
        %5762 = vmatmul.f32.gmra.mxu0 %v5682
        %v5763 = vpop.f32.mrf.mxu0
        %v5764 = vadd.f32 %v5653, %v5763
        %5765 = vmatmul.f32.gmra.mxu0 %v5685
        %v5766 = vpop.f32.mrf.mxu0
        %v5767 = vadd.f32 %v5658, %v5766
        %5768 = vmatmul.f32.gmra.mxu0 %v5688
        %v5769 = vpop.f32.mrf.mxu0
        %v5770 = vadd.f32 %v5663, %v5769
        %5771 = vdwg.mxu0
        %5772 = vmatpush.msra.mxu0 0.0
        %5773 = vmatpush.msra.mxu0 0.0
        %5774 = vmatpush.msra.mxu0 0.0
        %5775 = vmatpush.msra.mxu0 0.0
        %5776 = vmatpush.msra.mxu0 0.0
        %5777 = vmatpush.msra.mxu0 0.0
        %5778 = vmatpush.msra.mxu0 0.0
        %5779 = vmatpush.msra.mxu0 0.0
        %5780 = vmatpush.msra.mxu0 0.0
        %5781 = vmatpush.msra.mxu0 0.0
        %5782 = vmatpush.msra.mxu0 0.0
        %5783 = vmatpush.msra.mxu0 0.0
        %5784 = vmatpush.msra.mxu0 %v5611
        %5785 = vmatpush.msra.mxu0 %v5603
        %5786 = vmatpush.msra.mxu0 %v5595
        %5787 = vmatpush.msra.mxu0 %v5587
        %5788 = vmatmul.f32.gmra.mxu0 %v5667
        %v5789 = vpop.f32.mrf.mxu0
        %v5790 = vadd.f32 %v5628, %v5789
        %5791 = vmatmul.f32.gmra.mxu0 %v5670
        %v5792 = vpop.f32.mrf.mxu0
        %v5793 = vadd.f32 %v5633, %v5792
        %5794 = vmatmul.f32.gmra.mxu0 %v5673
        %v5795 = vpop.f32.mrf.mxu0
        %v5796 = vadd.f32 %v5638, %v5795
        %5797 = vmatmul.f32.gmra.mxu0 %v5676
        %v5798 = vpop.f32.mrf.mxu0
        %v5799 = vadd.f32 %v5643, %v5798
        %5800 = vmatmul.f32.gmra.mxu0 %v5679
        %v5801 = vpop.f32.mrf.mxu0
        %v5802 = vadd.f32 %v5648, %v5801
        %5803 = vmatmul.f32.gmra.mxu0 %v5682
        %v5804 = vpop.f32.mrf.mxu0
        %v5805 = vadd.f32 %v5653, %v5804
        %5806 = vmatmul.f32.gmra.mxu0 %v5685
        %v5807 = vpop.f32.mrf.mxu0
        %v5808 = vadd.f32 %v5658, %v5807
        %5809 = vmatmul.f32.gmra.mxu0 %v5688
        %v5810 = vpop.f32.mrf.mxu0
        %v5811 = vadd.f32 %v5663, %v5810
        %5812 = vdwg.mxu0
        %5813 = vmatpush.msra.mxu0 0.0
        %5814 = vmatpush.msra.mxu0 0.0
        %5815 = vmatpush.msra.mxu0 0.0
        %5816 = vmatpush.msra.mxu0 0.0
        %5817 = vmatpush.msra.mxu0 0.0
        %5818 = vmatpush.msra.mxu0 0.0
        %5819 = vmatpush.msra.mxu0 0.0
        %5820 = vmatpush.msra.mxu0 0.0
        %5821 = vmatpush.msra.mxu0 0.0
        %5822 = vmatpush.msra.mxu0 0.0
        %5823 = vmatpush.msra.mxu0 0.0
        %5824 = vmatpush.msra.mxu0 0.0
        %5825 = vmatpush.msra.mxu0 %v5612
        %5826 = vmatpush.msra.mxu0 %v5604
        %5827 = vmatpush.msra.mxu0 %v5596
        %5828 = vmatpush.msra.mxu0 %v5588
        %5829 = vmatmul.f32.gmra.mxu0 %v5667
        %v5830 = vpop.f32.mrf.mxu0
        %v5831 = vadd.f32 %v5628, %v5830
        %5832 = vmatmul.f32.gmra.mxu0 %v5670
        %v5833 = vpop.f32.mrf.mxu0
        %v5834 = vadd.f32 %v5633, %v5833
        %5835 = vmatmul.f32.gmra.mxu0 %v5673
        %v5836 = vpop.f32.mrf.mxu0
        %v5837 = vadd.f32 %v5638, %v5836
        %5838 = vmatmul.f32.gmra.mxu0 %v5676
        %v5839 = vpop.f32.mrf.mxu0
        %v5840 = vadd.f32 %v5643, %v5839
        %5841 = vmatmul.f32.gmra.mxu0 %v5679
        %v5842 = vpop.f32.mrf.mxu0
        %v5843 = vadd.f32 %v5648, %v5842
        %5844 = vmatmul.f32.gmra.mxu0 %v5682
        %v5845 = vpop.f32.mrf.mxu0
        %v5846 = vadd.f32 %v5653, %v5845
        %5847 = vmatmul.f32.gmra.mxu0 %v5685
        %v5848 = vpop.f32.mrf.mxu0
        %v5849 = vadd.f32 %v5658, %v5848
        %5850 = vmatmul.f32.gmra.mxu0 %v5688
        %v5851 = vpop.f32.mrf.mxu0
        %v5852 = vadd.f32 %v5663, %v5851
        %5853 = vdwg.mxu0
        %5854 = vmatpush.msra.mxu0 0.0
        %5855 = vmatpush.msra.mxu0 0.0
        %5856 = vmatpush.msra.mxu0 0.0
        %5857 = vmatpush.msra.mxu0 0.0
        %5858 = vmatpush.msra.mxu0 0.0
        %5859 = vmatpush.msra.mxu0 0.0
        %5860 = vmatpush.msra.mxu0 0.0
        %5861 = vmatpush.msra.mxu0 0.0
        %5862 = vmatpush.msra.mxu0 0.0
        %5863 = vmatpush.msra.mxu0 0.0
        %5864 = vmatpush.msra.mxu0 0.0
        %5865 = vmatpush.msra.mxu0 0.0
        %5866 = vmatpush.msra.mxu0 %v5613
        %5867 = vmatpush.msra.mxu0 %v5605
        %5868 = vmatpush.msra.mxu0 %v5597
        %5869 = vmatpush.msra.mxu0 %v5589
        %5870 = vmatmul.f32.gmra.mxu0 %v5667
        %v5871 = vpop.f32.mrf.mxu0
        %v5872 = vadd.f32 %v5628, %v5871
        %5873 = vmatmul.f32.gmra.mxu0 %v5670
        %v5874 = vpop.f32.mrf.mxu0
        %v5875 = vadd.f32 %v5633, %v5874
        %5876 = vmatmul.f32.gmra.mxu0 %v5673
        %v5877 = vpop.f32.mrf.mxu0
        %v5878 = vadd.f32 %v5638, %v5877
        %5879 = vmatmul.f32.gmra.mxu0 %v5676
        %v5880 = vpop.f32.mrf.mxu0
        %v5881 = vadd.f32 %v5643, %v5880
        %5882 = vmatmul.f32.gmra.mxu0 %v5679
        %v5883 = vpop.f32.mrf.mxu0
        %v5884 = vadd.f32 %v5648, %v5883
        %5885 = vmatmul.f32.gmra.mxu0 %v5682
        %v5886 = vpop.f32.mrf.mxu0
        %v5887 = vadd.f32 %v5653, %v5886
        %5888 = vmatmul.f32.gmra.mxu0 %v5685
        %v5889 = vpop.f32.mrf.mxu0
        %v5890 = vadd.f32 %v5658, %v5889
        %5891 = vmatmul.f32.gmra.mxu0 %v5688
        %v5892 = vpop.f32.mrf.mxu0
        %v5893 = vadd.f32 %v5663, %v5892
        %5894 = vdwg.mxu0
        %5895 = vmatpush.msra.mxu0 0.0
        %5896 = vmatpush.msra.mxu0 0.0
        %5897 = vmatpush.msra.mxu0 0.0
        %5898 = vmatpush.msra.mxu0 0.0
        %5899 = vmatpush.msra.mxu0 0.0
        %5900 = vmatpush.msra.mxu0 0.0
        %5901 = vmatpush.msra.mxu0 0.0
        %5902 = vmatpush.msra.mxu0 0.0
        %5903 = vmatpush.msra.mxu0 0.0
        %5904 = vmatpush.msra.mxu0 0.0
        %5905 = vmatpush.msra.mxu0 0.0
        %5906 = vmatpush.msra.mxu0 0.0
        %5907 = vmatpush.msra.mxu0 %v5614
        %5908 = vmatpush.msra.mxu0 %v5606
        %5909 = vmatpush.msra.mxu0 %v5598
        %5910 = vmatpush.msra.mxu0 %v5590
        %5911 = vmatmul.f32.gmra.mxu0 %v5667
        %v5912 = vpop.f32.mrf.mxu0
        %v5913 = vadd.f32 %v5628, %v5912
        %5914 = vmatmul.f32.gmra.mxu0 %v5670
        %v5915 = vpop.f32.mrf.mxu0
        %v5916 = vadd.f32 %v5633, %v5915
        %5917 = vmatmul.f32.gmra.mxu0 %v5673
        %v5918 = vpop.f32.mrf.mxu0
        %v5919 = vadd.f32 %v5638, %v5918
        %5920 = vmatmul.f32.gmra.mxu0 %v5676
        %v5921 = vpop.f32.mrf.mxu0
        %v5922 = vadd.f32 %v5643, %v5921
        %5923 = vmatmul.f32.gmra.mxu0 %v5679
        %v5924 = vpop.f32.mrf.mxu0
        %v5925 = vadd.f32 %v5648, %v5924
        %5926 = vmatmul.f32.gmra.mxu0 %v5682
        %v5927 = vpop.f32.mrf.mxu0
        %v5928 = vadd.f32 %v5653, %v5927
        %5929 = vmatmul.f32.gmra.mxu0 %v5685
        %v5930 = vpop.f32.mrf.mxu0
        %v5931 = vadd.f32 %v5658, %v5930
        %5932 = vmatmul.f32.gmra.mxu0 %v5688
        %v5933 = vpop.f32.mrf.mxu0
        %v5934 = vadd.f32 %v5663, %v5933
        %5935 = vdwg.mxu0
        %5936 = vmatpush.msra.mxu0 0.0
        %5937 = vmatpush.msra.mxu0 0.0
        %5938 = vmatpush.msra.mxu0 0.0
        %5939 = vmatpush.msra.mxu0 0.0
        %5940 = vmatpush.msra.mxu0 0.0
        %5941 = vmatpush.msra.mxu0 0.0
        %5942 = vmatpush.msra.mxu0 0.0
        %5943 = vmatpush.msra.mxu0 0.0
        %5944 = vmatpush.msra.mxu0 0.0
        %5945 = vmatpush.msra.mxu0 0.0
        %5946 = vmatpush.msra.mxu0 0.0
        %5947 = vmatpush.msra.mxu0 0.0
        %5948 = vmatpush.msra.mxu0 %v5615
        %5949 = vmatpush.msra.mxu0 %v5607
        %5950 = vmatpush.msra.mxu0 %v5599
        %5951 = vmatpush.msra.mxu0 %v5591
        %5952 = vmatmul.f32.gmra.mxu0 %v5667
        %v5953 = vpop.f32.mrf.mxu0
        %v5954 = vadd.f32 %v5628, %v5953
        %5955 = vmatmul.f32.gmra.mxu0 %v5670
        %v5956 = vpop.f32.mrf.mxu0
        %v5957 = vadd.f32 %v5633, %v5956
        %5958 = vmatmul.f32.gmra.mxu0 %v5673
        %v5959 = vpop.f32.mrf.mxu0
        %v5960 = vadd.f32 %v5638, %v5959
        %5961 = vmatmul.f32.gmra.mxu0 %v5676
        %v5962 = vpop.f32.mrf.mxu0
        %v5963 = vadd.f32 %v5643, %v5962
        %5964 = vmatmul.f32.gmra.mxu0 %v5679
        %v5965 = vpop.f32.mrf.mxu0
        %v5966 = vadd.f32 %v5648, %v5965
        %5967 = vmatmul.f32.gmra.mxu0 %v5682
        %v5968 = vpop.f32.mrf.mxu0
        %v5969 = vadd.f32 %v5653, %v5968
        %5970 = vmatmul.f32.gmra.mxu0 %v5685
        %v5971 = vpop.f32.mrf.mxu0
        %v5972 = vadd.f32 %v5658, %v5971
        %5973 = vmatmul.f32.gmra.mxu0 %v5688
        %v5974 = vpop.f32.mrf.mxu0
        %v5975 = vadd.f32 %v5663, %v5974
        %5976 = vdwg.mxu0
        %5977 = vmatpush.msra.mxu0 0.0
        %5978 = vmatpush.msra.mxu0 0.0
        %5979 = vmatpush.msra.mxu0 0.0
        %5980 = vmatpush.msra.mxu0 0.0
        %5981 = vmatpush.msra.mxu0 0.0
        %5982 = vmatpush.msra.mxu0 0.0
        %5983 = vmatpush.msra.mxu0 0.0
        %5984 = vmatpush.msra.mxu0 0.0
        %5985 = vmatpush.msra.mxu0 0.0
        %5986 = vmatpush.msra.mxu0 0.0
        %5987 = vmatpush.msra.mxu0 0.0
        %5988 = vmatpush.msra.mxu0 0.0
        %5989 = vmatpush.msra.mxu0 %v5616
        %5990 = vmatpush.msra.mxu0 %v5608
        %5991 = vmatpush.msra.mxu0 %v5600
        %5992 = vmatpush.msra.mxu0 %v5592
        %5993 = vmatmul.f32.gmra.mxu0 %v5667
        %v5994 = vpop.f32.mrf.mxu0
        %v5995 = vadd.f32 %v5628, %v5994
        %5996 = vmatmul.f32.gmra.mxu0 %v5670
        %v5997 = vpop.f32.mrf.mxu0
        %v5998 = vadd.f32 %v5633, %v5997
        %5999 = vmatmul.f32.gmra.mxu0 %v5673
        %v6000 = vpop.f32.mrf.mxu0
        %v6001 = vadd.f32 %v5638, %v6000
        %6002 = vmatmul.f32.gmra.mxu0 %v5676
        %v6003 = vpop.f32.mrf.mxu0
        %v6004 = vadd.f32 %v5643, %v6003
        %6005 = vmatmul.f32.gmra.mxu0 %v5679
        %v6006 = vpop.f32.mrf.mxu0
        %v6007 = vadd.f32 %v5648, %v6006
        %6008 = vmatmul.f32.gmra.mxu0 %v5682
        %v6009 = vpop.f32.mrf.mxu0
        %v6010 = vadd.f32 %v5653, %v6009
        %6011 = vmatmul.f32.gmra.mxu0 %v5685
        %v6012 = vpop.f32.mrf.mxu0
        %v6013 = vadd.f32 %v5658, %v6012
        %6014 = vmatmul.f32.gmra.mxu0 %v5688
        %v6015 = vpop.f32.mrf.mxu0
        %v6016 = vadd.f32 %v5663, %v6015
        %6017 = vdwg.mxu0
        %v6018 = vand.u32 2147483647, %v5708
        %vm6019 = vcmp.le.f32.partialorder %v6018, 0.7853982
        %vm6020 = vcmp.lt.s32.totalorder %v5708, 0
        %v6021 = vand.u32 %v5708, 2139095040
        %v6022 = vshrl.u32 %v6021, 23
        %v6023 = vsub.s32 %v6022, 127
        %v6024 = vand.u32 2147483647, %v5708
        %v6025 = vand.u32 %v6024, 8388607
        %v6026 = vor.u32 %v6025, 8388608
        %v6027 = vsub.s32 0, %v6026
        %v6028 = vadd.s32 %v6023, 1
        %vm6029 = vcmp.gt.s32.totalorder %v6028, 0
        %v6030 = vsel %vm6029, %v6028, 0
        %v6031 = vshrl.u32 %v6030, 5
        %v6032 = vand.u32 %v6030, 31
        %v6033 = vsub.s32 32, %v6032
        %v6034 = vshrl.u32 683565275, %v6033
        %v6035 = vshll.u32 683565275, %v6032
        %v6036 = vshrl.u32 2475754826, %v6033
        %v6037 = vor.u32 %v6035, %v6036
        %v6038 = vshll.u32 2475754826, %v6032
        %v6039 = vshrl.u32 2131351028, %v6033
        %v6040 = vor.u32 %v6038, %v6039
        %v6041 = vshll.u32 2131351028, %v6032
        %v6042 = vshrl.u32 2102212464, %v6033
        %v6043 = vor.u32 %v6041, %v6042
        %v6044 = vshll.u32 2102212464, %v6032
        %v6045 = vshrl.u32 920167782, %v6033
        %v6046 = vor.u32 %v6044, %v6045
        %v6047 = vshll.u32 920167782, %v6032
        %v6048 = vshrl.u32 1326507024, %v6033
        %v6049 = vor.u32 %v6047, %v6048
        %vm6050 = vcmp.lt.s32.totalorder %v6031, 1
        %vm6051 = vcmp.lt.s32.totalorder %v6031, 2
        %vm6052 = vcmp.lt.s32.totalorder %v6031, 3
        %vm6053 = vcmp.lt.s32.totalorder %v6031, 4
        %v6054 = vsel %vm6050, %v6034, %v6037
        %v6055 = vsel %vm6053, %v6043, 2102212464
        %v6056 = vsel %vm6052, %v6040, %v6055
        %v6057 = vsel %vm6051, %v6054, %v6056
        %v6058 = vsel %vm6050, %v6037, %v6040
        %v6059 = vsel %vm6053, %v6046, 920167782
        %v6060 = vsel %vm6052, %v6043, %v6059
        %v6061 = vsel %vm6051, %v6058, %v6060
        %v6062 = vsel %vm6050, %v6040, %v6043
        %v6063 = vsel %vm6053, %v6049, 1326507024
        %v6064 = vsel %vm6052, %v6046, %v6063
        %v6065 = vsel %vm6051, %v6062, %v6064
        %v6066 = vshll.u32 %v6026, 8
        %v6067 = vand.u32 %v6066, 65535
        %v6068 = vshrl.u32 %v6066, 16
        %v6069 = vand.u32 %v6065, 65535
        %v6070 = vshrl.u32 %v6065, 16
        %v6071 = vmul.u32 %v6067, %v6069
        %v6072 = vmul.u32 %v6067, %v6070
        %v6073 = vmul.u32 %v6068, %v6069
        %v6074 = vmul.u32 %v6068, %v6070
        %v6075 = vshll.u32 %v6072, 16
        %v6076 = vshrl.u32 %v6072, 16
        %v6077 = vshll.u32 %v6073, 16
        %v6078 = vshrl.u32 %v6073, 16
        %vm6079 = vc.u32 %v6071, %v6075
        %v6080 = vsel %vm6079, 1, 0
        %v6081 = vadd.s32 %v6071, %v6075
        %v6082 = vadd.s32 %v6074, %v6080
        %vm6083 = vc.u32 %v6081, %v6077
        %v6084 = vsel %vm6083, 1, 0
        %v6085 = vadd.s32 %v6081, %v6077
        %v6086 = vadd.s32 %v6082, %v6084
        %v6087 = vadd.s32 %v6086, %v6076
        %v6088 = vadd.s32 %v6087, %v6078
        %v6089 = vand.u32 %v6066, 65535
        %v6090 = vshrl.u32 %v6066, 16
        %v6091 = vand.u32 %v6061, 65535
        %v6092 = vshrl.u32 %v6061, 16
        %v6093 = vmul.u32 %v6089, %v6091
        %v6094 = vmul.u32 %v6089, %v6092
        %v6095 = vmul.u32 %v6090, %v6091
        %v6096 = vmul.u32 %v6090, %v6092
        %v6097 = vshll.u32 %v6094, 16
        %v6098 = vshrl.u32 %v6094, 16
        %v6099 = vshll.u32 %v6095, 16
        %v6100 = vshrl.u32 %v6095, 16
        %vm6101 = vc.u32 %v6093, %v6097
        %v6102 = vsel %vm6101, 1, 0
        %v6103 = vadd.s32 %v6093, %v6097
        %v6104 = vadd.s32 %v6096, %v6102
        %vm6105 = vc.u32 %v6103, %v6099
        %v6106 = vsel %vm6105, 1, 0
        %v6107 = vadd.s32 %v6103, %v6099
        %v6108 = vadd.s32 %v6104, %v6106
        %v6109 = vadd.s32 %v6108, %v6098
        %v6110 = vadd.s32 %v6109, %v6100
        %v6111 = vmul.u32 %v6066, %v6057
        %v6112 = vadd.s32 %v6088, %v6107
        %vm6113 = vc.u32 %v6088, %v6107
        %v6114 = vadd.s32 %v6110, 1
        %v6115 = vsel %vm6113, %v6114, %v6110
        %v6116 = vadd.s32 %v6111, %v6115
        %v6117 = vadd.s32 %v6116, 536870912
        %v6118 = vshrl.u32 %v6117, 30
        %v6119 = vshll.u32 %v6118, 30
        %v6120 = vsub.s32 %v6116, %v6119
        %vm6121 = vcmp.lt.s32.totalorder %v6120, 0
        %v6122 = vsub.s32 0, %v6120
        %v6123 = vsel %vm6121, %v6122, %v6120
        %v6124 = vclz %v6123
        %v6125 = vsub.s32 %v6124, 2
        %vm6126 = vcmp.gt.s32.totalorder 0, %v6125
        %v6127 = vsel %vm6126, 0, %v6125
        %v6128 = vsub.s32 32, %v6127
        %v6129 = vshll.u32 %v6120, %v6127
        %v6130 = vshrl.u32 %v6112, %v6128
        %v6131 = vor.u32 %v6129, %v6130
        %v6132 = vsub.s32 4294967266, %v6127
        %v6133 = vadd.s32 %v6132, 127
        %v6134 = vshll.u32 %v6133, 23
        %v6135 = vor.u32 4788187, %v6134
        %v6136 = vand.u32 2147483647, %v6135
        %v6138 = vcvt.s32.f32 %v6131
        %v6139 = vmul.f32 %v6138, %v6136
        %v6140 = vxor.u32 %v6139, 2147483648
        %v6141 = vsel %vm6020, %v6140, %v6139
        %v6142 = vsub.s32 4, %v6118
        %v6143 = vsel %vm6020, %v6142, %v6118
        %v6144 = vsel %vm6019, %v5708, %v6141
        %v6145 = vsel %vm6019, 0, %v6143
        %v6146 = vmul.f32 %v6144, %v6144
        %v6147 = vmul.f32 %v6146, -0.001358992
        %v6148 = vadd.f32 %v6147, 0.041655596
        %v6149 = vmul.f32 %v6146, %v6148
        %v6150 = vadd.f32 %v6149, -0.4999988
        %v6151 = vmul.f32 %v6146, %v6150
        %v6152 = vadd.f32 1.0, %v6151
        %v6153 = vmul.f32 %v6144, %v6144
        %v6154 = vmul.f32 %v6153, -0.00019511016
        %v6155 = vadd.f32 %v6154, 0.008332121
        %v6156 = vmul.f32 %v6153, %v6155
        %v6157 = vadd.f32 %v6156, -0.16666654
        %v6158 = vmul.f32 %v6153, %v6157
        %v6159 = vadd.f32 %v6158, 1.0
        %v6160 = vmul.f32 %v6159, %v6144
        %vm6161 = vweird.f32 %v5708
        %v6162 = vadd.s32 %v6145, 3
        %v6163 = vand.u32 %v6162, 3
        %vm6164 = vcmp.lt.s32.totalorder %v6163, 2
        %vm6165 = vcmp.eq.s32.totalorder %v6163, 0
        %v6166 = vxor.u32 %v6160, 2147483648
        %v6167 = vsel %vm6165, %v6152, %v6166
        %vm6168 = vcmp.eq.s32.totalorder %v6163, 2
        %v6169 = vxor.u32 %v6152, 2147483648
        %v6170 = vsel %vm6168, %v6169, %v6160
        %v6171 = vsel %vm6164, %v6167, %v6170
        %v6172 = vsel %vm6161, nan, %v6171
        %v6173 = vand.u32 2147483647, %v5749
        %vm6174 = vcmp.le.f32.partialorder %v6173, 0.7853982
        %vm6175 = vcmp.lt.s32.totalorder %v5749, 0
        %v6176 = vand.u32 %v5749, 2139095040
        %v6177 = vshrl.u32 %v6176, 23
        %v6178 = vsub.s32 %v6177, 127
        %v6179 = vand.u32 2147483647, %v5749
        %v6180 = vand.u32 %v6179, 8388607
        %v6181 = vor.u32 %v6180, 8388608
        %v6182 = vsub.s32 0, %v6181
        %v6183 = vadd.s32 %v6178, 1
        %vm6184 = vcmp.gt.s32.totalorder %v6183, 0
        %v6185 = vsel %vm6184, %v6183, 0
        %v6186 = vshrl.u32 %v6185, 5
        %v6187 = vand.u32 %v6185, 31
        %v6188 = vsub.s32 32, %v6187
        %v6189 = vshrl.u32 683565275, %v6188
        %v6190 = vshll.u32 683565275, %v6187
        %v6191 = vshrl.u32 2475754826, %v6188
        %v6192 = vor.u32 %v6190, %v6191
        %v6193 = vshll.u32 2475754826, %v6187
        %v6194 = vshrl.u32 2131351028, %v6188
        %v6195 = vor.u32 %v6193, %v6194
        %v6196 = vshll.u32 2131351028, %v6187
        %v6197 = vshrl.u32 2102212464, %v6188
        %v6198 = vor.u32 %v6196, %v6197
        %v6199 = vshll.u32 2102212464, %v6187
        %v6200 = vshrl.u32 920167782, %v6188
        %v6201 = vor.u32 %v6199, %v6200
        %v6202 = vshll.u32 920167782, %v6187
        %v6203 = vshrl.u32 1326507024, %v6188
        %v6204 = vor.u32 %v6202, %v6203
        %vm6205 = vcmp.lt.s32.totalorder %v6186, 1
        %vm6206 = vcmp.lt.s32.totalorder %v6186, 2
        %vm6207 = vcmp.lt.s32.totalorder %v6186, 3
        %vm6208 = vcmp.lt.s32.totalorder %v6186, 4
        %v6209 = vsel %vm6205, %v6189, %v6192
        %v6210 = vsel %vm6208, %v6198, 2102212464
        %v6211 = vsel %vm6207, %v6195, %v6210
        %v6212 = vsel %vm6206, %v6209, %v6211
        %v6213 = vsel %vm6205, %v6192, %v6195
        %v6214 = vsel %vm6208, %v6201, 920167782
        %v6215 = vsel %vm6207, %v6198, %v6214
        %v6216 = vsel %vm6206, %v6213, %v6215
        %v6217 = vsel %vm6205, %v6195, %v6198
        %v6218 = vsel %vm6208, %v6204, 1326507024
        %v6219 = vsel %vm6207, %v6201, %v6218
        %v6220 = vsel %vm6206, %v6217, %v6219
        %v6221 = vshll.u32 %v6181, 8
        %v6222 = vand.u32 %v6221, 65535
        %v6223 = vshrl.u32 %v6221, 16
        %v6224 = vand.u32 %v6220, 65535
        %v6225 = vshrl.u32 %v6220, 16
        %v6226 = vmul.u32 %v6222, %v6224
        %v6227 = vmul.u32 %v6222, %v6225
        %v6228 = vmul.u32 %v6223, %v6224
        %v6229 = vmul.u32 %v6223, %v6225
        %v6230 = vshll.u32 %v6227, 16
        %v6231 = vshrl.u32 %v6227, 16
        %v6232 = vshll.u32 %v6228, 16
        %v6233 = vshrl.u32 %v6228, 16
        %vm6234 = vc.u32 %v6226, %v6230
        %v6235 = vsel %vm6234, 1, 0
        %v6236 = vadd.s32 %v6226, %v6230
        %v6237 = vadd.s32 %v6229, %v6235
        %vm6238 = vc.u32 %v6236, %v6232
        %v6239 = vsel %vm6238, 1, 0
        %v6240 = vadd.s32 %v6236, %v6232
        %v6241 = vadd.s32 %v6237, %v6239
        %v6242 = vadd.s32 %v6241, %v6231
        %v6243 = vadd.s32 %v6242, %v6233
        %v6244 = vand.u32 %v6221, 65535
        %v6245 = vshrl.u32 %v6221, 16
        %v6246 = vand.u32 %v6216, 65535
        %v6247 = vshrl.u32 %v6216, 16
        %v6248 = vmul.u32 %v6244, %v6246
        %v6249 = vmul.u32 %v6244, %v6247
        %v6250 = vmul.u32 %v6245, %v6246
        %v6251 = vmul.u32 %v6245, %v6247
        %v6252 = vshll.u32 %v6249, 16
        %v6253 = vshrl.u32 %v6249, 16
        %v6254 = vshll.u32 %v6250, 16
        %v6255 = vshrl.u32 %v6250, 16
        %vm6256 = vc.u32 %v6248, %v6252
        %v6257 = vsel %vm6256, 1, 0
        %v6258 = vadd.s32 %v6248, %v6252
        %v6259 = vadd.s32 %v6251, %v6257
        %vm6260 = vc.u32 %v6258, %v6254
        %v6261 = vsel %vm6260, 1, 0
        %v6262 = vadd.s32 %v6258, %v6254
        %v6263 = vadd.s32 %v6259, %v6261
        %v6264 = vadd.s32 %v6263, %v6253
        %v6265 = vadd.s32 %v6264, %v6255
        %v6266 = vmul.u32 %v6221, %v6212
        %v6267 = vadd.s32 %v6243, %v6262
        %vm6268 = vc.u32 %v6243, %v6262
        %v6269 = vadd.s32 %v6265, 1
        %v6270 = vsel %vm6268, %v6269, %v6265
        %v6271 = vadd.s32 %v6266, %v6270
        %v6272 = vadd.s32 %v6271, 536870912
        %v6273 = vshrl.u32 %v6272, 30
        %v6274 = vshll.u32 %v6273, 30
        %v6275 = vsub.s32 %v6271, %v6274
        %vm6276 = vcmp.lt.s32.totalorder %v6275, 0
        %v6277 = vsub.s32 0, %v6275
        %v6278 = vsel %vm6276, %v6277, %v6275
        %v6279 = vclz %v6278
        %v6280 = vsub.s32 %v6279, 2
        %vm6281 = vcmp.gt.s32.totalorder 0, %v6280
        %v6282 = vsel %vm6281, 0, %v6280
        %v6283 = vsub.s32 32, %v6282
        %v6284 = vshll.u32 %v6275, %v6282
        %v6285 = vshrl.u32 %v6267, %v6283
        %v6286 = vor.u32 %v6284, %v6285
        %v6287 = vsub.s32 4294967266, %v6282
        %v6288 = vadd.s32 %v6287, 127
        %v6289 = vshll.u32 %v6288, 23
        %v6290 = vor.u32 4788187, %v6289
        %v6291 = vand.u32 2147483647, %v6290
        %v6293 = vcvt.s32.f32 %v6286
        %v6294 = vmul.f32 %v6293, %v6291
        %v6295 = vxor.u32 %v6294, 2147483648
        %v6296 = vsel %vm6175, %v6295, %v6294
        %v6297 = vsub.s32 4, %v6273
        %v6298 = vsel %vm6175, %v6297, %v6273
        %v6299 = vsel %vm6174, %v5749, %v6296
        %v6300 = vsel %vm6174, 0, %v6298
        %v6301 = vmul.f32 %v6299, %v6299
        %v6302 = vmul.f32 %v6301, -0.001358992
        %v6303 = vadd.f32 %v6302, 0.041655596
        %v6304 = vmul.f32 %v6301, %v6303
        %v6305 = vadd.f32 %v6304, -0.4999988
        %v6306 = vmul.f32 %v6301, %v6305
        %v6307 = vadd.f32 1.0, %v6306
        %v6308 = vmul.f32 %v6299, %v6299
        %v6309 = vmul.f32 %v6308, -0.00019511016
        %v6310 = vadd.f32 %v6309, 0.008332121
        %v6311 = vmul.f32 %v6308, %v6310
        %v6312 = vadd.f32 %v6311, -0.16666654
        %v6313 = vmul.f32 %v6308, %v6312
        %v6314 = vadd.f32 %v6313, 1.0
        %v6315 = vmul.f32 %v6314, %v6299
        %vm6316 = vweird.f32 %v5749
        %v6317 = vadd.s32 %v6300, 3
        %v6318 = vand.u32 %v6317, 3
        %vm6319 = vcmp.lt.s32.totalorder %v6318, 2
        %vm6320 = vcmp.eq.s32.totalorder %v6318, 0
        %v6321 = vxor.u32 %v6315, 2147483648
        %v6322 = vsel %vm6320, %v6307, %v6321
        %vm6323 = vcmp.eq.s32.totalorder %v6318, 2
        %v6324 = vxor.u32 %v6307, 2147483648
        %v6325 = vsel %vm6323, %v6324, %v6315
        %v6326 = vsel %vm6319, %v6322, %v6325
        %v6327 = vsel %vm6316, nan, %v6326
        %v6328 = vand.u32 2147483647, %v5790
        %vm6329 = vcmp.le.f32.partialorder %v6328, 0.7853982
        %vm6330 = vcmp.lt.s32.totalorder %v5790, 0
        %v6331 = vand.u32 %v5790, 2139095040
        %v6332 = vshrl.u32 %v6331, 23
        %v6333 = vsub.s32 %v6332, 127
        %v6334 = vand.u32 2147483647, %v5790
        %v6335 = vand.u32 %v6334, 8388607
        %v6336 = vor.u32 %v6335, 8388608
        %v6337 = vsub.s32 0, %v6336
        %v6338 = vadd.s32 %v6333, 1
        %vm6339 = vcmp.gt.s32.totalorder %v6338, 0
        %v6340 = vsel %vm6339, %v6338, 0
        %v6341 = vshrl.u32 %v6340, 5
        %v6342 = vand.u32 %v6340, 31
        %v6343 = vsub.s32 32, %v6342
        %v6344 = vshrl.u32 683565275, %v6343
        %v6345 = vshll.u32 683565275, %v6342
        %v6346 = vshrl.u32 2475754826, %v6343
        %v6347 = vor.u32 %v6345, %v6346
        %v6348 = vshll.u32 2475754826, %v6342
        %v6349 = vshrl.u32 2131351028, %v6343
        %v6350 = vor.u32 %v6348, %v6349
        %v6351 = vshll.u32 2131351028, %v6342
        %v6352 = vshrl.u32 2102212464, %v6343
        %v6353 = vor.u32 %v6351, %v6352
        %v6354 = vshll.u32 2102212464, %v6342
        %v6355 = vshrl.u32 920167782, %v6343
        %v6356 = vor.u32 %v6354, %v6355
        %v6357 = vshll.u32 920167782, %v6342
        %v6358 = vshrl.u32 1326507024, %v6343
        %v6359 = vor.u32 %v6357, %v6358
        %vm6360 = vcmp.lt.s32.totalorder %v6341, 1
        %vm6361 = vcmp.lt.s32.totalorder %v6341, 2
        %vm6362 = vcmp.lt.s32.totalorder %v6341, 3
        %vm6363 = vcmp.lt.s32.totalorder %v6341, 4
        %v6364 = vsel %vm6360, %v6344, %v6347
        %v6365 = vsel %vm6363, %v6353, 2102212464
        %v6366 = vsel %vm6362, %v6350, %v6365
        %v6367 = vsel %vm6361, %v6364, %v6366
        %v6368 = vsel %vm6360, %v6347, %v6350
        %v6369 = vsel %vm6363, %v6356, 920167782
        %v6370 = vsel %vm6362, %v6353, %v6369
        %v6371 = vsel %vm6361, %v6368, %v6370
        %v6372 = vsel %vm6360, %v6350, %v6353
        %v6373 = vsel %vm6363, %v6359, 1326507024
        %v6374 = vsel %vm6362, %v6356, %v6373
        %v6375 = vsel %vm6361, %v6372, %v6374
        %v6376 = vshll.u32 %v6336, 8
        %v6377 = vand.u32 %v6376, 65535
        %v6378 = vshrl.u32 %v6376, 16
        %v6379 = vand.u32 %v6375, 65535
        %v6380 = vshrl.u32 %v6375, 16
        %v6381 = vmul.u32 %v6377, %v6379
        %v6382 = vmul.u32 %v6377, %v6380
        %v6383 = vmul.u32 %v6378, %v6379
        %v6384 = vmul.u32 %v6378, %v6380
        %v6385 = vshll.u32 %v6382, 16
        %v6386 = vshrl.u32 %v6382, 16
        %v6387 = vshll.u32 %v6383, 16
        %v6388 = vshrl.u32 %v6383, 16
        %vm6389 = vc.u32 %v6381, %v6385
        %v6390 = vsel %vm6389, 1, 0
        %v6391 = vadd.s32 %v6381, %v6385
        %v6392 = vadd.s32 %v6384, %v6390
        %vm6393 = vc.u32 %v6391, %v6387
        %v6394 = vsel %vm6393, 1, 0
        %v6395 = vadd.s32 %v6391, %v6387
        %v6396 = vadd.s32 %v6392, %v6394
        %v6397 = vadd.s32 %v6396, %v6386
        %v6398 = vadd.s32 %v6397, %v6388
        %v6399 = vand.u32 %v6376, 65535
        %v6400 = vshrl.u32 %v6376, 16
        %v6401 = vand.u32 %v6371, 65535
        %v6402 = vshrl.u32 %v6371, 16
        %v6403 = vmul.u32 %v6399, %v6401
        %v6404 = vmul.u32 %v6399, %v6402
        %v6405 = vmul.u32 %v6400, %v6401
        %v6406 = vmul.u32 %v6400, %v6402
        %v6407 = vshll.u32 %v6404, 16
        %v6408 = vshrl.u32 %v6404, 16
        %v6409 = vshll.u32 %v6405, 16
        %v6410 = vshrl.u32 %v6405, 16
        %vm6411 = vc.u32 %v6403, %v6407
        %v6412 = vsel %vm6411, 1, 0
        %v6413 = vadd.s32 %v6403, %v6407
        %v6414 = vadd.s32 %v6406, %v6412
        %vm6415 = vc.u32 %v6413, %v6409
        %v6416 = vsel %vm6415, 1, 0
        %v6417 = vadd.s32 %v6413, %v6409
        %v6418 = vadd.s32 %v6414, %v6416
        %v6419 = vadd.s32 %v6418, %v6408
        %v6420 = vadd.s32 %v6419, %v6410
        %v6421 = vmul.u32 %v6376, %v6367
        %v6422 = vadd.s32 %v6398, %v6417
        %vm6423 = vc.u32 %v6398, %v6417
        %v6424 = vadd.s32 %v6420, 1
        %v6425 = vsel %vm6423, %v6424, %v6420
        %v6426 = vadd.s32 %v6421, %v6425
        %v6427 = vadd.s32 %v6426, 536870912
        %v6428 = vshrl.u32 %v6427, 30
        %v6429 = vshll.u32 %v6428, 30
        %v6430 = vsub.s32 %v6426, %v6429
        %vm6431 = vcmp.lt.s32.totalorder %v6430, 0
        %v6432 = vsub.s32 0, %v6430
        %v6433 = vsel %vm6431, %v6432, %v6430
        %v6434 = vclz %v6433
        %v6435 = vsub.s32 %v6434, 2
        %vm6436 = vcmp.gt.s32.totalorder 0, %v6435
        %v6437 = vsel %vm6436, 0, %v6435
        %v6438 = vsub.s32 32, %v6437
        %v6439 = vshll.u32 %v6430, %v6437
        %v6440 = vshrl.u32 %v6422, %v6438
        %v6441 = vor.u32 %v6439, %v6440
        %v6442 = vsub.s32 4294967266, %v6437
        %v6443 = vadd.s32 %v6442, 127
        %v6444 = vshll.u32 %v6443, 23
        %v6445 = vor.u32 4788187, %v6444
        %v6446 = vand.u32 2147483647, %v6445
        %v6448 = vcvt.s32.f32 %v6441
        %v6449 = vmul.f32 %v6448, %v6446
        %v6450 = vxor.u32 %v6449, 2147483648
        %v6451 = vsel %vm6330, %v6450, %v6449
        %v6452 = vsub.s32 4, %v6428
        %v6453 = vsel %vm6330, %v6452, %v6428
        %v6454 = vsel %vm6329, %v5790, %v6451
        %v6455 = vsel %vm6329, 0, %v6453
        %v6456 = vmul.f32 %v6454, %v6454
        %v6457 = vmul.f32 %v6456, -0.001358992
        %v6458 = vadd.f32 %v6457, 0.041655596
        %v6459 = vmul.f32 %v6456, %v6458
        %v6460 = vadd.f32 %v6459, -0.4999988
        %v6461 = vmul.f32 %v6456, %v6460
        %v6462 = vadd.f32 1.0, %v6461
        %v6463 = vmul.f32 %v6454, %v6454
        %v6464 = vmul.f32 %v6463, -0.00019511016
        %v6465 = vadd.f32 %v6464, 0.008332121
        %v6466 = vmul.f32 %v6463, %v6465
        %v6467 = vadd.f32 %v6466, -0.16666654
        %v6468 = vmul.f32 %v6463, %v6467
        %v6469 = vadd.f32 %v6468, 1.0
        %v6470 = vmul.f32 %v6469, %v6454
        %vm6471 = vweird.f32 %v5790
        %v6472 = vadd.s32 %v6455, 3
        %v6473 = vand.u32 %v6472, 3
        %vm6474 = vcmp.lt.s32.totalorder %v6473, 2
        %vm6475 = vcmp.eq.s32.totalorder %v6473, 0
        %v6476 = vxor.u32 %v6470, 2147483648
        %v6477 = vsel %vm6475, %v6462, %v6476
        %vm6478 = vcmp.eq.s32.totalorder %v6473, 2
        %v6479 = vxor.u32 %v6462, 2147483648
        %v6480 = vsel %vm6478, %v6479, %v6470
        %v6481 = vsel %vm6474, %v6477, %v6480
        %v6482 = vsel %vm6471, nan, %v6481
        %v6483 = vand.u32 2147483647, %v5831
        %vm6484 = vcmp.le.f32.partialorder %v6483, 0.7853982
        %vm6485 = vcmp.lt.s32.totalorder %v5831, 0
        %v6486 = vand.u32 %v5831, 2139095040
        %v6487 = vshrl.u32 %v6486, 23
        %v6488 = vsub.s32 %v6487, 127
        %v6489 = vand.u32 2147483647, %v5831
        %v6490 = vand.u32 %v6489, 8388607
        %v6491 = vor.u32 %v6490, 8388608
        %v6492 = vsub.s32 0, %v6491
        %v6493 = vadd.s32 %v6488, 1
        %vm6494 = vcmp.gt.s32.totalorder %v6493, 0
        %v6495 = vsel %vm6494, %v6493, 0
        %v6496 = vshrl.u32 %v6495, 5
        %v6497 = vand.u32 %v6495, 31
        %v6498 = vsub.s32 32, %v6497
        %v6499 = vshrl.u32 683565275, %v6498
        %v6500 = vshll.u32 683565275, %v6497
        %v6501 = vshrl.u32 2475754826, %v6498
        %v6502 = vor.u32 %v6500, %v6501
        %v6503 = vshll.u32 2475754826, %v6497
        %v6504 = vshrl.u32 2131351028, %v6498
        %v6505 = vor.u32 %v6503, %v6504
        %v6506 = vshll.u32 2131351028, %v6497
        %v6507 = vshrl.u32 2102212464, %v6498
        %v6508 = vor.u32 %v6506, %v6507
        %v6509 = vshll.u32 2102212464, %v6497
        %v6510 = vshrl.u32 920167782, %v6498
        %v6511 = vor.u32 %v6509, %v6510
        %v6512 = vshll.u32 920167782, %v6497
        %v6513 = vshrl.u32 1326507024, %v6498
        %v6514 = vor.u32 %v6512, %v6513
        %vm6515 = vcmp.lt.s32.totalorder %v6496, 1
        %vm6516 = vcmp.lt.s32.totalorder %v6496, 2
        %vm6517 = vcmp.lt.s32.totalorder %v6496, 3
        %vm6518 = vcmp.lt.s32.totalorder %v6496, 4
        %v6519 = vsel %vm6515, %v6499, %v6502
        %v6520 = vsel %vm6518, %v6508, 2102212464
        %v6521 = vsel %vm6517, %v6505, %v6520
        %v6522 = vsel %vm6516, %v6519, %v6521
        %v6523 = vsel %vm6515, %v6502, %v6505
        %v6524 = vsel %vm6518, %v6511, 920167782
        %v6525 = vsel %vm6517, %v6508, %v6524
        %v6526 = vsel %vm6516, %v6523, %v6525
        %v6527 = vsel %vm6515, %v6505, %v6508
        %v6528 = vsel %vm6518, %v6514, 1326507024
        %v6529 = vsel %vm6517, %v6511, %v6528
        %v6530 = vsel %vm6516, %v6527, %v6529
        %v6531 = vshll.u32 %v6491, 8
        %v6532 = vand.u32 %v6531, 65535
        %v6533 = vshrl.u32 %v6531, 16
        %v6534 = vand.u32 %v6530, 65535
        %v6535 = vshrl.u32 %v6530, 16
        %v6536 = vmul.u32 %v6532, %v6534
        %v6537 = vmul.u32 %v6532, %v6535
        %v6538 = vmul.u32 %v6533, %v6534
        %v6539 = vmul.u32 %v6533, %v6535
        %v6540 = vshll.u32 %v6537, 16
        %v6541 = vshrl.u32 %v6537, 16
        %v6542 = vshll.u32 %v6538, 16
        %v6543 = vshrl.u32 %v6538, 16
        %vm6544 = vc.u32 %v6536, %v6540
        %v6545 = vsel %vm6544, 1, 0
        %v6546 = vadd.s32 %v6536, %v6540
        %v6547 = vadd.s32 %v6539, %v6545
        %vm6548 = vc.u32 %v6546, %v6542
        %v6549 = vsel %vm6548, 1, 0
        %v6550 = vadd.s32 %v6546, %v6542
        %v6551 = vadd.s32 %v6547, %v6549
        %v6552 = vadd.s32 %v6551, %v6541
        %v6553 = vadd.s32 %v6552, %v6543
        %v6554 = vand.u32 %v6531, 65535
        %v6555 = vshrl.u32 %v6531, 16
        %v6556 = vand.u32 %v6526, 65535
        %v6557 = vshrl.u32 %v6526, 16
        %v6558 = vmul.u32 %v6554, %v6556
        %v6559 = vmul.u32 %v6554, %v6557
        %v6560 = vmul.u32 %v6555, %v6556
        %v6561 = vmul.u32 %v6555, %v6557
        %v6562 = vshll.u32 %v6559, 16
        %v6563 = vshrl.u32 %v6559, 16
        %v6564 = vshll.u32 %v6560, 16
        %v6565 = vshrl.u32 %v6560, 16
        %vm6566 = vc.u32 %v6558, %v6562
        %v6567 = vsel %vm6566, 1, 0
        %v6568 = vadd.s32 %v6558, %v6562
        %v6569 = vadd.s32 %v6561, %v6567
        %vm6570 = vc.u32 %v6568, %v6564
        %v6571 = vsel %vm6570, 1, 0
        %v6572 = vadd.s32 %v6568, %v6564
        %v6573 = vadd.s32 %v6569, %v6571
        %v6574 = vadd.s32 %v6573, %v6563
        %v6575 = vadd.s32 %v6574, %v6565
        %v6576 = vmul.u32 %v6531, %v6522
        %v6577 = vadd.s32 %v6553, %v6572
        %vm6578 = vc.u32 %v6553, %v6572
        %v6579 = vadd.s32 %v6575, 1
        %v6580 = vsel %vm6578, %v6579, %v6575
        %v6581 = vadd.s32 %v6576, %v6580
        %v6582 = vadd.s32 %v6581, 536870912
        %v6583 = vshrl.u32 %v6582, 30
        %v6584 = vshll.u32 %v6583, 30
        %v6585 = vsub.s32 %v6581, %v6584
        %vm6586 = vcmp.lt.s32.totalorder %v6585, 0
        %v6587 = vsub.s32 0, %v6585
        %v6588 = vsel %vm6586, %v6587, %v6585
        %v6589 = vclz %v6588
        %v6590 = vsub.s32 %v6589, 2
        %vm6591 = vcmp.gt.s32.totalorder 0, %v6590
        %v6592 = vsel %vm6591, 0, %v6590
        %v6593 = vsub.s32 32, %v6592
        %v6594 = vshll.u32 %v6585, %v6592
        %v6595 = vshrl.u32 %v6577, %v6593
        %v6596 = vor.u32 %v6594, %v6595
        %v6597 = vsub.s32 4294967266, %v6592
        %v6598 = vadd.s32 %v6597, 127
        %v6599 = vshll.u32 %v6598, 23
        %v6600 = vor.u32 4788187, %v6599
        %v6601 = vand.u32 2147483647, %v6600
        %v6603 = vcvt.s32.f32 %v6596
        %v6604 = vmul.f32 %v6603, %v6601
        %v6605 = vxor.u32 %v6604, 2147483648
        %v6606 = vsel %vm6485, %v6605, %v6604
        %v6607 = vsub.s32 4, %v6583
        %v6608 = vsel %vm6485, %v6607, %v6583
        %v6609 = vsel %vm6484, %v5831, %v6606
        %v6610 = vsel %vm6484, 0, %v6608
        %v6611 = vmul.f32 %v6609, %v6609
        %v6612 = vmul.f32 %v6611, -0.001358992
        %v6613 = vadd.f32 %v6612, 0.041655596
        %v6614 = vmul.f32 %v6611, %v6613
        %v6615 = vadd.f32 %v6614, -0.4999988
        %v6616 = vmul.f32 %v6611, %v6615
        %v6617 = vadd.f32 1.0, %v6616
        %v6618 = vmul.f32 %v6609, %v6609
        %v6619 = vmul.f32 %v6618, -0.00019511016
        %v6620 = vadd.f32 %v6619, 0.008332121
        %v6621 = vmul.f32 %v6618, %v6620
        %v6622 = vadd.f32 %v6621, -0.16666654
        %v6623 = vmul.f32 %v6618, %v6622
        %v6624 = vadd.f32 %v6623, 1.0
        %v6625 = vmul.f32 %v6624, %v6609
        %vm6626 = vweird.f32 %v5831
        %v6627 = vadd.s32 %v6610, 3
        %v6628 = vand.u32 %v6627, 3
        %vm6629 = vcmp.lt.s32.totalorder %v6628, 2
        %vm6630 = vcmp.eq.s32.totalorder %v6628, 0
        %v6631 = vxor.u32 %v6625, 2147483648
        %v6632 = vsel %vm6630, %v6617, %v6631
        %vm6633 = vcmp.eq.s32.totalorder %v6628, 2
        %v6634 = vxor.u32 %v6617, 2147483648
        %v6635 = vsel %vm6633, %v6634, %v6625
        %v6636 = vsel %vm6629, %v6632, %v6635
        %v6637 = vsel %vm6626, nan, %v6636
        %v6638 = vand.u32 2147483647, %v5872
        %vm6639 = vcmp.le.f32.partialorder %v6638, 0.7853982
        %vm6640 = vcmp.lt.s32.totalorder %v5872, 0
        %v6641 = vand.u32 %v5872, 2139095040
        %v6642 = vshrl.u32 %v6641, 23
        %v6643 = vsub.s32 %v6642, 127
        %v6644 = vand.u32 2147483647, %v5872
        %v6645 = vand.u32 %v6644, 8388607
        %v6646 = vor.u32 %v6645, 8388608
        %v6647 = vsub.s32 0, %v6646
        %v6648 = vadd.s32 %v6643, 1
        %vm6649 = vcmp.gt.s32.totalorder %v6648, 0
        %v6650 = vsel %vm6649, %v6648, 0
        %v6651 = vshrl.u32 %v6650, 5
        %v6652 = vand.u32 %v6650, 31
        %v6653 = vsub.s32 32, %v6652
        %v6654 = vshrl.u32 683565275, %v6653
        %v6655 = vshll.u32 683565275, %v6652
        %v6656 = vshrl.u32 2475754826, %v6653
        %v6657 = vor.u32 %v6655, %v6656
        %v6658 = vshll.u32 2475754826, %v6652
        %v6659 = vshrl.u32 2131351028, %v6653
        %v6660 = vor.u32 %v6658, %v6659
        %v6661 = vshll.u32 2131351028, %v6652
        %v6662 = vshrl.u32 2102212464, %v6653
        %v6663 = vor.u32 %v6661, %v6662
        %v6664 = vshll.u32 2102212464, %v6652
        %v6665 = vshrl.u32 920167782, %v6653
        %v6666 = vor.u32 %v6664, %v6665
        %v6667 = vshll.u32 920167782, %v6652
        %v6668 = vshrl.u32 1326507024, %v6653
        %v6669 = vor.u32 %v6667, %v6668
        %vm6670 = vcmp.lt.s32.totalorder %v6651, 1
        %vm6671 = vcmp.lt.s32.totalorder %v6651, 2
        %vm6672 = vcmp.lt.s32.totalorder %v6651, 3
        %vm6673 = vcmp.lt.s32.totalorder %v6651, 4
        %v6674 = vsel %vm6670, %v6654, %v6657
        %v6675 = vsel %vm6673, %v6663, 2102212464
        %v6676 = vsel %vm6672, %v6660, %v6675
        %v6677 = vsel %vm6671, %v6674, %v6676
        %v6678 = vsel %vm6670, %v6657, %v6660
        %v6679 = vsel %vm6673, %v6666, 920167782
        %v6680 = vsel %vm6672, %v6663, %v6679
        %v6681 = vsel %vm6671, %v6678, %v6680
        %v6682 = vsel %vm6670, %v6660, %v6663
        %v6683 = vsel %vm6673, %v6669, 1326507024
        %v6684 = vsel %vm6672, %v6666, %v6683
        %v6685 = vsel %vm6671, %v6682, %v6684
        %v6686 = vshll.u32 %v6646, 8
        %v6687 = vand.u32 %v6686, 65535
        %v6688 = vshrl.u32 %v6686, 16
        %v6689 = vand.u32 %v6685, 65535
        %v6690 = vshrl.u32 %v6685, 16
        %v6691 = vmul.u32 %v6687, %v6689
        %v6692 = vmul.u32 %v6687, %v6690
        %v6693 = vmul.u32 %v6688, %v6689
        %v6694 = vmul.u32 %v6688, %v6690
        %v6695 = vshll.u32 %v6692, 16
        %v6696 = vshrl.u32 %v6692, 16
        %v6697 = vshll.u32 %v6693, 16
        %v6698 = vshrl.u32 %v6693, 16
        %vm6699 = vc.u32 %v6691, %v6695
        %v6700 = vsel %vm6699, 1, 0
        %v6701 = vadd.s32 %v6691, %v6695
        %v6702 = vadd.s32 %v6694, %v6700
        %vm6703 = vc.u32 %v6701, %v6697
        %v6704 = vsel %vm6703, 1, 0
        %v6705 = vadd.s32 %v6701, %v6697
        %v6706 = vadd.s32 %v6702, %v6704
        %v6707 = vadd.s32 %v6706, %v6696
        %v6708 = vadd.s32 %v6707, %v6698
        %v6709 = vand.u32 %v6686, 65535
        %v6710 = vshrl.u32 %v6686, 16
        %v6711 = vand.u32 %v6681, 65535
        %v6712 = vshrl.u32 %v6681, 16
        %v6713 = vmul.u32 %v6709, %v6711
        %v6714 = vmul.u32 %v6709, %v6712
        %v6715 = vmul.u32 %v6710, %v6711
        %v6716 = vmul.u32 %v6710, %v6712
        %v6717 = vshll.u32 %v6714, 16
        %v6718 = vshrl.u32 %v6714, 16
        %v6719 = vshll.u32 %v6715, 16
        %v6720 = vshrl.u32 %v6715, 16
        %vm6721 = vc.u32 %v6713, %v6717
        %v6722 = vsel %vm6721, 1, 0
        %v6723 = vadd.s32 %v6713, %v6717
        %v6724 = vadd.s32 %v6716, %v6722
        %vm6725 = vc.u32 %v6723, %v6719
        %v6726 = vsel %vm6725, 1, 0
        %v6727 = vadd.s32 %v6723, %v6719
        %v6728 = vadd.s32 %v6724, %v6726
        %v6729 = vadd.s32 %v6728, %v6718
        %v6730 = vadd.s32 %v6729, %v6720
        %v6731 = vmul.u32 %v6686, %v6677
        %v6732 = vadd.s32 %v6708, %v6727
        %vm6733 = vc.u32 %v6708, %v6727
        %v6734 = vadd.s32 %v6730, 1
        %v6735 = vsel %vm6733, %v6734, %v6730
        %v6736 = vadd.s32 %v6731, %v6735
        %v6737 = vadd.s32 %v6736, 536870912
        %v6738 = vshrl.u32 %v6737, 30
        %v6739 = vshll.u32 %v6738, 30
        %v6740 = vsub.s32 %v6736, %v6739
        %vm6741 = vcmp.lt.s32.totalorder %v6740, 0
        %v6742 = vsub.s32 0, %v6740
        %v6743 = vsel %vm6741, %v6742, %v6740
        %v6744 = vclz %v6743
        %v6745 = vsub.s32 %v6744, 2
        %vm6746 = vcmp.gt.s32.totalorder 0, %v6745
        %v6747 = vsel %vm6746, 0, %v6745
        %v6748 = vsub.s32 32, %v6747
        %v6749 = vshll.u32 %v6740, %v6747
        %v6750 = vshrl.u32 %v6732, %v6748
        %v6751 = vor.u32 %v6749, %v6750
        %v6752 = vsub.s32 4294967266, %v6747
        %v6753 = vadd.s32 %v6752, 127
        %v6754 = vshll.u32 %v6753, 23
        %v6755 = vor.u32 4788187, %v6754
        %v6756 = vand.u32 2147483647, %v6755
        %v6758 = vcvt.s32.f32 %v6751
        %v6759 = vmul.f32 %v6758, %v6756
        %v6760 = vxor.u32 %v6759, 2147483648
        %v6761 = vsel %vm6640, %v6760, %v6759
        %v6762 = vsub.s32 4, %v6738
        %v6763 = vsel %vm6640, %v6762, %v6738
        %v6764 = vsel %vm6639, %v5872, %v6761
        %v6765 = vsel %vm6639, 0, %v6763
        %v6766 = vmul.f32 %v6764, %v6764
        %v6767 = vmul.f32 %v6766, -0.001358992
        %v6768 = vadd.f32 %v6767, 0.041655596
        %v6769 = vmul.f32 %v6766, %v6768
        %v6770 = vadd.f32 %v6769, -0.4999988
        %v6771 = vmul.f32 %v6766, %v6770
        %v6772 = vadd.f32 1.0, %v6771
        %v6773 = vmul.f32 %v6764, %v6764
        %v6774 = vmul.f32 %v6773, -0.00019511016
        %v6775 = vadd.f32 %v6774, 0.008332121
        %v6776 = vmul.f32 %v6773, %v6775
        %v6777 = vadd.f32 %v6776, -0.16666654
        %v6778 = vmul.f32 %v6773, %v6777
        %v6779 = vadd.f32 %v6778, 1.0
        %v6780 = vmul.f32 %v6779, %v6764
        %vm6781 = vweird.f32 %v5872
        %v6782 = vadd.s32 %v6765, 3
        %v6783 = vand.u32 %v6782, 3
        %vm6784 = vcmp.lt.s32.totalorder %v6783, 2
        %vm6785 = vcmp.eq.s32.totalorder %v6783, 0
        %v6786 = vxor.u32 %v6780, 2147483648
        %v6787 = vsel %vm6785, %v6772, %v6786
        %vm6788 = vcmp.eq.s32.totalorder %v6783, 2
        %v6789 = vxor.u32 %v6772, 2147483648
        %v6790 = vsel %vm6788, %v6789, %v6780
        %v6791 = vsel %vm6784, %v6787, %v6790
        %v6792 = vsel %vm6781, nan, %v6791
        %v6793 = vand.u32 2147483647, %v5913
        %vm6794 = vcmp.le.f32.partialorder %v6793, 0.7853982
        %vm6795 = vcmp.lt.s32.totalorder %v5913, 0
        %v6796 = vand.u32 %v5913, 2139095040
        %v6797 = vshrl.u32 %v6796, 23
        %v6798 = vsub.s32 %v6797, 127
        %v6799 = vand.u32 2147483647, %v5913
        %v6800 = vand.u32 %v6799, 8388607
        %v6801 = vor.u32 %v6800, 8388608
        %v6802 = vsub.s32 0, %v6801
        %v6803 = vadd.s32 %v6798, 1
        %vm6804 = vcmp.gt.s32.totalorder %v6803, 0
        %v6805 = vsel %vm6804, %v6803, 0
        %v6806 = vshrl.u32 %v6805, 5
        %v6807 = vand.u32 %v6805, 31
        %v6808 = vsub.s32 32, %v6807
        %v6809 = vshrl.u32 683565275, %v6808
        %v6810 = vshll.u32 683565275, %v6807
        %v6811 = vshrl.u32 2475754826, %v6808
        %v6812 = vor.u32 %v6810, %v6811
        %v6813 = vshll.u32 2475754826, %v6807
        %v6814 = vshrl.u32 2131351028, %v6808
        %v6815 = vor.u32 %v6813, %v6814
        %v6816 = vshll.u32 2131351028, %v6807
        %v6817 = vshrl.u32 2102212464, %v6808
        %v6818 = vor.u32 %v6816, %v6817
        %v6819 = vshll.u32 2102212464, %v6807
        %v6820 = vshrl.u32 920167782, %v6808
        %v6821 = vor.u32 %v6819, %v6820
        %v6822 = vshll.u32 920167782, %v6807
        %v6823 = vshrl.u32 1326507024, %v6808
        %v6824 = vor.u32 %v6822, %v6823
        %vm6825 = vcmp.lt.s32.totalorder %v6806, 1
        %vm6826 = vcmp.lt.s32.totalorder %v6806, 2
        %vm6827 = vcmp.lt.s32.totalorder %v6806, 3
        %vm6828 = vcmp.lt.s32.totalorder %v6806, 4
        %v6829 = vsel %vm6825, %v6809, %v6812
        %v6830 = vsel %vm6828, %v6818, 2102212464
        %v6831 = vsel %vm6827, %v6815, %v6830
        %v6832 = vsel %vm6826, %v6829, %v6831
        %v6833 = vsel %vm6825, %v6812, %v6815
        %v6834 = vsel %vm6828, %v6821, 920167782
        %v6835 = vsel %vm6827, %v6818, %v6834
        %v6836 = vsel %vm6826, %v6833, %v6835
        %v6837 = vsel %vm6825, %v6815, %v6818
        %v6838 = vsel %vm6828, %v6824, 1326507024
        %v6839 = vsel %vm6827, %v6821, %v6838
        %v6840 = vsel %vm6826, %v6837, %v6839
        %v6841 = vshll.u32 %v6801, 8
        %v6842 = vand.u32 %v6841, 65535
        %v6843 = vshrl.u32 %v6841, 16
        %v6844 = vand.u32 %v6840, 65535
        %v6845 = vshrl.u32 %v6840, 16
        %v6846 = vmul.u32 %v6842, %v6844
        %v6847 = vmul.u32 %v6842, %v6845
        %v6848 = vmul.u32 %v6843, %v6844
        %v6849 = vmul.u32 %v6843, %v6845
        %v6850 = vshll.u32 %v6847, 16
        %v6851 = vshrl.u32 %v6847, 16
        %v6852 = vshll.u32 %v6848, 16
        %v6853 = vshrl.u32 %v6848, 16
        %vm6854 = vc.u32 %v6846, %v6850
        %v6855 = vsel %vm6854, 1, 0
        %v6856 = vadd.s32 %v6846, %v6850
        %v6857 = vadd.s32 %v6849, %v6855
        %vm6858 = vc.u32 %v6856, %v6852
        %v6859 = vsel %vm6858, 1, 0
        %v6860 = vadd.s32 %v6856, %v6852
        %v6861 = vadd.s32 %v6857, %v6859
        %v6862 = vadd.s32 %v6861, %v6851
        %v6863 = vadd.s32 %v6862, %v6853
        %v6864 = vand.u32 %v6841, 65535
        %v6865 = vshrl.u32 %v6841, 16
        %v6866 = vand.u32 %v6836, 65535
        %v6867 = vshrl.u32 %v6836, 16
        %v6868 = vmul.u32 %v6864, %v6866
        %v6869 = vmul.u32 %v6864, %v6867
        %v6870 = vmul.u32 %v6865, %v6866
        %v6871 = vmul.u32 %v6865, %v6867
        %v6872 = vshll.u32 %v6869, 16
        %v6873 = vshrl.u32 %v6869, 16
        %v6874 = vshll.u32 %v6870, 16
        %v6875 = vshrl.u32 %v6870, 16
        %vm6876 = vc.u32 %v6868, %v6872
        %v6877 = vsel %vm6876, 1, 0
        %v6878 = vadd.s32 %v6868, %v6872
        %v6879 = vadd.s32 %v6871, %v6877
        %vm6880 = vc.u32 %v6878, %v6874
        %v6881 = vsel %vm6880, 1, 0
        %v6882 = vadd.s32 %v6878, %v6874
        %v6883 = vadd.s32 %v6879, %v6881
        %v6884 = vadd.s32 %v6883, %v6873
        %v6885 = vadd.s32 %v6884, %v6875
        %v6886 = vmul.u32 %v6841, %v6832
        %v6887 = vadd.s32 %v6863, %v6882
        %vm6888 = vc.u32 %v6863, %v6882
        %v6889 = vadd.s32 %v6885, 1
        %v6890 = vsel %vm6888, %v6889, %v6885
        %v6891 = vadd.s32 %v6886, %v6890
        %v6892 = vadd.s32 %v6891, 536870912
        %v6893 = vshrl.u32 %v6892, 30
        %v6894 = vshll.u32 %v6893, 30
        %v6895 = vsub.s32 %v6891, %v6894
        %vm6896 = vcmp.lt.s32.totalorder %v6895, 0
        %v6897 = vsub.s32 0, %v6895
        %v6898 = vsel %vm6896, %v6897, %v6895
        %v6899 = vclz %v6898
        %v6900 = vsub.s32 %v6899, 2
        %vm6901 = vcmp.gt.s32.totalorder 0, %v6900
        %v6902 = vsel %vm6901, 0, %v6900
        %v6903 = vsub.s32 32, %v6902
        %v6904 = vshll.u32 %v6895, %v6902
        %v6905 = vshrl.u32 %v6887, %v6903
        %v6906 = vor.u32 %v6904, %v6905
        %v6907 = vsub.s32 4294967266, %v6902
        %v6908 = vadd.s32 %v6907, 127
        %v6909 = vshll.u32 %v6908, 23
        %v6910 = vor.u32 4788187, %v6909
        %v6911 = vand.u32 2147483647, %v6910
        %v6913 = vcvt.s32.f32 %v6906
        %v6914 = vmul.f32 %v6913, %v6911
        %v6915 = vxor.u32 %v6914, 2147483648
        %v6916 = vsel %vm6795, %v6915, %v6914
        %v6917 = vsub.s32 4, %v6893
        %v6918 = vsel %vm6795, %v6917, %v6893
        %v6919 = vsel %vm6794, %v5913, %v6916
        %v6920 = vsel %vm6794, 0, %v6918
        %v6921 = vmul.f32 %v6919, %v6919
        %v6922 = vmul.f32 %v6921, -0.001358992
        %v6923 = vadd.f32 %v6922, 0.041655596
        %v6924 = vmul.f32 %v6921, %v6923
        %v6925 = vadd.f32 %v6924, -0.4999988
        %v6926 = vmul.f32 %v6921, %v6925
        %v6927 = vadd.f32 1.0, %v6926
        %v6928 = vmul.f32 %v6919, %v6919
        %v6929 = vmul.f32 %v6928, -0.00019511016
        %v6930 = vadd.f32 %v6929, 0.008332121
        %v6931 = vmul.f32 %v6928, %v6930
        %v6932 = vadd.f32 %v6931, -0.16666654
        %v6933 = vmul.f32 %v6928, %v6932
        %v6934 = vadd.f32 %v6933, 1.0
        %v6935 = vmul.f32 %v6934, %v6919
        %vm6936 = vweird.f32 %v5913
        %v6937 = vadd.s32 %v6920, 3
        %v6938 = vand.u32 %v6937, 3
        %vm6939 = vcmp.lt.s32.totalorder %v6938, 2
        %vm6940 = vcmp.eq.s32.totalorder %v6938, 0
        %v6941 = vxor.u32 %v6935, 2147483648
        %v6942 = vsel %vm6940, %v6927, %v6941
        %vm6943 = vcmp.eq.s32.totalorder %v6938, 2
        %v6944 = vxor.u32 %v6927, 2147483648
        %v6945 = vsel %vm6943, %v6944, %v6935
        %v6946 = vsel %vm6939, %v6942, %v6945
        %v6947 = vsel %vm6936, nan, %v6946
        %v6948 = vand.u32 2147483647, %v5954
        %vm6949 = vcmp.le.f32.partialorder %v6948, 0.7853982
        %vm6950 = vcmp.lt.s32.totalorder %v5954, 0
        %v6951 = vand.u32 %v5954, 2139095040
        %v6952 = vshrl.u32 %v6951, 23
        %v6953 = vsub.s32 %v6952, 127
        %v6954 = vand.u32 2147483647, %v5954
        %v6955 = vand.u32 %v6954, 8388607
        %v6956 = vor.u32 %v6955, 8388608
        %v6957 = vsub.s32 0, %v6956
        %v6958 = vadd.s32 %v6953, 1
        %vm6959 = vcmp.gt.s32.totalorder %v6958, 0
        %v6960 = vsel %vm6959, %v6958, 0
        %v6961 = vshrl.u32 %v6960, 5
        %v6962 = vand.u32 %v6960, 31
        %v6963 = vsub.s32 32, %v6962
        %v6964 = vshrl.u32 683565275, %v6963
        %v6965 = vshll.u32 683565275, %v6962
        %v6966 = vshrl.u32 2475754826, %v6963
        %v6967 = vor.u32 %v6965, %v6966
        %v6968 = vshll.u32 2475754826, %v6962
        %v6969 = vshrl.u32 2131351028, %v6963
        %v6970 = vor.u32 %v6968, %v6969
        %v6971 = vshll.u32 2131351028, %v6962
        %v6972 = vshrl.u32 2102212464, %v6963
        %v6973 = vor.u32 %v6971, %v6972
        %v6974 = vshll.u32 2102212464, %v6962
        %v6975 = vshrl.u32 920167782, %v6963
        %v6976 = vor.u32 %v6974, %v6975
        %v6977 = vshll.u32 920167782, %v6962
        %v6978 = vshrl.u32 1326507024, %v6963
        %v6979 = vor.u32 %v6977, %v6978
        %vm6980 = vcmp.lt.s32.totalorder %v6961, 1
        %vm6981 = vcmp.lt.s32.totalorder %v6961, 2
        %vm6982 = vcmp.lt.s32.totalorder %v6961, 3
        %vm6983 = vcmp.lt.s32.totalorder %v6961, 4
        %v6984 = vsel %vm6980, %v6964, %v6967
        %v6985 = vsel %vm6983, %v6973, 2102212464
        %v6986 = vsel %vm6982, %v6970, %v6985
        %v6987 = vsel %vm6981, %v6984, %v6986
        %v6988 = vsel %vm6980, %v6967, %v6970
        %v6989 = vsel %vm6983, %v6976, 920167782
        %v6990 = vsel %vm6982, %v6973, %v6989
        %v6991 = vsel %vm6981, %v6988, %v6990
        %v6992 = vsel %vm6980, %v6970, %v6973
        %v6993 = vsel %vm6983, %v6979, 1326507024
        %v6994 = vsel %vm6982, %v6976, %v6993
        %v6995 = vsel %vm6981, %v6992, %v6994
        %v6996 = vshll.u32 %v6956, 8
        %v6997 = vand.u32 %v6996, 65535
        %v6998 = vshrl.u32 %v6996, 16
        %v6999 = vand.u32 %v6995, 65535
        %v7000 = vshrl.u32 %v6995, 16
        %v7001 = vmul.u32 %v6997, %v6999
        %v7002 = vmul.u32 %v6997, %v7000
        %v7003 = vmul.u32 %v6998, %v6999
        %v7004 = vmul.u32 %v6998, %v7000
        %v7005 = vshll.u32 %v7002, 16
        %v7006 = vshrl.u32 %v7002, 16
        %v7007 = vshll.u32 %v7003, 16
        %v7008 = vshrl.u32 %v7003, 16
        %vm7009 = vc.u32 %v7001, %v7005
        %v7010 = vsel %vm7009, 1, 0
        %v7011 = vadd.s32 %v7001, %v7005
        %v7012 = vadd.s32 %v7004, %v7010
        %vm7013 = vc.u32 %v7011, %v7007
        %v7014 = vsel %vm7013, 1, 0
        %v7015 = vadd.s32 %v7011, %v7007
        %v7016 = vadd.s32 %v7012, %v7014
        %v7017 = vadd.s32 %v7016, %v7006
        %v7018 = vadd.s32 %v7017, %v7008
        %v7019 = vand.u32 %v6996, 65535
        %v7020 = vshrl.u32 %v6996, 16
        %v7021 = vand.u32 %v6991, 65535
        %v7022 = vshrl.u32 %v6991, 16
        %v7023 = vmul.u32 %v7019, %v7021
        %v7024 = vmul.u32 %v7019, %v7022
        %v7025 = vmul.u32 %v7020, %v7021
        %v7026 = vmul.u32 %v7020, %v7022
        %v7027 = vshll.u32 %v7024, 16
        %v7028 = vshrl.u32 %v7024, 16
        %v7029 = vshll.u32 %v7025, 16
        %v7030 = vshrl.u32 %v7025, 16
        %vm7031 = vc.u32 %v7023, %v7027
        %v7032 = vsel %vm7031, 1, 0
        %v7033 = vadd.s32 %v7023, %v7027
        %v7034 = vadd.s32 %v7026, %v7032
        %vm7035 = vc.u32 %v7033, %v7029
        %v7036 = vsel %vm7035, 1, 0
        %v7037 = vadd.s32 %v7033, %v7029
        %v7038 = vadd.s32 %v7034, %v7036
        %v7039 = vadd.s32 %v7038, %v7028
        %v7040 = vadd.s32 %v7039, %v7030
        %v7041 = vmul.u32 %v6996, %v6987
        %v7042 = vadd.s32 %v7018, %v7037
        %vm7043 = vc.u32 %v7018, %v7037
        %v7044 = vadd.s32 %v7040, 1
        %v7045 = vsel %vm7043, %v7044, %v7040
        %v7046 = vadd.s32 %v7041, %v7045
        %v7047 = vadd.s32 %v7046, 536870912
        %v7048 = vshrl.u32 %v7047, 30
        %v7049 = vshll.u32 %v7048, 30
        %v7050 = vsub.s32 %v7046, %v7049
        %vm7051 = vcmp.lt.s32.totalorder %v7050, 0
        %v7052 = vsub.s32 0, %v7050
        %v7053 = vsel %vm7051, %v7052, %v7050
        %v7054 = vclz %v7053
        %v7055 = vsub.s32 %v7054, 2
        %vm7056 = vcmp.gt.s32.totalorder 0, %v7055
        %v7057 = vsel %vm7056, 0, %v7055
        %v7058 = vsub.s32 32, %v7057
        %v7059 = vshll.u32 %v7050, %v7057
        %v7060 = vshrl.u32 %v7042, %v7058
        %v7061 = vor.u32 %v7059, %v7060
        %v7062 = vsub.s32 4294967266, %v7057
        %v7063 = vadd.s32 %v7062, 127
        %v7064 = vshll.u32 %v7063, 23
        %v7065 = vor.u32 4788187, %v7064
        %v7066 = vand.u32 2147483647, %v7065
        %v7068 = vcvt.s32.f32 %v7061
        %v7069 = vmul.f32 %v7068, %v7066
        %v7070 = vxor.u32 %v7069, 2147483648
        %v7071 = vsel %vm6950, %v7070, %v7069
        %v7072 = vsub.s32 4, %v7048
        %v7073 = vsel %vm6950, %v7072, %v7048
        %v7074 = vsel %vm6949, %v5954, %v7071
        %v7075 = vsel %vm6949, 0, %v7073
        %v7076 = vmul.f32 %v7074, %v7074
        %v7077 = vmul.f32 %v7076, -0.001358992
        %v7078 = vadd.f32 %v7077, 0.041655596
        %v7079 = vmul.f32 %v7076, %v7078
        %v7080 = vadd.f32 %v7079, -0.4999988
        %v7081 = vmul.f32 %v7076, %v7080
        %v7082 = vadd.f32 1.0, %v7081
        %v7083 = vmul.f32 %v7074, %v7074
        %v7084 = vmul.f32 %v7083, -0.00019511016
        %v7085 = vadd.f32 %v7084, 0.008332121
        %v7086 = vmul.f32 %v7083, %v7085
        %v7087 = vadd.f32 %v7086, -0.16666654
        %v7088 = vmul.f32 %v7083, %v7087
        %v7089 = vadd.f32 %v7088, 1.0
        %v7090 = vmul.f32 %v7089, %v7074
        %vm7091 = vweird.f32 %v5954
        %v7092 = vadd.s32 %v7075, 3
        %v7093 = vand.u32 %v7092, 3
        %vm7094 = vcmp.lt.s32.totalorder %v7093, 2
        %vm7095 = vcmp.eq.s32.totalorder %v7093, 0
        %v7096 = vxor.u32 %v7090, 2147483648
        %v7097 = vsel %vm7095, %v7082, %v7096
        %vm7098 = vcmp.eq.s32.totalorder %v7093, 2
        %v7099 = vxor.u32 %v7082, 2147483648
        %v7100 = vsel %vm7098, %v7099, %v7090
        %v7101 = vsel %vm7094, %v7097, %v7100
        %v7102 = vsel %vm7091, nan, %v7101
        %v7103 = vand.u32 2147483647, %v5995
        %vm7104 = vcmp.le.f32.partialorder %v7103, 0.7853982
        %vm7105 = vcmp.lt.s32.totalorder %v5995, 0
        %v7106 = vand.u32 %v5995, 2139095040
        %v7107 = vshrl.u32 %v7106, 23
        %v7108 = vsub.s32 %v7107, 127
        %v7109 = vand.u32 2147483647, %v5995
        %v7110 = vand.u32 %v7109, 8388607
        %v7111 = vor.u32 %v7110, 8388608
        %v7112 = vsub.s32 0, %v7111
        %v7113 = vadd.s32 %v7108, 1
        %vm7114 = vcmp.gt.s32.totalorder %v7113, 0
        %v7115 = vsel %vm7114, %v7113, 0
        %v7116 = vshrl.u32 %v7115, 5
        %v7117 = vand.u32 %v7115, 31
        %v7118 = vsub.s32 32, %v7117
        %v7119 = vshrl.u32 683565275, %v7118
        %v7120 = vshll.u32 683565275, %v7117
        %v7121 = vshrl.u32 2475754826, %v7118
        %v7122 = vor.u32 %v7120, %v7121
        %v7123 = vshll.u32 2475754826, %v7117
        %v7124 = vshrl.u32 2131351028, %v7118
        %v7125 = vor.u32 %v7123, %v7124
        %v7126 = vshll.u32 2131351028, %v7117
        %v7127 = vshrl.u32 2102212464, %v7118
        %v7128 = vor.u32 %v7126, %v7127
        %v7129 = vshll.u32 2102212464, %v7117
        %v7130 = vshrl.u32 920167782, %v7118
        %v7131 = vor.u32 %v7129, %v7130
        %v7132 = vshll.u32 920167782, %v7117
        %v7133 = vshrl.u32 1326507024, %v7118
        %v7134 = vor.u32 %v7132, %v7133
        %vm7135 = vcmp.lt.s32.totalorder %v7116, 1
        %vm7136 = vcmp.lt.s32.totalorder %v7116, 2
        %vm7137 = vcmp.lt.s32.totalorder %v7116, 3
        %vm7138 = vcmp.lt.s32.totalorder %v7116, 4
        %v7139 = vsel %vm7135, %v7119, %v7122
        %v7140 = vsel %vm7138, %v7128, 2102212464
        %v7141 = vsel %vm7137, %v7125, %v7140
        %v7142 = vsel %vm7136, %v7139, %v7141
        %v7143 = vsel %vm7135, %v7122, %v7125
        %v7144 = vsel %vm7138, %v7131, 920167782
        %v7145 = vsel %vm7137, %v7128, %v7144
        %v7146 = vsel %vm7136, %v7143, %v7145
        %v7147 = vsel %vm7135, %v7125, %v7128
        %v7148 = vsel %vm7138, %v7134, 1326507024
        %v7149 = vsel %vm7137, %v7131, %v7148
        %v7150 = vsel %vm7136, %v7147, %v7149
        %v7151 = vshll.u32 %v7111, 8
        %v7152 = vand.u32 %v7151, 65535
        %v7153 = vshrl.u32 %v7151, 16
        %v7154 = vand.u32 %v7150, 65535
        %v7155 = vshrl.u32 %v7150, 16
        %v7156 = vmul.u32 %v7152, %v7154
        %v7157 = vmul.u32 %v7152, %v7155
        %v7158 = vmul.u32 %v7153, %v7154
        %v7159 = vmul.u32 %v7153, %v7155
        %v7160 = vshll.u32 %v7157, 16
        %v7161 = vshrl.u32 %v7157, 16
        %v7162 = vshll.u32 %v7158, 16
        %v7163 = vshrl.u32 %v7158, 16
        %vm7164 = vc.u32 %v7156, %v7160
        %v7165 = vsel %vm7164, 1, 0
        %v7166 = vadd.s32 %v7156, %v7160
        %v7167 = vadd.s32 %v7159, %v7165
        %vm7168 = vc.u32 %v7166, %v7162
        %v7169 = vsel %vm7168, 1, 0
        %v7170 = vadd.s32 %v7166, %v7162
        %v7171 = vadd.s32 %v7167, %v7169
        %v7172 = vadd.s32 %v7171, %v7161
        %v7173 = vadd.s32 %v7172, %v7163
        %v7174 = vand.u32 %v7151, 65535
        %v7175 = vshrl.u32 %v7151, 16
        %v7176 = vand.u32 %v7146, 65535
        %v7177 = vshrl.u32 %v7146, 16
        %v7178 = vmul.u32 %v7174, %v7176
        %v7179 = vmul.u32 %v7174, %v7177
        %v7180 = vmul.u32 %v7175, %v7176
        %v7181 = vmul.u32 %v7175, %v7177
        %v7182 = vshll.u32 %v7179, 16
        %v7183 = vshrl.u32 %v7179, 16
        %v7184 = vshll.u32 %v7180, 16
        %v7185 = vshrl.u32 %v7180, 16
        %vm7186 = vc.u32 %v7178, %v7182
        %v7187 = vsel %vm7186, 1, 0
        %v7188 = vadd.s32 %v7178, %v7182
        %v7189 = vadd.s32 %v7181, %v7187
        %vm7190 = vc.u32 %v7188, %v7184
        %v7191 = vsel %vm7190, 1, 0
        %v7192 = vadd.s32 %v7188, %v7184
        %v7193 = vadd.s32 %v7189, %v7191
        %v7194 = vadd.s32 %v7193, %v7183
        %v7195 = vadd.s32 %v7194, %v7185
        %v7196 = vmul.u32 %v7151, %v7142
        %v7197 = vadd.s32 %v7173, %v7192
        %vm7198 = vc.u32 %v7173, %v7192
        %v7199 = vadd.s32 %v7195, 1
        %v7200 = vsel %vm7198, %v7199, %v7195
        %v7201 = vadd.s32 %v7196, %v7200
        %v7202 = vadd.s32 %v7201, 536870912
        %v7203 = vshrl.u32 %v7202, 30
        %v7204 = vshll.u32 %v7203, 30
        %v7205 = vsub.s32 %v7201, %v7204
        %vm7206 = vcmp.lt.s32.totalorder %v7205, 0
        %v7207 = vsub.s32 0, %v7205
        %v7208 = vsel %vm7206, %v7207, %v7205
        %v7209 = vclz %v7208
        %v7210 = vsub.s32 %v7209, 2
        %vm7211 = vcmp.gt.s32.totalorder 0, %v7210
        %v7212 = vsel %vm7211, 0, %v7210
        %v7213 = vsub.s32 32, %v7212
        %v7214 = vshll.u32 %v7205, %v7212
        %v7215 = vshrl.u32 %v7197, %v7213
        %v7216 = vor.u32 %v7214, %v7215
        %v7217 = vsub.s32 4294967266, %v7212
        %v7218 = vadd.s32 %v7217, 127
        %v7219 = vshll.u32 %v7218, 23
        %v7220 = vor.u32 4788187, %v7219
        %v7221 = vand.u32 2147483647, %v7220
        %v7223 = vcvt.s32.f32 %v7216
        %v7224 = vmul.f32 %v7223, %v7221
        %v7225 = vxor.u32 %v7224, 2147483648
        %v7226 = vsel %vm7105, %v7225, %v7224
        %v7227 = vsub.s32 4, %v7203
        %v7228 = vsel %vm7105, %v7227, %v7203
        %v7229 = vsel %vm7104, %v5995, %v7226
        %v7230 = vsel %vm7104, 0, %v7228
        %v7231 = vmul.f32 %v7229, %v7229
        %v7232 = vmul.f32 %v7231, -0.001358992
        %v7233 = vadd.f32 %v7232, 0.041655596
        %v7234 = vmul.f32 %v7231, %v7233
        %v7235 = vadd.f32 %v7234, -0.4999988
        %v7236 = vmul.f32 %v7231, %v7235
        %v7237 = vadd.f32 1.0, %v7236
        %v7238 = vmul.f32 %v7229, %v7229
        %v7239 = vmul.f32 %v7238, -0.00019511016
        %v7240 = vadd.f32 %v7239, 0.008332121
        %v7241 = vmul.f32 %v7238, %v7240
        %v7242 = vadd.f32 %v7241, -0.16666654
        %v7243 = vmul.f32 %v7238, %v7242
        %v7244 = vadd.f32 %v7243, 1.0
        %v7245 = vmul.f32 %v7244, %v7229
        %vm7246 = vweird.f32 %v5995
        %v7247 = vadd.s32 %v7230, 3
        %v7248 = vand.u32 %v7247, 3
        %vm7249 = vcmp.lt.s32.totalorder %v7248, 2
        %vm7250 = vcmp.eq.s32.totalorder %v7248, 0
        %v7251 = vxor.u32 %v7245, 2147483648
        %v7252 = vsel %vm7250, %v7237, %v7251
        %vm7253 = vcmp.eq.s32.totalorder %v7248, 2
        %v7254 = vxor.u32 %v7237, 2147483648
        %v7255 = vsel %vm7253, %v7254, %v7245
        %v7256 = vsel %vm7249, %v7252, %v7255
        %v7257 = vsel %vm7246, nan, %v7256
        %v7258 = vand.u32 2147483647, %v5711
        %vm7259 = vcmp.le.f32.partialorder %v7258, 0.7853982
        %vm7260 = vcmp.lt.s32.totalorder %v5711, 0
        %v7261 = vand.u32 %v5711, 2139095040
        %v7262 = vshrl.u32 %v7261, 23
        %v7263 = vsub.s32 %v7262, 127
        %v7264 = vand.u32 2147483647, %v5711
        %v7265 = vand.u32 %v7264, 8388607
        %v7266 = vor.u32 %v7265, 8388608
        %v7267 = vsub.s32 0, %v7266
        %v7268 = vadd.s32 %v7263, 1
        %vm7269 = vcmp.gt.s32.totalorder %v7268, 0
        %v7270 = vsel %vm7269, %v7268, 0
        %v7271 = vshrl.u32 %v7270, 5
        %v7272 = vand.u32 %v7270, 31
        %v7273 = vsub.s32 32, %v7272
        %v7274 = vshrl.u32 683565275, %v7273
        %v7275 = vshll.u32 683565275, %v7272
        %v7276 = vshrl.u32 2475754826, %v7273
        %v7277 = vor.u32 %v7275, %v7276
        %v7278 = vshll.u32 2475754826, %v7272
        %v7279 = vshrl.u32 2131351028, %v7273
        %v7280 = vor.u32 %v7278, %v7279
        %v7281 = vshll.u32 2131351028, %v7272
        %v7282 = vshrl.u32 2102212464, %v7273
        %v7283 = vor.u32 %v7281, %v7282
        %v7284 = vshll.u32 2102212464, %v7272
        %v7285 = vshrl.u32 920167782, %v7273
        %v7286 = vor.u32 %v7284, %v7285
        %v7287 = vshll.u32 920167782, %v7272
        %v7288 = vshrl.u32 1326507024, %v7273
        %v7289 = vor.u32 %v7287, %v7288
        %vm7290 = vcmp.lt.s32.totalorder %v7271, 1
        %vm7291 = vcmp.lt.s32.totalorder %v7271, 2
        %vm7292 = vcmp.lt.s32.totalorder %v7271, 3
        %vm7293 = vcmp.lt.s32.totalorder %v7271, 4
        %v7294 = vsel %vm7290, %v7274, %v7277
        %v7295 = vsel %vm7293, %v7283, 2102212464
        %v7296 = vsel %vm7292, %v7280, %v7295
        %v7297 = vsel %vm7291, %v7294, %v7296
        %v7298 = vsel %vm7290, %v7277, %v7280
        %v7299 = vsel %vm7293, %v7286, 920167782
        %v7300 = vsel %vm7292, %v7283, %v7299
        %v7301 = vsel %vm7291, %v7298, %v7300
        %v7302 = vsel %vm7290, %v7280, %v7283
        %v7303 = vsel %vm7293, %v7289, 1326507024
        %v7304 = vsel %vm7292, %v7286, %v7303
        %v7305 = vsel %vm7291, %v7302, %v7304
        %v7306 = vshll.u32 %v7266, 8
        %v7307 = vand.u32 %v7306, 65535
        %v7308 = vshrl.u32 %v7306, 16
        %v7309 = vand.u32 %v7305, 65535
        %v7310 = vshrl.u32 %v7305, 16
        %v7311 = vmul.u32 %v7307, %v7309
        %v7312 = vmul.u32 %v7307, %v7310
        %v7313 = vmul.u32 %v7308, %v7309
        %v7314 = vmul.u32 %v7308, %v7310
        %v7315 = vshll.u32 %v7312, 16
        %v7316 = vshrl.u32 %v7312, 16
        %v7317 = vshll.u32 %v7313, 16
        %v7318 = vshrl.u32 %v7313, 16
        %vm7319 = vc.u32 %v7311, %v7315
        %v7320 = vsel %vm7319, 1, 0
        %v7321 = vadd.s32 %v7311, %v7315
        %v7322 = vadd.s32 %v7314, %v7320
        %vm7323 = vc.u32 %v7321, %v7317
        %v7324 = vsel %vm7323, 1, 0
        %v7325 = vadd.s32 %v7321, %v7317
        %v7326 = vadd.s32 %v7322, %v7324
        %v7327 = vadd.s32 %v7326, %v7316
        %v7328 = vadd.s32 %v7327, %v7318
        %v7329 = vand.u32 %v7306, 65535
        %v7330 = vshrl.u32 %v7306, 16
        %v7331 = vand.u32 %v7301, 65535
        %v7332 = vshrl.u32 %v7301, 16
        %v7333 = vmul.u32 %v7329, %v7331
        %v7334 = vmul.u32 %v7329, %v7332
        %v7335 = vmul.u32 %v7330, %v7331
        %v7336 = vmul.u32 %v7330, %v7332
        %v7337 = vshll.u32 %v7334, 16
        %v7338 = vshrl.u32 %v7334, 16
        %v7339 = vshll.u32 %v7335, 16
        %v7340 = vshrl.u32 %v7335, 16
        %vm7341 = vc.u32 %v7333, %v7337
        %v7342 = vsel %vm7341, 1, 0
        %v7343 = vadd.s32 %v7333, %v7337
        %v7344 = vadd.s32 %v7336, %v7342
        %vm7345 = vc.u32 %v7343, %v7339
        %v7346 = vsel %vm7345, 1, 0
        %v7347 = vadd.s32 %v7343, %v7339
        %v7348 = vadd.s32 %v7344, %v7346
        %v7349 = vadd.s32 %v7348, %v7338
        %v7350 = vadd.s32 %v7349, %v7340
        %v7351 = vmul.u32 %v7306, %v7297
        %v7352 = vadd.s32 %v7328, %v7347
        %vm7353 = vc.u32 %v7328, %v7347
        %v7354 = vadd.s32 %v7350, 1
        %v7355 = vsel %vm7353, %v7354, %v7350
        %v7356 = vadd.s32 %v7351, %v7355
        %v7357 = vadd.s32 %v7356, 536870912
        %v7358 = vshrl.u32 %v7357, 30
        %v7359 = vshll.u32 %v7358, 30
        %v7360 = vsub.s32 %v7356, %v7359
        %vm7361 = vcmp.lt.s32.totalorder %v7360, 0
        %v7362 = vsub.s32 0, %v7360
        %v7363 = vsel %vm7361, %v7362, %v7360
        %v7364 = vclz %v7363
        %v7365 = vsub.s32 %v7364, 2
        %vm7366 = vcmp.gt.s32.totalorder 0, %v7365
        %v7367 = vsel %vm7366, 0, %v7365
        %v7368 = vsub.s32 32, %v7367
        %v7369 = vshll.u32 %v7360, %v7367
        %v7370 = vshrl.u32 %v7352, %v7368
        %v7371 = vor.u32 %v7369, %v7370
        %v7372 = vsub.s32 4294967266, %v7367
        %v7373 = vadd.s32 %v7372, 127
        %v7374 = vshll.u32 %v7373, 23
        %v7375 = vor.u32 4788187, %v7374
        %v7376 = vand.u32 2147483647, %v7375
        %v7378 = vcvt.s32.f32 %v7371
        %v7379 = vmul.f32 %v7378, %v7376
        %v7380 = vxor.u32 %v7379, 2147483648
        %v7381 = vsel %vm7260, %v7380, %v7379
        %v7382 = vsub.s32 4, %v7358
        %v7383 = vsel %vm7260, %v7382, %v7358
        %v7384 = vsel %vm7259, %v5711, %v7381
        %v7385 = vsel %vm7259, 0, %v7383
        %v7386 = vmul.f32 %v7384, %v7384
        %v7387 = vmul.f32 %v7386, -0.001358992
        %v7388 = vadd.f32 %v7387, 0.041655596
        %v7389 = vmul.f32 %v7386, %v7388
        %v7390 = vadd.f32 %v7389, -0.4999988
        %v7391 = vmul.f32 %v7386, %v7390
        %v7392 = vadd.f32 1.0, %v7391
        %v7393 = vmul.f32 %v7384, %v7384
        %v7394 = vmul.f32 %v7393, -0.00019511016
        %v7395 = vadd.f32 %v7394, 0.008332121
        %v7396 = vmul.f32 %v7393, %v7395
        %v7397 = vadd.f32 %v7396, -0.16666654
        %v7398 = vmul.f32 %v7393, %v7397
        %v7399 = vadd.f32 %v7398, 1.0
        %v7400 = vmul.f32 %v7399, %v7384
        %vm7401 = vweird.f32 %v5711
        %v7402 = vadd.s32 %v7385, 3
        %v7403 = vand.u32 %v7402, 3
        %vm7404 = vcmp.lt.s32.totalorder %v7403, 2
        %vm7405 = vcmp.eq.s32.totalorder %v7403, 0
        %v7406 = vxor.u32 %v7400, 2147483648
        %v7407 = vsel %vm7405, %v7392, %v7406
        %vm7408 = vcmp.eq.s32.totalorder %v7403, 2
        %v7409 = vxor.u32 %v7392, 2147483648
        %v7410 = vsel %vm7408, %v7409, %v7400
        %v7411 = vsel %vm7404, %v7407, %v7410
        %v7412 = vsel %vm7401, nan, %v7411
        %v7413 = vand.u32 2147483647, %v5752
        %vm7414 = vcmp.le.f32.partialorder %v7413, 0.7853982
        %vm7415 = vcmp.lt.s32.totalorder %v5752, 0
        %v7416 = vand.u32 %v5752, 2139095040
        %v7417 = vshrl.u32 %v7416, 23
        %v7418 = vsub.s32 %v7417, 127
        %v7419 = vand.u32 2147483647, %v5752
        %v7420 = vand.u32 %v7419, 8388607
        %v7421 = vor.u32 %v7420, 8388608
        %v7422 = vsub.s32 0, %v7421
        %v7423 = vadd.s32 %v7418, 1
        %vm7424 = vcmp.gt.s32.totalorder %v7423, 0
        %v7425 = vsel %vm7424, %v7423, 0
        %v7426 = vshrl.u32 %v7425, 5
        %v7427 = vand.u32 %v7425, 31
        %v7428 = vsub.s32 32, %v7427
        %v7429 = vshrl.u32 683565275, %v7428
        %v7430 = vshll.u32 683565275, %v7427
        %v7431 = vshrl.u32 2475754826, %v7428
        %v7432 = vor.u32 %v7430, %v7431
        %v7433 = vshll.u32 2475754826, %v7427
        %v7434 = vshrl.u32 2131351028, %v7428
        %v7435 = vor.u32 %v7433, %v7434
        %v7436 = vshll.u32 2131351028, %v7427
        %v7437 = vshrl.u32 2102212464, %v7428
        %v7438 = vor.u32 %v7436, %v7437
        %v7439 = vshll.u32 2102212464, %v7427
        %v7440 = vshrl.u32 920167782, %v7428
        %v7441 = vor.u32 %v7439, %v7440
        %v7442 = vshll.u32 920167782, %v7427
        %v7443 = vshrl.u32 1326507024, %v7428
        %v7444 = vor.u32 %v7442, %v7443
        %vm7445 = vcmp.lt.s32.totalorder %v7426, 1
        %vm7446 = vcmp.lt.s32.totalorder %v7426, 2
        %vm7447 = vcmp.lt.s32.totalorder %v7426, 3
        %vm7448 = vcmp.lt.s32.totalorder %v7426, 4
        %v7449 = vsel %vm7445, %v7429, %v7432
        %v7450 = vsel %vm7448, %v7438, 2102212464
        %v7451 = vsel %vm7447, %v7435, %v7450
        %v7452 = vsel %vm7446, %v7449, %v7451
        %v7453 = vsel %vm7445, %v7432, %v7435
        %v7454 = vsel %vm7448, %v7441, 920167782
        %v7455 = vsel %vm7447, %v7438, %v7454
        %v7456 = vsel %vm7446, %v7453, %v7455
        %v7457 = vsel %vm7445, %v7435, %v7438
        %v7458 = vsel %vm7448, %v7444, 1326507024
        %v7459 = vsel %vm7447, %v7441, %v7458
        %v7460 = vsel %vm7446, %v7457, %v7459
        %v7461 = vshll.u32 %v7421, 8
        %v7462 = vand.u32 %v7461, 65535
        %v7463 = vshrl.u32 %v7461, 16
        %v7464 = vand.u32 %v7460, 65535
        %v7465 = vshrl.u32 %v7460, 16
        %v7466 = vmul.u32 %v7462, %v7464
        %v7467 = vmul.u32 %v7462, %v7465
        %v7468 = vmul.u32 %v7463, %v7464
        %v7469 = vmul.u32 %v7463, %v7465
        %v7470 = vshll.u32 %v7467, 16
        %v7471 = vshrl.u32 %v7467, 16
        %v7472 = vshll.u32 %v7468, 16
        %v7473 = vshrl.u32 %v7468, 16
        %vm7474 = vc.u32 %v7466, %v7470
        %v7475 = vsel %vm7474, 1, 0
        %v7476 = vadd.s32 %v7466, %v7470
        %v7477 = vadd.s32 %v7469, %v7475
        %vm7478 = vc.u32 %v7476, %v7472
        %v7479 = vsel %vm7478, 1, 0
        %v7480 = vadd.s32 %v7476, %v7472
        %v7481 = vadd.s32 %v7477, %v7479
        %v7482 = vadd.s32 %v7481, %v7471
        %v7483 = vadd.s32 %v7482, %v7473
        %v7484 = vand.u32 %v7461, 65535
        %v7485 = vshrl.u32 %v7461, 16
        %v7486 = vand.u32 %v7456, 65535
        %v7487 = vshrl.u32 %v7456, 16
        %v7488 = vmul.u32 %v7484, %v7486
        %v7489 = vmul.u32 %v7484, %v7487
        %v7490 = vmul.u32 %v7485, %v7486
        %v7491 = vmul.u32 %v7485, %v7487
        %v7492 = vshll.u32 %v7489, 16
        %v7493 = vshrl.u32 %v7489, 16
        %v7494 = vshll.u32 %v7490, 16
        %v7495 = vshrl.u32 %v7490, 16
        %vm7496 = vc.u32 %v7488, %v7492
        %v7497 = vsel %vm7496, 1, 0
        %v7498 = vadd.s32 %v7488, %v7492
        %v7499 = vadd.s32 %v7491, %v7497
        %vm7500 = vc.u32 %v7498, %v7494
        %v7501 = vsel %vm7500, 1, 0
        %v7502 = vadd.s32 %v7498, %v7494
        %v7503 = vadd.s32 %v7499, %v7501
        %v7504 = vadd.s32 %v7503, %v7493
        %v7505 = vadd.s32 %v7504, %v7495
        %v7506 = vmul.u32 %v7461, %v7452
        %v7507 = vadd.s32 %v7483, %v7502
        %vm7508 = vc.u32 %v7483, %v7502
        %v7509 = vadd.s32 %v7505, 1
        %v7510 = vsel %vm7508, %v7509, %v7505
        %v7511 = vadd.s32 %v7506, %v7510
        %v7512 = vadd.s32 %v7511, 536870912
        %v7513 = vshrl.u32 %v7512, 30
        %v7514 = vshll.u32 %v7513, 30
        %v7515 = vsub.s32 %v7511, %v7514
        %vm7516 = vcmp.lt.s32.totalorder %v7515, 0
        %v7517 = vsub.s32 0, %v7515
        %v7518 = vsel %vm7516, %v7517, %v7515
        %v7519 = vclz %v7518
        %v7520 = vsub.s32 %v7519, 2
        %vm7521 = vcmp.gt.s32.totalorder 0, %v7520
        %v7522 = vsel %vm7521, 0, %v7520
        %v7523 = vsub.s32 32, %v7522
        %v7524 = vshll.u32 %v7515, %v7522
        %v7525 = vshrl.u32 %v7507, %v7523
        %v7526 = vor.u32 %v7524, %v7525
        %v7527 = vsub.s32 4294967266, %v7522
        %v7528 = vadd.s32 %v7527, 127
        %v7529 = vshll.u32 %v7528, 23
        %v7530 = vor.u32 4788187, %v7529
        %v7531 = vand.u32 2147483647, %v7530
        %v7533 = vcvt.s32.f32 %v7526
        %v7534 = vmul.f32 %v7533, %v7531
        %v7535 = vxor.u32 %v7534, 2147483648
        %v7536 = vsel %vm7415, %v7535, %v7534
        %v7537 = vsub.s32 4, %v7513
        %v7538 = vsel %vm7415, %v7537, %v7513
        %v7539 = vsel %vm7414, %v5752, %v7536
        %v7540 = vsel %vm7414, 0, %v7538
        %v7541 = vmul.f32 %v7539, %v7539
        %v7542 = vmul.f32 %v7541, -0.001358992
        %v7543 = vadd.f32 %v7542, 0.041655596
        %v7544 = vmul.f32 %v7541, %v7543
        %v7545 = vadd.f32 %v7544, -0.4999988
        %v7546 = vmul.f32 %v7541, %v7545
        %v7547 = vadd.f32 1.0, %v7546
        %v7548 = vmul.f32 %v7539, %v7539
        %v7549 = vmul.f32 %v7548, -0.00019511016
        %v7550 = vadd.f32 %v7549, 0.008332121
        %v7551 = vmul.f32 %v7548, %v7550
        %v7552 = vadd.f32 %v7551, -0.16666654
        %v7553 = vmul.f32 %v7548, %v7552
        %v7554 = vadd.f32 %v7553, 1.0
        %v7555 = vmul.f32 %v7554, %v7539
        %vm7556 = vweird.f32 %v5752
        %v7557 = vadd.s32 %v7540, 3
        %v7558 = vand.u32 %v7557, 3
        %vm7559 = vcmp.lt.s32.totalorder %v7558, 2
        %vm7560 = vcmp.eq.s32.totalorder %v7558, 0
        %v7561 = vxor.u32 %v7555, 2147483648
        %v7562 = vsel %vm7560, %v7547, %v7561
        %vm7563 = vcmp.eq.s32.totalorder %v7558, 2
        %v7564 = vxor.u32 %v7547, 2147483648
        %v7565 = vsel %vm7563, %v7564, %v7555
        %v7566 = vsel %vm7559, %v7562, %v7565
        %v7567 = vsel %vm7556, nan, %v7566
        %v7568 = vand.u32 2147483647, %v5793
        %vm7569 = vcmp.le.f32.partialorder %v7568, 0.7853982
        %vm7570 = vcmp.lt.s32.totalorder %v5793, 0
        %v7571 = vand.u32 %v5793, 2139095040
        %v7572 = vshrl.u32 %v7571, 23
        %v7573 = vsub.s32 %v7572, 127
        %v7574 = vand.u32 2147483647, %v5793
        %v7575 = vand.u32 %v7574, 8388607
        %v7576 = vor.u32 %v7575, 8388608
        %v7577 = vsub.s32 0, %v7576
        %v7578 = vadd.s32 %v7573, 1
        %vm7579 = vcmp.gt.s32.totalorder %v7578, 0
        %v7580 = vsel %vm7579, %v7578, 0
        %v7581 = vshrl.u32 %v7580, 5
        %v7582 = vand.u32 %v7580, 31
        %v7583 = vsub.s32 32, %v7582
        %v7584 = vshrl.u32 683565275, %v7583
        %v7585 = vshll.u32 683565275, %v7582
        %v7586 = vshrl.u32 2475754826, %v7583
        %v7587 = vor.u32 %v7585, %v7586
        %v7588 = vshll.u32 2475754826, %v7582
        %v7589 = vshrl.u32 2131351028, %v7583
        %v7590 = vor.u32 %v7588, %v7589
        %v7591 = vshll.u32 2131351028, %v7582
        %v7592 = vshrl.u32 2102212464, %v7583
        %v7593 = vor.u32 %v7591, %v7592
        %v7594 = vshll.u32 2102212464, %v7582
        %v7595 = vshrl.u32 920167782, %v7583
        %v7596 = vor.u32 %v7594, %v7595
        %v7597 = vshll.u32 920167782, %v7582
        %v7598 = vshrl.u32 1326507024, %v7583
        %v7599 = vor.u32 %v7597, %v7598
        %vm7600 = vcmp.lt.s32.totalorder %v7581, 1
        %vm7601 = vcmp.lt.s32.totalorder %v7581, 2
        %vm7602 = vcmp.lt.s32.totalorder %v7581, 3
        %vm7603 = vcmp.lt.s32.totalorder %v7581, 4
        %v7604 = vsel %vm7600, %v7584, %v7587
        %v7605 = vsel %vm7603, %v7593, 2102212464
        %v7606 = vsel %vm7602, %v7590, %v7605
        %v7607 = vsel %vm7601, %v7604, %v7606
        %v7608 = vsel %vm7600, %v7587, %v7590
        %v7609 = vsel %vm7603, %v7596, 920167782
        %v7610 = vsel %vm7602, %v7593, %v7609
        %v7611 = vsel %vm7601, %v7608, %v7610
        %v7612 = vsel %vm7600, %v7590, %v7593
        %v7613 = vsel %vm7603, %v7599, 1326507024
        %v7614 = vsel %vm7602, %v7596, %v7613
        %v7615 = vsel %vm7601, %v7612, %v7614
        %v7616 = vshll.u32 %v7576, 8
        %v7617 = vand.u32 %v7616, 65535
        %v7618 = vshrl.u32 %v7616, 16
        %v7619 = vand.u32 %v7615, 65535
        %v7620 = vshrl.u32 %v7615, 16
        %v7621 = vmul.u32 %v7617, %v7619
        %v7622 = vmul.u32 %v7617, %v7620
        %v7623 = vmul.u32 %v7618, %v7619
        %v7624 = vmul.u32 %v7618, %v7620
        %v7625 = vshll.u32 %v7622, 16
        %v7626 = vshrl.u32 %v7622, 16
        %v7627 = vshll.u32 %v7623, 16
        %v7628 = vshrl.u32 %v7623, 16
        %vm7629 = vc.u32 %v7621, %v7625
        %v7630 = vsel %vm7629, 1, 0
        %v7631 = vadd.s32 %v7621, %v7625
        %v7632 = vadd.s32 %v7624, %v7630
        %vm7633 = vc.u32 %v7631, %v7627
        %v7634 = vsel %vm7633, 1, 0
        %v7635 = vadd.s32 %v7631, %v7627
        %v7636 = vadd.s32 %v7632, %v7634
        %v7637 = vadd.s32 %v7636, %v7626
        %v7638 = vadd.s32 %v7637, %v7628
        %v7639 = vand.u32 %v7616, 65535
        %v7640 = vshrl.u32 %v7616, 16
        %v7641 = vand.u32 %v7611, 65535
        %v7642 = vshrl.u32 %v7611, 16
        %v7643 = vmul.u32 %v7639, %v7641
        %v7644 = vmul.u32 %v7639, %v7642
        %v7645 = vmul.u32 %v7640, %v7641
        %v7646 = vmul.u32 %v7640, %v7642
        %v7647 = vshll.u32 %v7644, 16
        %v7648 = vshrl.u32 %v7644, 16
        %v7649 = vshll.u32 %v7645, 16
        %v7650 = vshrl.u32 %v7645, 16
        %vm7651 = vc.u32 %v7643, %v7647
        %v7652 = vsel %vm7651, 1, 0
        %v7653 = vadd.s32 %v7643, %v7647
        %v7654 = vadd.s32 %v7646, %v7652
        %vm7655 = vc.u32 %v7653, %v7649
        %v7656 = vsel %vm7655, 1, 0
        %v7657 = vadd.s32 %v7653, %v7649
        %v7658 = vadd.s32 %v7654, %v7656
        %v7659 = vadd.s32 %v7658, %v7648
        %v7660 = vadd.s32 %v7659, %v7650
        %v7661 = vmul.u32 %v7616, %v7607
        %v7662 = vadd.s32 %v7638, %v7657
        %vm7663 = vc.u32 %v7638, %v7657
        %v7664 = vadd.s32 %v7660, 1
        %v7665 = vsel %vm7663, %v7664, %v7660
        %v7666 = vadd.s32 %v7661, %v7665
        %v7667 = vadd.s32 %v7666, 536870912
        %v7668 = vshrl.u32 %v7667, 30
        %v7669 = vshll.u32 %v7668, 30
        %v7670 = vsub.s32 %v7666, %v7669
        %vm7671 = vcmp.lt.s32.totalorder %v7670, 0
        %v7672 = vsub.s32 0, %v7670
        %v7673 = vsel %vm7671, %v7672, %v7670
        %v7674 = vclz %v7673
        %v7675 = vsub.s32 %v7674, 2
        %vm7676 = vcmp.gt.s32.totalorder 0, %v7675
        %v7677 = vsel %vm7676, 0, %v7675
        %v7678 = vsub.s32 32, %v7677
        %v7679 = vshll.u32 %v7670, %v7677
        %v7680 = vshrl.u32 %v7662, %v7678
        %v7681 = vor.u32 %v7679, %v7680
        %v7682 = vsub.s32 4294967266, %v7677
        %v7683 = vadd.s32 %v7682, 127
        %v7684 = vshll.u32 %v7683, 23
        %v7685 = vor.u32 4788187, %v7684
        %v7686 = vand.u32 2147483647, %v7685
        %v7688 = vcvt.s32.f32 %v7681
        %v7689 = vmul.f32 %v7688, %v7686
        %v7690 = vxor.u32 %v7689, 2147483648
        %v7691 = vsel %vm7570, %v7690, %v7689
        %v7692 = vsub.s32 4, %v7668
        %v7693 = vsel %vm7570, %v7692, %v7668
        %v7694 = vsel %vm7569, %v5793, %v7691
        %v7695 = vsel %vm7569, 0, %v7693
        %v7696 = vmul.f32 %v7694, %v7694
        %v7697 = vmul.f32 %v7696, -0.001358992
        %v7698 = vadd.f32 %v7697, 0.041655596
        %v7699 = vmul.f32 %v7696, %v7698
        %v7700 = vadd.f32 %v7699, -0.4999988
        %v7701 = vmul.f32 %v7696, %v7700
        %v7702 = vadd.f32 1.0, %v7701
        %v7703 = vmul.f32 %v7694, %v7694
        %v7704 = vmul.f32 %v7703, -0.00019511016
        %v7705 = vadd.f32 %v7704, 0.008332121
        %v7706 = vmul.f32 %v7703, %v7705
        %v7707 = vadd.f32 %v7706, -0.16666654
        %v7708 = vmul.f32 %v7703, %v7707
        %v7709 = vadd.f32 %v7708, 1.0
        %v7710 = vmul.f32 %v7709, %v7694
        %vm7711 = vweird.f32 %v5793
        %v7712 = vadd.s32 %v7695, 3
        %v7713 = vand.u32 %v7712, 3
        %vm7714 = vcmp.lt.s32.totalorder %v7713, 2
        %vm7715 = vcmp.eq.s32.totalorder %v7713, 0
        %v7716 = vxor.u32 %v7710, 2147483648
        %v7717 = vsel %vm7715, %v7702, %v7716
        %vm7718 = vcmp.eq.s32.totalorder %v7713, 2
        %v7719 = vxor.u32 %v7702, 2147483648
        %v7720 = vsel %vm7718, %v7719, %v7710
        %v7721 = vsel %vm7714, %v7717, %v7720
        %v7722 = vsel %vm7711, nan, %v7721
        %v7723 = vand.u32 2147483647, %v5834
        %vm7724 = vcmp.le.f32.partialorder %v7723, 0.7853982
        %vm7725 = vcmp.lt.s32.totalorder %v5834, 0
        %v7726 = vand.u32 %v5834, 2139095040
        %v7727 = vshrl.u32 %v7726, 23
        %v7728 = vsub.s32 %v7727, 127
        %v7729 = vand.u32 2147483647, %v5834
        %v7730 = vand.u32 %v7729, 8388607
        %v7731 = vor.u32 %v7730, 8388608
        %v7732 = vsub.s32 0, %v7731
        %v7733 = vadd.s32 %v7728, 1
        %vm7734 = vcmp.gt.s32.totalorder %v7733, 0
        %v7735 = vsel %vm7734, %v7733, 0
        %v7736 = vshrl.u32 %v7735, 5
        %v7737 = vand.u32 %v7735, 31
        %v7738 = vsub.s32 32, %v7737
        %v7739 = vshrl.u32 683565275, %v7738
        %v7740 = vshll.u32 683565275, %v7737
        %v7741 = vshrl.u32 2475754826, %v7738
        %v7742 = vor.u32 %v7740, %v7741
        %v7743 = vshll.u32 2475754826, %v7737
        %v7744 = vshrl.u32 2131351028, %v7738
        %v7745 = vor.u32 %v7743, %v7744
        %v7746 = vshll.u32 2131351028, %v7737
        %v7747 = vshrl.u32 2102212464, %v7738
        %v7748 = vor.u32 %v7746, %v7747
        %v7749 = vshll.u32 2102212464, %v7737
        %v7750 = vshrl.u32 920167782, %v7738
        %v7751 = vor.u32 %v7749, %v7750
        %v7752 = vshll.u32 920167782, %v7737
        %v7753 = vshrl.u32 1326507024, %v7738
        %v7754 = vor.u32 %v7752, %v7753
        %vm7755 = vcmp.lt.s32.totalorder %v7736, 1
        %vm7756 = vcmp.lt.s32.totalorder %v7736, 2
        %vm7757 = vcmp.lt.s32.totalorder %v7736, 3
        %vm7758 = vcmp.lt.s32.totalorder %v7736, 4
        %v7759 = vsel %vm7755, %v7739, %v7742
        %v7760 = vsel %vm7758, %v7748, 2102212464
        %v7761 = vsel %vm7757, %v7745, %v7760
        %v7762 = vsel %vm7756, %v7759, %v7761
        %v7763 = vsel %vm7755, %v7742, %v7745
        %v7764 = vsel %vm7758, %v7751, 920167782
        %v7765 = vsel %vm7757, %v7748, %v7764
        %v7766 = vsel %vm7756, %v7763, %v7765
        %v7767 = vsel %vm7755, %v7745, %v7748
        %v7768 = vsel %vm7758, %v7754, 1326507024
        %v7769 = vsel %vm7757, %v7751, %v7768
        %v7770 = vsel %vm7756, %v7767, %v7769
        %v7771 = vshll.u32 %v7731, 8
        %v7772 = vand.u32 %v7771, 65535
        %v7773 = vshrl.u32 %v7771, 16
        %v7774 = vand.u32 %v7770, 65535
        %v7775 = vshrl.u32 %v7770, 16
        %v7776 = vmul.u32 %v7772, %v7774
        %v7777 = vmul.u32 %v7772, %v7775
        %v7778 = vmul.u32 %v7773, %v7774
        %v7779 = vmul.u32 %v7773, %v7775
        %v7780 = vshll.u32 %v7777, 16
        %v7781 = vshrl.u32 %v7777, 16
        %v7782 = vshll.u32 %v7778, 16
        %v7783 = vshrl.u32 %v7778, 16
        %vm7784 = vc.u32 %v7776, %v7780
        %v7785 = vsel %vm7784, 1, 0
        %v7786 = vadd.s32 %v7776, %v7780
        %v7787 = vadd.s32 %v7779, %v7785
        %vm7788 = vc.u32 %v7786, %v7782
        %v7789 = vsel %vm7788, 1, 0
        %v7790 = vadd.s32 %v7786, %v7782
        %v7791 = vadd.s32 %v7787, %v7789
        %v7792 = vadd.s32 %v7791, %v7781
        %v7793 = vadd.s32 %v7792, %v7783
        %v7794 = vand.u32 %v7771, 65535
        %v7795 = vshrl.u32 %v7771, 16
        %v7796 = vand.u32 %v7766, 65535
        %v7797 = vshrl.u32 %v7766, 16
        %v7798 = vmul.u32 %v7794, %v7796
        %v7799 = vmul.u32 %v7794, %v7797
        %v7800 = vmul.u32 %v7795, %v7796
        %v7801 = vmul.u32 %v7795, %v7797
        %v7802 = vshll.u32 %v7799, 16
        %v7803 = vshrl.u32 %v7799, 16
        %v7804 = vshll.u32 %v7800, 16
        %v7805 = vshrl.u32 %v7800, 16
        %vm7806 = vc.u32 %v7798, %v7802
        %v7807 = vsel %vm7806, 1, 0
        %v7808 = vadd.s32 %v7798, %v7802
        %v7809 = vadd.s32 %v7801, %v7807
        %vm7810 = vc.u32 %v7808, %v7804
        %v7811 = vsel %vm7810, 1, 0
        %v7812 = vadd.s32 %v7808, %v7804
        %v7813 = vadd.s32 %v7809, %v7811
        %v7814 = vadd.s32 %v7813, %v7803
        %v7815 = vadd.s32 %v7814, %v7805
        %v7816 = vmul.u32 %v7771, %v7762
        %v7817 = vadd.s32 %v7793, %v7812
        %vm7818 = vc.u32 %v7793, %v7812
        %v7819 = vadd.s32 %v7815, 1
        %v7820 = vsel %vm7818, %v7819, %v7815
        %v7821 = vadd.s32 %v7816, %v7820
        %v7822 = vadd.s32 %v7821, 536870912
        %v7823 = vshrl.u32 %v7822, 30
        %v7824 = vshll.u32 %v7823, 30
        %v7825 = vsub.s32 %v7821, %v7824
        %vm7826 = vcmp.lt.s32.totalorder %v7825, 0
        %v7827 = vsub.s32 0, %v7825
        %v7828 = vsel %vm7826, %v7827, %v7825
        %v7829 = vclz %v7828
        %v7830 = vsub.s32 %v7829, 2
        %vm7831 = vcmp.gt.s32.totalorder 0, %v7830
        %v7832 = vsel %vm7831, 0, %v7830
        %v7833 = vsub.s32 32, %v7832
        %v7834 = vshll.u32 %v7825, %v7832
        %v7835 = vshrl.u32 %v7817, %v7833
        %v7836 = vor.u32 %v7834, %v7835
        %v7837 = vsub.s32 4294967266, %v7832
        %v7838 = vadd.s32 %v7837, 127
        %v7839 = vshll.u32 %v7838, 23
        %v7840 = vor.u32 4788187, %v7839
        %v7841 = vand.u32 2147483647, %v7840
        %v7843 = vcvt.s32.f32 %v7836
        %v7844 = vmul.f32 %v7843, %v7841
        %v7845 = vxor.u32 %v7844, 2147483648
        %v7846 = vsel %vm7725, %v7845, %v7844
        %v7847 = vsub.s32 4, %v7823
        %v7848 = vsel %vm7725, %v7847, %v7823
        %v7849 = vsel %vm7724, %v5834, %v7846
        %v7850 = vsel %vm7724, 0, %v7848
        %v7851 = vmul.f32 %v7849, %v7849
        %v7852 = vmul.f32 %v7851, -0.001358992
        %v7853 = vadd.f32 %v7852, 0.041655596
        %v7854 = vmul.f32 %v7851, %v7853
        %v7855 = vadd.f32 %v7854, -0.4999988
        %v7856 = vmul.f32 %v7851, %v7855
        %v7857 = vadd.f32 1.0, %v7856
        %v7858 = vmul.f32 %v7849, %v7849
        %v7859 = vmul.f32 %v7858, -0.00019511016
        %v7860 = vadd.f32 %v7859, 0.008332121
        %v7861 = vmul.f32 %v7858, %v7860
        %v7862 = vadd.f32 %v7861, -0.16666654
        %v7863 = vmul.f32 %v7858, %v7862
        %v7864 = vadd.f32 %v7863, 1.0
        %v7865 = vmul.f32 %v7864, %v7849
        %vm7866 = vweird.f32 %v5834
        %v7867 = vadd.s32 %v7850, 3
        %v7868 = vand.u32 %v7867, 3
        %vm7869 = vcmp.lt.s32.totalorder %v7868, 2
        %vm7870 = vcmp.eq.s32.totalorder %v7868, 0
        %v7871 = vxor.u32 %v7865, 2147483648
        %v7872 = vsel %vm7870, %v7857, %v7871
        %vm7873 = vcmp.eq.s32.totalorder %v7868, 2
        %v7874 = vxor.u32 %v7857, 2147483648
        %v7875 = vsel %vm7873, %v7874, %v7865
        %v7876 = vsel %vm7869, %v7872, %v7875
        %v7877 = vsel %vm7866, nan, %v7876
        %v7878 = vand.u32 2147483647, %v5875
        %vm7879 = vcmp.le.f32.partialorder %v7878, 0.7853982
        %vm7880 = vcmp.lt.s32.totalorder %v5875, 0
        %v7881 = vand.u32 %v5875, 2139095040
        %v7882 = vshrl.u32 %v7881, 23
        %v7883 = vsub.s32 %v7882, 127
        %v7884 = vand.u32 2147483647, %v5875
        %v7885 = vand.u32 %v7884, 8388607
        %v7886 = vor.u32 %v7885, 8388608
        %v7887 = vsub.s32 0, %v7886
        %v7888 = vadd.s32 %v7883, 1
        %vm7889 = vcmp.gt.s32.totalorder %v7888, 0
        %v7890 = vsel %vm7889, %v7888, 0
        %v7891 = vshrl.u32 %v7890, 5
        %v7892 = vand.u32 %v7890, 31
        %v7893 = vsub.s32 32, %v7892
        %v7894 = vshrl.u32 683565275, %v7893
        %v7895 = vshll.u32 683565275, %v7892
        %v7896 = vshrl.u32 2475754826, %v7893
        %v7897 = vor.u32 %v7895, %v7896
        %v7898 = vshll.u32 2475754826, %v7892
        %v7899 = vshrl.u32 2131351028, %v7893
        %v7900 = vor.u32 %v7898, %v7899
        %v7901 = vshll.u32 2131351028, %v7892
        %v7902 = vshrl.u32 2102212464, %v7893
        %v7903 = vor.u32 %v7901, %v7902
        %v7904 = vshll.u32 2102212464, %v7892
        %v7905 = vshrl.u32 920167782, %v7893
        %v7906 = vor.u32 %v7904, %v7905
        %v7907 = vshll.u32 920167782, %v7892
        %v7908 = vshrl.u32 1326507024, %v7893
        %v7909 = vor.u32 %v7907, %v7908
        %vm7910 = vcmp.lt.s32.totalorder %v7891, 1
        %vm7911 = vcmp.lt.s32.totalorder %v7891, 2
        %vm7912 = vcmp.lt.s32.totalorder %v7891, 3
        %vm7913 = vcmp.lt.s32.totalorder %v7891, 4
        %v7914 = vsel %vm7910, %v7894, %v7897
        %v7915 = vsel %vm7913, %v7903, 2102212464
        %v7916 = vsel %vm7912, %v7900, %v7915
        %v7917 = vsel %vm7911, %v7914, %v7916
        %v7918 = vsel %vm7910, %v7897, %v7900
        %v7919 = vsel %vm7913, %v7906, 920167782
        %v7920 = vsel %vm7912, %v7903, %v7919
        %v7921 = vsel %vm7911, %v7918, %v7920
        %v7922 = vsel %vm7910, %v7900, %v7903
        %v7923 = vsel %vm7913, %v7909, 1326507024
        %v7924 = vsel %vm7912, %v7906, %v7923
        %v7925 = vsel %vm7911, %v7922, %v7924
        %v7926 = vshll.u32 %v7886, 8
        %v7927 = vand.u32 %v7926, 65535
        %v7928 = vshrl.u32 %v7926, 16
        %v7929 = vand.u32 %v7925, 65535
        %v7930 = vshrl.u32 %v7925, 16
        %v7931 = vmul.u32 %v7927, %v7929
        %v7932 = vmul.u32 %v7927, %v7930
        %v7933 = vmul.u32 %v7928, %v7929
        %v7934 = vmul.u32 %v7928, %v7930
        %v7935 = vshll.u32 %v7932, 16
        %v7936 = vshrl.u32 %v7932, 16
        %v7937 = vshll.u32 %v7933, 16
        %v7938 = vshrl.u32 %v7933, 16
        %vm7939 = vc.u32 %v7931, %v7935
        %v7940 = vsel %vm7939, 1, 0
        %v7941 = vadd.s32 %v7931, %v7935
        %v7942 = vadd.s32 %v7934, %v7940
        %vm7943 = vc.u32 %v7941, %v7937
        %v7944 = vsel %vm7943, 1, 0
        %v7945 = vadd.s32 %v7941, %v7937
        %v7946 = vadd.s32 %v7942, %v7944
        %v7947 = vadd.s32 %v7946, %v7936
        %v7948 = vadd.s32 %v7947, %v7938
        %v7949 = vand.u32 %v7926, 65535
        %v7950 = vshrl.u32 %v7926, 16
        %v7951 = vand.u32 %v7921, 65535
        %v7952 = vshrl.u32 %v7921, 16
        %v7953 = vmul.u32 %v7949, %v7951
        %v7954 = vmul.u32 %v7949, %v7952
        %v7955 = vmul.u32 %v7950, %v7951
        %v7956 = vmul.u32 %v7950, %v7952
        %v7957 = vshll.u32 %v7954, 16
        %v7958 = vshrl.u32 %v7954, 16
        %v7959 = vshll.u32 %v7955, 16
        %v7960 = vshrl.u32 %v7955, 16
        %vm7961 = vc.u32 %v7953, %v7957
        %v7962 = vsel %vm7961, 1, 0
        %v7963 = vadd.s32 %v7953, %v7957
        %v7964 = vadd.s32 %v7956, %v7962
        %vm7965 = vc.u32 %v7963, %v7959
        %v7966 = vsel %vm7965, 1, 0
        %v7967 = vadd.s32 %v7963, %v7959
        %v7968 = vadd.s32 %v7964, %v7966
        %v7969 = vadd.s32 %v7968, %v7958
        %v7970 = vadd.s32 %v7969, %v7960
        %v7971 = vmul.u32 %v7926, %v7917
        %v7972 = vadd.s32 %v7948, %v7967
        %vm7973 = vc.u32 %v7948, %v7967
        %v7974 = vadd.s32 %v7970, 1
        %v7975 = vsel %vm7973, %v7974, %v7970
        %v7976 = vadd.s32 %v7971, %v7975
        %v7977 = vadd.s32 %v7976, 536870912
        %v7978 = vshrl.u32 %v7977, 30
        %v7979 = vshll.u32 %v7978, 30
        %v7980 = vsub.s32 %v7976, %v7979
        %vm7981 = vcmp.lt.s32.totalorder %v7980, 0
        %v7982 = vsub.s32 0, %v7980
        %v7983 = vsel %vm7981, %v7982, %v7980
        %v7984 = vclz %v7983
        %v7985 = vsub.s32 %v7984, 2
        %vm7986 = vcmp.gt.s32.totalorder 0, %v7985
        %v7987 = vsel %vm7986, 0, %v7985
        %v7988 = vsub.s32 32, %v7987
        %v7989 = vshll.u32 %v7980, %v7987
        %v7990 = vshrl.u32 %v7972, %v7988
        %v7991 = vor.u32 %v7989, %v7990
        %v7992 = vsub.s32 4294967266, %v7987
        %v7993 = vadd.s32 %v7992, 127
        %v7994 = vshll.u32 %v7993, 23
        %v7995 = vor.u32 4788187, %v7994
        %v7996 = vand.u32 2147483647, %v7995
        %v7998 = vcvt.s32.f32 %v7991
        %v7999 = vmul.f32 %v7998, %v7996
        %v8000 = vxor.u32 %v7999, 2147483648
        %v8001 = vsel %vm7880, %v8000, %v7999
        %v8002 = vsub.s32 4, %v7978
        %v8003 = vsel %vm7880, %v8002, %v7978
        %v8004 = vsel %vm7879, %v5875, %v8001
        %v8005 = vsel %vm7879, 0, %v8003
        %v8006 = vmul.f32 %v8004, %v8004
        %v8007 = vmul.f32 %v8006, -0.001358992
        %v8008 = vadd.f32 %v8007, 0.041655596
        %v8009 = vmul.f32 %v8006, %v8008
        %v8010 = vadd.f32 %v8009, -0.4999988
        %v8011 = vmul.f32 %v8006, %v8010
        %v8012 = vadd.f32 1.0, %v8011
        %v8013 = vmul.f32 %v8004, %v8004
        %v8014 = vmul.f32 %v8013, -0.00019511016
        %v8015 = vadd.f32 %v8014, 0.008332121
        %v8016 = vmul.f32 %v8013, %v8015
        %v8017 = vadd.f32 %v8016, -0.16666654
        %v8018 = vmul.f32 %v8013, %v8017
        %v8019 = vadd.f32 %v8018, 1.0
        %v8020 = vmul.f32 %v8019, %v8004
        %vm8021 = vweird.f32 %v5875
        %v8022 = vadd.s32 %v8005, 3
        %v8023 = vand.u32 %v8022, 3
        %vm8024 = vcmp.lt.s32.totalorder %v8023, 2
        %vm8025 = vcmp.eq.s32.totalorder %v8023, 0
        %v8026 = vxor.u32 %v8020, 2147483648
        %v8027 = vsel %vm8025, %v8012, %v8026
        %vm8028 = vcmp.eq.s32.totalorder %v8023, 2
        %v8029 = vxor.u32 %v8012, 2147483648
        %v8030 = vsel %vm8028, %v8029, %v8020
        %v8031 = vsel %vm8024, %v8027, %v8030
        %v8032 = vsel %vm8021, nan, %v8031
        %v8033 = vand.u32 2147483647, %v5916
        %vm8034 = vcmp.le.f32.partialorder %v8033, 0.7853982
        %vm8035 = vcmp.lt.s32.totalorder %v5916, 0
        %v8036 = vand.u32 %v5916, 2139095040
        %v8037 = vshrl.u32 %v8036, 23
        %v8038 = vsub.s32 %v8037, 127
        %v8039 = vand.u32 2147483647, %v5916
        %v8040 = vand.u32 %v8039, 8388607
        %v8041 = vor.u32 %v8040, 8388608
        %v8042 = vsub.s32 0, %v8041
        %v8043 = vadd.s32 %v8038, 1
        %vm8044 = vcmp.gt.s32.totalorder %v8043, 0
        %v8045 = vsel %vm8044, %v8043, 0
        %v8046 = vshrl.u32 %v8045, 5
        %v8047 = vand.u32 %v8045, 31
        %v8048 = vsub.s32 32, %v8047
        %v8049 = vshrl.u32 683565275, %v8048
        %v8050 = vshll.u32 683565275, %v8047
        %v8051 = vshrl.u32 2475754826, %v8048
        %v8052 = vor.u32 %v8050, %v8051
        %v8053 = vshll.u32 2475754826, %v8047
        %v8054 = vshrl.u32 2131351028, %v8048
        %v8055 = vor.u32 %v8053, %v8054
        %v8056 = vshll.u32 2131351028, %v8047
        %v8057 = vshrl.u32 2102212464, %v8048
        %v8058 = vor.u32 %v8056, %v8057
        %v8059 = vshll.u32 2102212464, %v8047
        %v8060 = vshrl.u32 920167782, %v8048
        %v8061 = vor.u32 %v8059, %v8060
        %v8062 = vshll.u32 920167782, %v8047
        %v8063 = vshrl.u32 1326507024, %v8048
        %v8064 = vor.u32 %v8062, %v8063
        %vm8065 = vcmp.lt.s32.totalorder %v8046, 1
        %vm8066 = vcmp.lt.s32.totalorder %v8046, 2
        %vm8067 = vcmp.lt.s32.totalorder %v8046, 3
        %vm8068 = vcmp.lt.s32.totalorder %v8046, 4
        %v8069 = vsel %vm8065, %v8049, %v8052
        %v8070 = vsel %vm8068, %v8058, 2102212464
        %v8071 = vsel %vm8067, %v8055, %v8070
        %v8072 = vsel %vm8066, %v8069, %v8071
        %v8073 = vsel %vm8065, %v8052, %v8055
        %v8074 = vsel %vm8068, %v8061, 920167782
        %v8075 = vsel %vm8067, %v8058, %v8074
        %v8076 = vsel %vm8066, %v8073, %v8075
        %v8077 = vsel %vm8065, %v8055, %v8058
        %v8078 = vsel %vm8068, %v8064, 1326507024
        %v8079 = vsel %vm8067, %v8061, %v8078
        %v8080 = vsel %vm8066, %v8077, %v8079
        %v8081 = vshll.u32 %v8041, 8
        %v8082 = vand.u32 %v8081, 65535
        %v8083 = vshrl.u32 %v8081, 16
        %v8084 = vand.u32 %v8080, 65535
        %v8085 = vshrl.u32 %v8080, 16
        %v8086 = vmul.u32 %v8082, %v8084
        %v8087 = vmul.u32 %v8082, %v8085
        %v8088 = vmul.u32 %v8083, %v8084
        %v8089 = vmul.u32 %v8083, %v8085
        %v8090 = vshll.u32 %v8087, 16
        %v8091 = vshrl.u32 %v8087, 16
        %v8092 = vshll.u32 %v8088, 16
        %v8093 = vshrl.u32 %v8088, 16
        %vm8094 = vc.u32 %v8086, %v8090
        %v8095 = vsel %vm8094, 1, 0
        %v8096 = vadd.s32 %v8086, %v8090
        %v8097 = vadd.s32 %v8089, %v8095
        %vm8098 = vc.u32 %v8096, %v8092
        %v8099 = vsel %vm8098, 1, 0
        %v8100 = vadd.s32 %v8096, %v8092
        %v8101 = vadd.s32 %v8097, %v8099
        %v8102 = vadd.s32 %v8101, %v8091
        %v8103 = vadd.s32 %v8102, %v8093
        %v8104 = vand.u32 %v8081, 65535
        %v8105 = vshrl.u32 %v8081, 16
        %v8106 = vand.u32 %v8076, 65535
        %v8107 = vshrl.u32 %v8076, 16
        %v8108 = vmul.u32 %v8104, %v8106
        %v8109 = vmul.u32 %v8104, %v8107
        %v8110 = vmul.u32 %v8105, %v8106
        %v8111 = vmul.u32 %v8105, %v8107
        %v8112 = vshll.u32 %v8109, 16
        %v8113 = vshrl.u32 %v8109, 16
        %v8114 = vshll.u32 %v8110, 16
        %v8115 = vshrl.u32 %v8110, 16
        %vm8116 = vc.u32 %v8108, %v8112
        %v8117 = vsel %vm8116, 1, 0
        %v8118 = vadd.s32 %v8108, %v8112
        %v8119 = vadd.s32 %v8111, %v8117
        %vm8120 = vc.u32 %v8118, %v8114
        %v8121 = vsel %vm8120, 1, 0
        %v8122 = vadd.s32 %v8118, %v8114
        %v8123 = vadd.s32 %v8119, %v8121
        %v8124 = vadd.s32 %v8123, %v8113
        %v8125 = vadd.s32 %v8124, %v8115
        %v8126 = vmul.u32 %v8081, %v8072
        %v8127 = vadd.s32 %v8103, %v8122
        %vm8128 = vc.u32 %v8103, %v8122
        %v8129 = vadd.s32 %v8125, 1
        %v8130 = vsel %vm8128, %v8129, %v8125
        %v8131 = vadd.s32 %v8126, %v8130
        %v8132 = vadd.s32 %v8131, 536870912
        %v8133 = vshrl.u32 %v8132, 30
        %v8134 = vshll.u32 %v8133, 30
        %v8135 = vsub.s32 %v8131, %v8134
        %vm8136 = vcmp.lt.s32.totalorder %v8135, 0
        %v8137 = vsub.s32 0, %v8135
        %v8138 = vsel %vm8136, %v8137, %v8135
        %v8139 = vclz %v8138
        %v8140 = vsub.s32 %v8139, 2
        %vm8141 = vcmp.gt.s32.totalorder 0, %v8140
        %v8142 = vsel %vm8141, 0, %v8140
        %v8143 = vsub.s32 32, %v8142
        %v8144 = vshll.u32 %v8135, %v8142
        %v8145 = vshrl.u32 %v8127, %v8143
        %v8146 = vor.u32 %v8144, %v8145
        %v8147 = vsub.s32 4294967266, %v8142
        %v8148 = vadd.s32 %v8147, 127
        %v8149 = vshll.u32 %v8148, 23
        %v8150 = vor.u32 4788187, %v8149
        %v8151 = vand.u32 2147483647, %v8150
        %v8153 = vcvt.s32.f32 %v8146
        %v8154 = vmul.f32 %v8153, %v8151
        %v8155 = vxor.u32 %v8154, 2147483648
        %v8156 = vsel %vm8035, %v8155, %v8154
        %v8157 = vsub.s32 4, %v8133
        %v8158 = vsel %vm8035, %v8157, %v8133
        %v8159 = vsel %vm8034, %v5916, %v8156
        %v8160 = vsel %vm8034, 0, %v8158
        %v8161 = vmul.f32 %v8159, %v8159
        %v8162 = vmul.f32 %v8161, -0.001358992
        %v8163 = vadd.f32 %v8162, 0.041655596
        %v8164 = vmul.f32 %v8161, %v8163
        %v8165 = vadd.f32 %v8164, -0.4999988
        %v8166 = vmul.f32 %v8161, %v8165
        %v8167 = vadd.f32 1.0, %v8166
        %v8168 = vmul.f32 %v8159, %v8159
        %v8169 = vmul.f32 %v8168, -0.00019511016
        %v8170 = vadd.f32 %v8169, 0.008332121
        %v8171 = vmul.f32 %v8168, %v8170
        %v8172 = vadd.f32 %v8171, -0.16666654
        %v8173 = vmul.f32 %v8168, %v8172
        %v8174 = vadd.f32 %v8173, 1.0
        %v8175 = vmul.f32 %v8174, %v8159
        %vm8176 = vweird.f32 %v5916
        %v8177 = vadd.s32 %v8160, 3
        %v8178 = vand.u32 %v8177, 3
        %vm8179 = vcmp.lt.s32.totalorder %v8178, 2
        %vm8180 = vcmp.eq.s32.totalorder %v8178, 0
        %v8181 = vxor.u32 %v8175, 2147483648
        %v8182 = vsel %vm8180, %v8167, %v8181
        %vm8183 = vcmp.eq.s32.totalorder %v8178, 2
        %v8184 = vxor.u32 %v8167, 2147483648
        %v8185 = vsel %vm8183, %v8184, %v8175
        %v8186 = vsel %vm8179, %v8182, %v8185
        %v8187 = vsel %vm8176, nan, %v8186
        %v8188 = vand.u32 2147483647, %v5957
        %vm8189 = vcmp.le.f32.partialorder %v8188, 0.7853982
        %vm8190 = vcmp.lt.s32.totalorder %v5957, 0
        %v8191 = vand.u32 %v5957, 2139095040
        %v8192 = vshrl.u32 %v8191, 23
        %v8193 = vsub.s32 %v8192, 127
        %v8194 = vand.u32 2147483647, %v5957
        %v8195 = vand.u32 %v8194, 8388607
        %v8196 = vor.u32 %v8195, 8388608
        %v8197 = vsub.s32 0, %v8196
        %v8198 = vadd.s32 %v8193, 1
        %vm8199 = vcmp.gt.s32.totalorder %v8198, 0
        %v8200 = vsel %vm8199, %v8198, 0
        %v8201 = vshrl.u32 %v8200, 5
        %v8202 = vand.u32 %v8200, 31
        %v8203 = vsub.s32 32, %v8202
        %v8204 = vshrl.u32 683565275, %v8203
        %v8205 = vshll.u32 683565275, %v8202
        %v8206 = vshrl.u32 2475754826, %v8203
        %v8207 = vor.u32 %v8205, %v8206
        %v8208 = vshll.u32 2475754826, %v8202
        %v8209 = vshrl.u32 2131351028, %v8203
        %v8210 = vor.u32 %v8208, %v8209
        %v8211 = vshll.u32 2131351028, %v8202
        %v8212 = vshrl.u32 2102212464, %v8203
        %v8213 = vor.u32 %v8211, %v8212
        %v8214 = vshll.u32 2102212464, %v8202
        %v8215 = vshrl.u32 920167782, %v8203
        %v8216 = vor.u32 %v8214, %v8215
        %v8217 = vshll.u32 920167782, %v8202
        %v8218 = vshrl.u32 1326507024, %v8203
        %v8219 = vor.u32 %v8217, %v8218
        %vm8220 = vcmp.lt.s32.totalorder %v8201, 1
        %vm8221 = vcmp.lt.s32.totalorder %v8201, 2
        %vm8222 = vcmp.lt.s32.totalorder %v8201, 3
        %vm8223 = vcmp.lt.s32.totalorder %v8201, 4
        %v8224 = vsel %vm8220, %v8204, %v8207
        %v8225 = vsel %vm8223, %v8213, 2102212464
        %v8226 = vsel %vm8222, %v8210, %v8225
        %v8227 = vsel %vm8221, %v8224, %v8226
        %v8228 = vsel %vm8220, %v8207, %v8210
        %v8229 = vsel %vm8223, %v8216, 920167782
        %v8230 = vsel %vm8222, %v8213, %v8229
        %v8231 = vsel %vm8221, %v8228, %v8230
        %v8232 = vsel %vm8220, %v8210, %v8213
        %v8233 = vsel %vm8223, %v8219, 1326507024
        %v8234 = vsel %vm8222, %v8216, %v8233
        %v8235 = vsel %vm8221, %v8232, %v8234
        %v8236 = vshll.u32 %v8196, 8
        %v8237 = vand.u32 %v8236, 65535
        %v8238 = vshrl.u32 %v8236, 16
        %v8239 = vand.u32 %v8235, 65535
        %v8240 = vshrl.u32 %v8235, 16
        %v8241 = vmul.u32 %v8237, %v8239
        %v8242 = vmul.u32 %v8237, %v8240
        %v8243 = vmul.u32 %v8238, %v8239
        %v8244 = vmul.u32 %v8238, %v8240
        %v8245 = vshll.u32 %v8242, 16
        %v8246 = vshrl.u32 %v8242, 16
        %v8247 = vshll.u32 %v8243, 16
        %v8248 = vshrl.u32 %v8243, 16
        %vm8249 = vc.u32 %v8241, %v8245
        %v8250 = vsel %vm8249, 1, 0
        %v8251 = vadd.s32 %v8241, %v8245
        %v8252 = vadd.s32 %v8244, %v8250
        %vm8253 = vc.u32 %v8251, %v8247
        %v8254 = vsel %vm8253, 1, 0
        %v8255 = vadd.s32 %v8251, %v8247
        %v8256 = vadd.s32 %v8252, %v8254
        %v8257 = vadd.s32 %v8256, %v8246
        %v8258 = vadd.s32 %v8257, %v8248
        %v8259 = vand.u32 %v8236, 65535
        %v8260 = vshrl.u32 %v8236, 16
        %v8261 = vand.u32 %v8231, 65535
        %v8262 = vshrl.u32 %v8231, 16
        %v8263 = vmul.u32 %v8259, %v8261
        %v8264 = vmul.u32 %v8259, %v8262
        %v8265 = vmul.u32 %v8260, %v8261
        %v8266 = vmul.u32 %v8260, %v8262
        %v8267 = vshll.u32 %v8264, 16
        %v8268 = vshrl.u32 %v8264, 16
        %v8269 = vshll.u32 %v8265, 16
        %v8270 = vshrl.u32 %v8265, 16
        %vm8271 = vc.u32 %v8263, %v8267
        %v8272 = vsel %vm8271, 1, 0
        %v8273 = vadd.s32 %v8263, %v8267
        %v8274 = vadd.s32 %v8266, %v8272
        %vm8275 = vc.u32 %v8273, %v8269
        %v8276 = vsel %vm8275, 1, 0
        %v8277 = vadd.s32 %v8273, %v8269
        %v8278 = vadd.s32 %v8274, %v8276
        %v8279 = vadd.s32 %v8278, %v8268
        %v8280 = vadd.s32 %v8279, %v8270
        %v8281 = vmul.u32 %v8236, %v8227
        %v8282 = vadd.s32 %v8258, %v8277
        %vm8283 = vc.u32 %v8258, %v8277
        %v8284 = vadd.s32 %v8280, 1
        %v8285 = vsel %vm8283, %v8284, %v8280
        %v8286 = vadd.s32 %v8281, %v8285
        %v8287 = vadd.s32 %v8286, 536870912
        %v8288 = vshrl.u32 %v8287, 30
        %v8289 = vshll.u32 %v8288, 30
        %v8290 = vsub.s32 %v8286, %v8289
        %vm8291 = vcmp.lt.s32.totalorder %v8290, 0
        %v8292 = vsub.s32 0, %v8290
        %v8293 = vsel %vm8291, %v8292, %v8290
        %v8294 = vclz %v8293
        %v8295 = vsub.s32 %v8294, 2
        %vm8296 = vcmp.gt.s32.totalorder 0, %v8295
        %v8297 = vsel %vm8296, 0, %v8295
        %v8298 = vsub.s32 32, %v8297
        %v8299 = vshll.u32 %v8290, %v8297
        %v8300 = vshrl.u32 %v8282, %v8298
        %v8301 = vor.u32 %v8299, %v8300
        %v8302 = vsub.s32 4294967266, %v8297
        %v8303 = vadd.s32 %v8302, 127
        %v8304 = vshll.u32 %v8303, 23
        %v8305 = vor.u32 4788187, %v8304
        %v8306 = vand.u32 2147483647, %v8305
        %v8308 = vcvt.s32.f32 %v8301
        %v8309 = vmul.f32 %v8308, %v8306
        %v8310 = vxor.u32 %v8309, 2147483648
        %v8311 = vsel %vm8190, %v8310, %v8309
        %v8312 = vsub.s32 4, %v8288
        %v8313 = vsel %vm8190, %v8312, %v8288
        %v8314 = vsel %vm8189, %v5957, %v8311
        %v8315 = vsel %vm8189, 0, %v8313
        %v8316 = vmul.f32 %v8314, %v8314
        %v8317 = vmul.f32 %v8316, -0.001358992
        %v8318 = vadd.f32 %v8317, 0.041655596
        %v8319 = vmul.f32 %v8316, %v8318
        %v8320 = vadd.f32 %v8319, -0.4999988
        %v8321 = vmul.f32 %v8316, %v8320
        %v8322 = vadd.f32 1.0, %v8321
        %v8323 = vmul.f32 %v8314, %v8314
        %v8324 = vmul.f32 %v8323, -0.00019511016
        %v8325 = vadd.f32 %v8324, 0.008332121
        %v8326 = vmul.f32 %v8323, %v8325
        %v8327 = vadd.f32 %v8326, -0.16666654
        %v8328 = vmul.f32 %v8323, %v8327
        %v8329 = vadd.f32 %v8328, 1.0
        %v8330 = vmul.f32 %v8329, %v8314
        %vm8331 = vweird.f32 %v5957
        %v8332 = vadd.s32 %v8315, 3
        %v8333 = vand.u32 %v8332, 3
        %vm8334 = vcmp.lt.s32.totalorder %v8333, 2
        %vm8335 = vcmp.eq.s32.totalorder %v8333, 0
        %v8336 = vxor.u32 %v8330, 2147483648
        %v8337 = vsel %vm8335, %v8322, %v8336
        %vm8338 = vcmp.eq.s32.totalorder %v8333, 2
        %v8339 = vxor.u32 %v8322, 2147483648
        %v8340 = vsel %vm8338, %v8339, %v8330
        %v8341 = vsel %vm8334, %v8337, %v8340
        %v8342 = vsel %vm8331, nan, %v8341
        %v8343 = vand.u32 2147483647, %v5998
        %vm8344 = vcmp.le.f32.partialorder %v8343, 0.7853982
        %vm8345 = vcmp.lt.s32.totalorder %v5998, 0
        %v8346 = vand.u32 %v5998, 2139095040
        %v8347 = vshrl.u32 %v8346, 23
        %v8348 = vsub.s32 %v8347, 127
        %v8349 = vand.u32 2147483647, %v5998
        %v8350 = vand.u32 %v8349, 8388607
        %v8351 = vor.u32 %v8350, 8388608
        %v8352 = vsub.s32 0, %v8351
        %v8353 = vadd.s32 %v8348, 1
        %vm8354 = vcmp.gt.s32.totalorder %v8353, 0
        %v8355 = vsel %vm8354, %v8353, 0
        %v8356 = vshrl.u32 %v8355, 5
        %v8357 = vand.u32 %v8355, 31
        %v8358 = vsub.s32 32, %v8357
        %v8359 = vshrl.u32 683565275, %v8358
        %v8360 = vshll.u32 683565275, %v8357
        %v8361 = vshrl.u32 2475754826, %v8358
        %v8362 = vor.u32 %v8360, %v8361
        %v8363 = vshll.u32 2475754826, %v8357
        %v8364 = vshrl.u32 2131351028, %v8358
        %v8365 = vor.u32 %v8363, %v8364
        %v8366 = vshll.u32 2131351028, %v8357
        %v8367 = vshrl.u32 2102212464, %v8358
        %v8368 = vor.u32 %v8366, %v8367
        %v8369 = vshll.u32 2102212464, %v8357
        %v8370 = vshrl.u32 920167782, %v8358
        %v8371 = vor.u32 %v8369, %v8370
        %v8372 = vshll.u32 920167782, %v8357
        %v8373 = vshrl.u32 1326507024, %v8358
        %v8374 = vor.u32 %v8372, %v8373
        %vm8375 = vcmp.lt.s32.totalorder %v8356, 1
        %vm8376 = vcmp.lt.s32.totalorder %v8356, 2
        %vm8377 = vcmp.lt.s32.totalorder %v8356, 3
        %vm8378 = vcmp.lt.s32.totalorder %v8356, 4
        %v8379 = vsel %vm8375, %v8359, %v8362
        %v8380 = vsel %vm8378, %v8368, 2102212464
        %v8381 = vsel %vm8377, %v8365, %v8380
        %v8382 = vsel %vm8376, %v8379, %v8381
        %v8383 = vsel %vm8375, %v8362, %v8365
        %v8384 = vsel %vm8378, %v8371, 920167782
        %v8385 = vsel %vm8377, %v8368, %v8384
        %v8386 = vsel %vm8376, %v8383, %v8385
        %v8387 = vsel %vm8375, %v8365, %v8368
        %v8388 = vsel %vm8378, %v8374, 1326507024
        %v8389 = vsel %vm8377, %v8371, %v8388
        %v8390 = vsel %vm8376, %v8387, %v8389
        %v8391 = vshll.u32 %v8351, 8
        %v8392 = vand.u32 %v8391, 65535
        %v8393 = vshrl.u32 %v8391, 16
        %v8394 = vand.u32 %v8390, 65535
        %v8395 = vshrl.u32 %v8390, 16
        %v8396 = vmul.u32 %v8392, %v8394
        %v8397 = vmul.u32 %v8392, %v8395
        %v8398 = vmul.u32 %v8393, %v8394
        %v8399 = vmul.u32 %v8393, %v8395
        %v8400 = vshll.u32 %v8397, 16
        %v8401 = vshrl.u32 %v8397, 16
        %v8402 = vshll.u32 %v8398, 16
        %v8403 = vshrl.u32 %v8398, 16
        %vm8404 = vc.u32 %v8396, %v8400
        %v8405 = vsel %vm8404, 1, 0
        %v8406 = vadd.s32 %v8396, %v8400
        %v8407 = vadd.s32 %v8399, %v8405
        %vm8408 = vc.u32 %v8406, %v8402
        %v8409 = vsel %vm8408, 1, 0
        %v8410 = vadd.s32 %v8406, %v8402
        %v8411 = vadd.s32 %v8407, %v8409
        %v8412 = vadd.s32 %v8411, %v8401
        %v8413 = vadd.s32 %v8412, %v8403
        %v8414 = vand.u32 %v8391, 65535
        %v8415 = vshrl.u32 %v8391, 16
        %v8416 = vand.u32 %v8386, 65535
        %v8417 = vshrl.u32 %v8386, 16
        %v8418 = vmul.u32 %v8414, %v8416
        %v8419 = vmul.u32 %v8414, %v8417
        %v8420 = vmul.u32 %v8415, %v8416
        %v8421 = vmul.u32 %v8415, %v8417
        %v8422 = vshll.u32 %v8419, 16
        %v8423 = vshrl.u32 %v8419, 16
        %v8424 = vshll.u32 %v8420, 16
        %v8425 = vshrl.u32 %v8420, 16
        %vm8426 = vc.u32 %v8418, %v8422
        %v8427 = vsel %vm8426, 1, 0
        %v8428 = vadd.s32 %v8418, %v8422
        %v8429 = vadd.s32 %v8421, %v8427
        %vm8430 = vc.u32 %v8428, %v8424
        %v8431 = vsel %vm8430, 1, 0
        %v8432 = vadd.s32 %v8428, %v8424
        %v8433 = vadd.s32 %v8429, %v8431
        %v8434 = vadd.s32 %v8433, %v8423
        %v8435 = vadd.s32 %v8434, %v8425
        %v8436 = vmul.u32 %v8391, %v8382
        %v8437 = vadd.s32 %v8413, %v8432
        %vm8438 = vc.u32 %v8413, %v8432
        %v8439 = vadd.s32 %v8435, 1
        %v8440 = vsel %vm8438, %v8439, %v8435
        %v8441 = vadd.s32 %v8436, %v8440
        %v8442 = vadd.s32 %v8441, 536870912
        %v8443 = vshrl.u32 %v8442, 30
        %v8444 = vshll.u32 %v8443, 30
        %v8445 = vsub.s32 %v8441, %v8444
        %vm8446 = vcmp.lt.s32.totalorder %v8445, 0
        %v8447 = vsub.s32 0, %v8445
        %v8448 = vsel %vm8446, %v8447, %v8445
        %v8449 = vclz %v8448
        %v8450 = vsub.s32 %v8449, 2
        %vm8451 = vcmp.gt.s32.totalorder 0, %v8450
        %v8452 = vsel %vm8451, 0, %v8450
        %v8453 = vsub.s32 32, %v8452
        %v8454 = vshll.u32 %v8445, %v8452
        %v8455 = vshrl.u32 %v8437, %v8453
        %v8456 = vor.u32 %v8454, %v8455
        %v8457 = vsub.s32 4294967266, %v8452
        %v8458 = vadd.s32 %v8457, 127
        %v8459 = vshll.u32 %v8458, 23
        %v8460 = vor.u32 4788187, %v8459
        %v8461 = vand.u32 2147483647, %v8460
        %v8463 = vcvt.s32.f32 %v8456
        %v8464 = vmul.f32 %v8463, %v8461
        %v8465 = vxor.u32 %v8464, 2147483648
        %v8466 = vsel %vm8345, %v8465, %v8464
        %v8467 = vsub.s32 4, %v8443
        %v8468 = vsel %vm8345, %v8467, %v8443
        %v8469 = vsel %vm8344, %v5998, %v8466
        %v8470 = vsel %vm8344, 0, %v8468
        %v8471 = vmul.f32 %v8469, %v8469
        %v8472 = vmul.f32 %v8471, -0.001358992
        %v8473 = vadd.f32 %v8472, 0.041655596
        %v8474 = vmul.f32 %v8471, %v8473
        %v8475 = vadd.f32 %v8474, -0.4999988
        %v8476 = vmul.f32 %v8471, %v8475
        %v8477 = vadd.f32 1.0, %v8476
        %v8478 = vmul.f32 %v8469, %v8469
        %v8479 = vmul.f32 %v8478, -0.00019511016
        %v8480 = vadd.f32 %v8479, 0.008332121
        %v8481 = vmul.f32 %v8478, %v8480
        %v8482 = vadd.f32 %v8481, -0.16666654
        %v8483 = vmul.f32 %v8478, %v8482
        %v8484 = vadd.f32 %v8483, 1.0
        %v8485 = vmul.f32 %v8484, %v8469
        %vm8486 = vweird.f32 %v5998
        %v8487 = vadd.s32 %v8470, 3
        %v8488 = vand.u32 %v8487, 3
        %vm8489 = vcmp.lt.s32.totalorder %v8488, 2
        %vm8490 = vcmp.eq.s32.totalorder %v8488, 0
        %v8491 = vxor.u32 %v8485, 2147483648
        %v8492 = vsel %vm8490, %v8477, %v8491
        %vm8493 = vcmp.eq.s32.totalorder %v8488, 2
        %v8494 = vxor.u32 %v8477, 2147483648
        %v8495 = vsel %vm8493, %v8494, %v8485
        %v8496 = vsel %vm8489, %v8492, %v8495
        %v8497 = vsel %vm8486, nan, %v8496
        %v8498 = vand.u32 2147483647, %v5714
        %vm8499 = vcmp.le.f32.partialorder %v8498, 0.7853982
        %vm8500 = vcmp.lt.s32.totalorder %v5714, 0
        %v8501 = vand.u32 %v5714, 2139095040
        %v8502 = vshrl.u32 %v8501, 23
        %v8503 = vsub.s32 %v8502, 127
        %v8504 = vand.u32 2147483647, %v5714
        %v8505 = vand.u32 %v8504, 8388607
        %v8506 = vor.u32 %v8505, 8388608
        %v8507 = vsub.s32 0, %v8506
        %v8508 = vadd.s32 %v8503, 1
        %vm8509 = vcmp.gt.s32.totalorder %v8508, 0
        %v8510 = vsel %vm8509, %v8508, 0
        %v8511 = vshrl.u32 %v8510, 5
        %v8512 = vand.u32 %v8510, 31
        %v8513 = vsub.s32 32, %v8512
        %v8514 = vshrl.u32 683565275, %v8513
        %v8515 = vshll.u32 683565275, %v8512
        %v8516 = vshrl.u32 2475754826, %v8513
        %v8517 = vor.u32 %v8515, %v8516
        %v8518 = vshll.u32 2475754826, %v8512
        %v8519 = vshrl.u32 2131351028, %v8513
        %v8520 = vor.u32 %v8518, %v8519
        %v8521 = vshll.u32 2131351028, %v8512
        %v8522 = vshrl.u32 2102212464, %v8513
        %v8523 = vor.u32 %v8521, %v8522
        %v8524 = vshll.u32 2102212464, %v8512
        %v8525 = vshrl.u32 920167782, %v8513
        %v8526 = vor.u32 %v8524, %v8525
        %v8527 = vshll.u32 920167782, %v8512
        %v8528 = vshrl.u32 1326507024, %v8513
        %v8529 = vor.u32 %v8527, %v8528
        %vm8530 = vcmp.lt.s32.totalorder %v8511, 1
        %vm8531 = vcmp.lt.s32.totalorder %v8511, 2
        %vm8532 = vcmp.lt.s32.totalorder %v8511, 3
        %vm8533 = vcmp.lt.s32.totalorder %v8511, 4
        %v8534 = vsel %vm8530, %v8514, %v8517
        %v8535 = vsel %vm8533, %v8523, 2102212464
        %v8536 = vsel %vm8532, %v8520, %v8535
        %v8537 = vsel %vm8531, %v8534, %v8536
        %v8538 = vsel %vm8530, %v8517, %v8520
        %v8539 = vsel %vm8533, %v8526, 920167782
        %v8540 = vsel %vm8532, %v8523, %v8539
        %v8541 = vsel %vm8531, %v8538, %v8540
        %v8542 = vsel %vm8530, %v8520, %v8523
        %v8543 = vsel %vm8533, %v8529, 1326507024
        %v8544 = vsel %vm8532, %v8526, %v8543
        %v8545 = vsel %vm8531, %v8542, %v8544
        %v8546 = vshll.u32 %v8506, 8
        %v8547 = vand.u32 %v8546, 65535
        %v8548 = vshrl.u32 %v8546, 16
        %v8549 = vand.u32 %v8545, 65535
        %v8550 = vshrl.u32 %v8545, 16
        %v8551 = vmul.u32 %v8547, %v8549
        %v8552 = vmul.u32 %v8547, %v8550
        %v8553 = vmul.u32 %v8548, %v8549
        %v8554 = vmul.u32 %v8548, %v8550
        %v8555 = vshll.u32 %v8552, 16
        %v8556 = vshrl.u32 %v8552, 16
        %v8557 = vshll.u32 %v8553, 16
        %v8558 = vshrl.u32 %v8553, 16
        %vm8559 = vc.u32 %v8551, %v8555
        %v8560 = vsel %vm8559, 1, 0
        %v8561 = vadd.s32 %v8551, %v8555
        %v8562 = vadd.s32 %v8554, %v8560
        %vm8563 = vc.u32 %v8561, %v8557
        %v8564 = vsel %vm8563, 1, 0
        %v8565 = vadd.s32 %v8561, %v8557
        %v8566 = vadd.s32 %v8562, %v8564
        %v8567 = vadd.s32 %v8566, %v8556
        %v8568 = vadd.s32 %v8567, %v8558
        %v8569 = vand.u32 %v8546, 65535
        %v8570 = vshrl.u32 %v8546, 16
        %v8571 = vand.u32 %v8541, 65535
        %v8572 = vshrl.u32 %v8541, 16
        %v8573 = vmul.u32 %v8569, %v8571
        %v8574 = vmul.u32 %v8569, %v8572
        %v8575 = vmul.u32 %v8570, %v8571
        %v8576 = vmul.u32 %v8570, %v8572
        %v8577 = vshll.u32 %v8574, 16
        %v8578 = vshrl.u32 %v8574, 16
        %v8579 = vshll.u32 %v8575, 16
        %v8580 = vshrl.u32 %v8575, 16
        %vm8581 = vc.u32 %v8573, %v8577
        %v8582 = vsel %vm8581, 1, 0
        %v8583 = vadd.s32 %v8573, %v8577
        %v8584 = vadd.s32 %v8576, %v8582
        %vm8585 = vc.u32 %v8583, %v8579
        %v8586 = vsel %vm8585, 1, 0
        %v8587 = vadd.s32 %v8583, %v8579
        %v8588 = vadd.s32 %v8584, %v8586
        %v8589 = vadd.s32 %v8588, %v8578
        %v8590 = vadd.s32 %v8589, %v8580
        %v8591 = vmul.u32 %v8546, %v8537
        %v8592 = vadd.s32 %v8568, %v8587
        %vm8593 = vc.u32 %v8568, %v8587
        %v8594 = vadd.s32 %v8590, 1
        %v8595 = vsel %vm8593, %v8594, %v8590
        %v8596 = vadd.s32 %v8591, %v8595
        %v8597 = vadd.s32 %v8596, 536870912
        %v8598 = vshrl.u32 %v8597, 30
        %v8599 = vshll.u32 %v8598, 30
        %v8600 = vsub.s32 %v8596, %v8599
        %vm8601 = vcmp.lt.s32.totalorder %v8600, 0
        %v8602 = vsub.s32 0, %v8600
        %v8603 = vsel %vm8601, %v8602, %v8600
        %v8604 = vclz %v8603
        %v8605 = vsub.s32 %v8604, 2
        %vm8606 = vcmp.gt.s32.totalorder 0, %v8605
        %v8607 = vsel %vm8606, 0, %v8605
        %v8608 = vsub.s32 32, %v8607
        %v8609 = vshll.u32 %v8600, %v8607
        %v8610 = vshrl.u32 %v8592, %v8608
        %v8611 = vor.u32 %v8609, %v8610
        %v8612 = vsub.s32 4294967266, %v8607
        %v8613 = vadd.s32 %v8612, 127
        %v8614 = vshll.u32 %v8613, 23
        %v8615 = vor.u32 4788187, %v8614
        %v8616 = vand.u32 2147483647, %v8615
        %v8618 = vcvt.s32.f32 %v8611
        %v8619 = vmul.f32 %v8618, %v8616
        %v8620 = vxor.u32 %v8619, 2147483648
        %v8621 = vsel %vm8500, %v8620, %v8619
        %v8622 = vsub.s32 4, %v8598
        %v8623 = vsel %vm8500, %v8622, %v8598
        %v8624 = vsel %vm8499, %v5714, %v8621
        %v8625 = vsel %vm8499, 0, %v8623
        %v8626 = vmul.f32 %v8624, %v8624
        %v8627 = vmul.f32 %v8626, -0.001358992
        %v8628 = vadd.f32 %v8627, 0.041655596
        %v8629 = vmul.f32 %v8626, %v8628
        %v8630 = vadd.f32 %v8629, -0.4999988
        %v8631 = vmul.f32 %v8626, %v8630
        %v8632 = vadd.f32 1.0, %v8631
        %v8633 = vmul.f32 %v8624, %v8624
        %v8634 = vmul.f32 %v8633, -0.00019511016
        %v8635 = vadd.f32 %v8634, 0.008332121
        %v8636 = vmul.f32 %v8633, %v8635
        %v8637 = vadd.f32 %v8636, -0.16666654
        %v8638 = vmul.f32 %v8633, %v8637
        %v8639 = vadd.f32 %v8638, 1.0
        %v8640 = vmul.f32 %v8639, %v8624
        %vm8641 = vweird.f32 %v5714
        %v8642 = vadd.s32 %v8625, 3
        %v8643 = vand.u32 %v8642, 3
        %vm8644 = vcmp.lt.s32.totalorder %v8643, 2
        %vm8645 = vcmp.eq.s32.totalorder %v8643, 0
        %v8646 = vxor.u32 %v8640, 2147483648
        %v8647 = vsel %vm8645, %v8632, %v8646
        %vm8648 = vcmp.eq.s32.totalorder %v8643, 2
        %v8649 = vxor.u32 %v8632, 2147483648
        %v8650 = vsel %vm8648, %v8649, %v8640
        %v8651 = vsel %vm8644, %v8647, %v8650
        %v8652 = vsel %vm8641, nan, %v8651
        %v8653 = vand.u32 2147483647, %v5755
        %vm8654 = vcmp.le.f32.partialorder %v8653, 0.7853982
        %vm8655 = vcmp.lt.s32.totalorder %v5755, 0
        %v8656 = vand.u32 %v5755, 2139095040
        %v8657 = vshrl.u32 %v8656, 23
        %v8658 = vsub.s32 %v8657, 127
        %v8659 = vand.u32 2147483647, %v5755
        %v8660 = vand.u32 %v8659, 8388607
        %v8661 = vor.u32 %v8660, 8388608
        %v8662 = vsub.s32 0, %v8661
        %v8663 = vadd.s32 %v8658, 1
        %vm8664 = vcmp.gt.s32.totalorder %v8663, 0
        %v8665 = vsel %vm8664, %v8663, 0
        %v8666 = vshrl.u32 %v8665, 5
        %v8667 = vand.u32 %v8665, 31
        %v8668 = vsub.s32 32, %v8667
        %v8669 = vshrl.u32 683565275, %v8668
        %v8670 = vshll.u32 683565275, %v8667
        %v8671 = vshrl.u32 2475754826, %v8668
        %v8672 = vor.u32 %v8670, %v8671
        %v8673 = vshll.u32 2475754826, %v8667
        %v8674 = vshrl.u32 2131351028, %v8668
        %v8675 = vor.u32 %v8673, %v8674
        %v8676 = vshll.u32 2131351028, %v8667
        %v8677 = vshrl.u32 2102212464, %v8668
        %v8678 = vor.u32 %v8676, %v8677
        %v8679 = vshll.u32 2102212464, %v8667
        %v8680 = vshrl.u32 920167782, %v8668
        %v8681 = vor.u32 %v8679, %v8680
        %v8682 = vshll.u32 920167782, %v8667
        %v8683 = vshrl.u32 1326507024, %v8668
        %v8684 = vor.u32 %v8682, %v8683
        %vm8685 = vcmp.lt.s32.totalorder %v8666, 1
        %vm8686 = vcmp.lt.s32.totalorder %v8666, 2
        %vm8687 = vcmp.lt.s32.totalorder %v8666, 3
        %vm8688 = vcmp.lt.s32.totalorder %v8666, 4
        %v8689 = vsel %vm8685, %v8669, %v8672
        %v8690 = vsel %vm8688, %v8678, 2102212464
        %v8691 = vsel %vm8687, %v8675, %v8690
        %v8692 = vsel %vm8686, %v8689, %v8691
        %v8693 = vsel %vm8685, %v8672, %v8675
        %v8694 = vsel %vm8688, %v8681, 920167782
        %v8695 = vsel %vm8687, %v8678, %v8694
        %v8696 = vsel %vm8686, %v8693, %v8695
        %v8697 = vsel %vm8685, %v8675, %v8678
        %v8698 = vsel %vm8688, %v8684, 1326507024
        %v8699 = vsel %vm8687, %v8681, %v8698
        %v8700 = vsel %vm8686, %v8697, %v8699
        %v8701 = vshll.u32 %v8661, 8
        %v8702 = vand.u32 %v8701, 65535
        %v8703 = vshrl.u32 %v8701, 16
        %v8704 = vand.u32 %v8700, 65535
        %v8705 = vshrl.u32 %v8700, 16
        %v8706 = vmul.u32 %v8702, %v8704
        %v8707 = vmul.u32 %v8702, %v8705
        %v8708 = vmul.u32 %v8703, %v8704
        %v8709 = vmul.u32 %v8703, %v8705
        %v8710 = vshll.u32 %v8707, 16
        %v8711 = vshrl.u32 %v8707, 16
        %v8712 = vshll.u32 %v8708, 16
        %v8713 = vshrl.u32 %v8708, 16
        %vm8714 = vc.u32 %v8706, %v8710
        %v8715 = vsel %vm8714, 1, 0
        %v8716 = vadd.s32 %v8706, %v8710
        %v8717 = vadd.s32 %v8709, %v8715
        %vm8718 = vc.u32 %v8716, %v8712
        %v8719 = vsel %vm8718, 1, 0
        %v8720 = vadd.s32 %v8716, %v8712
        %v8721 = vadd.s32 %v8717, %v8719
        %v8722 = vadd.s32 %v8721, %v8711
        %v8723 = vadd.s32 %v8722, %v8713
        %v8724 = vand.u32 %v8701, 65535
        %v8725 = vshrl.u32 %v8701, 16
        %v8726 = vand.u32 %v8696, 65535
        %v8727 = vshrl.u32 %v8696, 16
        %v8728 = vmul.u32 %v8724, %v8726
        %v8729 = vmul.u32 %v8724, %v8727
        %v8730 = vmul.u32 %v8725, %v8726
        %v8731 = vmul.u32 %v8725, %v8727
        %v8732 = vshll.u32 %v8729, 16
        %v8733 = vshrl.u32 %v8729, 16
        %v8734 = vshll.u32 %v8730, 16
        %v8735 = vshrl.u32 %v8730, 16
        %vm8736 = vc.u32 %v8728, %v8732
        %v8737 = vsel %vm8736, 1, 0
        %v8738 = vadd.s32 %v8728, %v8732
        %v8739 = vadd.s32 %v8731, %v8737
        %vm8740 = vc.u32 %v8738, %v8734
        %v8741 = vsel %vm8740, 1, 0
        %v8742 = vadd.s32 %v8738, %v8734
        %v8743 = vadd.s32 %v8739, %v8741
        %v8744 = vadd.s32 %v8743, %v8733
        %v8745 = vadd.s32 %v8744, %v8735
        %v8746 = vmul.u32 %v8701, %v8692
        %v8747 = vadd.s32 %v8723, %v8742
        %vm8748 = vc.u32 %v8723, %v8742
        %v8749 = vadd.s32 %v8745, 1
        %v8750 = vsel %vm8748, %v8749, %v8745
        %v8751 = vadd.s32 %v8746, %v8750
        %v8752 = vadd.s32 %v8751, 536870912
        %v8753 = vshrl.u32 %v8752, 30
        %v8754 = vshll.u32 %v8753, 30
        %v8755 = vsub.s32 %v8751, %v8754
        %vm8756 = vcmp.lt.s32.totalorder %v8755, 0
        %v8757 = vsub.s32 0, %v8755
        %v8758 = vsel %vm8756, %v8757, %v8755
        %v8759 = vclz %v8758
        %v8760 = vsub.s32 %v8759, 2
        %vm8761 = vcmp.gt.s32.totalorder 0, %v8760
        %v8762 = vsel %vm8761, 0, %v8760
        %v8763 = vsub.s32 32, %v8762
        %v8764 = vshll.u32 %v8755, %v8762
        %v8765 = vshrl.u32 %v8747, %v8763
        %v8766 = vor.u32 %v8764, %v8765
        %v8767 = vsub.s32 4294967266, %v8762
        %v8768 = vadd.s32 %v8767, 127
        %v8769 = vshll.u32 %v8768, 23
        %v8770 = vor.u32 4788187, %v8769
        %v8771 = vand.u32 2147483647, %v8770
        %v8773 = vcvt.s32.f32 %v8766
        %v8774 = vmul.f32 %v8773, %v8771
        %v8775 = vxor.u32 %v8774, 2147483648
        %v8776 = vsel %vm8655, %v8775, %v8774
        %v8777 = vsub.s32 4, %v8753
        %v8778 = vsel %vm8655, %v8777, %v8753
        %v8779 = vsel %vm8654, %v5755, %v8776
        %v8780 = vsel %vm8654, 0, %v8778
        %v8781 = vmul.f32 %v8779, %v8779
        %v8782 = vmul.f32 %v8781, -0.001358992
        %v8783 = vadd.f32 %v8782, 0.041655596
        %v8784 = vmul.f32 %v8781, %v8783
        %v8785 = vadd.f32 %v8784, -0.4999988
        %v8786 = vmul.f32 %v8781, %v8785
        %v8787 = vadd.f32 1.0, %v8786
        %v8788 = vmul.f32 %v8779, %v8779
        %v8789 = vmul.f32 %v8788, -0.00019511016
        %v8790 = vadd.f32 %v8789, 0.008332121
        %v8791 = vmul.f32 %v8788, %v8790
        %v8792 = vadd.f32 %v8791, -0.16666654
        %v8793 = vmul.f32 %v8788, %v8792
        %v8794 = vadd.f32 %v8793, 1.0
        %v8795 = vmul.f32 %v8794, %v8779
        %vm8796 = vweird.f32 %v5755
        %v8797 = vadd.s32 %v8780, 3
        %v8798 = vand.u32 %v8797, 3
        %vm8799 = vcmp.lt.s32.totalorder %v8798, 2
        %vm8800 = vcmp.eq.s32.totalorder %v8798, 0
        %v8801 = vxor.u32 %v8795, 2147483648
        %v8802 = vsel %vm8800, %v8787, %v8801
        %vm8803 = vcmp.eq.s32.totalorder %v8798, 2
        %v8804 = vxor.u32 %v8787, 2147483648
        %v8805 = vsel %vm8803, %v8804, %v8795
        %v8806 = vsel %vm8799, %v8802, %v8805
        %v8807 = vsel %vm8796, nan, %v8806
        %v8808 = vand.u32 2147483647, %v5796
        %vm8809 = vcmp.le.f32.partialorder %v8808, 0.7853982
        %vm8810 = vcmp.lt.s32.totalorder %v5796, 0
        %v8811 = vand.u32 %v5796, 2139095040
        %v8812 = vshrl.u32 %v8811, 23
        %v8813 = vsub.s32 %v8812, 127
        %v8814 = vand.u32 2147483647, %v5796
        %v8815 = vand.u32 %v8814, 8388607
        %v8816 = vor.u32 %v8815, 8388608
        %v8817 = vsub.s32 0, %v8816
        %v8818 = vadd.s32 %v8813, 1
        %vm8819 = vcmp.gt.s32.totalorder %v8818, 0
        %v8820 = vsel %vm8819, %v8818, 0
        %v8821 = vshrl.u32 %v8820, 5
        %v8822 = vand.u32 %v8820, 31
        %v8823 = vsub.s32 32, %v8822
        %v8824 = vshrl.u32 683565275, %v8823
        %v8825 = vshll.u32 683565275, %v8822
        %v8826 = vshrl.u32 2475754826, %v8823
        %v8827 = vor.u32 %v8825, %v8826
        %v8828 = vshll.u32 2475754826, %v8822
        %v8829 = vshrl.u32 2131351028, %v8823
        %v8830 = vor.u32 %v8828, %v8829
        %v8831 = vshll.u32 2131351028, %v8822
        %v8832 = vshrl.u32 2102212464, %v8823
        %v8833 = vor.u32 %v8831, %v8832
        %v8834 = vshll.u32 2102212464, %v8822
        %v8835 = vshrl.u32 920167782, %v8823
        %v8836 = vor.u32 %v8834, %v8835
        %v8837 = vshll.u32 920167782, %v8822
        %v8838 = vshrl.u32 1326507024, %v8823
        %v8839 = vor.u32 %v8837, %v8838
        %vm8840 = vcmp.lt.s32.totalorder %v8821, 1
        %vm8841 = vcmp.lt.s32.totalorder %v8821, 2
        %vm8842 = vcmp.lt.s32.totalorder %v8821, 3
        %vm8843 = vcmp.lt.s32.totalorder %v8821, 4
        %v8844 = vsel %vm8840, %v8824, %v8827
        %v8845 = vsel %vm8843, %v8833, 2102212464
        %v8846 = vsel %vm8842, %v8830, %v8845
        %v8847 = vsel %vm8841, %v8844, %v8846
        %v8848 = vsel %vm8840, %v8827, %v8830
        %v8849 = vsel %vm8843, %v8836, 920167782
        %v8850 = vsel %vm8842, %v8833, %v8849
        %v8851 = vsel %vm8841, %v8848, %v8850
        %v8852 = vsel %vm8840, %v8830, %v8833
        %v8853 = vsel %vm8843, %v8839, 1326507024
        %v8854 = vsel %vm8842, %v8836, %v8853
        %v8855 = vsel %vm8841, %v8852, %v8854
        %v8856 = vshll.u32 %v8816, 8
        %v8857 = vand.u32 %v8856, 65535
        %v8858 = vshrl.u32 %v8856, 16
        %v8859 = vand.u32 %v8855, 65535
        %v8860 = vshrl.u32 %v8855, 16
        %v8861 = vmul.u32 %v8857, %v8859
        %v8862 = vmul.u32 %v8857, %v8860
        %v8863 = vmul.u32 %v8858, %v8859
        %v8864 = vmul.u32 %v8858, %v8860
        %v8865 = vshll.u32 %v8862, 16
        %v8866 = vshrl.u32 %v8862, 16
        %v8867 = vshll.u32 %v8863, 16
        %v8868 = vshrl.u32 %v8863, 16
        %vm8869 = vc.u32 %v8861, %v8865
        %v8870 = vsel %vm8869, 1, 0
        %v8871 = vadd.s32 %v8861, %v8865
        %v8872 = vadd.s32 %v8864, %v8870
        %vm8873 = vc.u32 %v8871, %v8867
        %v8874 = vsel %vm8873, 1, 0
        %v8875 = vadd.s32 %v8871, %v8867
        %v8876 = vadd.s32 %v8872, %v8874
        %v8877 = vadd.s32 %v8876, %v8866
        %v8878 = vadd.s32 %v8877, %v8868
        %v8879 = vand.u32 %v8856, 65535
        %v8880 = vshrl.u32 %v8856, 16
        %v8881 = vand.u32 %v8851, 65535
        %v8882 = vshrl.u32 %v8851, 16
        %v8883 = vmul.u32 %v8879, %v8881
        %v8884 = vmul.u32 %v8879, %v8882
        %v8885 = vmul.u32 %v8880, %v8881
        %v8886 = vmul.u32 %v8880, %v8882
        %v8887 = vshll.u32 %v8884, 16
        %v8888 = vshrl.u32 %v8884, 16
        %v8889 = vshll.u32 %v8885, 16
        %v8890 = vshrl.u32 %v8885, 16
        %vm8891 = vc.u32 %v8883, %v8887
        %v8892 = vsel %vm8891, 1, 0
        %v8893 = vadd.s32 %v8883, %v8887
        %v8894 = vadd.s32 %v8886, %v8892
        %vm8895 = vc.u32 %v8893, %v8889
        %v8896 = vsel %vm8895, 1, 0
        %v8897 = vadd.s32 %v8893, %v8889
        %v8898 = vadd.s32 %v8894, %v8896
        %v8899 = vadd.s32 %v8898, %v8888
        %v8900 = vadd.s32 %v8899, %v8890
        %v8901 = vmul.u32 %v8856, %v8847
        %v8902 = vadd.s32 %v8878, %v8897
        %vm8903 = vc.u32 %v8878, %v8897
        %v8904 = vadd.s32 %v8900, 1
        %v8905 = vsel %vm8903, %v8904, %v8900
        %v8906 = vadd.s32 %v8901, %v8905
        %v8907 = vadd.s32 %v8906, 536870912
        %v8908 = vshrl.u32 %v8907, 30
        %v8909 = vshll.u32 %v8908, 30
        %v8910 = vsub.s32 %v8906, %v8909
        %vm8911 = vcmp.lt.s32.totalorder %v8910, 0
        %v8912 = vsub.s32 0, %v8910
        %v8913 = vsel %vm8911, %v8912, %v8910
        %v8914 = vclz %v8913
        %v8915 = vsub.s32 %v8914, 2
        %vm8916 = vcmp.gt.s32.totalorder 0, %v8915
        %v8917 = vsel %vm8916, 0, %v8915
        %v8918 = vsub.s32 32, %v8917
        %v8919 = vshll.u32 %v8910, %v8917
        %v8920 = vshrl.u32 %v8902, %v8918
        %v8921 = vor.u32 %v8919, %v8920
        %v8922 = vsub.s32 4294967266, %v8917
        %v8923 = vadd.s32 %v8922, 127
        %v8924 = vshll.u32 %v8923, 23
        %v8925 = vor.u32 4788187, %v8924
        %v8926 = vand.u32 2147483647, %v8925
        %v8928 = vcvt.s32.f32 %v8921
        %v8929 = vmul.f32 %v8928, %v8926
        %v8930 = vxor.u32 %v8929, 2147483648
        %v8931 = vsel %vm8810, %v8930, %v8929
        %v8932 = vsub.s32 4, %v8908
        %v8933 = vsel %vm8810, %v8932, %v8908
        %v8934 = vsel %vm8809, %v5796, %v8931
        %v8935 = vsel %vm8809, 0, %v8933
        %v8936 = vmul.f32 %v8934, %v8934
        %v8937 = vmul.f32 %v8936, -0.001358992
        %v8938 = vadd.f32 %v8937, 0.041655596
        %v8939 = vmul.f32 %v8936, %v8938
        %v8940 = vadd.f32 %v8939, -0.4999988
        %v8941 = vmul.f32 %v8936, %v8940
        %v8942 = vadd.f32 1.0, %v8941
        %v8943 = vmul.f32 %v8934, %v8934
        %v8944 = vmul.f32 %v8943, -0.00019511016
        %v8945 = vadd.f32 %v8944, 0.008332121
        %v8946 = vmul.f32 %v8943, %v8945
        %v8947 = vadd.f32 %v8946, -0.16666654
        %v8948 = vmul.f32 %v8943, %v8947
        %v8949 = vadd.f32 %v8948, 1.0
        %v8950 = vmul.f32 %v8949, %v8934
        %vm8951 = vweird.f32 %v5796
        %v8952 = vadd.s32 %v8935, 3
        %v8953 = vand.u32 %v8952, 3
        %vm8954 = vcmp.lt.s32.totalorder %v8953, 2
        %vm8955 = vcmp.eq.s32.totalorder %v8953, 0
        %v8956 = vxor.u32 %v8950, 2147483648
        %v8957 = vsel %vm8955, %v8942, %v8956
        %vm8958 = vcmp.eq.s32.totalorder %v8953, 2
        %v8959 = vxor.u32 %v8942, 2147483648
        %v8960 = vsel %vm8958, %v8959, %v8950
        %v8961 = vsel %vm8954, %v8957, %v8960
        %v8962 = vsel %vm8951, nan, %v8961
        %v8963 = vand.u32 2147483647, %v5837
        %vm8964 = vcmp.le.f32.partialorder %v8963, 0.7853982
        %vm8965 = vcmp.lt.s32.totalorder %v5837, 0
        %v8966 = vand.u32 %v5837, 2139095040
        %v8967 = vshrl.u32 %v8966, 23
        %v8968 = vsub.s32 %v8967, 127
        %v8969 = vand.u32 2147483647, %v5837
        %v8970 = vand.u32 %v8969, 8388607
        %v8971 = vor.u32 %v8970, 8388608
        %v8972 = vsub.s32 0, %v8971
        %v8973 = vadd.s32 %v8968, 1
        %vm8974 = vcmp.gt.s32.totalorder %v8973, 0
        %v8975 = vsel %vm8974, %v8973, 0
        %v8976 = vshrl.u32 %v8975, 5
        %v8977 = vand.u32 %v8975, 31
        %v8978 = vsub.s32 32, %v8977
        %v8979 = vshrl.u32 683565275, %v8978
        %v8980 = vshll.u32 683565275, %v8977
        %v8981 = vshrl.u32 2475754826, %v8978
        %v8982 = vor.u32 %v8980, %v8981
        %v8983 = vshll.u32 2475754826, %v8977
        %v8984 = vshrl.u32 2131351028, %v8978
        %v8985 = vor.u32 %v8983, %v8984
        %v8986 = vshll.u32 2131351028, %v8977
        %v8987 = vshrl.u32 2102212464, %v8978
        %v8988 = vor.u32 %v8986, %v8987
        %v8989 = vshll.u32 2102212464, %v8977
        %v8990 = vshrl.u32 920167782, %v8978
        %v8991 = vor.u32 %v8989, %v8990
        %v8992 = vshll.u32 920167782, %v8977
        %v8993 = vshrl.u32 1326507024, %v8978
        %v8994 = vor.u32 %v8992, %v8993
        %vm8995 = vcmp.lt.s32.totalorder %v8976, 1
        %vm8996 = vcmp.lt.s32.totalorder %v8976, 2
        %vm8997 = vcmp.lt.s32.totalorder %v8976, 3
        %vm8998 = vcmp.lt.s32.totalorder %v8976, 4
        %v8999 = vsel %vm8995, %v8979, %v8982
        %v9000 = vsel %vm8998, %v8988, 2102212464
        %v9001 = vsel %vm8997, %v8985, %v9000
        %v9002 = vsel %vm8996, %v8999, %v9001
        %v9003 = vsel %vm8995, %v8982, %v8985
        %v9004 = vsel %vm8998, %v8991, 920167782
        %v9005 = vsel %vm8997, %v8988, %v9004
        %v9006 = vsel %vm8996, %v9003, %v9005
        %v9007 = vsel %vm8995, %v8985, %v8988
        %v9008 = vsel %vm8998, %v8994, 1326507024
        %v9009 = vsel %vm8997, %v8991, %v9008
        %v9010 = vsel %vm8996, %v9007, %v9009
        %v9011 = vshll.u32 %v8971, 8
        %v9012 = vand.u32 %v9011, 65535
        %v9013 = vshrl.u32 %v9011, 16
        %v9014 = vand.u32 %v9010, 65535
        %v9015 = vshrl.u32 %v9010, 16
        %v9016 = vmul.u32 %v9012, %v9014
        %v9017 = vmul.u32 %v9012, %v9015
        %v9018 = vmul.u32 %v9013, %v9014
        %v9019 = vmul.u32 %v9013, %v9015
        %v9020 = vshll.u32 %v9017, 16
        %v9021 = vshrl.u32 %v9017, 16
        %v9022 = vshll.u32 %v9018, 16
        %v9023 = vshrl.u32 %v9018, 16
        %vm9024 = vc.u32 %v9016, %v9020
        %v9025 = vsel %vm9024, 1, 0
        %v9026 = vadd.s32 %v9016, %v9020
        %v9027 = vadd.s32 %v9019, %v9025
        %vm9028 = vc.u32 %v9026, %v9022
        %v9029 = vsel %vm9028, 1, 0
        %v9030 = vadd.s32 %v9026, %v9022
        %v9031 = vadd.s32 %v9027, %v9029
        %v9032 = vadd.s32 %v9031, %v9021
        %v9033 = vadd.s32 %v9032, %v9023
        %v9034 = vand.u32 %v9011, 65535
        %v9035 = vshrl.u32 %v9011, 16
        %v9036 = vand.u32 %v9006, 65535
        %v9037 = vshrl.u32 %v9006, 16
        %v9038 = vmul.u32 %v9034, %v9036
        %v9039 = vmul.u32 %v9034, %v9037
        %v9040 = vmul.u32 %v9035, %v9036
        %v9041 = vmul.u32 %v9035, %v9037
        %v9042 = vshll.u32 %v9039, 16
        %v9043 = vshrl.u32 %v9039, 16
        %v9044 = vshll.u32 %v9040, 16
        %v9045 = vshrl.u32 %v9040, 16
        %vm9046 = vc.u32 %v9038, %v9042
        %v9047 = vsel %vm9046, 1, 0
        %v9048 = vadd.s32 %v9038, %v9042
        %v9049 = vadd.s32 %v9041, %v9047
        %vm9050 = vc.u32 %v9048, %v9044
        %v9051 = vsel %vm9050, 1, 0
        %v9052 = vadd.s32 %v9048, %v9044
        %v9053 = vadd.s32 %v9049, %v9051
        %v9054 = vadd.s32 %v9053, %v9043
        %v9055 = vadd.s32 %v9054, %v9045
        %v9056 = vmul.u32 %v9011, %v9002
        %v9057 = vadd.s32 %v9033, %v9052
        %vm9058 = vc.u32 %v9033, %v9052
        %v9059 = vadd.s32 %v9055, 1
        %v9060 = vsel %vm9058, %v9059, %v9055
        %v9061 = vadd.s32 %v9056, %v9060
        %v9062 = vadd.s32 %v9061, 536870912
        %v9063 = vshrl.u32 %v9062, 30
        %v9064 = vshll.u32 %v9063, 30
        %v9065 = vsub.s32 %v9061, %v9064
        %vm9066 = vcmp.lt.s32.totalorder %v9065, 0
        %v9067 = vsub.s32 0, %v9065
        %v9068 = vsel %vm9066, %v9067, %v9065
        %v9069 = vclz %v9068
        %v9070 = vsub.s32 %v9069, 2
        %vm9071 = vcmp.gt.s32.totalorder 0, %v9070
        %v9072 = vsel %vm9071, 0, %v9070
        %v9073 = vsub.s32 32, %v9072
        %v9074 = vshll.u32 %v9065, %v9072
        %v9075 = vshrl.u32 %v9057, %v9073
        %v9076 = vor.u32 %v9074, %v9075
        %v9077 = vsub.s32 4294967266, %v9072
        %v9078 = vadd.s32 %v9077, 127
        %v9079 = vshll.u32 %v9078, 23
        %v9080 = vor.u32 4788187, %v9079
        %v9081 = vand.u32 2147483647, %v9080
        %v9083 = vcvt.s32.f32 %v9076
        %v9084 = vmul.f32 %v9083, %v9081
        %v9085 = vxor.u32 %v9084, 2147483648
        %v9086 = vsel %vm8965, %v9085, %v9084
        %v9087 = vsub.s32 4, %v9063
        %v9088 = vsel %vm8965, %v9087, %v9063
        %v9089 = vsel %vm8964, %v5837, %v9086
        %v9090 = vsel %vm8964, 0, %v9088
        %v9091 = vmul.f32 %v9089, %v9089
        %v9092 = vmul.f32 %v9091, -0.001358992
        %v9093 = vadd.f32 %v9092, 0.041655596
        %v9094 = vmul.f32 %v9091, %v9093
        %v9095 = vadd.f32 %v9094, -0.4999988
        %v9096 = vmul.f32 %v9091, %v9095
        %v9097 = vadd.f32 1.0, %v9096
        %v9098 = vmul.f32 %v9089, %v9089
        %v9099 = vmul.f32 %v9098, -0.00019511016
        %v9100 = vadd.f32 %v9099, 0.008332121
        %v9101 = vmul.f32 %v9098, %v9100
        %v9102 = vadd.f32 %v9101, -0.16666654
        %v9103 = vmul.f32 %v9098, %v9102
        %v9104 = vadd.f32 %v9103, 1.0
        %v9105 = vmul.f32 %v9104, %v9089
        %vm9106 = vweird.f32 %v5837
        %v9107 = vadd.s32 %v9090, 3
        %v9108 = vand.u32 %v9107, 3
        %vm9109 = vcmp.lt.s32.totalorder %v9108, 2
        %vm9110 = vcmp.eq.s32.totalorder %v9108, 0
        %v9111 = vxor.u32 %v9105, 2147483648
        %v9112 = vsel %vm9110, %v9097, %v9111
        %vm9113 = vcmp.eq.s32.totalorder %v9108, 2
        %v9114 = vxor.u32 %v9097, 2147483648
        %v9115 = vsel %vm9113, %v9114, %v9105
        %v9116 = vsel %vm9109, %v9112, %v9115
        %v9117 = vsel %vm9106, nan, %v9116
        %v9118 = vand.u32 2147483647, %v5878
        %vm9119 = vcmp.le.f32.partialorder %v9118, 0.7853982
        %vm9120 = vcmp.lt.s32.totalorder %v5878, 0
        %v9121 = vand.u32 %v5878, 2139095040
        %v9122 = vshrl.u32 %v9121, 23
        %v9123 = vsub.s32 %v9122, 127
        %v9124 = vand.u32 2147483647, %v5878
        %v9125 = vand.u32 %v9124, 8388607
        %v9126 = vor.u32 %v9125, 8388608
        %v9127 = vsub.s32 0, %v9126
        %v9128 = vadd.s32 %v9123, 1
        %vm9129 = vcmp.gt.s32.totalorder %v9128, 0
        %v9130 = vsel %vm9129, %v9128, 0
        %v9131 = vshrl.u32 %v9130, 5
        %v9132 = vand.u32 %v9130, 31
        %v9133 = vsub.s32 32, %v9132
        %v9134 = vshrl.u32 683565275, %v9133
        %v9135 = vshll.u32 683565275, %v9132
        %v9136 = vshrl.u32 2475754826, %v9133
        %v9137 = vor.u32 %v9135, %v9136
        %v9138 = vshll.u32 2475754826, %v9132
        %v9139 = vshrl.u32 2131351028, %v9133
        %v9140 = vor.u32 %v9138, %v9139
        %v9141 = vshll.u32 2131351028, %v9132
        %v9142 = vshrl.u32 2102212464, %v9133
        %v9143 = vor.u32 %v9141, %v9142
        %v9144 = vshll.u32 2102212464, %v9132
        %v9145 = vshrl.u32 920167782, %v9133
        %v9146 = vor.u32 %v9144, %v9145
        %v9147 = vshll.u32 920167782, %v9132
        %v9148 = vshrl.u32 1326507024, %v9133
        %v9149 = vor.u32 %v9147, %v9148
        %vm9150 = vcmp.lt.s32.totalorder %v9131, 1
        %vm9151 = vcmp.lt.s32.totalorder %v9131, 2
        %vm9152 = vcmp.lt.s32.totalorder %v9131, 3
        %vm9153 = vcmp.lt.s32.totalorder %v9131, 4
        %v9154 = vsel %vm9150, %v9134, %v9137
        %v9155 = vsel %vm9153, %v9143, 2102212464
        %v9156 = vsel %vm9152, %v9140, %v9155
        %v9157 = vsel %vm9151, %v9154, %v9156
        %v9158 = vsel %vm9150, %v9137, %v9140
        %v9159 = vsel %vm9153, %v9146, 920167782
        %v9160 = vsel %vm9152, %v9143, %v9159
        %v9161 = vsel %vm9151, %v9158, %v9160
        %v9162 = vsel %vm9150, %v9140, %v9143
        %v9163 = vsel %vm9153, %v9149, 1326507024
        %v9164 = vsel %vm9152, %v9146, %v9163
        %v9165 = vsel %vm9151, %v9162, %v9164
        %v9166 = vshll.u32 %v9126, 8
        %v9167 = vand.u32 %v9166, 65535
        %v9168 = vshrl.u32 %v9166, 16
        %v9169 = vand.u32 %v9165, 65535
        %v9170 = vshrl.u32 %v9165, 16
        %v9171 = vmul.u32 %v9167, %v9169
        %v9172 = vmul.u32 %v9167, %v9170
        %v9173 = vmul.u32 %v9168, %v9169
        %v9174 = vmul.u32 %v9168, %v9170
        %v9175 = vshll.u32 %v9172, 16
        %v9176 = vshrl.u32 %v9172, 16
        %v9177 = vshll.u32 %v9173, 16
        %v9178 = vshrl.u32 %v9173, 16
        %vm9179 = vc.u32 %v9171, %v9175
        %v9180 = vsel %vm9179, 1, 0
        %v9181 = vadd.s32 %v9171, %v9175
        %v9182 = vadd.s32 %v9174, %v9180
        %vm9183 = vc.u32 %v9181, %v9177
        %v9184 = vsel %vm9183, 1, 0
        %v9185 = vadd.s32 %v9181, %v9177
        %v9186 = vadd.s32 %v9182, %v9184
        %v9187 = vadd.s32 %v9186, %v9176
        %v9188 = vadd.s32 %v9187, %v9178
        %v9189 = vand.u32 %v9166, 65535
        %v9190 = vshrl.u32 %v9166, 16
        %v9191 = vand.u32 %v9161, 65535
        %v9192 = vshrl.u32 %v9161, 16
        %v9193 = vmul.u32 %v9189, %v9191
        %v9194 = vmul.u32 %v9189, %v9192
        %v9195 = vmul.u32 %v9190, %v9191
        %v9196 = vmul.u32 %v9190, %v9192
        %v9197 = vshll.u32 %v9194, 16
        %v9198 = vshrl.u32 %v9194, 16
        %v9199 = vshll.u32 %v9195, 16
        %v9200 = vshrl.u32 %v9195, 16
        %vm9201 = vc.u32 %v9193, %v9197
        %v9202 = vsel %vm9201, 1, 0
        %v9203 = vadd.s32 %v9193, %v9197
        %v9204 = vadd.s32 %v9196, %v9202
        %vm9205 = vc.u32 %v9203, %v9199
        %v9206 = vsel %vm9205, 1, 0
        %v9207 = vadd.s32 %v9203, %v9199
        %v9208 = vadd.s32 %v9204, %v9206
        %v9209 = vadd.s32 %v9208, %v9198
        %v9210 = vadd.s32 %v9209, %v9200
        %v9211 = vmul.u32 %v9166, %v9157
        %v9212 = vadd.s32 %v9188, %v9207
        %vm9213 = vc.u32 %v9188, %v9207
        %v9214 = vadd.s32 %v9210, 1
        %v9215 = vsel %vm9213, %v9214, %v9210
        %v9216 = vadd.s32 %v9211, %v9215
        %v9217 = vadd.s32 %v9216, 536870912
        %v9218 = vshrl.u32 %v9217, 30
        %v9219 = vshll.u32 %v9218, 30
        %v9220 = vsub.s32 %v9216, %v9219
        %vm9221 = vcmp.lt.s32.totalorder %v9220, 0
        %v9222 = vsub.s32 0, %v9220
        %v9223 = vsel %vm9221, %v9222, %v9220
        %v9224 = vclz %v9223
        %v9225 = vsub.s32 %v9224, 2
        %vm9226 = vcmp.gt.s32.totalorder 0, %v9225
        %v9227 = vsel %vm9226, 0, %v9225
        %v9228 = vsub.s32 32, %v9227
        %v9229 = vshll.u32 %v9220, %v9227
        %v9230 = vshrl.u32 %v9212, %v9228
        %v9231 = vor.u32 %v9229, %v9230
        %v9232 = vsub.s32 4294967266, %v9227
        %v9233 = vadd.s32 %v9232, 127
        %v9234 = vshll.u32 %v9233, 23
        %v9235 = vor.u32 4788187, %v9234
        %v9236 = vand.u32 2147483647, %v9235
        %v9238 = vcvt.s32.f32 %v9231
        %v9239 = vmul.f32 %v9238, %v9236
        %v9240 = vxor.u32 %v9239, 2147483648
        %v9241 = vsel %vm9120, %v9240, %v9239
        %v9242 = vsub.s32 4, %v9218
        %v9243 = vsel %vm9120, %v9242, %v9218
        %v9244 = vsel %vm9119, %v5878, %v9241
        %v9245 = vsel %vm9119, 0, %v9243
        %v9246 = vmul.f32 %v9244, %v9244
        %v9247 = vmul.f32 %v9246, -0.001358992
        %v9248 = vadd.f32 %v9247, 0.041655596
        %v9249 = vmul.f32 %v9246, %v9248
        %v9250 = vadd.f32 %v9249, -0.4999988
        %v9251 = vmul.f32 %v9246, %v9250
        %v9252 = vadd.f32 1.0, %v9251
        %v9253 = vmul.f32 %v9244, %v9244
        %v9254 = vmul.f32 %v9253, -0.00019511016
        %v9255 = vadd.f32 %v9254, 0.008332121
        %v9256 = vmul.f32 %v9253, %v9255
        %v9257 = vadd.f32 %v9256, -0.16666654
        %v9258 = vmul.f32 %v9253, %v9257
        %v9259 = vadd.f32 %v9258, 1.0
        %v9260 = vmul.f32 %v9259, %v9244
        %vm9261 = vweird.f32 %v5878
        %v9262 = vadd.s32 %v9245, 3
        %v9263 = vand.u32 %v9262, 3
        %vm9264 = vcmp.lt.s32.totalorder %v9263, 2
        %vm9265 = vcmp.eq.s32.totalorder %v9263, 0
        %v9266 = vxor.u32 %v9260, 2147483648
        %v9267 = vsel %vm9265, %v9252, %v9266
        %vm9268 = vcmp.eq.s32.totalorder %v9263, 2
        %v9269 = vxor.u32 %v9252, 2147483648
        %v9270 = vsel %vm9268, %v9269, %v9260
        %v9271 = vsel %vm9264, %v9267, %v9270
        %v9272 = vsel %vm9261, nan, %v9271
        %v9273 = vand.u32 2147483647, %v5919
        %vm9274 = vcmp.le.f32.partialorder %v9273, 0.7853982
        %vm9275 = vcmp.lt.s32.totalorder %v5919, 0
        %v9276 = vand.u32 %v5919, 2139095040
        %v9277 = vshrl.u32 %v9276, 23
        %v9278 = vsub.s32 %v9277, 127
        %v9279 = vand.u32 2147483647, %v5919
        %v9280 = vand.u32 %v9279, 8388607
        %v9281 = vor.u32 %v9280, 8388608
        %v9282 = vsub.s32 0, %v9281
        %v9283 = vadd.s32 %v9278, 1
        %vm9284 = vcmp.gt.s32.totalorder %v9283, 0
        %v9285 = vsel %vm9284, %v9283, 0
        %v9286 = vshrl.u32 %v9285, 5
        %v9287 = vand.u32 %v9285, 31
        %v9288 = vsub.s32 32, %v9287
        %v9289 = vshrl.u32 683565275, %v9288
        %v9290 = vshll.u32 683565275, %v9287
        %v9291 = vshrl.u32 2475754826, %v9288
        %v9292 = vor.u32 %v9290, %v9291
        %v9293 = vshll.u32 2475754826, %v9287
        %v9294 = vshrl.u32 2131351028, %v9288
        %v9295 = vor.u32 %v9293, %v9294
        %v9296 = vshll.u32 2131351028, %v9287
        %v9297 = vshrl.u32 2102212464, %v9288
        %v9298 = vor.u32 %v9296, %v9297
        %v9299 = vshll.u32 2102212464, %v9287
        %v9300 = vshrl.u32 920167782, %v9288
        %v9301 = vor.u32 %v9299, %v9300
        %v9302 = vshll.u32 920167782, %v9287
        %v9303 = vshrl.u32 1326507024, %v9288
        %v9304 = vor.u32 %v9302, %v9303
        %vm9305 = vcmp.lt.s32.totalorder %v9286, 1
        %vm9306 = vcmp.lt.s32.totalorder %v9286, 2
        %vm9307 = vcmp.lt.s32.totalorder %v9286, 3
        %vm9308 = vcmp.lt.s32.totalorder %v9286, 4
        %v9309 = vsel %vm9305, %v9289, %v9292
        %v9310 = vsel %vm9308, %v9298, 2102212464
        %v9311 = vsel %vm9307, %v9295, %v9310
        %v9312 = vsel %vm9306, %v9309, %v9311
        %v9313 = vsel %vm9305, %v9292, %v9295
        %v9314 = vsel %vm9308, %v9301, 920167782
        %v9315 = vsel %vm9307, %v9298, %v9314
        %v9316 = vsel %vm9306, %v9313, %v9315
        %v9317 = vsel %vm9305, %v9295, %v9298
        %v9318 = vsel %vm9308, %v9304, 1326507024
        %v9319 = vsel %vm9307, %v9301, %v9318
        %v9320 = vsel %vm9306, %v9317, %v9319
        %v9321 = vshll.u32 %v9281, 8
        %v9322 = vand.u32 %v9321, 65535
        %v9323 = vshrl.u32 %v9321, 16
        %v9324 = vand.u32 %v9320, 65535
        %v9325 = vshrl.u32 %v9320, 16
        %v9326 = vmul.u32 %v9322, %v9324
        %v9327 = vmul.u32 %v9322, %v9325
        %v9328 = vmul.u32 %v9323, %v9324
        %v9329 = vmul.u32 %v9323, %v9325
        %v9330 = vshll.u32 %v9327, 16
        %v9331 = vshrl.u32 %v9327, 16
        %v9332 = vshll.u32 %v9328, 16
        %v9333 = vshrl.u32 %v9328, 16
        %vm9334 = vc.u32 %v9326, %v9330
        %v9335 = vsel %vm9334, 1, 0
        %v9336 = vadd.s32 %v9326, %v9330
        %v9337 = vadd.s32 %v9329, %v9335
        %vm9338 = vc.u32 %v9336, %v9332
        %v9339 = vsel %vm9338, 1, 0
        %v9340 = vadd.s32 %v9336, %v9332
        %v9341 = vadd.s32 %v9337, %v9339
        %v9342 = vadd.s32 %v9341, %v9331
        %v9343 = vadd.s32 %v9342, %v9333
        %v9344 = vand.u32 %v9321, 65535
        %v9345 = vshrl.u32 %v9321, 16
        %v9346 = vand.u32 %v9316, 65535
        %v9347 = vshrl.u32 %v9316, 16
        %v9348 = vmul.u32 %v9344, %v9346
        %v9349 = vmul.u32 %v9344, %v9347
        %v9350 = vmul.u32 %v9345, %v9346
        %v9351 = vmul.u32 %v9345, %v9347
        %v9352 = vshll.u32 %v9349, 16
        %v9353 = vshrl.u32 %v9349, 16
        %v9354 = vshll.u32 %v9350, 16
        %v9355 = vshrl.u32 %v9350, 16
        %vm9356 = vc.u32 %v9348, %v9352
        %v9357 = vsel %vm9356, 1, 0
        %v9358 = vadd.s32 %v9348, %v9352
        %v9359 = vadd.s32 %v9351, %v9357
        %vm9360 = vc.u32 %v9358, %v9354
        %v9361 = vsel %vm9360, 1, 0
        %v9362 = vadd.s32 %v9358, %v9354
        %v9363 = vadd.s32 %v9359, %v9361
        %v9364 = vadd.s32 %v9363, %v9353
        %v9365 = vadd.s32 %v9364, %v9355
        %v9366 = vmul.u32 %v9321, %v9312
        %v9367 = vadd.s32 %v9343, %v9362
        %vm9368 = vc.u32 %v9343, %v9362
        %v9369 = vadd.s32 %v9365, 1
        %v9370 = vsel %vm9368, %v9369, %v9365
        %v9371 = vadd.s32 %v9366, %v9370
        %v9372 = vadd.s32 %v9371, 536870912
        %v9373 = vshrl.u32 %v9372, 30
        %v9374 = vshll.u32 %v9373, 30
        %v9375 = vsub.s32 %v9371, %v9374
        %vm9376 = vcmp.lt.s32.totalorder %v9375, 0
        %v9377 = vsub.s32 0, %v9375
        %v9378 = vsel %vm9376, %v9377, %v9375
        %v9379 = vclz %v9378
        %v9380 = vsub.s32 %v9379, 2
        %vm9381 = vcmp.gt.s32.totalorder 0, %v9380
        %v9382 = vsel %vm9381, 0, %v9380
        %v9383 = vsub.s32 32, %v9382
        %v9384 = vshll.u32 %v9375, %v9382
        %v9385 = vshrl.u32 %v9367, %v9383
        %v9386 = vor.u32 %v9384, %v9385
        %v9387 = vsub.s32 4294967266, %v9382
        %v9388 = vadd.s32 %v9387, 127
        %v9389 = vshll.u32 %v9388, 23
        %v9390 = vor.u32 4788187, %v9389
        %v9391 = vand.u32 2147483647, %v9390
        %v9393 = vcvt.s32.f32 %v9386
        %v9394 = vmul.f32 %v9393, %v9391
        %v9395 = vxor.u32 %v9394, 2147483648
        %v9396 = vsel %vm9275, %v9395, %v9394
        %v9397 = vsub.s32 4, %v9373
        %v9398 = vsel %vm9275, %v9397, %v9373
        %v9399 = vsel %vm9274, %v5919, %v9396
        %v9400 = vsel %vm9274, 0, %v9398
        %v9401 = vmul.f32 %v9399, %v9399
        %v9402 = vmul.f32 %v9401, -0.001358992
        %v9403 = vadd.f32 %v9402, 0.041655596
        %v9404 = vmul.f32 %v9401, %v9403
        %v9405 = vadd.f32 %v9404, -0.4999988
        %v9406 = vmul.f32 %v9401, %v9405
        %v9407 = vadd.f32 1.0, %v9406
        %v9408 = vmul.f32 %v9399, %v9399
        %v9409 = vmul.f32 %v9408, -0.00019511016
        %v9410 = vadd.f32 %v9409, 0.008332121
        %v9411 = vmul.f32 %v9408, %v9410
        %v9412 = vadd.f32 %v9411, -0.16666654
        %v9413 = vmul.f32 %v9408, %v9412
        %v9414 = vadd.f32 %v9413, 1.0
        %v9415 = vmul.f32 %v9414, %v9399
        %vm9416 = vweird.f32 %v5919
        %v9417 = vadd.s32 %v9400, 3
        %v9418 = vand.u32 %v9417, 3
        %vm9419 = vcmp.lt.s32.totalorder %v9418, 2
        %vm9420 = vcmp.eq.s32.totalorder %v9418, 0
        %v9421 = vxor.u32 %v9415, 2147483648
        %v9422 = vsel %vm9420, %v9407, %v9421
        %vm9423 = vcmp.eq.s32.totalorder %v9418, 2
        %v9424 = vxor.u32 %v9407, 2147483648
        %v9425 = vsel %vm9423, %v9424, %v9415
        %v9426 = vsel %vm9419, %v9422, %v9425
        %v9427 = vsel %vm9416, nan, %v9426
        %v9428 = vand.u32 2147483647, %v5960
        %vm9429 = vcmp.le.f32.partialorder %v9428, 0.7853982
        %vm9430 = vcmp.lt.s32.totalorder %v5960, 0
        %v9431 = vand.u32 %v5960, 2139095040
        %v9432 = vshrl.u32 %v9431, 23
        %v9433 = vsub.s32 %v9432, 127
        %v9434 = vand.u32 2147483647, %v5960
        %v9435 = vand.u32 %v9434, 8388607
        %v9436 = vor.u32 %v9435, 8388608
        %v9437 = vsub.s32 0, %v9436
        %v9438 = vadd.s32 %v9433, 1
        %vm9439 = vcmp.gt.s32.totalorder %v9438, 0
        %v9440 = vsel %vm9439, %v9438, 0
        %v9441 = vshrl.u32 %v9440, 5
        %v9442 = vand.u32 %v9440, 31
        %v9443 = vsub.s32 32, %v9442
        %v9444 = vshrl.u32 683565275, %v9443
        %v9445 = vshll.u32 683565275, %v9442
        %v9446 = vshrl.u32 2475754826, %v9443
        %v9447 = vor.u32 %v9445, %v9446
        %v9448 = vshll.u32 2475754826, %v9442
        %v9449 = vshrl.u32 2131351028, %v9443
        %v9450 = vor.u32 %v9448, %v9449
        %v9451 = vshll.u32 2131351028, %v9442
        %v9452 = vshrl.u32 2102212464, %v9443
        %v9453 = vor.u32 %v9451, %v9452
        %v9454 = vshll.u32 2102212464, %v9442
        %v9455 = vshrl.u32 920167782, %v9443
        %v9456 = vor.u32 %v9454, %v9455
        %v9457 = vshll.u32 920167782, %v9442
        %v9458 = vshrl.u32 1326507024, %v9443
        %v9459 = vor.u32 %v9457, %v9458
        %vm9460 = vcmp.lt.s32.totalorder %v9441, 1
        %vm9461 = vcmp.lt.s32.totalorder %v9441, 2
        %vm9462 = vcmp.lt.s32.totalorder %v9441, 3
        %vm9463 = vcmp.lt.s32.totalorder %v9441, 4
        %v9464 = vsel %vm9460, %v9444, %v9447
        %v9465 = vsel %vm9463, %v9453, 2102212464
        %v9466 = vsel %vm9462, %v9450, %v9465
        %v9467 = vsel %vm9461, %v9464, %v9466
        %v9468 = vsel %vm9460, %v9447, %v9450
        %v9469 = vsel %vm9463, %v9456, 920167782
        %v9470 = vsel %vm9462, %v9453, %v9469
        %v9471 = vsel %vm9461, %v9468, %v9470
        %v9472 = vsel %vm9460, %v9450, %v9453
        %v9473 = vsel %vm9463, %v9459, 1326507024
        %v9474 = vsel %vm9462, %v9456, %v9473
        %v9475 = vsel %vm9461, %v9472, %v9474
        %v9476 = vshll.u32 %v9436, 8
        %v9477 = vand.u32 %v9476, 65535
        %v9478 = vshrl.u32 %v9476, 16
        %v9479 = vand.u32 %v9475, 65535
        %v9480 = vshrl.u32 %v9475, 16
        %v9481 = vmul.u32 %v9477, %v9479
        %v9482 = vmul.u32 %v9477, %v9480
        %v9483 = vmul.u32 %v9478, %v9479
        %v9484 = vmul.u32 %v9478, %v9480
        %v9485 = vshll.u32 %v9482, 16
        %v9486 = vshrl.u32 %v9482, 16
        %v9487 = vshll.u32 %v9483, 16
        %v9488 = vshrl.u32 %v9483, 16
        %vm9489 = vc.u32 %v9481, %v9485
        %v9490 = vsel %vm9489, 1, 0
        %v9491 = vadd.s32 %v9481, %v9485
        %v9492 = vadd.s32 %v9484, %v9490
        %vm9493 = vc.u32 %v9491, %v9487
        %v9494 = vsel %vm9493, 1, 0
        %v9495 = vadd.s32 %v9491, %v9487
        %v9496 = vadd.s32 %v9492, %v9494
        %v9497 = vadd.s32 %v9496, %v9486
        %v9498 = vadd.s32 %v9497, %v9488
        %v9499 = vand.u32 %v9476, 65535
        %v9500 = vshrl.u32 %v9476, 16
        %v9501 = vand.u32 %v9471, 65535
        %v9502 = vshrl.u32 %v9471, 16
        %v9503 = vmul.u32 %v9499, %v9501
        %v9504 = vmul.u32 %v9499, %v9502
        %v9505 = vmul.u32 %v9500, %v9501
        %v9506 = vmul.u32 %v9500, %v9502
        %v9507 = vshll.u32 %v9504, 16
        %v9508 = vshrl.u32 %v9504, 16
        %v9509 = vshll.u32 %v9505, 16
        %v9510 = vshrl.u32 %v9505, 16
        %vm9511 = vc.u32 %v9503, %v9507
        %v9512 = vsel %vm9511, 1, 0
        %v9513 = vadd.s32 %v9503, %v9507
        %v9514 = vadd.s32 %v9506, %v9512
        %vm9515 = vc.u32 %v9513, %v9509
        %v9516 = vsel %vm9515, 1, 0
        %v9517 = vadd.s32 %v9513, %v9509
        %v9518 = vadd.s32 %v9514, %v9516
        %v9519 = vadd.s32 %v9518, %v9508
        %v9520 = vadd.s32 %v9519, %v9510
        %v9521 = vmul.u32 %v9476, %v9467
        %v9522 = vadd.s32 %v9498, %v9517
        %vm9523 = vc.u32 %v9498, %v9517
        %v9524 = vadd.s32 %v9520, 1
        %v9525 = vsel %vm9523, %v9524, %v9520
        %v9526 = vadd.s32 %v9521, %v9525
        %v9527 = vadd.s32 %v9526, 536870912
        %v9528 = vshrl.u32 %v9527, 30
        %v9529 = vshll.u32 %v9528, 30
        %v9530 = vsub.s32 %v9526, %v9529
        %vm9531 = vcmp.lt.s32.totalorder %v9530, 0
        %v9532 = vsub.s32 0, %v9530
        %v9533 = vsel %vm9531, %v9532, %v9530
        %v9534 = vclz %v9533
        %v9535 = vsub.s32 %v9534, 2
        %vm9536 = vcmp.gt.s32.totalorder 0, %v9535
        %v9537 = vsel %vm9536, 0, %v9535
        %v9538 = vsub.s32 32, %v9537
        %v9539 = vshll.u32 %v9530, %v9537
        %v9540 = vshrl.u32 %v9522, %v9538
        %v9541 = vor.u32 %v9539, %v9540
        %v9542 = vsub.s32 4294967266, %v9537
        %v9543 = vadd.s32 %v9542, 127
        %v9544 = vshll.u32 %v9543, 23
        %v9545 = vor.u32 4788187, %v9544
        %v9546 = vand.u32 2147483647, %v9545
        %v9548 = vcvt.s32.f32 %v9541
        %v9549 = vmul.f32 %v9548, %v9546
        %v9550 = vxor.u32 %v9549, 2147483648
        %v9551 = vsel %vm9430, %v9550, %v9549
        %v9552 = vsub.s32 4, %v9528
        %v9553 = vsel %vm9430, %v9552, %v9528
        %v9554 = vsel %vm9429, %v5960, %v9551
        %v9555 = vsel %vm9429, 0, %v9553
        %v9556 = vmul.f32 %v9554, %v9554
        %v9557 = vmul.f32 %v9556, -0.001358992
        %v9558 = vadd.f32 %v9557, 0.041655596
        %v9559 = vmul.f32 %v9556, %v9558
        %v9560 = vadd.f32 %v9559, -0.4999988
        %v9561 = vmul.f32 %v9556, %v9560
        %v9562 = vadd.f32 1.0, %v9561
        %v9563 = vmul.f32 %v9554, %v9554
        %v9564 = vmul.f32 %v9563, -0.00019511016
        %v9565 = vadd.f32 %v9564, 0.008332121
        %v9566 = vmul.f32 %v9563, %v9565
        %v9567 = vadd.f32 %v9566, -0.16666654
        %v9568 = vmul.f32 %v9563, %v9567
        %v9569 = vadd.f32 %v9568, 1.0
        %v9570 = vmul.f32 %v9569, %v9554
        %vm9571 = vweird.f32 %v5960
        %v9572 = vadd.s32 %v9555, 3
        %v9573 = vand.u32 %v9572, 3
        %vm9574 = vcmp.lt.s32.totalorder %v9573, 2
        %vm9575 = vcmp.eq.s32.totalorder %v9573, 0
        %v9576 = vxor.u32 %v9570, 2147483648
        %v9577 = vsel %vm9575, %v9562, %v9576
        %vm9578 = vcmp.eq.s32.totalorder %v9573, 2
        %v9579 = vxor.u32 %v9562, 2147483648
        %v9580 = vsel %vm9578, %v9579, %v9570
        %v9581 = vsel %vm9574, %v9577, %v9580
        %v9582 = vsel %vm9571, nan, %v9581
        %v9583 = vand.u32 2147483647, %v6001
        %vm9584 = vcmp.le.f32.partialorder %v9583, 0.7853982
        %vm9585 = vcmp.lt.s32.totalorder %v6001, 0
        %v9586 = vand.u32 %v6001, 2139095040
        %v9587 = vshrl.u32 %v9586, 23
        %v9588 = vsub.s32 %v9587, 127
        %v9589 = vand.u32 2147483647, %v6001
        %v9590 = vand.u32 %v9589, 8388607
        %v9591 = vor.u32 %v9590, 8388608
        %v9592 = vsub.s32 0, %v9591
        %v9593 = vadd.s32 %v9588, 1
        %vm9594 = vcmp.gt.s32.totalorder %v9593, 0
        %v9595 = vsel %vm9594, %v9593, 0
        %v9596 = vshrl.u32 %v9595, 5
        %v9597 = vand.u32 %v9595, 31
        %v9598 = vsub.s32 32, %v9597
        %v9599 = vshrl.u32 683565275, %v9598
        %v9600 = vshll.u32 683565275, %v9597
        %v9601 = vshrl.u32 2475754826, %v9598
        %v9602 = vor.u32 %v9600, %v9601
        %v9603 = vshll.u32 2475754826, %v9597
        %v9604 = vshrl.u32 2131351028, %v9598
        %v9605 = vor.u32 %v9603, %v9604
        %v9606 = vshll.u32 2131351028, %v9597
        %v9607 = vshrl.u32 2102212464, %v9598
        %v9608 = vor.u32 %v9606, %v9607
        %v9609 = vshll.u32 2102212464, %v9597
        %v9610 = vshrl.u32 920167782, %v9598
        %v9611 = vor.u32 %v9609, %v9610
        %v9612 = vshll.u32 920167782, %v9597
        %v9613 = vshrl.u32 1326507024, %v9598
        %v9614 = vor.u32 %v9612, %v9613
        %vm9615 = vcmp.lt.s32.totalorder %v9596, 1
        %vm9616 = vcmp.lt.s32.totalorder %v9596, 2
        %vm9617 = vcmp.lt.s32.totalorder %v9596, 3
        %vm9618 = vcmp.lt.s32.totalorder %v9596, 4
        %v9619 = vsel %vm9615, %v9599, %v9602
        %v9620 = vsel %vm9618, %v9608, 2102212464
        %v9621 = vsel %vm9617, %v9605, %v9620
        %v9622 = vsel %vm9616, %v9619, %v9621
        %v9623 = vsel %vm9615, %v9602, %v9605
        %v9624 = vsel %vm9618, %v9611, 920167782
        %v9625 = vsel %vm9617, %v9608, %v9624
        %v9626 = vsel %vm9616, %v9623, %v9625
        %v9627 = vsel %vm9615, %v9605, %v9608
        %v9628 = vsel %vm9618, %v9614, 1326507024
        %v9629 = vsel %vm9617, %v9611, %v9628
        %v9630 = vsel %vm9616, %v9627, %v9629
        %v9631 = vshll.u32 %v9591, 8
        %v9632 = vand.u32 %v9631, 65535
        %v9633 = vshrl.u32 %v9631, 16
        %v9634 = vand.u32 %v9630, 65535
        %v9635 = vshrl.u32 %v9630, 16
        %v9636 = vmul.u32 %v9632, %v9634
        %v9637 = vmul.u32 %v9632, %v9635
        %v9638 = vmul.u32 %v9633, %v9634
        %v9639 = vmul.u32 %v9633, %v9635
        %v9640 = vshll.u32 %v9637, 16
        %v9641 = vshrl.u32 %v9637, 16
        %v9642 = vshll.u32 %v9638, 16
        %v9643 = vshrl.u32 %v9638, 16
        %vm9644 = vc.u32 %v9636, %v9640
        %v9645 = vsel %vm9644, 1, 0
        %v9646 = vadd.s32 %v9636, %v9640
        %v9647 = vadd.s32 %v9639, %v9645
        %vm9648 = vc.u32 %v9646, %v9642
        %v9649 = vsel %vm9648, 1, 0
        %v9650 = vadd.s32 %v9646, %v9642
        %v9651 = vadd.s32 %v9647, %v9649
        %v9652 = vadd.s32 %v9651, %v9641
        %v9653 = vadd.s32 %v9652, %v9643
        %v9654 = vand.u32 %v9631, 65535
        %v9655 = vshrl.u32 %v9631, 16
        %v9656 = vand.u32 %v9626, 65535
        %v9657 = vshrl.u32 %v9626, 16
        %v9658 = vmul.u32 %v9654, %v9656
        %v9659 = vmul.u32 %v9654, %v9657
        %v9660 = vmul.u32 %v9655, %v9656
        %v9661 = vmul.u32 %v9655, %v9657
        %v9662 = vshll.u32 %v9659, 16
        %v9663 = vshrl.u32 %v9659, 16
        %v9664 = vshll.u32 %v9660, 16
        %v9665 = vshrl.u32 %v9660, 16
        %vm9666 = vc.u32 %v9658, %v9662
        %v9667 = vsel %vm9666, 1, 0
        %v9668 = vadd.s32 %v9658, %v9662
        %v9669 = vadd.s32 %v9661, %v9667
        %vm9670 = vc.u32 %v9668, %v9664
        %v9671 = vsel %vm9670, 1, 0
        %v9672 = vadd.s32 %v9668, %v9664
        %v9673 = vadd.s32 %v9669, %v9671
        %v9674 = vadd.s32 %v9673, %v9663
        %v9675 = vadd.s32 %v9674, %v9665
        %v9676 = vmul.u32 %v9631, %v9622
        %v9677 = vadd.s32 %v9653, %v9672
        %vm9678 = vc.u32 %v9653, %v9672
        %v9679 = vadd.s32 %v9675, 1
        %v9680 = vsel %vm9678, %v9679, %v9675
        %v9681 = vadd.s32 %v9676, %v9680
        %v9682 = vadd.s32 %v9681, 536870912
        %v9683 = vshrl.u32 %v9682, 30
        %v9684 = vshll.u32 %v9683, 30
        %v9685 = vsub.s32 %v9681, %v9684
        %vm9686 = vcmp.lt.s32.totalorder %v9685, 0
        %v9687 = vsub.s32 0, %v9685
        %v9688 = vsel %vm9686, %v9687, %v9685
        %v9689 = vclz %v9688
        %v9690 = vsub.s32 %v9689, 2
        %vm9691 = vcmp.gt.s32.totalorder 0, %v9690
        %v9692 = vsel %vm9691, 0, %v9690
        %v9693 = vsub.s32 32, %v9692
        %v9694 = vshll.u32 %v9685, %v9692
        %v9695 = vshrl.u32 %v9677, %v9693
        %v9696 = vor.u32 %v9694, %v9695
        %v9697 = vsub.s32 4294967266, %v9692
        %v9698 = vadd.s32 %v9697, 127
        %v9699 = vshll.u32 %v9698, 23
        %v9700 = vor.u32 4788187, %v9699
        %v9701 = vand.u32 2147483647, %v9700
        %v9703 = vcvt.s32.f32 %v9696
        %v9704 = vmul.f32 %v9703, %v9701
        %v9705 = vxor.u32 %v9704, 2147483648
        %v9706 = vsel %vm9585, %v9705, %v9704
        %v9707 = vsub.s32 4, %v9683
        %v9708 = vsel %vm9585, %v9707, %v9683
        %v9709 = vsel %vm9584, %v6001, %v9706
        %v9710 = vsel %vm9584, 0, %v9708
        %v9711 = vmul.f32 %v9709, %v9709
        %v9712 = vmul.f32 %v9711, -0.001358992
        %v9713 = vadd.f32 %v9712, 0.041655596
        %v9714 = vmul.f32 %v9711, %v9713
        %v9715 = vadd.f32 %v9714, -0.4999988
        %v9716 = vmul.f32 %v9711, %v9715
        %v9717 = vadd.f32 1.0, %v9716
        %v9718 = vmul.f32 %v9709, %v9709
        %v9719 = vmul.f32 %v9718, -0.00019511016
        %v9720 = vadd.f32 %v9719, 0.008332121
        %v9721 = vmul.f32 %v9718, %v9720
        %v9722 = vadd.f32 %v9721, -0.16666654
        %v9723 = vmul.f32 %v9718, %v9722
        %v9724 = vadd.f32 %v9723, 1.0
        %v9725 = vmul.f32 %v9724, %v9709
        %vm9726 = vweird.f32 %v6001
        %v9727 = vadd.s32 %v9710, 3
        %v9728 = vand.u32 %v9727, 3
        %vm9729 = vcmp.lt.s32.totalorder %v9728, 2
        %vm9730 = vcmp.eq.s32.totalorder %v9728, 0
        %v9731 = vxor.u32 %v9725, 2147483648
        %v9732 = vsel %vm9730, %v9717, %v9731
        %vm9733 = vcmp.eq.s32.totalorder %v9728, 2
        %v9734 = vxor.u32 %v9717, 2147483648
        %v9735 = vsel %vm9733, %v9734, %v9725
        %v9736 = vsel %vm9729, %v9732, %v9735
        %v9737 = vsel %vm9726, nan, %v9736
        %v9738 = vand.u32 2147483647, %v5717
        %vm9739 = vcmp.le.f32.partialorder %v9738, 0.7853982
        %vm9740 = vcmp.lt.s32.totalorder %v5717, 0
        %v9741 = vand.u32 %v5717, 2139095040
        %v9742 = vshrl.u32 %v9741, 23
        %v9743 = vsub.s32 %v9742, 127
        %v9744 = vand.u32 2147483647, %v5717
        %v9745 = vand.u32 %v9744, 8388607
        %v9746 = vor.u32 %v9745, 8388608
        %v9747 = vsub.s32 0, %v9746
        %v9748 = vadd.s32 %v9743, 1
        %vm9749 = vcmp.gt.s32.totalorder %v9748, 0
        %v9750 = vsel %vm9749, %v9748, 0
        %v9751 = vshrl.u32 %v9750, 5
        %v9752 = vand.u32 %v9750, 31
        %v9753 = vsub.s32 32, %v9752
        %v9754 = vshrl.u32 683565275, %v9753
        %v9755 = vshll.u32 683565275, %v9752
        %v9756 = vshrl.u32 2475754826, %v9753
        %v9757 = vor.u32 %v9755, %v9756
        %v9758 = vshll.u32 2475754826, %v9752
        %v9759 = vshrl.u32 2131351028, %v9753
        %v9760 = vor.u32 %v9758, %v9759
        %v9761 = vshll.u32 2131351028, %v9752
        %v9762 = vshrl.u32 2102212464, %v9753
        %v9763 = vor.u32 %v9761, %v9762
        %v9764 = vshll.u32 2102212464, %v9752
        %v9765 = vshrl.u32 920167782, %v9753
        %v9766 = vor.u32 %v9764, %v9765
        %v9767 = vshll.u32 920167782, %v9752
        %v9768 = vshrl.u32 1326507024, %v9753
        %v9769 = vor.u32 %v9767, %v9768
        %vm9770 = vcmp.lt.s32.totalorder %v9751, 1
        %vm9771 = vcmp.lt.s32.totalorder %v9751, 2
        %vm9772 = vcmp.lt.s32.totalorder %v9751, 3
        %vm9773 = vcmp.lt.s32.totalorder %v9751, 4
        %v9774 = vsel %vm9770, %v9754, %v9757
        %v9775 = vsel %vm9773, %v9763, 2102212464
        %v9776 = vsel %vm9772, %v9760, %v9775
        %v9777 = vsel %vm9771, %v9774, %v9776
        %v9778 = vsel %vm9770, %v9757, %v9760
        %v9779 = vsel %vm9773, %v9766, 920167782
        %v9780 = vsel %vm9772, %v9763, %v9779
        %v9781 = vsel %vm9771, %v9778, %v9780
        %v9782 = vsel %vm9770, %v9760, %v9763
        %v9783 = vsel %vm9773, %v9769, 1326507024
        %v9784 = vsel %vm9772, %v9766, %v9783
        %v9785 = vsel %vm9771, %v9782, %v9784
        %v9786 = vshll.u32 %v9746, 8
        %v9787 = vand.u32 %v9786, 65535
        %v9788 = vshrl.u32 %v9786, 16
        %v9789 = vand.u32 %v9785, 65535
        %v9790 = vshrl.u32 %v9785, 16
        %v9791 = vmul.u32 %v9787, %v9789
        %v9792 = vmul.u32 %v9787, %v9790
        %v9793 = vmul.u32 %v9788, %v9789
        %v9794 = vmul.u32 %v9788, %v9790
        %v9795 = vshll.u32 %v9792, 16
        %v9796 = vshrl.u32 %v9792, 16
        %v9797 = vshll.u32 %v9793, 16
        %v9798 = vshrl.u32 %v9793, 16
        %vm9799 = vc.u32 %v9791, %v9795
        %v9800 = vsel %vm9799, 1, 0
        %v9801 = vadd.s32 %v9791, %v9795
        %v9802 = vadd.s32 %v9794, %v9800
        %vm9803 = vc.u32 %v9801, %v9797
        %v9804 = vsel %vm9803, 1, 0
        %v9805 = vadd.s32 %v9801, %v9797
        %v9806 = vadd.s32 %v9802, %v9804
        %v9807 = vadd.s32 %v9806, %v9796
        %v9808 = vadd.s32 %v9807, %v9798
        %v9809 = vand.u32 %v9786, 65535
        %v9810 = vshrl.u32 %v9786, 16
        %v9811 = vand.u32 %v9781, 65535
        %v9812 = vshrl.u32 %v9781, 16
        %v9813 = vmul.u32 %v9809, %v9811
        %v9814 = vmul.u32 %v9809, %v9812
        %v9815 = vmul.u32 %v9810, %v9811
        %v9816 = vmul.u32 %v9810, %v9812
        %v9817 = vshll.u32 %v9814, 16
        %v9818 = vshrl.u32 %v9814, 16
        %v9819 = vshll.u32 %v9815, 16
        %v9820 = vshrl.u32 %v9815, 16
        %vm9821 = vc.u32 %v9813, %v9817
        %v9822 = vsel %vm9821, 1, 0
        %v9823 = vadd.s32 %v9813, %v9817
        %v9824 = vadd.s32 %v9816, %v9822
        %vm9825 = vc.u32 %v9823, %v9819
        %v9826 = vsel %vm9825, 1, 0
        %v9827 = vadd.s32 %v9823, %v9819
        %v9828 = vadd.s32 %v9824, %v9826
        %v9829 = vadd.s32 %v9828, %v9818
        %v9830 = vadd.s32 %v9829, %v9820
        %v9831 = vmul.u32 %v9786, %v9777
        %v9832 = vadd.s32 %v9808, %v9827
        %vm9833 = vc.u32 %v9808, %v9827
        %v9834 = vadd.s32 %v9830, 1
        %v9835 = vsel %vm9833, %v9834, %v9830
        %v9836 = vadd.s32 %v9831, %v9835
        %v9837 = vadd.s32 %v9836, 536870912
        %v9838 = vshrl.u32 %v9837, 30
        %v9839 = vshll.u32 %v9838, 30
        %v9840 = vsub.s32 %v9836, %v9839
        %vm9841 = vcmp.lt.s32.totalorder %v9840, 0
        %v9842 = vsub.s32 0, %v9840
        %v9843 = vsel %vm9841, %v9842, %v9840
        %v9844 = vclz %v9843
        %v9845 = vsub.s32 %v9844, 2
        %vm9846 = vcmp.gt.s32.totalorder 0, %v9845
        %v9847 = vsel %vm9846, 0, %v9845
        %v9848 = vsub.s32 32, %v9847
        %v9849 = vshll.u32 %v9840, %v9847
        %v9850 = vshrl.u32 %v9832, %v9848
        %v9851 = vor.u32 %v9849, %v9850
        %v9852 = vsub.s32 4294967266, %v9847
        %v9853 = vadd.s32 %v9852, 127
        %v9854 = vshll.u32 %v9853, 23
        %v9855 = vor.u32 4788187, %v9854
        %v9856 = vand.u32 2147483647, %v9855
        %v9858 = vcvt.s32.f32 %v9851
        %v9859 = vmul.f32 %v9858, %v9856
        %v9860 = vxor.u32 %v9859, 2147483648
        %v9861 = vsel %vm9740, %v9860, %v9859
        %v9862 = vsub.s32 4, %v9838
        %v9863 = vsel %vm9740, %v9862, %v9838
        %v9864 = vsel %vm9739, %v5717, %v9861
        %v9865 = vsel %vm9739, 0, %v9863
        %v9866 = vmul.f32 %v9864, %v9864
        %v9867 = vmul.f32 %v9866, -0.001358992
        %v9868 = vadd.f32 %v9867, 0.041655596
        %v9869 = vmul.f32 %v9866, %v9868
        %v9870 = vadd.f32 %v9869, -0.4999988
        %v9871 = vmul.f32 %v9866, %v9870
        %v9872 = vadd.f32 1.0, %v9871
        %v9873 = vmul.f32 %v9864, %v9864
        %v9874 = vmul.f32 %v9873, -0.00019511016
        %v9875 = vadd.f32 %v9874, 0.008332121
        %v9876 = vmul.f32 %v9873, %v9875
        %v9877 = vadd.f32 %v9876, -0.16666654
        %v9878 = vmul.f32 %v9873, %v9877
        %v9879 = vadd.f32 %v9878, 1.0
        %v9880 = vmul.f32 %v9879, %v9864
        %vm9881 = vweird.f32 %v5717
        %v9882 = vadd.s32 %v9865, 3
        %v9883 = vand.u32 %v9882, 3
        %vm9884 = vcmp.lt.s32.totalorder %v9883, 2
        %vm9885 = vcmp.eq.s32.totalorder %v9883, 0
        %v9886 = vxor.u32 %v9880, 2147483648
        %v9887 = vsel %vm9885, %v9872, %v9886
        %vm9888 = vcmp.eq.s32.totalorder %v9883, 2
        %v9889 = vxor.u32 %v9872, 2147483648
        %v9890 = vsel %vm9888, %v9889, %v9880
        %v9891 = vsel %vm9884, %v9887, %v9890
        %v9892 = vsel %vm9881, nan, %v9891
        %v9893 = vand.u32 2147483647, %v5758
        %vm9894 = vcmp.le.f32.partialorder %v9893, 0.7853982
        %vm9895 = vcmp.lt.s32.totalorder %v5758, 0
        %v9896 = vand.u32 %v5758, 2139095040
        %v9897 = vshrl.u32 %v9896, 23
        %v9898 = vsub.s32 %v9897, 127
        %v9899 = vand.u32 2147483647, %v5758
        %v9900 = vand.u32 %v9899, 8388607
        %v9901 = vor.u32 %v9900, 8388608
        %v9902 = vsub.s32 0, %v9901
        %v9903 = vadd.s32 %v9898, 1
        %vm9904 = vcmp.gt.s32.totalorder %v9903, 0
        %v9905 = vsel %vm9904, %v9903, 0
        %v9906 = vshrl.u32 %v9905, 5
        %v9907 = vand.u32 %v9905, 31
        %v9908 = vsub.s32 32, %v9907
        %v9909 = vshrl.u32 683565275, %v9908
        %v9910 = vshll.u32 683565275, %v9907
        %v9911 = vshrl.u32 2475754826, %v9908
        %v9912 = vor.u32 %v9910, %v9911
        %v9913 = vshll.u32 2475754826, %v9907
        %v9914 = vshrl.u32 2131351028, %v9908
        %v9915 = vor.u32 %v9913, %v9914
        %v9916 = vshll.u32 2131351028, %v9907
        %v9917 = vshrl.u32 2102212464, %v9908
        %v9918 = vor.u32 %v9916, %v9917
        %v9919 = vshll.u32 2102212464, %v9907
        %v9920 = vshrl.u32 920167782, %v9908
        %v9921 = vor.u32 %v9919, %v9920
        %v9922 = vshll.u32 920167782, %v9907
        %v9923 = vshrl.u32 1326507024, %v9908
        %v9924 = vor.u32 %v9922, %v9923
        %vm9925 = vcmp.lt.s32.totalorder %v9906, 1
        %vm9926 = vcmp.lt.s32.totalorder %v9906, 2
        %vm9927 = vcmp.lt.s32.totalorder %v9906, 3
        %vm9928 = vcmp.lt.s32.totalorder %v9906, 4
        %v9929 = vsel %vm9925, %v9909, %v9912
        %v9930 = vsel %vm9928, %v9918, 2102212464
        %v9931 = vsel %vm9927, %v9915, %v9930
        %v9932 = vsel %vm9926, %v9929, %v9931
        %v9933 = vsel %vm9925, %v9912, %v9915
        %v9934 = vsel %vm9928, %v9921, 920167782
        %v9935 = vsel %vm9927, %v9918, %v9934
        %v9936 = vsel %vm9926, %v9933, %v9935
        %v9937 = vsel %vm9925, %v9915, %v9918
        %v9938 = vsel %vm9928, %v9924, 1326507024
        %v9939 = vsel %vm9927, %v9921, %v9938
        %v9940 = vsel %vm9926, %v9937, %v9939
        %v9941 = vshll.u32 %v9901, 8
        %v9942 = vand.u32 %v9941, 65535
        %v9943 = vshrl.u32 %v9941, 16
        %v9944 = vand.u32 %v9940, 65535
        %v9945 = vshrl.u32 %v9940, 16
        %v9946 = vmul.u32 %v9942, %v9944
        %v9947 = vmul.u32 %v9942, %v9945
        %v9948 = vmul.u32 %v9943, %v9944
        %v9949 = vmul.u32 %v9943, %v9945
        %v9950 = vshll.u32 %v9947, 16
        %v9951 = vshrl.u32 %v9947, 16
        %v9952 = vshll.u32 %v9948, 16
        %v9953 = vshrl.u32 %v9948, 16
        %vm9954 = vc.u32 %v9946, %v9950
        %v9955 = vsel %vm9954, 1, 0
        %v9956 = vadd.s32 %v9946, %v9950
        %v9957 = vadd.s32 %v9949, %v9955
        %vm9958 = vc.u32 %v9956, %v9952
        %v9959 = vsel %vm9958, 1, 0
        %v9960 = vadd.s32 %v9956, %v9952
        %v9961 = vadd.s32 %v9957, %v9959
        %v9962 = vadd.s32 %v9961, %v9951
        %v9963 = vadd.s32 %v9962, %v9953
        %v9964 = vand.u32 %v9941, 65535
        %v9965 = vshrl.u32 %v9941, 16
        %v9966 = vand.u32 %v9936, 65535
        %v9967 = vshrl.u32 %v9936, 16
        %v9968 = vmul.u32 %v9964, %v9966
        %v9969 = vmul.u32 %v9964, %v9967
        %v9970 = vmul.u32 %v9965, %v9966
        %v9971 = vmul.u32 %v9965, %v9967
        %v9972 = vshll.u32 %v9969, 16
        %v9973 = vshrl.u32 %v9969, 16
        %v9974 = vshll.u32 %v9970, 16
        %v9975 = vshrl.u32 %v9970, 16
        %vm9976 = vc.u32 %v9968, %v9972
        %v9977 = vsel %vm9976, 1, 0
        %v9978 = vadd.s32 %v9968, %v9972
        %v9979 = vadd.s32 %v9971, %v9977
        %vm9980 = vc.u32 %v9978, %v9974
        %v9981 = vsel %vm9980, 1, 0
        %v9982 = vadd.s32 %v9978, %v9974
        %v9983 = vadd.s32 %v9979, %v9981
        %v9984 = vadd.s32 %v9983, %v9973
        %v9985 = vadd.s32 %v9984, %v9975
        %v9986 = vmul.u32 %v9941, %v9932
        %v9987 = vadd.s32 %v9963, %v9982
        %vm9988 = vc.u32 %v9963, %v9982
        %v9989 = vadd.s32 %v9985, 1
        %v9990 = vsel %vm9988, %v9989, %v9985
        %v9991 = vadd.s32 %v9986, %v9990
        %v9992 = vadd.s32 %v9991, 536870912
        %v9993 = vshrl.u32 %v9992, 30
        %v9994 = vshll.u32 %v9993, 30
        %v9995 = vsub.s32 %v9991, %v9994
        %vm9996 = vcmp.lt.s32.totalorder %v9995, 0
        %v9997 = vsub.s32 0, %v9995
        %v9998 = vsel %vm9996, %v9997, %v9995
        %v9999 = vclz %v9998
        %v10000 = vsub.s32 %v9999, 2
        %vm10001 = vcmp.gt.s32.totalorder 0, %v10000
        %v10002 = vsel %vm10001, 0, %v10000
        %v10003 = vsub.s32 32, %v10002
        %v10004 = vshll.u32 %v9995, %v10002
        %v10005 = vshrl.u32 %v9987, %v10003
        %v10006 = vor.u32 %v10004, %v10005
        %v10007 = vsub.s32 4294967266, %v10002
        %v10008 = vadd.s32 %v10007, 127
        %v10009 = vshll.u32 %v10008, 23
        %v10010 = vor.u32 4788187, %v10009
        %v10011 = vand.u32 2147483647, %v10010
        %v10013 = vcvt.s32.f32 %v10006
        %v10014 = vmul.f32 %v10013, %v10011
        %v10015 = vxor.u32 %v10014, 2147483648
        %v10016 = vsel %vm9895, %v10015, %v10014
        %v10017 = vsub.s32 4, %v9993
        %v10018 = vsel %vm9895, %v10017, %v9993
        %v10019 = vsel %vm9894, %v5758, %v10016
        %v10020 = vsel %vm9894, 0, %v10018
        %v10021 = vmul.f32 %v10019, %v10019
        %v10022 = vmul.f32 %v10021, -0.001358992
        %v10023 = vadd.f32 %v10022, 0.041655596
        %v10024 = vmul.f32 %v10021, %v10023
        %v10025 = vadd.f32 %v10024, -0.4999988
        %v10026 = vmul.f32 %v10021, %v10025
        %v10027 = vadd.f32 1.0, %v10026
        %v10028 = vmul.f32 %v10019, %v10019
        %v10029 = vmul.f32 %v10028, -0.00019511016
        %v10030 = vadd.f32 %v10029, 0.008332121
        %v10031 = vmul.f32 %v10028, %v10030
        %v10032 = vadd.f32 %v10031, -0.16666654
        %v10033 = vmul.f32 %v10028, %v10032
        %v10034 = vadd.f32 %v10033, 1.0
        %v10035 = vmul.f32 %v10034, %v10019
        %vm10036 = vweird.f32 %v5758
        %v10037 = vadd.s32 %v10020, 3
        %v10038 = vand.u32 %v10037, 3
        %vm10039 = vcmp.lt.s32.totalorder %v10038, 2
        %vm10040 = vcmp.eq.s32.totalorder %v10038, 0
        %v10041 = vxor.u32 %v10035, 2147483648
        %v10042 = vsel %vm10040, %v10027, %v10041
        %vm10043 = vcmp.eq.s32.totalorder %v10038, 2
        %v10044 = vxor.u32 %v10027, 2147483648
        %v10045 = vsel %vm10043, %v10044, %v10035
        %v10046 = vsel %vm10039, %v10042, %v10045
        %v10047 = vsel %vm10036, nan, %v10046
        %v10048 = vand.u32 2147483647, %v5799
        %vm10049 = vcmp.le.f32.partialorder %v10048, 0.7853982
        %vm10050 = vcmp.lt.s32.totalorder %v5799, 0
        %v10051 = vand.u32 %v5799, 2139095040
        %v10052 = vshrl.u32 %v10051, 23
        %v10053 = vsub.s32 %v10052, 127
        %v10054 = vand.u32 2147483647, %v5799
        %v10055 = vand.u32 %v10054, 8388607
        %v10056 = vor.u32 %v10055, 8388608
        %v10057 = vsub.s32 0, %v10056
        %v10058 = vadd.s32 %v10053, 1
        %vm10059 = vcmp.gt.s32.totalorder %v10058, 0
        %v10060 = vsel %vm10059, %v10058, 0
        %v10061 = vshrl.u32 %v10060, 5
        %v10062 = vand.u32 %v10060, 31
        %v10063 = vsub.s32 32, %v10062
        %v10064 = vshrl.u32 683565275, %v10063
        %v10065 = vshll.u32 683565275, %v10062
        %v10066 = vshrl.u32 2475754826, %v10063
        %v10067 = vor.u32 %v10065, %v10066
        %v10068 = vshll.u32 2475754826, %v10062
        %v10069 = vshrl.u32 2131351028, %v10063
        %v10070 = vor.u32 %v10068, %v10069
        %v10071 = vshll.u32 2131351028, %v10062
        %v10072 = vshrl.u32 2102212464, %v10063
        %v10073 = vor.u32 %v10071, %v10072
        %v10074 = vshll.u32 2102212464, %v10062
        %v10075 = vshrl.u32 920167782, %v10063
        %v10076 = vor.u32 %v10074, %v10075
        %v10077 = vshll.u32 920167782, %v10062
        %v10078 = vshrl.u32 1326507024, %v10063
        %v10079 = vor.u32 %v10077, %v10078
        %vm10080 = vcmp.lt.s32.totalorder %v10061, 1
        %vm10081 = vcmp.lt.s32.totalorder %v10061, 2
        %vm10082 = vcmp.lt.s32.totalorder %v10061, 3
        %vm10083 = vcmp.lt.s32.totalorder %v10061, 4
        %v10084 = vsel %vm10080, %v10064, %v10067
        %v10085 = vsel %vm10083, %v10073, 2102212464
        %v10086 = vsel %vm10082, %v10070, %v10085
        %v10087 = vsel %vm10081, %v10084, %v10086
        %v10088 = vsel %vm10080, %v10067, %v10070
        %v10089 = vsel %vm10083, %v10076, 920167782
        %v10090 = vsel %vm10082, %v10073, %v10089
        %v10091 = vsel %vm10081, %v10088, %v10090
        %v10092 = vsel %vm10080, %v10070, %v10073
        %v10093 = vsel %vm10083, %v10079, 1326507024
        %v10094 = vsel %vm10082, %v10076, %v10093
        %v10095 = vsel %vm10081, %v10092, %v10094
        %v10096 = vshll.u32 %v10056, 8
        %v10097 = vand.u32 %v10096, 65535
        %v10098 = vshrl.u32 %v10096, 16
        %v10099 = vand.u32 %v10095, 65535
        %v10100 = vshrl.u32 %v10095, 16
        %v10101 = vmul.u32 %v10097, %v10099
        %v10102 = vmul.u32 %v10097, %v10100
        %v10103 = vmul.u32 %v10098, %v10099
        %v10104 = vmul.u32 %v10098, %v10100
        %v10105 = vshll.u32 %v10102, 16
        %v10106 = vshrl.u32 %v10102, 16
        %v10107 = vshll.u32 %v10103, 16
        %v10108 = vshrl.u32 %v10103, 16
        %vm10109 = vc.u32 %v10101, %v10105
        %v10110 = vsel %vm10109, 1, 0
        %v10111 = vadd.s32 %v10101, %v10105
        %v10112 = vadd.s32 %v10104, %v10110
        %vm10113 = vc.u32 %v10111, %v10107
        %v10114 = vsel %vm10113, 1, 0
        %v10115 = vadd.s32 %v10111, %v10107
        %v10116 = vadd.s32 %v10112, %v10114
        %v10117 = vadd.s32 %v10116, %v10106
        %v10118 = vadd.s32 %v10117, %v10108
        %v10119 = vand.u32 %v10096, 65535
        %v10120 = vshrl.u32 %v10096, 16
        %v10121 = vand.u32 %v10091, 65535
        %v10122 = vshrl.u32 %v10091, 16
        %v10123 = vmul.u32 %v10119, %v10121
        %v10124 = vmul.u32 %v10119, %v10122
        %v10125 = vmul.u32 %v10120, %v10121
        %v10126 = vmul.u32 %v10120, %v10122
        %v10127 = vshll.u32 %v10124, 16
        %v10128 = vshrl.u32 %v10124, 16
        %v10129 = vshll.u32 %v10125, 16
        %v10130 = vshrl.u32 %v10125, 16
        %vm10131 = vc.u32 %v10123, %v10127
        %v10132 = vsel %vm10131, 1, 0
        %v10133 = vadd.s32 %v10123, %v10127
        %v10134 = vadd.s32 %v10126, %v10132
        %vm10135 = vc.u32 %v10133, %v10129
        %v10136 = vsel %vm10135, 1, 0
        %v10137 = vadd.s32 %v10133, %v10129
        %v10138 = vadd.s32 %v10134, %v10136
        %v10139 = vadd.s32 %v10138, %v10128
        %v10140 = vadd.s32 %v10139, %v10130
        %v10141 = vmul.u32 %v10096, %v10087
        %v10142 = vadd.s32 %v10118, %v10137
        %vm10143 = vc.u32 %v10118, %v10137
        %v10144 = vadd.s32 %v10140, 1
        %v10145 = vsel %vm10143, %v10144, %v10140
        %v10146 = vadd.s32 %v10141, %v10145
        %v10147 = vadd.s32 %v10146, 536870912
        %v10148 = vshrl.u32 %v10147, 30
        %v10149 = vshll.u32 %v10148, 30
        %v10150 = vsub.s32 %v10146, %v10149
        %vm10151 = vcmp.lt.s32.totalorder %v10150, 0
        %v10152 = vsub.s32 0, %v10150
        %v10153 = vsel %vm10151, %v10152, %v10150
        %v10154 = vclz %v10153
        %v10155 = vsub.s32 %v10154, 2
        %vm10156 = vcmp.gt.s32.totalorder 0, %v10155
        %v10157 = vsel %vm10156, 0, %v10155
        %v10158 = vsub.s32 32, %v10157
        %v10159 = vshll.u32 %v10150, %v10157
        %v10160 = vshrl.u32 %v10142, %v10158
        %v10161 = vor.u32 %v10159, %v10160
        %v10162 = vsub.s32 4294967266, %v10157
        %v10163 = vadd.s32 %v10162, 127
        %v10164 = vshll.u32 %v10163, 23
        %v10165 = vor.u32 4788187, %v10164
        %v10166 = vand.u32 2147483647, %v10165
        %v10168 = vcvt.s32.f32 %v10161
        %v10169 = vmul.f32 %v10168, %v10166
        %v10170 = vxor.u32 %v10169, 2147483648
        %v10171 = vsel %vm10050, %v10170, %v10169
        %v10172 = vsub.s32 4, %v10148
        %v10173 = vsel %vm10050, %v10172, %v10148
        %v10174 = vsel %vm10049, %v5799, %v10171
        %v10175 = vsel %vm10049, 0, %v10173
        %v10176 = vmul.f32 %v10174, %v10174
        %v10177 = vmul.f32 %v10176, -0.001358992
        %v10178 = vadd.f32 %v10177, 0.041655596
        %v10179 = vmul.f32 %v10176, %v10178
        %v10180 = vadd.f32 %v10179, -0.4999988
        %v10181 = vmul.f32 %v10176, %v10180
        %v10182 = vadd.f32 1.0, %v10181
        %v10183 = vmul.f32 %v10174, %v10174
        %v10184 = vmul.f32 %v10183, -0.00019511016
        %v10185 = vadd.f32 %v10184, 0.008332121
        %v10186 = vmul.f32 %v10183, %v10185
        %v10187 = vadd.f32 %v10186, -0.16666654
        %v10188 = vmul.f32 %v10183, %v10187
        %v10189 = vadd.f32 %v10188, 1.0
        %v10190 = vmul.f32 %v10189, %v10174
        %vm10191 = vweird.f32 %v5799
        %v10192 = vadd.s32 %v10175, 3
        %v10193 = vand.u32 %v10192, 3
        %vm10194 = vcmp.lt.s32.totalorder %v10193, 2
        %vm10195 = vcmp.eq.s32.totalorder %v10193, 0
        %v10196 = vxor.u32 %v10190, 2147483648
        %v10197 = vsel %vm10195, %v10182, %v10196
        %vm10198 = vcmp.eq.s32.totalorder %v10193, 2
        %v10199 = vxor.u32 %v10182, 2147483648
        %v10200 = vsel %vm10198, %v10199, %v10190
        %v10201 = vsel %vm10194, %v10197, %v10200
        %v10202 = vsel %vm10191, nan, %v10201
        %v10203 = vand.u32 2147483647, %v5840
        %vm10204 = vcmp.le.f32.partialorder %v10203, 0.7853982
        %vm10205 = vcmp.lt.s32.totalorder %v5840, 0
        %v10206 = vand.u32 %v5840, 2139095040
        %v10207 = vshrl.u32 %v10206, 23
        %v10208 = vsub.s32 %v10207, 127
        %v10209 = vand.u32 2147483647, %v5840
        %v10210 = vand.u32 %v10209, 8388607
        %v10211 = vor.u32 %v10210, 8388608
        %v10212 = vsub.s32 0, %v10211
        %v10213 = vadd.s32 %v10208, 1
        %vm10214 = vcmp.gt.s32.totalorder %v10213, 0
        %v10215 = vsel %vm10214, %v10213, 0
        %v10216 = vshrl.u32 %v10215, 5
        %v10217 = vand.u32 %v10215, 31
        %v10218 = vsub.s32 32, %v10217
        %v10219 = vshrl.u32 683565275, %v10218
        %v10220 = vshll.u32 683565275, %v10217
        %v10221 = vshrl.u32 2475754826, %v10218
        %v10222 = vor.u32 %v10220, %v10221
        %v10223 = vshll.u32 2475754826, %v10217
        %v10224 = vshrl.u32 2131351028, %v10218
        %v10225 = vor.u32 %v10223, %v10224
        %v10226 = vshll.u32 2131351028, %v10217
        %v10227 = vshrl.u32 2102212464, %v10218
        %v10228 = vor.u32 %v10226, %v10227
        %v10229 = vshll.u32 2102212464, %v10217
        %v10230 = vshrl.u32 920167782, %v10218
        %v10231 = vor.u32 %v10229, %v10230
        %v10232 = vshll.u32 920167782, %v10217
        %v10233 = vshrl.u32 1326507024, %v10218
        %v10234 = vor.u32 %v10232, %v10233
        %vm10235 = vcmp.lt.s32.totalorder %v10216, 1
        %vm10236 = vcmp.lt.s32.totalorder %v10216, 2
        %vm10237 = vcmp.lt.s32.totalorder %v10216, 3
        %vm10238 = vcmp.lt.s32.totalorder %v10216, 4
        %v10239 = vsel %vm10235, %v10219, %v10222
        %v10240 = vsel %vm10238, %v10228, 2102212464
        %v10241 = vsel %vm10237, %v10225, %v10240
        %v10242 = vsel %vm10236, %v10239, %v10241
        %v10243 = vsel %vm10235, %v10222, %v10225
        %v10244 = vsel %vm10238, %v10231, 920167782
        %v10245 = vsel %vm10237, %v10228, %v10244
        %v10246 = vsel %vm10236, %v10243, %v10245
        %v10247 = vsel %vm10235, %v10225, %v10228
        %v10248 = vsel %vm10238, %v10234, 1326507024
        %v10249 = vsel %vm10237, %v10231, %v10248
        %v10250 = vsel %vm10236, %v10247, %v10249
        %v10251 = vshll.u32 %v10211, 8
        %v10252 = vand.u32 %v10251, 65535
        %v10253 = vshrl.u32 %v10251, 16
        %v10254 = vand.u32 %v10250, 65535
        %v10255 = vshrl.u32 %v10250, 16
        %v10256 = vmul.u32 %v10252, %v10254
        %v10257 = vmul.u32 %v10252, %v10255
        %v10258 = vmul.u32 %v10253, %v10254
        %v10259 = vmul.u32 %v10253, %v10255
        %v10260 = vshll.u32 %v10257, 16
        %v10261 = vshrl.u32 %v10257, 16
        %v10262 = vshll.u32 %v10258, 16
        %v10263 = vshrl.u32 %v10258, 16
        %vm10264 = vc.u32 %v10256, %v10260
        %v10265 = vsel %vm10264, 1, 0
        %v10266 = vadd.s32 %v10256, %v10260
        %v10267 = vadd.s32 %v10259, %v10265
        %vm10268 = vc.u32 %v10266, %v10262
        %v10269 = vsel %vm10268, 1, 0
        %v10270 = vadd.s32 %v10266, %v10262
        %v10271 = vadd.s32 %v10267, %v10269
        %v10272 = vadd.s32 %v10271, %v10261
        %v10273 = vadd.s32 %v10272, %v10263
        %v10274 = vand.u32 %v10251, 65535
        %v10275 = vshrl.u32 %v10251, 16
        %v10276 = vand.u32 %v10246, 65535
        %v10277 = vshrl.u32 %v10246, 16
        %v10278 = vmul.u32 %v10274, %v10276
        %v10279 = vmul.u32 %v10274, %v10277
        %v10280 = vmul.u32 %v10275, %v10276
        %v10281 = vmul.u32 %v10275, %v10277
        %v10282 = vshll.u32 %v10279, 16
        %v10283 = vshrl.u32 %v10279, 16
        %v10284 = vshll.u32 %v10280, 16
        %v10285 = vshrl.u32 %v10280, 16
        %vm10286 = vc.u32 %v10278, %v10282
        %v10287 = vsel %vm10286, 1, 0
        %v10288 = vadd.s32 %v10278, %v10282
        %v10289 = vadd.s32 %v10281, %v10287
        %vm10290 = vc.u32 %v10288, %v10284
        %v10291 = vsel %vm10290, 1, 0
        %v10292 = vadd.s32 %v10288, %v10284
        %v10293 = vadd.s32 %v10289, %v10291
        %v10294 = vadd.s32 %v10293, %v10283
        %v10295 = vadd.s32 %v10294, %v10285
        %v10296 = vmul.u32 %v10251, %v10242
        %v10297 = vadd.s32 %v10273, %v10292
        %vm10298 = vc.u32 %v10273, %v10292
        %v10299 = vadd.s32 %v10295, 1
        %v10300 = vsel %vm10298, %v10299, %v10295
        %v10301 = vadd.s32 %v10296, %v10300
        %v10302 = vadd.s32 %v10301, 536870912
        %v10303 = vshrl.u32 %v10302, 30
        %v10304 = vshll.u32 %v10303, 30
        %v10305 = vsub.s32 %v10301, %v10304
        %vm10306 = vcmp.lt.s32.totalorder %v10305, 0
        %v10307 = vsub.s32 0, %v10305
        %v10308 = vsel %vm10306, %v10307, %v10305
        %v10309 = vclz %v10308
        %v10310 = vsub.s32 %v10309, 2
        %vm10311 = vcmp.gt.s32.totalorder 0, %v10310
        %v10312 = vsel %vm10311, 0, %v10310
        %v10313 = vsub.s32 32, %v10312
        %v10314 = vshll.u32 %v10305, %v10312
        %v10315 = vshrl.u32 %v10297, %v10313
        %v10316 = vor.u32 %v10314, %v10315
        %v10317 = vsub.s32 4294967266, %v10312
        %v10318 = vadd.s32 %v10317, 127
        %v10319 = vshll.u32 %v10318, 23
        %v10320 = vor.u32 4788187, %v10319
        %v10321 = vand.u32 2147483647, %v10320
        %v10323 = vcvt.s32.f32 %v10316
        %v10324 = vmul.f32 %v10323, %v10321
        %v10325 = vxor.u32 %v10324, 2147483648
        %v10326 = vsel %vm10205, %v10325, %v10324
        %v10327 = vsub.s32 4, %v10303
        %v10328 = vsel %vm10205, %v10327, %v10303
        %v10329 = vsel %vm10204, %v5840, %v10326
        %v10330 = vsel %vm10204, 0, %v10328
        %v10331 = vmul.f32 %v10329, %v10329
        %v10332 = vmul.f32 %v10331, -0.001358992
        %v10333 = vadd.f32 %v10332, 0.041655596
        %v10334 = vmul.f32 %v10331, %v10333
        %v10335 = vadd.f32 %v10334, -0.4999988
        %v10336 = vmul.f32 %v10331, %v10335
        %v10337 = vadd.f32 1.0, %v10336
        %v10338 = vmul.f32 %v10329, %v10329
        %v10339 = vmul.f32 %v10338, -0.00019511016
        %v10340 = vadd.f32 %v10339, 0.008332121
        %v10341 = vmul.f32 %v10338, %v10340
        %v10342 = vadd.f32 %v10341, -0.16666654
        %v10343 = vmul.f32 %v10338, %v10342
        %v10344 = vadd.f32 %v10343, 1.0
        %v10345 = vmul.f32 %v10344, %v10329
        %vm10346 = vweird.f32 %v5840
        %v10347 = vadd.s32 %v10330, 3
        %v10348 = vand.u32 %v10347, 3
        %vm10349 = vcmp.lt.s32.totalorder %v10348, 2
        %vm10350 = vcmp.eq.s32.totalorder %v10348, 0
        %v10351 = vxor.u32 %v10345, 2147483648
        %v10352 = vsel %vm10350, %v10337, %v10351
        %vm10353 = vcmp.eq.s32.totalorder %v10348, 2
        %v10354 = vxor.u32 %v10337, 2147483648
        %v10355 = vsel %vm10353, %v10354, %v10345
        %v10356 = vsel %vm10349, %v10352, %v10355
        %v10357 = vsel %vm10346, nan, %v10356
        %v10358 = vand.u32 2147483647, %v5881
        %vm10359 = vcmp.le.f32.partialorder %v10358, 0.7853982
        %vm10360 = vcmp.lt.s32.totalorder %v5881, 0
        %v10361 = vand.u32 %v5881, 2139095040
        %v10362 = vshrl.u32 %v10361, 23
        %v10363 = vsub.s32 %v10362, 127
        %v10364 = vand.u32 2147483647, %v5881
        %v10365 = vand.u32 %v10364, 8388607
        %v10366 = vor.u32 %v10365, 8388608
        %v10367 = vsub.s32 0, %v10366
        %v10368 = vadd.s32 %v10363, 1
        %vm10369 = vcmp.gt.s32.totalorder %v10368, 0
        %v10370 = vsel %vm10369, %v10368, 0
        %v10371 = vshrl.u32 %v10370, 5
        %v10372 = vand.u32 %v10370, 31
        %v10373 = vsub.s32 32, %v10372
        %v10374 = vshrl.u32 683565275, %v10373
        %v10375 = vshll.u32 683565275, %v10372
        %v10376 = vshrl.u32 2475754826, %v10373
        %v10377 = vor.u32 %v10375, %v10376
        %v10378 = vshll.u32 2475754826, %v10372
        %v10379 = vshrl.u32 2131351028, %v10373
        %v10380 = vor.u32 %v10378, %v10379
        %v10381 = vshll.u32 2131351028, %v10372
        %v10382 = vshrl.u32 2102212464, %v10373
        %v10383 = vor.u32 %v10381, %v10382
        %v10384 = vshll.u32 2102212464, %v10372
        %v10385 = vshrl.u32 920167782, %v10373
        %v10386 = vor.u32 %v10384, %v10385
        %v10387 = vshll.u32 920167782, %v10372
        %v10388 = vshrl.u32 1326507024, %v10373
        %v10389 = vor.u32 %v10387, %v10388
        %vm10390 = vcmp.lt.s32.totalorder %v10371, 1
        %vm10391 = vcmp.lt.s32.totalorder %v10371, 2
        %vm10392 = vcmp.lt.s32.totalorder %v10371, 3
        %vm10393 = vcmp.lt.s32.totalorder %v10371, 4
        %v10394 = vsel %vm10390, %v10374, %v10377
        %v10395 = vsel %vm10393, %v10383, 2102212464
        %v10396 = vsel %vm10392, %v10380, %v10395
        %v10397 = vsel %vm10391, %v10394, %v10396
        %v10398 = vsel %vm10390, %v10377, %v10380
        %v10399 = vsel %vm10393, %v10386, 920167782
        %v10400 = vsel %vm10392, %v10383, %v10399
        %v10401 = vsel %vm10391, %v10398, %v10400
        %v10402 = vsel %vm10390, %v10380, %v10383
        %v10403 = vsel %vm10393, %v10389, 1326507024
        %v10404 = vsel %vm10392, %v10386, %v10403
        %v10405 = vsel %vm10391, %v10402, %v10404
        %v10406 = vshll.u32 %v10366, 8
        %v10407 = vand.u32 %v10406, 65535
        %v10408 = vshrl.u32 %v10406, 16
        %v10409 = vand.u32 %v10405, 65535
        %v10410 = vshrl.u32 %v10405, 16
        %v10411 = vmul.u32 %v10407, %v10409
        %v10412 = vmul.u32 %v10407, %v10410
        %v10413 = vmul.u32 %v10408, %v10409
        %v10414 = vmul.u32 %v10408, %v10410
        %v10415 = vshll.u32 %v10412, 16
        %v10416 = vshrl.u32 %v10412, 16
        %v10417 = vshll.u32 %v10413, 16
        %v10418 = vshrl.u32 %v10413, 16
        %vm10419 = vc.u32 %v10411, %v10415
        %v10420 = vsel %vm10419, 1, 0
        %v10421 = vadd.s32 %v10411, %v10415
        %v10422 = vadd.s32 %v10414, %v10420
        %vm10423 = vc.u32 %v10421, %v10417
        %v10424 = vsel %vm10423, 1, 0
        %v10425 = vadd.s32 %v10421, %v10417
        %v10426 = vadd.s32 %v10422, %v10424
        %v10427 = vadd.s32 %v10426, %v10416
        %v10428 = vadd.s32 %v10427, %v10418
        %v10429 = vand.u32 %v10406, 65535
        %v10430 = vshrl.u32 %v10406, 16
        %v10431 = vand.u32 %v10401, 65535
        %v10432 = vshrl.u32 %v10401, 16
        %v10433 = vmul.u32 %v10429, %v10431
        %v10434 = vmul.u32 %v10429, %v10432
        %v10435 = vmul.u32 %v10430, %v10431
        %v10436 = vmul.u32 %v10430, %v10432
        %v10437 = vshll.u32 %v10434, 16
        %v10438 = vshrl.u32 %v10434, 16
        %v10439 = vshll.u32 %v10435, 16
        %v10440 = vshrl.u32 %v10435, 16
        %vm10441 = vc.u32 %v10433, %v10437
        %v10442 = vsel %vm10441, 1, 0
        %v10443 = vadd.s32 %v10433, %v10437
        %v10444 = vadd.s32 %v10436, %v10442
        %vm10445 = vc.u32 %v10443, %v10439
        %v10446 = vsel %vm10445, 1, 0
        %v10447 = vadd.s32 %v10443, %v10439
        %v10448 = vadd.s32 %v10444, %v10446
        %v10449 = vadd.s32 %v10448, %v10438
        %v10450 = vadd.s32 %v10449, %v10440
        %v10451 = vmul.u32 %v10406, %v10397
        %v10452 = vadd.s32 %v10428, %v10447
        %vm10453 = vc.u32 %v10428, %v10447
        %v10454 = vadd.s32 %v10450, 1
        %v10455 = vsel %vm10453, %v10454, %v10450
        %v10456 = vadd.s32 %v10451, %v10455
        %v10457 = vadd.s32 %v10456, 536870912
        %v10458 = vshrl.u32 %v10457, 30
        %v10459 = vshll.u32 %v10458, 30
        %v10460 = vsub.s32 %v10456, %v10459
        %vm10461 = vcmp.lt.s32.totalorder %v10460, 0
        %v10462 = vsub.s32 0, %v10460
        %v10463 = vsel %vm10461, %v10462, %v10460
        %v10464 = vclz %v10463
        %v10465 = vsub.s32 %v10464, 2
        %vm10466 = vcmp.gt.s32.totalorder 0, %v10465
        %v10467 = vsel %vm10466, 0, %v10465
        %v10468 = vsub.s32 32, %v10467
        %v10469 = vshll.u32 %v10460, %v10467
        %v10470 = vshrl.u32 %v10452, %v10468
        %v10471 = vor.u32 %v10469, %v10470
        %v10472 = vsub.s32 4294967266, %v10467
        %v10473 = vadd.s32 %v10472, 127
        %v10474 = vshll.u32 %v10473, 23
        %v10475 = vor.u32 4788187, %v10474
        %v10476 = vand.u32 2147483647, %v10475
        %v10478 = vcvt.s32.f32 %v10471
        %v10479 = vmul.f32 %v10478, %v10476
        %v10480 = vxor.u32 %v10479, 2147483648
        %v10481 = vsel %vm10360, %v10480, %v10479
        %v10482 = vsub.s32 4, %v10458
        %v10483 = vsel %vm10360, %v10482, %v10458
        %v10484 = vsel %vm10359, %v5881, %v10481
        %v10485 = vsel %vm10359, 0, %v10483
        %v10486 = vmul.f32 %v10484, %v10484
        %v10487 = vmul.f32 %v10486, -0.001358992
        %v10488 = vadd.f32 %v10487, 0.041655596
        %v10489 = vmul.f32 %v10486, %v10488
        %v10490 = vadd.f32 %v10489, -0.4999988
        %v10491 = vmul.f32 %v10486, %v10490
        %v10492 = vadd.f32 1.0, %v10491
        %v10493 = vmul.f32 %v10484, %v10484
        %v10494 = vmul.f32 %v10493, -0.00019511016
        %v10495 = vadd.f32 %v10494, 0.008332121
        %v10496 = vmul.f32 %v10493, %v10495
        %v10497 = vadd.f32 %v10496, -0.16666654
        %v10498 = vmul.f32 %v10493, %v10497
        %v10499 = vadd.f32 %v10498, 1.0
        %v10500 = vmul.f32 %v10499, %v10484
        %vm10501 = vweird.f32 %v5881
        %v10502 = vadd.s32 %v10485, 3
        %v10503 = vand.u32 %v10502, 3
        %vm10504 = vcmp.lt.s32.totalorder %v10503, 2
        %vm10505 = vcmp.eq.s32.totalorder %v10503, 0
        %v10506 = vxor.u32 %v10500, 2147483648
        %v10507 = vsel %vm10505, %v10492, %v10506
        %vm10508 = vcmp.eq.s32.totalorder %v10503, 2
        %v10509 = vxor.u32 %v10492, 2147483648
        %v10510 = vsel %vm10508, %v10509, %v10500
        %v10511 = vsel %vm10504, %v10507, %v10510
        %v10512 = vsel %vm10501, nan, %v10511
        %v10513 = vand.u32 2147483647, %v5922
        %vm10514 = vcmp.le.f32.partialorder %v10513, 0.7853982
        %vm10515 = vcmp.lt.s32.totalorder %v5922, 0
        %v10516 = vand.u32 %v5922, 2139095040
        %v10517 = vshrl.u32 %v10516, 23
        %v10518 = vsub.s32 %v10517, 127
        %v10519 = vand.u32 2147483647, %v5922
        %v10520 = vand.u32 %v10519, 8388607
        %v10521 = vor.u32 %v10520, 8388608
        %v10522 = vsub.s32 0, %v10521
        %v10523 = vadd.s32 %v10518, 1
        %vm10524 = vcmp.gt.s32.totalorder %v10523, 0
        %v10525 = vsel %vm10524, %v10523, 0
        %v10526 = vshrl.u32 %v10525, 5
        %v10527 = vand.u32 %v10525, 31
        %v10528 = vsub.s32 32, %v10527
        %v10529 = vshrl.u32 683565275, %v10528
        %v10530 = vshll.u32 683565275, %v10527
        %v10531 = vshrl.u32 2475754826, %v10528
        %v10532 = vor.u32 %v10530, %v10531
        %v10533 = vshll.u32 2475754826, %v10527
        %v10534 = vshrl.u32 2131351028, %v10528
        %v10535 = vor.u32 %v10533, %v10534
        %v10536 = vshll.u32 2131351028, %v10527
        %v10537 = vshrl.u32 2102212464, %v10528
        %v10538 = vor.u32 %v10536, %v10537
        %v10539 = vshll.u32 2102212464, %v10527
        %v10540 = vshrl.u32 920167782, %v10528
        %v10541 = vor.u32 %v10539, %v10540
        %v10542 = vshll.u32 920167782, %v10527
        %v10543 = vshrl.u32 1326507024, %v10528
        %v10544 = vor.u32 %v10542, %v10543
        %vm10545 = vcmp.lt.s32.totalorder %v10526, 1
        %vm10546 = vcmp.lt.s32.totalorder %v10526, 2
        %vm10547 = vcmp.lt.s32.totalorder %v10526, 3
        %vm10548 = vcmp.lt.s32.totalorder %v10526, 4
        %v10549 = vsel %vm10545, %v10529, %v10532
        %v10550 = vsel %vm10548, %v10538, 2102212464
        %v10551 = vsel %vm10547, %v10535, %v10550
        %v10552 = vsel %vm10546, %v10549, %v10551
        %v10553 = vsel %vm10545, %v10532, %v10535
        %v10554 = vsel %vm10548, %v10541, 920167782
        %v10555 = vsel %vm10547, %v10538, %v10554
        %v10556 = vsel %vm10546, %v10553, %v10555
        %v10557 = vsel %vm10545, %v10535, %v10538
        %v10558 = vsel %vm10548, %v10544, 1326507024
        %v10559 = vsel %vm10547, %v10541, %v10558
        %v10560 = vsel %vm10546, %v10557, %v10559
        %v10561 = vshll.u32 %v10521, 8
        %v10562 = vand.u32 %v10561, 65535
        %v10563 = vshrl.u32 %v10561, 16
        %v10564 = vand.u32 %v10560, 65535
        %v10565 = vshrl.u32 %v10560, 16
        %v10566 = vmul.u32 %v10562, %v10564
        %v10567 = vmul.u32 %v10562, %v10565
        %v10568 = vmul.u32 %v10563, %v10564
        %v10569 = vmul.u32 %v10563, %v10565
        %v10570 = vshll.u32 %v10567, 16
        %v10571 = vshrl.u32 %v10567, 16
        %v10572 = vshll.u32 %v10568, 16
        %v10573 = vshrl.u32 %v10568, 16
        %vm10574 = vc.u32 %v10566, %v10570
        %v10575 = vsel %vm10574, 1, 0
        %v10576 = vadd.s32 %v10566, %v10570
        %v10577 = vadd.s32 %v10569, %v10575
        %vm10578 = vc.u32 %v10576, %v10572
        %v10579 = vsel %vm10578, 1, 0
        %v10580 = vadd.s32 %v10576, %v10572
        %v10581 = vadd.s32 %v10577, %v10579
        %v10582 = vadd.s32 %v10581, %v10571
        %v10583 = vadd.s32 %v10582, %v10573
        %v10584 = vand.u32 %v10561, 65535
        %v10585 = vshrl.u32 %v10561, 16
        %v10586 = vand.u32 %v10556, 65535
        %v10587 = vshrl.u32 %v10556, 16
        %v10588 = vmul.u32 %v10584, %v10586
        %v10589 = vmul.u32 %v10584, %v10587
        %v10590 = vmul.u32 %v10585, %v10586
        %v10591 = vmul.u32 %v10585, %v10587
        %v10592 = vshll.u32 %v10589, 16
        %v10593 = vshrl.u32 %v10589, 16
        %v10594 = vshll.u32 %v10590, 16
        %v10595 = vshrl.u32 %v10590, 16
        %vm10596 = vc.u32 %v10588, %v10592
        %v10597 = vsel %vm10596, 1, 0
        %v10598 = vadd.s32 %v10588, %v10592
        %v10599 = vadd.s32 %v10591, %v10597
        %vm10600 = vc.u32 %v10598, %v10594
        %v10601 = vsel %vm10600, 1, 0
        %v10602 = vadd.s32 %v10598, %v10594
        %v10603 = vadd.s32 %v10599, %v10601
        %v10604 = vadd.s32 %v10603, %v10593
        %v10605 = vadd.s32 %v10604, %v10595
        %v10606 = vmul.u32 %v10561, %v10552
        %v10607 = vadd.s32 %v10583, %v10602
        %vm10608 = vc.u32 %v10583, %v10602
        %v10609 = vadd.s32 %v10605, 1
        %v10610 = vsel %vm10608, %v10609, %v10605
        %v10611 = vadd.s32 %v10606, %v10610
        %v10612 = vadd.s32 %v10611, 536870912
        %v10613 = vshrl.u32 %v10612, 30
        %v10614 = vshll.u32 %v10613, 30
        %v10615 = vsub.s32 %v10611, %v10614
        %vm10616 = vcmp.lt.s32.totalorder %v10615, 0
        %v10617 = vsub.s32 0, %v10615
        %v10618 = vsel %vm10616, %v10617, %v10615
        %v10619 = vclz %v10618
        %v10620 = vsub.s32 %v10619, 2
        %vm10621 = vcmp.gt.s32.totalorder 0, %v10620
        %v10622 = vsel %vm10621, 0, %v10620
        %v10623 = vsub.s32 32, %v10622
        %v10624 = vshll.u32 %v10615, %v10622
        %v10625 = vshrl.u32 %v10607, %v10623
        %v10626 = vor.u32 %v10624, %v10625
        %v10627 = vsub.s32 4294967266, %v10622
        %v10628 = vadd.s32 %v10627, 127
        %v10629 = vshll.u32 %v10628, 23
        %v10630 = vor.u32 4788187, %v10629
        %v10631 = vand.u32 2147483647, %v10630
        %v10633 = vcvt.s32.f32 %v10626
        %v10634 = vmul.f32 %v10633, %v10631
        %v10635 = vxor.u32 %v10634, 2147483648
        %v10636 = vsel %vm10515, %v10635, %v10634
        %v10637 = vsub.s32 4, %v10613
        %v10638 = vsel %vm10515, %v10637, %v10613
        %v10639 = vsel %vm10514, %v5922, %v10636
        %v10640 = vsel %vm10514, 0, %v10638
        %v10641 = vmul.f32 %v10639, %v10639
        %v10642 = vmul.f32 %v10641, -0.001358992
        %v10643 = vadd.f32 %v10642, 0.041655596
        %v10644 = vmul.f32 %v10641, %v10643
        %v10645 = vadd.f32 %v10644, -0.4999988
        %v10646 = vmul.f32 %v10641, %v10645
        %v10647 = vadd.f32 1.0, %v10646
        %v10648 = vmul.f32 %v10639, %v10639
        %v10649 = vmul.f32 %v10648, -0.00019511016
        %v10650 = vadd.f32 %v10649, 0.008332121
        %v10651 = vmul.f32 %v10648, %v10650
        %v10652 = vadd.f32 %v10651, -0.16666654
        %v10653 = vmul.f32 %v10648, %v10652
        %v10654 = vadd.f32 %v10653, 1.0
        %v10655 = vmul.f32 %v10654, %v10639
        %vm10656 = vweird.f32 %v5922
        %v10657 = vadd.s32 %v10640, 3
        %v10658 = vand.u32 %v10657, 3
        %vm10659 = vcmp.lt.s32.totalorder %v10658, 2
        %vm10660 = vcmp.eq.s32.totalorder %v10658, 0
        %v10661 = vxor.u32 %v10655, 2147483648
        %v10662 = vsel %vm10660, %v10647, %v10661
        %vm10663 = vcmp.eq.s32.totalorder %v10658, 2
        %v10664 = vxor.u32 %v10647, 2147483648
        %v10665 = vsel %vm10663, %v10664, %v10655
        %v10666 = vsel %vm10659, %v10662, %v10665
        %v10667 = vsel %vm10656, nan, %v10666
        %v10668 = vand.u32 2147483647, %v5963
        %vm10669 = vcmp.le.f32.partialorder %v10668, 0.7853982
        %vm10670 = vcmp.lt.s32.totalorder %v5963, 0
        %v10671 = vand.u32 %v5963, 2139095040
        %v10672 = vshrl.u32 %v10671, 23
        %v10673 = vsub.s32 %v10672, 127
        %v10674 = vand.u32 2147483647, %v5963
        %v10675 = vand.u32 %v10674, 8388607
        %v10676 = vor.u32 %v10675, 8388608
        %v10677 = vsub.s32 0, %v10676
        %v10678 = vadd.s32 %v10673, 1
        %vm10679 = vcmp.gt.s32.totalorder %v10678, 0
        %v10680 = vsel %vm10679, %v10678, 0
        %v10681 = vshrl.u32 %v10680, 5
        %v10682 = vand.u32 %v10680, 31
        %v10683 = vsub.s32 32, %v10682
        %v10684 = vshrl.u32 683565275, %v10683
        %v10685 = vshll.u32 683565275, %v10682
        %v10686 = vshrl.u32 2475754826, %v10683
        %v10687 = vor.u32 %v10685, %v10686
        %v10688 = vshll.u32 2475754826, %v10682
        %v10689 = vshrl.u32 2131351028, %v10683
        %v10690 = vor.u32 %v10688, %v10689
        %v10691 = vshll.u32 2131351028, %v10682
        %v10692 = vshrl.u32 2102212464, %v10683
        %v10693 = vor.u32 %v10691, %v10692
        %v10694 = vshll.u32 2102212464, %v10682
        %v10695 = vshrl.u32 920167782, %v10683
        %v10696 = vor.u32 %v10694, %v10695
        %v10697 = vshll.u32 920167782, %v10682
        %v10698 = vshrl.u32 1326507024, %v10683
        %v10699 = vor.u32 %v10697, %v10698
        %vm10700 = vcmp.lt.s32.totalorder %v10681, 1
        %vm10701 = vcmp.lt.s32.totalorder %v10681, 2
        %vm10702 = vcmp.lt.s32.totalorder %v10681, 3
        %vm10703 = vcmp.lt.s32.totalorder %v10681, 4
        %v10704 = vsel %vm10700, %v10684, %v10687
        %v10705 = vsel %vm10703, %v10693, 2102212464
        %v10706 = vsel %vm10702, %v10690, %v10705
        %v10707 = vsel %vm10701, %v10704, %v10706
        %v10708 = vsel %vm10700, %v10687, %v10690
        %v10709 = vsel %vm10703, %v10696, 920167782
        %v10710 = vsel %vm10702, %v10693, %v10709
        %v10711 = vsel %vm10701, %v10708, %v10710
        %v10712 = vsel %vm10700, %v10690, %v10693
        %v10713 = vsel %vm10703, %v10699, 1326507024
        %v10714 = vsel %vm10702, %v10696, %v10713
        %v10715 = vsel %vm10701, %v10712, %v10714
        %v10716 = vshll.u32 %v10676, 8
        %v10717 = vand.u32 %v10716, 65535
        %v10718 = vshrl.u32 %v10716, 16
        %v10719 = vand.u32 %v10715, 65535
        %v10720 = vshrl.u32 %v10715, 16
        %v10721 = vmul.u32 %v10717, %v10719
        %v10722 = vmul.u32 %v10717, %v10720
        %v10723 = vmul.u32 %v10718, %v10719
        %v10724 = vmul.u32 %v10718, %v10720
        %v10725 = vshll.u32 %v10722, 16
        %v10726 = vshrl.u32 %v10722, 16
        %v10727 = vshll.u32 %v10723, 16
        %v10728 = vshrl.u32 %v10723, 16
        %vm10729 = vc.u32 %v10721, %v10725
        %v10730 = vsel %vm10729, 1, 0
        %v10731 = vadd.s32 %v10721, %v10725
        %v10732 = vadd.s32 %v10724, %v10730
        %vm10733 = vc.u32 %v10731, %v10727
        %v10734 = vsel %vm10733, 1, 0
        %v10735 = vadd.s32 %v10731, %v10727
        %v10736 = vadd.s32 %v10732, %v10734
        %v10737 = vadd.s32 %v10736, %v10726
        %v10738 = vadd.s32 %v10737, %v10728
        %v10739 = vand.u32 %v10716, 65535
        %v10740 = vshrl.u32 %v10716, 16
        %v10741 = vand.u32 %v10711, 65535
        %v10742 = vshrl.u32 %v10711, 16
        %v10743 = vmul.u32 %v10739, %v10741
        %v10744 = vmul.u32 %v10739, %v10742
        %v10745 = vmul.u32 %v10740, %v10741
        %v10746 = vmul.u32 %v10740, %v10742
        %v10747 = vshll.u32 %v10744, 16
        %v10748 = vshrl.u32 %v10744, 16
        %v10749 = vshll.u32 %v10745, 16
        %v10750 = vshrl.u32 %v10745, 16
        %vm10751 = vc.u32 %v10743, %v10747
        %v10752 = vsel %vm10751, 1, 0
        %v10753 = vadd.s32 %v10743, %v10747
        %v10754 = vadd.s32 %v10746, %v10752
        %vm10755 = vc.u32 %v10753, %v10749
        %v10756 = vsel %vm10755, 1, 0
        %v10757 = vadd.s32 %v10753, %v10749
        %v10758 = vadd.s32 %v10754, %v10756
        %v10759 = vadd.s32 %v10758, %v10748
        %v10760 = vadd.s32 %v10759, %v10750
        %v10761 = vmul.u32 %v10716, %v10707
        %v10762 = vadd.s32 %v10738, %v10757
        %vm10763 = vc.u32 %v10738, %v10757
        %v10764 = vadd.s32 %v10760, 1
        %v10765 = vsel %vm10763, %v10764, %v10760
        %v10766 = vadd.s32 %v10761, %v10765
        %v10767 = vadd.s32 %v10766, 536870912
        %v10768 = vshrl.u32 %v10767, 30
        %v10769 = vshll.u32 %v10768, 30
        %v10770 = vsub.s32 %v10766, %v10769
        %vm10771 = vcmp.lt.s32.totalorder %v10770, 0
        %v10772 = vsub.s32 0, %v10770
        %v10773 = vsel %vm10771, %v10772, %v10770
        %v10774 = vclz %v10773
        %v10775 = vsub.s32 %v10774, 2
        %vm10776 = vcmp.gt.s32.totalorder 0, %v10775
        %v10777 = vsel %vm10776, 0, %v10775
        %v10778 = vsub.s32 32, %v10777
        %v10779 = vshll.u32 %v10770, %v10777
        %v10780 = vshrl.u32 %v10762, %v10778
        %v10781 = vor.u32 %v10779, %v10780
        %v10782 = vsub.s32 4294967266, %v10777
        %v10783 = vadd.s32 %v10782, 127
        %v10784 = vshll.u32 %v10783, 23
        %v10785 = vor.u32 4788187, %v10784
        %v10786 = vand.u32 2147483647, %v10785
        %v10788 = vcvt.s32.f32 %v10781
        %v10789 = vmul.f32 %v10788, %v10786
        %v10790 = vxor.u32 %v10789, 2147483648
        %v10791 = vsel %vm10670, %v10790, %v10789
        %v10792 = vsub.s32 4, %v10768
        %v10793 = vsel %vm10670, %v10792, %v10768
        %v10794 = vsel %vm10669, %v5963, %v10791
        %v10795 = vsel %vm10669, 0, %v10793
        %v10796 = vmul.f32 %v10794, %v10794
        %v10797 = vmul.f32 %v10796, -0.001358992
        %v10798 = vadd.f32 %v10797, 0.041655596
        %v10799 = vmul.f32 %v10796, %v10798
        %v10800 = vadd.f32 %v10799, -0.4999988
        %v10801 = vmul.f32 %v10796, %v10800
        %v10802 = vadd.f32 1.0, %v10801
        %v10803 = vmul.f32 %v10794, %v10794
        %v10804 = vmul.f32 %v10803, -0.00019511016
        %v10805 = vadd.f32 %v10804, 0.008332121
        %v10806 = vmul.f32 %v10803, %v10805
        %v10807 = vadd.f32 %v10806, -0.16666654
        %v10808 = vmul.f32 %v10803, %v10807
        %v10809 = vadd.f32 %v10808, 1.0
        %v10810 = vmul.f32 %v10809, %v10794
        %vm10811 = vweird.f32 %v5963
        %v10812 = vadd.s32 %v10795, 3
        %v10813 = vand.u32 %v10812, 3
        %vm10814 = vcmp.lt.s32.totalorder %v10813, 2
        %vm10815 = vcmp.eq.s32.totalorder %v10813, 0
        %v10816 = vxor.u32 %v10810, 2147483648
        %v10817 = vsel %vm10815, %v10802, %v10816
        %vm10818 = vcmp.eq.s32.totalorder %v10813, 2
        %v10819 = vxor.u32 %v10802, 2147483648
        %v10820 = vsel %vm10818, %v10819, %v10810
        %v10821 = vsel %vm10814, %v10817, %v10820
        %v10822 = vsel %vm10811, nan, %v10821
        %v10823 = vand.u32 2147483647, %v6004
        %vm10824 = vcmp.le.f32.partialorder %v10823, 0.7853982
        %vm10825 = vcmp.lt.s32.totalorder %v6004, 0
        %v10826 = vand.u32 %v6004, 2139095040
        %v10827 = vshrl.u32 %v10826, 23
        %v10828 = vsub.s32 %v10827, 127
        %v10829 = vand.u32 2147483647, %v6004
        %v10830 = vand.u32 %v10829, 8388607
        %v10831 = vor.u32 %v10830, 8388608
        %v10832 = vsub.s32 0, %v10831
        %v10833 = vadd.s32 %v10828, 1
        %vm10834 = vcmp.gt.s32.totalorder %v10833, 0
        %v10835 = vsel %vm10834, %v10833, 0
        %v10836 = vshrl.u32 %v10835, 5
        %v10837 = vand.u32 %v10835, 31
        %v10838 = vsub.s32 32, %v10837
        %v10839 = vshrl.u32 683565275, %v10838
        %v10840 = vshll.u32 683565275, %v10837
        %v10841 = vshrl.u32 2475754826, %v10838
        %v10842 = vor.u32 %v10840, %v10841
        %v10843 = vshll.u32 2475754826, %v10837
        %v10844 = vshrl.u32 2131351028, %v10838
        %v10845 = vor.u32 %v10843, %v10844
        %v10846 = vshll.u32 2131351028, %v10837
        %v10847 = vshrl.u32 2102212464, %v10838
        %v10848 = vor.u32 %v10846, %v10847
        %v10849 = vshll.u32 2102212464, %v10837
        %v10850 = vshrl.u32 920167782, %v10838
        %v10851 = vor.u32 %v10849, %v10850
        %v10852 = vshll.u32 920167782, %v10837
        %v10853 = vshrl.u32 1326507024, %v10838
        %v10854 = vor.u32 %v10852, %v10853
        %vm10855 = vcmp.lt.s32.totalorder %v10836, 1
        %vm10856 = vcmp.lt.s32.totalorder %v10836, 2
        %vm10857 = vcmp.lt.s32.totalorder %v10836, 3
        %vm10858 = vcmp.lt.s32.totalorder %v10836, 4
        %v10859 = vsel %vm10855, %v10839, %v10842
        %v10860 = vsel %vm10858, %v10848, 2102212464
        %v10861 = vsel %vm10857, %v10845, %v10860
        %v10862 = vsel %vm10856, %v10859, %v10861
        %v10863 = vsel %vm10855, %v10842, %v10845
        %v10864 = vsel %vm10858, %v10851, 920167782
        %v10865 = vsel %vm10857, %v10848, %v10864
        %v10866 = vsel %vm10856, %v10863, %v10865
        %v10867 = vsel %vm10855, %v10845, %v10848
        %v10868 = vsel %vm10858, %v10854, 1326507024
        %v10869 = vsel %vm10857, %v10851, %v10868
        %v10870 = vsel %vm10856, %v10867, %v10869
        %v10871 = vshll.u32 %v10831, 8
        %v10872 = vand.u32 %v10871, 65535
        %v10873 = vshrl.u32 %v10871, 16
        %v10874 = vand.u32 %v10870, 65535
        %v10875 = vshrl.u32 %v10870, 16
        %v10876 = vmul.u32 %v10872, %v10874
        %v10877 = vmul.u32 %v10872, %v10875
        %v10878 = vmul.u32 %v10873, %v10874
        %v10879 = vmul.u32 %v10873, %v10875
        %v10880 = vshll.u32 %v10877, 16
        %v10881 = vshrl.u32 %v10877, 16
        %v10882 = vshll.u32 %v10878, 16
        %v10883 = vshrl.u32 %v10878, 16
        %vm10884 = vc.u32 %v10876, %v10880
        %v10885 = vsel %vm10884, 1, 0
        %v10886 = vadd.s32 %v10876, %v10880
        %v10887 = vadd.s32 %v10879, %v10885
        %vm10888 = vc.u32 %v10886, %v10882
        %v10889 = vsel %vm10888, 1, 0
        %v10890 = vadd.s32 %v10886, %v10882
        %v10891 = vadd.s32 %v10887, %v10889
        %v10892 = vadd.s32 %v10891, %v10881
        %v10893 = vadd.s32 %v10892, %v10883
        %v10894 = vand.u32 %v10871, 65535
        %v10895 = vshrl.u32 %v10871, 16
        %v10896 = vand.u32 %v10866, 65535
        %v10897 = vshrl.u32 %v10866, 16
        %v10898 = vmul.u32 %v10894, %v10896
        %v10899 = vmul.u32 %v10894, %v10897
        %v10900 = vmul.u32 %v10895, %v10896
        %v10901 = vmul.u32 %v10895, %v10897
        %v10902 = vshll.u32 %v10899, 16
        %v10903 = vshrl.u32 %v10899, 16
        %v10904 = vshll.u32 %v10900, 16
        %v10905 = vshrl.u32 %v10900, 16
        %vm10906 = vc.u32 %v10898, %v10902
        %v10907 = vsel %vm10906, 1, 0
        %v10908 = vadd.s32 %v10898, %v10902
        %v10909 = vadd.s32 %v10901, %v10907
        %vm10910 = vc.u32 %v10908, %v10904
        %v10911 = vsel %vm10910, 1, 0
        %v10912 = vadd.s32 %v10908, %v10904
        %v10913 = vadd.s32 %v10909, %v10911
        %v10914 = vadd.s32 %v10913, %v10903
        %v10915 = vadd.s32 %v10914, %v10905
        %v10916 = vmul.u32 %v10871, %v10862
        %v10917 = vadd.s32 %v10893, %v10912
        %vm10918 = vc.u32 %v10893, %v10912
        %v10919 = vadd.s32 %v10915, 1
        %v10920 = vsel %vm10918, %v10919, %v10915
        %v10921 = vadd.s32 %v10916, %v10920
        %v10922 = vadd.s32 %v10921, 536870912
        %v10923 = vshrl.u32 %v10922, 30
        %v10924 = vshll.u32 %v10923, 30
        %v10925 = vsub.s32 %v10921, %v10924
        %vm10926 = vcmp.lt.s32.totalorder %v10925, 0
        %v10927 = vsub.s32 0, %v10925
        %v10928 = vsel %vm10926, %v10927, %v10925
        %v10929 = vclz %v10928
        %v10930 = vsub.s32 %v10929, 2
        %vm10931 = vcmp.gt.s32.totalorder 0, %v10930
        %v10932 = vsel %vm10931, 0, %v10930
        %v10933 = vsub.s32 32, %v10932
        %v10934 = vshll.u32 %v10925, %v10932
        %v10935 = vshrl.u32 %v10917, %v10933
        %v10936 = vor.u32 %v10934, %v10935
        %v10937 = vsub.s32 4294967266, %v10932
        %v10938 = vadd.s32 %v10937, 127
        %v10939 = vshll.u32 %v10938, 23
        %v10940 = vor.u32 4788187, %v10939
        %v10941 = vand.u32 2147483647, %v10940
        %v10943 = vcvt.s32.f32 %v10936
        %v10944 = vmul.f32 %v10943, %v10941
        %v10945 = vxor.u32 %v10944, 2147483648
        %v10946 = vsel %vm10825, %v10945, %v10944
        %v10947 = vsub.s32 4, %v10923
        %v10948 = vsel %vm10825, %v10947, %v10923
        %v10949 = vsel %vm10824, %v6004, %v10946
        %v10950 = vsel %vm10824, 0, %v10948
        %v10951 = vmul.f32 %v10949, %v10949
        %v10952 = vmul.f32 %v10951, -0.001358992
        %v10953 = vadd.f32 %v10952, 0.041655596
        %v10954 = vmul.f32 %v10951, %v10953
        %v10955 = vadd.f32 %v10954, -0.4999988
        %v10956 = vmul.f32 %v10951, %v10955
        %v10957 = vadd.f32 1.0, %v10956
        %v10958 = vmul.f32 %v10949, %v10949
        %v10959 = vmul.f32 %v10958, -0.00019511016
        %v10960 = vadd.f32 %v10959, 0.008332121
        %v10961 = vmul.f32 %v10958, %v10960
        %v10962 = vadd.f32 %v10961, -0.16666654
        %v10963 = vmul.f32 %v10958, %v10962
        %v10964 = vadd.f32 %v10963, 1.0
        %v10965 = vmul.f32 %v10964, %v10949
        %vm10966 = vweird.f32 %v6004
        %v10967 = vadd.s32 %v10950, 3
        %v10968 = vand.u32 %v10967, 3
        %vm10969 = vcmp.lt.s32.totalorder %v10968, 2
        %vm10970 = vcmp.eq.s32.totalorder %v10968, 0
        %v10971 = vxor.u32 %v10965, 2147483648
        %v10972 = vsel %vm10970, %v10957, %v10971
        %vm10973 = vcmp.eq.s32.totalorder %v10968, 2
        %v10974 = vxor.u32 %v10957, 2147483648
        %v10975 = vsel %vm10973, %v10974, %v10965
        %v10976 = vsel %vm10969, %v10972, %v10975
        %v10977 = vsel %vm10966, nan, %v10976
        %v10978 = vmul.f32 %v5720, %v6172
        %v10979 = vmul.f32 %v5761, %v6327
        %v10980 = vmul.f32 %v5802, %v6482
        %v10981 = vmul.f32 %v5843, %v6637
        %v10982 = vmul.f32 %v5884, %v6792
        %v10983 = vmul.f32 %v5925, %v6947
        %v10984 = vmul.f32 %v5966, %v7102
        %v10985 = vmul.f32 %v6007, %v7257
        %v10986 = vmul.f32 %v5723, %v7412
        %v10987 = vmul.f32 %v5764, %v7567
        %v10988 = vmul.f32 %v5805, %v7722
        %v10989 = vmul.f32 %v5846, %v7877
        %v10990 = vmul.f32 %v5887, %v8032
        %v10991 = vmul.f32 %v5928, %v8187
        %v10992 = vmul.f32 %v5969, %v8342
        %v10993 = vmul.f32 %v6010, %v8497
        %v10994 = vmul.f32 %v5726, %v8652
        %v10995 = vmul.f32 %v5767, %v8807
        %v10996 = vmul.f32 %v5808, %v8962
        %v10997 = vmul.f32 %v5849, %v9117
        %v10998 = vmul.f32 %v5890, %v9272
        %v10999 = vmul.f32 %v5931, %v9427
        %v11000 = vmul.f32 %v5972, %v9582
        %v11001 = vmul.f32 %v6013, %v9737
        %v11002 = vmul.f32 %v5729, %v9892
        %v11003 = vmul.f32 %v5770, %v10047
        %v11004 = vmul.f32 %v5811, %v10202
        %v11005 = vmul.f32 %v5852, %v10357
        %v11006 = vmul.f32 %v5893, %v10512
        %v11007 = vmul.f32 %v5934, %v10667
        %v11008 = vmul.f32 %v5975, %v10822
        %v11009 = vmul.f32 %v6016, %v10977
        %v11010 = vadd.f32 %v10978, %v10986
        %v11011 = vadd.f32 %v11010, %v10994
        %v11012 = vadd.f32 %v11011, %v11002
        %v11013 = vrot.slane %v11012, 4
        %v11014 = vadd.f32 %v11012, %v11013
        %v11015 = vrot.slane %v11014, 2
        %v11016 = vadd.f32 %v11014, %v11015
        %v11017 = vrot.slane %v11016, 1
        %v11018 = vadd.f32 %v11016, %v11017
        %v11019 = vadd.f32 %v10979, %v10987
        %v11020 = vadd.f32 %v11019, %v10995
        %v11021 = vadd.f32 %v11020, %v11003
        %v11022 = vrot.slane %v11021, 4
        %v11023 = vadd.f32 %v11021, %v11022
        %v11024 = vrot.slane %v11023, 2
        %v11025 = vadd.f32 %v11023, %v11024
        %v11026 = vrot.slane %v11025, 1
        %v11027 = vadd.f32 %v11025, %v11026
        %v11028 = vadd.f32 %v10980, %v10988
        %v11029 = vadd.f32 %v11028, %v10996
        %v11030 = vadd.f32 %v11029, %v11004
        %v11031 = vrot.slane %v11030, 4
        %v11032 = vadd.f32 %v11030, %v11031
        %v11033 = vrot.slane %v11032, 2
        %v11034 = vadd.f32 %v11032, %v11033
        %v11035 = vrot.slane %v11034, 1
        %v11036 = vadd.f32 %v11034, %v11035
        %v11037 = vadd.f32 %v10981, %v10989
        %v11038 = vadd.f32 %v11037, %v10997
        %v11039 = vadd.f32 %v11038, %v11005
        %v11040 = vrot.slane %v11039, 4
        %v11041 = vadd.f32 %v11039, %v11040
        %v11042 = vrot.slane %v11041, 2
        %v11043 = vadd.f32 %v11041, %v11042
        %v11044 = vrot.slane %v11043, 1
        %v11045 = vadd.f32 %v11043, %v11044
        %v11046 = vadd.f32 %v10982, %v10990
        %v11047 = vadd.f32 %v11046, %v10998
        %v11048 = vadd.f32 %v11047, %v11006
        %v11049 = vrot.slane %v11048, 4
        %v11050 = vadd.f32 %v11048, %v11049
        %v11051 = vrot.slane %v11050, 2
        %v11052 = vadd.f32 %v11050, %v11051
        %v11053 = vrot.slane %v11052, 1
        %v11054 = vadd.f32 %v11052, %v11053
        %v11055 = vadd.f32 %v10983, %v10991
        %v11056 = vadd.f32 %v11055, %v10999
        %v11057 = vadd.f32 %v11056, %v11007
        %v11058 = vrot.slane %v11057, 4
        %v11059 = vadd.f32 %v11057, %v11058
        %v11060 = vrot.slane %v11059, 2
        %v11061 = vadd.f32 %v11059, %v11060
        %v11062 = vrot.slane %v11061, 1
        %v11063 = vadd.f32 %v11061, %v11062
        %v11064 = vadd.f32 %v10984, %v10992
        %v11065 = vadd.f32 %v11064, %v11000
        %v11066 = vadd.f32 %v11065, %v11008
        %v11067 = vrot.slane %v11066, 4
        %v11068 = vadd.f32 %v11066, %v11067
        %v11069 = vrot.slane %v11068, 2
        %v11070 = vadd.f32 %v11068, %v11069
        %v11071 = vrot.slane %v11070, 1
        %v11072 = vadd.f32 %v11070, %v11071
        %v11073 = vadd.f32 %v10985, %v10993
        %v11074 = vadd.f32 %v11073, %v11001
        %v11075 = vadd.f32 %v11074, %v11009
        %v11076 = vrot.slane %v11075, 4
        %v11077 = vadd.f32 %v11075, %v11076
        %v11078 = vrot.slane %v11077, 2
        %v11079 = vadd.f32 %v11077, %v11078
        %v11080 = vrot.slane %v11079, 1
        %v11081 = vadd.f32 %v11079, %v11080
        %11083 = vset.pattern.permute.xlu0 0
        %11084 = vperm.xlu0 %11083, %v215
        %v11085 = vpop.permute.xlu0 %11084
        %v11087 = vadd.f32 %v11018, %v11085
        %v11088 = vadd.f32 %v11027, %v11085
        %v11089 = vadd.f32 %v11036, %v11085
        %v11090 = vadd.f32 %v11045, %v11085
        %v11091 = vadd.f32 %v11054, %v11085
        %v11092 = vadd.f32 %v11063, %v11085
        %v11093 = vadd.f32 %v11072, %v11085
        %v11094 = vadd.f32 %v11081, %v11085
        %v11103 = vrot.slane %v11088, 7
        %v11104 = vrot.slane %v11089, 6
        %v11105 = vrot.slane %v11090, 5
        %v11106 = vrot.slane %v11091, 4
        %v11107 = vrot.slane %v11092, 3
        %v11108 = vrot.slane %v11093, 2
        %v11109 = vrot.slane %v11094, 1
        %vm11110 = vcmask 1040384
        %v11111 = vsel %vm11110, %v11087, %v11103
        %vm11112 = vcmask 1042434
        %v11113 = vsel %vm11112, %v11104, %v11105
        %vm11114 = vcmask 1041408
        %v11115 = vsel %vm11114, %v11111, %v11113
        %vm11116 = vcmask 1044484
        %v11117 = vsel %vm11116, %v11106, %v11107
        %vm11118 = vcmask 1046534
        %v11119 = vsel %vm11118, %v11108, %v11109
        %vm11120 = vcmask 1045508
        %v11121 = vsel %vm11120, %v11117, %v11119
        %vm11122 = vcmask 1043456
        %v11123 = vsel %vm11122, %v11115, %v11121
        %11125 = vst [vmem:[%s191] sm:$0xff] %v11123
        %s11126 = sand.u32 %s115, 1
        %s11127 = scalar_lea.sflag [#allocation3], %s11126
        %s11128 = sand.u32 %s115, 1
        %s11129 = smul.addr %s11128, 8
        %s11130 = scalar_lea.vmem [#allocation2], %s11129
        // Predicated region
        $region37: #{tpu_custom_call.1} parent=35 // pred_check
          %p11131 = pneg %p125
        $region38: #{tpu_custom_call.1} parent=35 // pred_check_branch
          %11133 = sbr.rel (%p11131) target = $region40
        $region39: #{tpu_custom_call.1} parent=35 // pred_region
          %s11134 = smul.u32 8, %s18
          %11136 = vsyncadd %s11127, 0
          %s11137 = scalar_lea.hbm %s4, %s11134
          %s11139 = sshll.u32 %s11130, 4
          %s11140 = int_to_ptr.vmem [resolvable:$true] %s11139
          %s11141 = sshll.u32 %s11137, 4
          %s11142 = int_to_ptr.hbm [resolvable:$true] %s11141
          %11144 = dma.vmem_to_hbm [thread:$0]  %s11140, 128, %s11142, %s11127
        $region40: #{tpu_custom_call.1} parent=35 // pred_fallthru
          _
      $region36: #{tpu_custom_call.1} parent=5 // pred_fallthru
        _
      %p11145 = scmp.le.s32.totalorder 2, %s13
      // Predicated region
      $region41: #{tpu_custom_call.1} parent=5 // pred_check
        %p11146 = pneg %p11145
      $region42: #{tpu_custom_call.1} parent=5 // pred_check_branch
        %11148 = sbr.rel (%p11146) target = $region44
      $region43: #{tpu_custom_call.1} parent=5 // pred_region
        %s11149 = ssub.s32 %s13, 2
        // Predicated region
        $region45: #{tpu_custom_call.1} parent=43 // pred_check
          %p11150 = pneg %p131
        $region46: #{tpu_custom_call.1} parent=43 // pred_check_branch
          %11152 = sbr.rel (%p11150) target = $region48
        $region47: #{tpu_custom_call.1} parent=43 // pred_region
          %s11153 = sand.u32 %s116, 1
          %s11154 = scalar_lea.sflag [#allocation3], %s11153
          %s11155 = sand.u32 %s116, 1
          %s11156 = smul.addr %s11155, 8
          %s11157 = scalar_lea.vmem [#allocation2], %s11156
          %11159 = dma.done %s11154, 128
        $region48: #{tpu_custom_call.1} parent=43 // pred_fallthru
          _
      $region44: #{tpu_custom_call.1} parent=5 // pred_fallthru
        _
    $region6: #{tpu_custom_call.1} parent=1 // loop_footer
      %s17 = sadd.s32 1, %s13
    $region7: #{tpu_custom_call.1} parent=1 // loop_footer_branch
      %12 = sbr.rel target = $region3
    $region8: #{tpu_custom_call.1} parent=1 // loop_exit
      _
    %11160 = vsyncpa [#allocation3], 1
    %s11161 = scalar_lea.sflag [#allocation3], 1
    %11162 = vsyncpa %s11161, 1

</llo_original>
